<compile_context>
chip_gen: v5e
topology: v5e:2x2
jax: 0.10.0
libtpu: 0.0.40
codegen_flags: <defaults>
</compile_context>

<pallas_src>
import functools

import jax
import jax.numpy as jnp
from jax.experimental import pallas as pl
from jax.experimental.pallas import tpu as pltpu

_BN_EPS = 1e-5


# ----------------------------------------------------------------------------
# helpers
# ----------------------------------------------------------------------------
def _round_up(x, m):
    return ((x + m - 1) // m) * m


def _pick_tile_and_pad(dim, pref):
    """Largest 128-multiple tile <= pref that divides the 128-padded dim."""
    dim128 = _round_up(max(dim, 128), 128)
    pref = max(128, (pref // 128) * 128)
    best = 128
    t = 128
    while t <= min(pref, dim128):
        if dim128 % t == 0:
            best = t
        t += 128
    return best, dim128


def _is_v7x():
    try:
        return "v7" in jax.devices()[0].device_kind.lower()
    except Exception:
        return False


def _split_for_megacore(dim_pad, tile):
    """v7x only: ensure the parallel axis has >= 2 tiles so both TCs are used."""
    if dim_pad // tile >= 2 or dim_pad < 256:
        return tile
    t = (dim_pad // 2 // 128) * 128
    while t >= 128:
        if dim_pad % t == 0:
            return t
        t -= 128
    return tile


def _cparams(sem, block_bytes):
    # vmem limit derived from the actual block footprint (+ headroom for the
    # double/triple-buffered pipeline), capped well below the v7x 64 MiB ceiling.
    limit = int(min(max(6 * block_bytes, 16 << 20), 48 << 20))
    return pltpu.CompilerParams(dimension_semantics=sem, vmem_limit_bytes=limit)


# ----------------------------------------------------------------------------
# Pallas kernels
# ----------------------------------------------------------------------------
def _xw_kernel(x_ref, scale_ref, shift_ref, w_ref, o_ref):
    """(x * scale + shift) @ W  -> bf16. scale/shift fold the previous BN."""
    x = x_ref[...].astype(jnp.float32) * scale_ref[...] + shift_ref[...]
    o_ref[...] = jnp.dot(x.astype(jnp.bfloat16), w_ref[...],
                         preferred_element_type=jnp.float32).astype(o_ref.dtype)


def _he_kernel(ht_ref, xw_ref, binv_ref, o_ref, acc_ref):
    """he = B^{-1} (H^T @ xw), using a pre-transposed H^T tile (plain MXU feed)."""
    k = pl.program_id(2)

    @pl.when(k == 0)
    def _():
        acc_ref[...] = jnp.zeros_like(acc_ref)

    acc_ref[...] += jnp.dot(ht_ref[...], xw_ref[...],
                            preferred_element_type=jnp.float32)

    @pl.when(k == pl.num_programs(2) - 1)
    def _():
        o_ref[...] = (acc_ref[...] * binv_ref[...]).astype(o_ref.dtype)


def _prop_kernel(h_ref, he_ref, dinv_ref, bias_ref, mask_ref,
                 z_ref, s_ref, ss_ref, acc_ref):
    """z = relu(D^{-1} (H @ he) + bias); padded rows zeroed; fused BN partial stats."""
    k = pl.program_id(2)

    @pl.when(k == 0)
    def _():
        acc_ref[...] = jnp.zeros_like(acc_ref)

    acc_ref[...] += jnp.dot(h_ref[...], he_ref[...],
                            preferred_element_type=jnp.float32)

    @pl.when(k == pl.num_programs(2) - 1)
    def _():
        out = acc_ref[...] * dinv_ref[...] + bias_ref[...]
        out = jnp.maximum(out, 0.0) * mask_ref[...]        # ReLU + zero padded rows
        z_ref[...] = out.astype(z_ref.dtype)
        # Fused BatchNorm batch stats: per-tile partial sum / sum-of-squares,
        # written into row 0 of an (8, tf) block (rows 1..7 are zeros).
        row0 = (jax.lax.broadcasted_iota(jnp.int32, s_ref.shape, 0) == 0
                ).astype(jnp.float32)
        s_ref[...] = row0 * jnp.sum(out, axis=0, keepdims=True)
        ss_ref[...] = row0 * jnp.sum(out * out, axis=0, keepdims=True)


# ----------------------------------------------------------------------------
# pallas_call wrappers
# ----------------------------------------------------------------------------
def _xw(x, scale, shift, w, *, tn, tf):
    n, fin = x.shape
    fout = w.shape[1]
    blk = tn * fin * x.dtype.itemsize + fin * tf * 2 + tn * tf * 2 + 2 * fin * 4
    return pl.pallas_call(
        _xw_kernel,
        out_shape=jax.ShapeDtypeStruct((n, fout), jnp.bfloat16),
        grid=(n // tn, fout // tf),
        in_specs=[
            pl.BlockSpec((tn, fin), lambda i, j: (i, 0)),
            pl.BlockSpec((1, fin), lambda i, j: (0, 0)),
            pl.BlockSpec((1, fin), lambda i, j: (0, 0)),
            pl.BlockSpec((fin, tf), lambda i, j: (0, j)),
        ],
        out_specs=pl.BlockSpec((tn, tf), lambda i, j: (i, j)),
        compiler_params=_cparams(("parallel", "parallel"), blk),
    )(x, scale, shift, w)


def _hyperedge_features(ht, xw, b_inv, *, tn, te, tf):
    e, n = ht.shape
    f = xw.shape[1]
    blk = te * tn * 2 + tn * tf * 2 + te * tf * (2 + 4) + te * 4
    return pl.pallas_call(
        _he_kernel,
        out_shape=jax.ShapeDtypeStruct((e, f), jnp.bfloat16),
        grid=(e // te, f // tf, n // tn),
        in_specs=[
            pl.BlockSpec((te, tn), lambda ei, fi, ni: (ei, ni)),
            pl.BlockSpec((tn, tf), lambda ei, fi, ni: (ni, fi)),
            pl.BlockSpec((te, 1), lambda ei, fi, ni: (ei, 0)),
        ],
        out_specs=pl.BlockSpec((te, tf), lambda ei, fi, ni: (ei, fi)),
        scratch_shapes=[pltpu.VMEM((te, tf), jnp.float32)],
        compiler_params=_cparams(("parallel", "parallel", "arbitrary"), blk),
    )(ht, xw, b_inv)


def _node_update(h, he, d_inv, bias, mask, *, tn, te, tf):
    n, e = h.shape
    f = he.shape[1]
    n_tiles = n // tn
    blk = (tn * te * 2 + te * tf * 2 + tn * tf * (2 + 4)
           + tn * 8 + tf * 4 + 2 * 8 * tf * 4)
    return pl.pallas_call(
        _prop_kernel,
        out_shape=(jax.ShapeDtypeStruct((n, f), jnp.bfloat16),
                   jax.ShapeDtypeStruct((n_tiles * 8, f), jnp.float32),
                   jax.ShapeDtypeStruct((n_tiles * 8, f), jnp.float32)),
        grid=(n // tn, f // tf, e // te),
        in_specs=[
            pl.BlockSpec((tn, te), lambda ni, fi, ei: (ni, ei)),
            pl.BlockSpec((te, tf), lambda ni, fi, ei: (ei, fi)),
            pl.BlockSpec((tn, 1), lambda ni, fi, ei: (ni, 0)),
            pl.BlockSpec((1, tf), lambda ni, fi, ei: (0, fi)),
            pl.BlockSpec((tn, 1), lambda ni, fi, ei: (ni, 0)),
        ],
        out_specs=(pl.BlockSpec((tn, tf), lambda ni, fi, ei: (ni, fi)),
                   pl.BlockSpec((8, tf), lambda ni, fi, ei: (ni, fi)),
                   pl.BlockSpec((8, tf), lambda ni, fi, ei: (ni, fi))),
        scratch_shapes=[pltpu.VMEM((tn, tf), jnp.float32)],
        compiler_params=_cparams(("parallel", "parallel", "arbitrary"), blk),
    )(h, he, d_inv, bias, mask)


# ----------------------------------------------------------------------------
# layer & full forward
# ----------------------------------------------------------------------------
def hypergraph_conv_layer(x, scale, shift, h_bf, ht_bf, d_inv, b_inv, mask,
                          w_bf, bias, *, tn, te, tf):
    xw = _xw(x, scale, shift, w_bf, tn=tn, tf=tf)                       # [N,F] bf16
    he = _hyperedge_features(ht_bf, xw, b_inv, tn=tn, te=te, tf=tf)     # [E,F] bf16
    z, s, ss = _node_update(h_bf, he, d_inv, bias, mask,
                            tn=tn, te=te, tf=tf)                        # bf16, f32, f32
    return z, s, ss


def _bn_affine(s_partial, ss_partial, gamma, beta, n_true):
    """Training-mode BatchNorm1d stats (from fused partial sums) -> (scale, shift)."""
    s = jnp.sum(s_partial, axis=0, keepdims=True)
    ss = jnp.sum(ss_partial, axis=0, keepdims=True)
    mean = s / n_true
    # NOTE: E[x^2]-E[x]^2 in f32 (clamped); acceptable for ReLU'd activations.
    var = jnp.maximum(ss / n_true - mean * mean, 0.0)
    scale = gamma * jax.lax.rsqrt(var + _BN_EPS)
    shift = beta - mean * scale
    return scale, shift


def hgnn_encoder_forward(params, x, edge, num_hyperedges, *, tile=512):
    """x: [N, in_ch] f32, edge: [2, nnz] int32 (row0=node idx, row1=hyperedge idx)."""
    n, fin = x.shape
    e = num_hyperedges

    hidden = params["w1"].shape[1]
    assert hidden % 128 == 0, "hidden width must be a multiple of 128"

    tn, n_pad = _pick_tile_and_pad(n, tile)
    te, e_pad = _pick_tile_and_pad(e, tile)
    if _is_v7x():
        tn = _split_for_megacore(n_pad, tn)
        te = _split_for_megacore(e_pad, te)

    # -------- glue: dense incidence built directly at padded shape (both layouts)
    nodes, hedges = edge[0], edge[1]
    h = jnp.zeros((n_pad, e_pad), jnp.float32).at[nodes, hedges].add(1.0)
    ht = jnp.zeros((e_pad, n_pad), jnp.float32).at[hedges, nodes].add(1.0)

    deg_n = jnp.sum(h, axis=1, keepdims=True)
    deg_e = jnp.sum(ht, axis=1, keepdims=True)
    d_inv = jnp.where(deg_n > 0, 1.0 / deg_n, 0.0)      # padded rows -> 0
    b_inv = jnp.where(deg_e > 0, 1.0 / deg_e, 0.0)
    mask = (jnp.arange(n_pad) < n).astype(jnp.float32).reshape(n_pad, 1)

    h_bf = h.astype(jnp.bfloat16)     # exact: small integer counts
    ht_bf = ht.astype(jnp.bfloat16)

    x_p = jnp.zeros((n_pad, fin), jnp.float32).at[:n].set(x)

    # pad the last layer's output features to a lane-dense multiple of 128
    f3 = params["w3"].shape[1]
    f3_pad = _round_up(max(f3, 128), 128)
    w3 = jnp.zeros((hidden, f3_pad), jnp.float32).at[:, :f3].set(params["w3"])
    b3 = jnp.zeros((1, f3_pad), jnp.float32).at[:, :f3].set(params["b3"])

    w1 = params["w1"].astype(jnp.bfloat16)
    w2 = params["w2"].astype(jnp.bfloat16)
    w3 = w3.astype(jnp.bfloat16)

    # full output-feature width as a single lane-dense tile (capped at 512)
    tf12, _ = _pick_tile_and_pad(hidden, 512)
    tf3, _ = _pick_tile_and_pad(f3_pad, 512)

    sc0 = jnp.ones((1, fin), jnp.float32)
    sh0 = jnp.zeros((1, fin), jnp.float32)

    z1, s1, ss1 = hypergraph_conv_layer(x_p, sc0, sh0, h_bf, ht_bf, d_inv, b_inv,
                                        mask, w1, params["b1"],
                                        tn=tn, te=te, tf=tf12)
    sc1, sh1 = _bn_affine(s1, ss1, params["g1"], params["be1"], n)

    z2, s2, ss2 = hypergraph_conv_layer(z1, sc1, sh1, h_bf, ht_bf, d_inv, b_inv,
                                        mask, w2, params["b2"],
                                        tn=tn, te=te, tf=tf12)
    sc2, sh2 = _bn_affine(s2, ss2, params["g2"], params["be2"], n)

    z3, _, _ = hypergraph_conv_layer(z2, sc2, sh2, h_bf, ht_bf, d_inv, b_inv,
                                     mask, w3, b3, tn=tn, te=te, tf=tf3)

    return z3[:n, :f3].astype(jnp.float32)


def init_params(key, in_channels, out_channels, hidden=256):
    ks = jax.random.split(key, 6)
    s = 0.1

    def lin(k, fi, fo):
        return s * jax.random.normal(k, (fi, fo), jnp.float32)

    return {
        "w1": lin(ks[0], in_channels, hidden),
        "b1": s * jax.random.normal(ks[1], (1, hidden), jnp.float32),
        "g1": jnp.ones((1, hidden), jnp.float32),
        "be1": jnp.zeros((1, hidden), jnp.float32),
        "w2": lin(ks[2], hidden, hidden),
        "b2": s * jax.random.normal(ks[3], (1, hidden), jnp.float32),
        "g2": jnp.ones((1, hidden), jnp.float32),
        "be2": jnp.zeros((1, hidden), jnp.float32),
        "w3": lin(ks[4], hidden, out_channels),
        "b3": s * jax.random.normal(ks[5], (1, out_channels), jnp.float32),
    }


# ----------------------------------------------------------------------------
# pure-JAX f32 reference (relaxed-tolerance self-check; bf16 pipeline is intentional)
# ----------------------------------------------------------------------------
def _reference_forward(params, x, edge, num_hyperedges):
    n = x.shape[0]
    h = jnp.zeros((n, num_hyperedges), jnp.float32).at[edge[0], edge[1]].add(1.0)
    deg_n = h.sum(1, keepdims=True)
    deg_e = h.sum(0, keepdims=True).T
    d_inv = jnp.where(deg_n > 0, 1.0 / deg_n, 0.0)
    b_inv = jnp.where(deg_e > 0, 1.0 / deg_e, 0.0)

    def conv(xx, w, b):
        xw = xx @ w
        he = b_inv * (h.T @ xw)
        return jnp.maximum(d_inv * (h @ he) + b, 0.0)

    def bn(xx, g, be):
        m = xx.mean(0, keepdims=True)
        v = jnp.maximum((xx * xx).mean(0, keepdims=True) - m * m, 0.0)
        return (xx - m) * jax.lax.rsqrt(v + _BN_EPS) * g + be

    x1 = bn(conv(x, params["w1"], params["b1"]), params["g1"], params["be1"])
    x2 = bn(conv(x1, params["w2"], params["b2"]), params["g2"], params["be2"])
    return conv(x2, params["w3"], params["b3"])


if __name__ == "__main__":
    key = jax.random.PRNGKey(0)
    k_x, k_p = jax.random.split(key)

    N, E = 200, 100          # nodes / hyperedges (non-multiples: exercises padding)
    IN_CH, OUT_CH = 64, 64

    x = jax.random.normal(k_x, (N, IN_CH), jnp.float32)

    # Deterministic hyperedge index [2, nnz]: each node belongs to 2 hyperedges.
    idx = jnp.arange(N, dtype=jnp.int32)
    nodes = jnp.concatenate([idx, idx])
    hedges = jnp.concatenate([idx % E, (idx * 7 + 3) % E]).astype(jnp.int32)
    edge = jnp.stack([nodes, hedges], axis=0)            # [2, 400]

    params = init_params(k_p, IN_CH, OUT_CH)

    fwd = jax.jit(functools.partial(hgnn_encoder_forward, num_hyperedges=E))
    out = jax.block_until_ready(fwd(params, x, edge))

    assert out.shape == (N, OUT_CH)
    assert bool(jnp.all(jnp.isfinite(out)))

    ref = _reference_forward(params, x, edge, E)
    max_err = float(jnp.max(jnp.abs(out - ref)))
    # bf16 operands / bf16 intermediate activations are intentional -> relaxed tol.
    assert max_err < 0.2, f"mismatch vs f32 reference: {max_err}"

    print("KERNEL_OK")
</pallas_src>

<mosaic_0001>
module attributes {stable_mosaic.version = 11 : i64} {
  func.func @_xw_kernel(%arg0: i32, %arg1: i32, %arg2: memref<256x64xf32, #tpu.memory_space<vmem>>, %arg3: memref<1x64xf32, #tpu.memory_space<vmem>>, %arg4: memref<1x64xf32, #tpu.memory_space<vmem>>, %arg5: memref<64x256xbf16, #tpu.memory_space<vmem>>, %arg6: memref<256x256xbf16, #tpu.memory_space<vmem>>) attributes {dimension_semantics = [#tpu.dimension_semantics<parallel>, #tpu.dimension_semantics<parallel>], iteration_bounds = array<i64: 1, 1>, scalar_prefetch = 0 : i64, scratch_operands = 0 : i64, tpu.core_type = #tpu.core_type<tc>, window_params = [{transform_indices = @transform_0, window_bounds = array<i64: 256, 64>}, {pipeline_mode = #tpu.pipeline_mode<synchronous>, transform_indices = @transform_1, window_bounds = array<i64: 1, 64>}, {pipeline_mode = #tpu.pipeline_mode<synchronous>, transform_indices = @transform_2, window_bounds = array<i64: 1, 64>}, {transform_indices = @transform_3, window_bounds = array<i64: 64, 256>}, {transform_indices = @transform_4, window_bounds = array<i64: 256, 256>}]} {
    %c0 = arith.constant 0 : index
    %c0_0 = arith.constant 0 : index
    %0 = vector.load %arg2[%c0, %c0_0] : memref<256x64xf32, #tpu.memory_space<vmem>>, vector<256x64xf32>
    %c0_1 = arith.constant 0 : index
    %c0_2 = arith.constant 0 : index
    %1 = vector.load %arg3[%c0_1, %c0_2] : memref<1x64xf32, #tpu.memory_space<vmem>>, vector<1x64xf32>
    %2 = vector.broadcast %1 : vector<1x64xf32> to vector<256x64xf32>
    %3 = arith.mulf %0, %2 : vector<256x64xf32>
    %c0_3 = arith.constant 0 : index
    %c0_4 = arith.constant 0 : index
    %4 = vector.load %arg4[%c0_3, %c0_4] : memref<1x64xf32, #tpu.memory_space<vmem>>, vector<1x64xf32>
    %5 = vector.broadcast %4 : vector<1x64xf32> to vector<256x64xf32>
    %6 = arith.addf %3, %5 : vector<256x64xf32>
    %7 = arith.truncf %6 : vector<256x64xf32> to vector<256x64xbf16>
    %c0_5 = arith.constant 0 : index
    %c0_6 = arith.constant 0 : index
    %8 = vector.load %arg5[%c0_5, %c0_6] : memref<64x256xbf16, #tpu.memory_space<vmem>>, vector<64x256xbf16>
    %cst = arith.constant dense<0.000000e+00> : vector<256x256xf32>
    %9 = tpu.matmul %7, %8, %cst {dimension_numbers = #tpu.dot_dimension_numbers<[1], [0], [0], [1], [0, 0, 1, 1], [], []>} : vector<256x64xbf16>, vector<64x256xbf16>, vector<256x256xf32> -> vector<256x256xf32>
    %10 = arith.truncf %9 : vector<256x256xf32> to vector<256x256xbf16>
    %c0_7 = arith.constant 0 : index
    %c0_8 = arith.constant 0 : index
    %11 = vector.load %arg6[%c0_7, %c0_8] : memref<256x256xbf16, #tpu.memory_space<vmem>>, vector<256x256xbf16>
    tpu.vector_store %arg6[%c0_7, %c0_8], %10 {strides = array<i32>} : memref<256x256xbf16, #tpu.memory_space<vmem>>, vector<256x256xbf16>,
    return
  }
  func.func @transform_0(%arg0: i32, %arg1: i32) -> (i32, i32) {
    %c0_i32 = arith.constant 0 : i32
    %c0_i32_0 = arith.constant 0 : i32
    return %arg0, %c0_i32 : i32, i32
  }
  func.func @transform_1(%arg0: i32, %arg1: i32) -> (i32, i32) {
    %c0_i32 = arith.constant 0 : i32
    %c0_i32_0 = arith.constant 0 : i32
    %c0_i32_1 = arith.constant 0 : i32
    return %c0_i32, %c0_i32_0 : i32, i32
  }
  func.func @transform_2(%arg0: i32, %arg1: i32) -> (i32, i32) {
    %c0_i32 = arith.constant 0 : i32
    %c0_i32_0 = arith.constant 0 : i32
    %c0_i32_1 = arith.constant 0 : i32
    return %c0_i32, %c0_i32_0 : i32, i32
  }
  func.func @transform_3(%arg0: i32, %arg1: i32) -> (i32, i32) {
    %c0_i32 = arith.constant 0 : i32
    %c0_i32_0 = arith.constant 0 : i32
    return %c0_i32, %arg1 : i32, i32
  }
  func.func @transform_4(%arg0: i32, %arg1: i32) -> (i32, i32) {
    %c0_i32 = arith.constant 0 : i32
    return %arg0, %arg1 : i32, i32
  }
}

module attributes {stable_mosaic.version = 11 : i64} {
  func.func @_he_kernel(%arg0: i32, %arg1: i32, %arg2: i32, %arg3: memref<128x256xbf16, #tpu.memory_space<vmem>>, %arg4: memref<256x256xbf16, #tpu.memory_space<vmem>>, %arg5: memref<128x1xf32, #tpu.memory_space<vmem>>, %arg6: memref<128x256xbf16, #tpu.memory_space<vmem>>, %arg7: memref<128x256xf32, #tpu.memory_space<vmem>>) attributes {dimension_semantics = [#tpu.dimension_semantics<parallel>, #tpu.dimension_semantics<parallel>, #tpu.dimension_semantics<arbitrary>], iteration_bounds = array<i64: 1, 1, 1>, scalar_prefetch = 0 : i64, scratch_operands = 1 : i64, tpu.core_type = #tpu.core_type<tc>, window_params = [{transform_indices = @transform_0, window_bounds = array<i64: 128, 256>}, {transform_indices = @transform_1, window_bounds = array<i64: 256, 256>}, {transform_indices = @transform_2, window_bounds = array<i64: 128, 1>}, {transform_indices = @transform_3, window_bounds = array<i64: 128, 256>}]} {
    %c0_i32 = arith.constant 0 : i32
    %0 = arith.cmpi eq, %arg2, %c0_i32 : i32
    %1 = arith.extui %0 : i1 to i32
    %c0_i32_0 = arith.constant 0 : i32
    %2 = arith.cmpi ne, %1, %c0_i32_0 : i32
    scf.if %2 {
      %cst_10 = arith.constant 0.000000e+00 : f32
      %12 = vector.broadcast %cst_10 : f32 to vector<128x256xf32>
      %c0_11 = arith.constant 0 : index
      %c0_12 = arith.constant 0 : index
      %13 = vector.load %arg7[%c0_11, %c0_12] : memref<128x256xf32, #tpu.memory_space<vmem>>, vector<128x256xf32>
      tpu.vector_store %arg7[%c0_11, %c0_12], %12 {strides = array<i32>} : memref<128x256xf32, #tpu.memory_space<vmem>>, vector<128x256xf32>,
    } else {
    }
    %c0 = arith.constant 0 : index
    %c0_1 = arith.constant 0 : index
    %3 = vector.load %arg7[%c0, %c0_1] : memref<128x256xf32, #tpu.memory_space<vmem>>, vector<128x256xf32>
    %c0_2 = arith.constant 0 : index
    %c0_3 = arith.constant 0 : index
    %4 = vector.load %arg3[%c0_2, %c0_3] : memref<128x256xbf16, #tpu.memory_space<vmem>>, vector<128x256xbf16>
    %c0_4 = arith.constant 0 : index
    %c0_5 = arith.constant 0 : index
    %5 = vector.load %arg4[%c0_4, %c0_5] : memref<256x256xbf16, #tpu.memory_space<vmem>>, vector<256x256xbf16>
    %cst = arith.constant dense<0.000000e+00> : vector<128x256xf32>
    %6 = tpu.matmul %4, %5, %cst {dimension_numbers = #tpu.dot_dimension_numbers<[1], [0], [0], [1], [0, 0, 1, 1], [], []>} : vector<128x256xbf16>, vector<256x256xbf16>, vector<128x256xf32> -> vector<128x256xf32>
    %7 = arith.addf %3, %6 : vector<128x256xf32>
    %c0_6 = arith.constant 0 : index
    %c0_7 = arith.constant 0 : index
    %8 = vector.load %arg7[%c0_6, %c0_7] : memref<128x256xf32, #tpu.memory_space<vmem>>, vector<128x256xf32>
    tpu.vector_store %arg7[%c0_6, %c0_7], %7 {strides = array<i32>} : memref<128x256xf32, #tpu.memory_space<vmem>>, vector<128x256xf32>,
    %c0_i32_8 = arith.constant 0 : i32
    %9 = arith.cmpi eq, %arg2, %c0_i32_8 : i32
    %10 = arith.extui %9 : i1 to i32
    %c0_i32_9 = arith.constant 0 : i32
    %11 = arith.cmpi ne, %10, %c0_i32_9 : i32
    scf.if %11 {
      %c0_10 = arith.constant 0 : index
      %c0_11 = arith.constant 0 : index
      %12 = vector.load %arg7[%c0_10, %c0_11] : memref<128x256xf32, #tpu.memory_space<vmem>>, vector<128x256xf32>
      %c0_12 = arith.constant 0 : index
      %c0_13 = arith.constant 0 : index
      %13 = vector.load %arg5[%c0_12, %c0_13] : memref<128x1xf32, #tpu.memory_space<vmem>>, vector<128x1xf32>
      %14 = vector.broadcast %13 : vector<128x1xf32> to vector<128x256xf32>
      %15 = arith.mulf %12, %14 : vector<128x256xf32>
      %16 = arith.truncf %15 : vector<128x256xf32> to vector<128x256xbf16>
      %c0_14 = arith.constant 0 : index
      %c0_15 = arith.constant 0 : index
      %17 = vector.load %arg6[%c0_14, %c0_15] : memref<128x256xbf16, #tpu.memory_space<vmem>>, vector<128x256xbf16>
      tpu.vector_store %arg6[%c0_14, %c0_15], %16 {strides = array<i32>} : memref<128x256xbf16, #tpu.memory_space<vmem>>, vector<128x256xbf16>,
    } else {
    }
    return
  }
  func.func @transform_0(%arg0: i32, %arg1: i32, %arg2: i32) -> (i32, i32) {
    %c0_i32 = arith.constant 0 : i32
    return %arg0, %arg2 : i32, i32
  }
  func.func @transform_1(%arg0: i32, %arg1: i32, %arg2: i32) -> (i32, i32) {
    %c0_i32 = arith.constant 0 : i32
    return %arg2, %arg1 : i32, i32
  }
  func.func @transform_2(%arg0: i32, %arg1: i32, %arg2: i32) -> (i32, i32) {
    %c0_i32 = arith.constant 0 : i32
    %c0_i32_0 = arith.constant 0 : i32
    return %arg0, %c0_i32 : i32, i32
  }
  func.func @transform_3(%arg0: i32, %arg1: i32, %arg2: i32) -> (i32, i32) {
    %c0_i32 = arith.constant 0 : i32
    return %arg0, %arg1 : i32, i32
  }
}

module attributes {stable_mosaic.version = 11 : i64} {
  func.func @_prop_kernel(%arg0: i32, %arg1: i32, %arg2: i32, %arg3: memref<256x128xbf16, #tpu.memory_space<vmem>>, %arg4: memref<128x256xbf16, #tpu.memory_space<vmem>>, %arg5: memref<256x1xf32, #tpu.memory_space<vmem>>, %arg6: memref<1x256xf32, #tpu.memory_space<vmem>>, %arg7: memref<256x1xf32, #tpu.memory_space<vmem>>, %arg8: memref<256x256xbf16, #tpu.memory_space<vmem>>, %arg9: memref<8x256xf32, #tpu.memory_space<vmem>>, %arg10: memref<8x256xf32, #tpu.memory_space<vmem>>, %arg11: memref<256x256xf32, #tpu.memory_space<vmem>>) attributes {dimension_semantics = [#tpu.dimension_semantics<parallel>, #tpu.dimension_semantics<parallel>, #tpu.dimension_semantics<arbitrary>], iteration_bounds = array<i64: 1, 1, 1>, scalar_prefetch = 0 : i64, scratch_operands = 1 : i64, tpu.core_type = #tpu.core_type<tc>, window_params = [{transform_indices = @transform_0, window_bounds = array<i64: 256, 128>}, {transform_indices = @transform_1, window_bounds = array<i64: 128, 256>}, {transform_indices = @transform_2, window_bounds = array<i64: 256, 1>}, {transform_indices = @transform_3, window_bounds = array<i64: 1, 256>}, {transform_indices = @transform_4, window_bounds = array<i64: 256, 1>}, {transform_indices = @transform_5, window_bounds = array<i64: 256, 256>}, {transform_indices = @transform_6, window_bounds = array<i64: 8, 256>}, {transform_indices = @transform_7, window_bounds = array<i64: 8, 256>}]} {
    %c0_i32 = arith.constant 0 : i32
    %0 = arith.cmpi eq, %arg2, %c0_i32 : i32
    %1 = arith.extui %0 : i1 to i32
    %c0_i32_0 = arith.constant 0 : i32
    %2 = arith.cmpi ne, %1, %c0_i32_0 : i32
    scf.if %2 {
      %cst_10 = arith.constant 0.000000e+00 : f32
      %12 = vector.broadcast %cst_10 : f32 to vector<256x256xf32>
      %c0_11 = arith.constant 0 : index
      %c0_12 = arith.constant 0 : index
      %13 = vector.load %arg11[%c0_11, %c0_12] : memref<256x256xf32, #tpu.memory_space<vmem>>, vector<256x256xf32>
      tpu.vector_store %arg11[%c0_11, %c0_12], %12 {strides = array<i32>} : memref<256x256xf32, #tpu.memory_space<vmem>>, vector<256x256xf32>,
    } else {
    }
    %c0 = arith.constant 0 : index
    %c0_1 = arith.constant 0 : index
    %3 = vector.load %arg11[%c0, %c0_1] : memref<256x256xf32, #tpu.memory_space<vmem>>, vector<256x256xf32>
    %c0_2 = arith.constant 0 : index
    %c0_3 = arith.constant 0 : index
    %4 = vector.load %arg3[%c0_2, %c0_3] : memref<256x128xbf16, #tpu.memory_space<vmem>>, vector<256x128xbf16>
    %c0_4 = arith.constant 0 : index
    %c0_5 = arith.constant 0 : index
    %5 = vector.load %arg4[%c0_4, %c0_5] : memref<128x256xbf16, #tpu.memory_space<vmem>>, vector<128x256xbf16>
    %cst = arith.constant dense<0.000000e+00> : vector<256x256xf32>
    %6 = tpu.matmul %4, %5, %cst {dimension_numbers = #tpu.dot_dimension_numbers<[1], [0], [0], [1], [0, 0, 1, 1], [], []>} : vector<256x128xbf16>, vector<128x256xbf16>, vector<256x256xf32> -> vector<256x256xf32>
    %7 = arith.addf %3, %6 : vector<256x256xf32>
    %c0_6 = arith.constant 0 : index
    %c0_7 = arith.constant 0 : index
    %8 = vector.load %arg11[%c0_6, %c0_7] : memref<256x256xf32, #tpu.memory_space<vmem>>, vector<256x256xf32>
    tpu.vector_store %arg11[%c0_6, %c0_7], %7 {strides = array<i32>} : memref<256x256xf32, #tpu.memory_space<vmem>>, vector<256x256xf32>,
    %c0_i32_8 = arith.constant 0 : i32
    %9 = arith.cmpi eq, %arg2, %c0_i32_8 : i32
    %10 = arith.extui %9 : i1 to i32
    %c0_i32_9 = arith.constant 0 : i32
    %11 = arith.cmpi ne, %10, %c0_i32_9 : i32
    scf.if %11 {
      %c0_10 = arith.constant 0 : index
      %c0_11 = arith.constant 0 : index
      %12 = vector.load %arg11[%c0_10, %c0_11] : memref<256x256xf32, #tpu.memory_space<vmem>>, vector<256x256xf32>
      %c0_12 = arith.constant 0 : index
      %c0_13 = arith.constant 0 : index
      %13 = vector.load %arg5[%c0_12, %c0_13] : memref<256x1xf32, #tpu.memory_space<vmem>>, vector<256x1xf32>
      %14 = vector.broadcast %13 : vector<256x1xf32> to vector<256x256xf32>
      %15 = arith.mulf %12, %14 : vector<256x256xf32>
      %c0_14 = arith.constant 0 : index
      %c0_15 = arith.constant 0 : index
      %16 = vector.load %arg6[%c0_14, %c0_15] : memref<1x256xf32, #tpu.memory_space<vmem>>, vector<1x256xf32>
      %17 = vector.broadcast %16 : vector<1x256xf32> to vector<256x256xf32>
      %18 = arith.addf %15, %17 : vector<256x256xf32>
      %cst_16 = arith.constant 0.000000e+00 : f32
      %19 = vector.broadcast %cst_16 : f32 to vector<256x256xf32>
      %20 = arith.maximumf %18, %19 : vector<256x256xf32>
      %c0_17 = arith.constant 0 : index
      %c0_18 = arith.constant 0 : index
      %21 = vector.load %arg7[%c0_17, %c0_18] : memref<256x1xf32, #tpu.memory_space<vmem>>, vector<256x1xf32>
      %22 = vector.broadcast %21 : vector<256x1xf32> to vector<256x256xf32>
      %23 = arith.mulf %20, %22 : vector<256x256xf32>
      %24 = arith.truncf %23 : vector<256x256xf32> to vector<256x256xbf16>
      %c0_19 = arith.constant 0 : index
      %c0_20 = arith.constant 0 : index
      %25 = vector.load %arg8[%c0_19, %c0_20] : memref<256x256xbf16, #tpu.memory_space<vmem>>, vector<256x256xbf16>
      tpu.vector_store %arg8[%c0_19, %c0_20], %24 {strides = array<i32>} : memref<256x256xbf16, #tpu.memory_space<vmem>>, vector<256x256xbf16>,
      %26 = tpu.iota {dimensions = array<i32: 0>} : vector<8x256xi32>
      %c0_i32_21 = arith.constant 0 : i32
      %27 = vector.broadcast %c0_i32_21 : i32 to vector<8x256xi32>
      %28 = arith.cmpi eq, %26, %27 : vector<8x256xi32>
      %29 = arith.extui %28 : vector<8x256xi1> to vector<8x256xi32>
      %30 = arith.sitofp %29 : vector<8x256xi32> to vector<8x256xf32>
      %cst_22 = arith.constant dense<0.000000e+00> : vector<256xf32>
      %31 = vector.multi_reduction <add>, %23, %cst_22 [0] : vector<256x256xf32> to vector<256xf32>
      %32 = vector.shape_cast %31 : vector<256xf32> to vector<1x256xf32>
      %33 = vector.broadcast %32 : vector<1x256xf32> to vector<8x256xf32>
      %34 = arith.mulf %30, %33 : vector<8x256xf32>
      %c0_23 = arith.constant 0 : index
      %c0_24 = arith.constant 0 : index
      %35 = vector.load %arg9[%c0_23, %c0_24] : memref<8x256xf32, #tpu.memory_space<vmem>>, vector<8x256xf32>
      tpu.vector_store %arg9[%c0_23, %c0_24], %34 {strides = array<i32>} : memref<8x256xf32, #tpu.memory_space<vmem>>, vector<8x256xf32>,
      %36 = arith.mulf %23, %23 : vector<256x256xf32>
      %cst_25 = arith.constant dense<0.000000e+00> : vector<256xf32>
      %37 = vector.multi_reduction <add>, %36, %cst_25 [0] : vector<256x256xf32> to vector<256xf32>
      %38 = vector.shape_cast %37 : vector<256xf32> to vector<1x256xf32>
      %39 = vector.broadcast %38 : vector<1x256xf32> to vector<8x256xf32>
      %40 = arith.mulf %30, %39 : vector<8x256xf32>
      %c0_26 = arith.constant 0 : index
      %c0_27 = arith.constant 0 : index
      %41 = vector.load %arg10[%c0_26, %c0_27] : memref<8x256xf32, #tpu.memory_space<vmem>>, vector<8x256xf32>
      tpu.vector_store %arg10[%c0_26, %c0_27], %40 {strides = array<i32>} : memref<8x256xf32, #tpu.memory_space<vmem>>, vector<8x256xf32>,
    } else {
    }
    return
  }
  func.func @transform_0(%arg0: i32, %arg1: i32, %arg2: i32) -> (i32, i32) {
    %c0_i32 = arith.constant 0 : i32
    return %arg0, %arg2 : i32, i32
  }
  func.func @transform_1(%arg0: i32, %arg1: i32, %arg2: i32) -> (i32, i32) {
    %c0_i32 = arith.constant 0 : i32
    return %arg2, %arg1 : i32, i32
  }
  func.func @transform_2(%arg0: i32, %arg1: i32, %arg2: i32) -> (i32, i32) {
    %c0_i32 = arith.constant 0 : i32
    %c0_i32_0 = arith.constant 0 : i32
    return %arg0, %c0_i32 : i32, i32
  }
  func.func @transform_3(%arg0: i32, %arg1: i32, %arg2: i32) -> (i32, i32) {
    %c0_i32 = arith.constant 0 : i32
    %c0_i32_0 = arith.constant 0 : i32
    return %c0_i32, %arg1 : i32, i32
  }
  func.func @transform_4(%arg0: i32, %arg1: i32, %arg2: i32) -> (i32, i32) {
    %c0_i32 = arith.constant 0 : i32
    %c0_i32_0 = arith.constant 0 : i32
    return %arg0, %c0_i32 : i32, i32
  }
  func.func @transform_5(%arg0: i32, %arg1: i32, %arg2: i32) -> (i32, i32) {
    %c0_i32 = arith.constant 0 : i32
    return %arg0, %arg1 : i32, i32
  }
  func.func @transform_6(%arg0: i32, %arg1: i32, %arg2: i32) -> (i32, i32) {
    %c0_i32 = arith.constant 0 : i32
    return %arg0, %arg1 : i32, i32
  }
  func.func @transform_7(%arg0: i32, %arg1: i32, %arg2: i32) -> (i32, i32) {
    %c0_i32 = arith.constant 0 : i32
    return %arg0, %arg1 : i32, i32
  }
}

module attributes {stable_mosaic.version = 11 : i64} {
  func.func @_xw_kernel(%arg0: i32, %arg1: i32, %arg2: memref<256x256xbf16, #tpu.memory_space<vmem>>, %arg3: memref<1x256xf32, #tpu.memory_space<vmem>>, %arg4: memref<1x256xf32, #tpu.memory_space<vmem>>, %arg5: memref<256x256xbf16, #tpu.memory_space<vmem>>, %arg6: memref<256x256xbf16, #tpu.memory_space<vmem>>) attributes {dimension_semantics = [#tpu.dimension_semantics<parallel>, #tpu.dimension_semantics<parallel>], iteration_bounds = array<i64: 1, 1>, scalar_prefetch = 0 : i64, scratch_operands = 0 : i64, tpu.core_type = #tpu.core_type<tc>, window_params = [{transform_indices = @transform_0, window_bounds = array<i64: 256, 256>}, {pipeline_mode = #tpu.pipeline_mode<synchronous>, transform_indices = @transform_1, window_bounds = array<i64: 1, 256>}, {pipeline_mode = #tpu.pipeline_mode<synchronous>, transform_indices = @transform_2, window_bounds = array<i64: 1, 256>}, {transform_indices = @transform_3, window_bounds = array<i64: 256, 256>}, {transform_indices = @transform_4, window_bounds = array<i64: 256, 256>}]} {
    %c0 = arith.constant 0 : index
    %c0_0 = arith.constant 0 : index
    %0 = vector.load %arg2[%c0, %c0_0] : memref<256x256xbf16, #tpu.memory_space<vmem>>, vector<256x256xbf16>
    %1 = arith.extf %0 : vector<256x256xbf16> to vector<256x256xf32>
    %c0_1 = arith.constant 0 : index
    %c0_2 = arith.constant 0 : index
    %2 = vector.load %arg3[%c0_1, %c0_2] : memref<1x256xf32, #tpu.memory_space<vmem>>, vector<1x256xf32>
    %3 = vector.broadcast %2 : vector<1x256xf32> to vector<256x256xf32>
    %4 = arith.mulf %1, %3 : vector<256x256xf32>
    %c0_3 = arith.constant 0 : index
    %c0_4 = arith.constant 0 : index
    %5 = vector.load %arg4[%c0_3, %c0_4] : memref<1x256xf32, #tpu.memory_space<vmem>>, vector<1x256xf32>
    %6 = vector.broadcast %5 : vector<1x256xf32> to vector<256x256xf32>
    %7 = arith.addf %4, %6 : vector<256x256xf32>
    %8 = arith.truncf %7 : vector<256x256xf32> to vector<256x256xbf16>
    %c0_5 = arith.constant 0 : index
    %c0_6 = arith.constant 0 : index
    %9 = vector.load %arg5[%c0_5, %c0_6] : memref<256x256xbf16, #tpu.memory_space<vmem>>, vector<256x256xbf16>
    %cst = arith.constant dense<0.000000e+00> : vector<256x256xf32>
    %10 = tpu.matmul %8, %9, %cst {dimension_numbers = #tpu.dot_dimension_numbers<[1], [0], [0], [1], [0, 0, 1, 1], [], []>} : vector<256x256xbf16>, vector<256x256xbf16>, vector<256x256xf32> -> vector<256x256xf32>
    %11 = arith.truncf %10 : vector<256x256xf32> to vector<256x256xbf16>
    %c0_7 = arith.constant 0 : index
    %c0_8 = arith.constant 0 : index
    %12 = vector.load %arg6[%c0_7, %c0_8] : memref<256x256xbf16, #tpu.memory_space<vmem>>, vector<256x256xbf16>
    tpu.vector_store %arg6[%c0_7, %c0_8], %11 {strides = array<i32>} : memref<256x256xbf16, #tpu.memory_space<vmem>>, vector<256x256xbf16>,
    return
  }
  func.func @transform_0(%arg0: i32, %arg1: i32) -> (i32, i32) {
    %c0_i32 = arith.constant 0 : i32
    %c0_i32_0 = arith.constant 0 : i32
    return %arg0, %c0_i32 : i32, i32
  }
  func.func @transform_1(%arg0: i32, %arg1: i32) -> (i32, i32) {
    %c0_i32 = arith.constant 0 : i32
    %c0_i32_0 = arith.constant 0 : i32
    %c0_i32_1 = arith.constant 0 : i32
    return %c0_i32, %c0_i32_0 : i32, i32
  }
  func.func @transform_2(%arg0: i32, %arg1: i32) -> (i32, i32) {
    %c0_i32 = arith.constant 0 : i32
    %c0_i32_0 = arith.constant 0 : i32
    %c0_i32_1 = arith.constant 0 : i32
    return %c0_i32, %c0_i32_0 : i32, i32
  }
  func.func @transform_3(%arg0: i32, %arg1: i32) -> (i32, i32) {
    %c0_i32 = arith.constant 0 : i32
    %c0_i32_0 = arith.constant 0 : i32
    return %c0_i32, %arg1 : i32, i32
  }
  func.func @transform_4(%arg0: i32, %arg1: i32) -> (i32, i32) {
    %c0_i32 = arith.constant 0 : i32
    return %arg0, %arg1 : i32, i32
  }
}

module attributes {stable_mosaic.version = 11 : i64} {
  func.func @_xw_kernel(%arg0: i32, %arg1: i32, %arg2: memref<256x256xbf16, #tpu.memory_space<vmem>>, %arg3: memref<1x256xf32, #tpu.memory_space<vmem>>, %arg4: memref<1x256xf32, #tpu.memory_space<vmem>>, %arg5: memref<256x128xbf16, #tpu.memory_space<vmem>>, %arg6: memref<256x128xbf16, #tpu.memory_space<vmem>>) attributes {dimension_semantics = [#tpu.dimension_semantics<parallel>, #tpu.dimension_semantics<parallel>], iteration_bounds = array<i64: 1, 1>, scalar_prefetch = 0 : i64, scratch_operands = 0 : i64, tpu.core_type = #tpu.core_type<tc>, window_params = [{transform_indices = @transform_0, window_bounds = array<i64: 256, 256>}, {pipeline_mode = #tpu.pipeline_mode<synchronous>, transform_indices = @transform_1, window_bounds = array<i64: 1, 256>}, {pipeline_mode = #tpu.pipeline_mode<synchronous>, transform_indices = @transform_2, window_bounds = array<i64: 1, 256>}, {transform_indices = @transform_3, window_bounds = array<i64: 256, 128>}, {transform_indices = @transform_4, window_bounds = array<i64: 256, 128>}]} {
    %c0 = arith.constant 0 : index
    %c0_0 = arith.constant 0 : index
    %0 = vector.load %arg2[%c0, %c0_0] : memref<256x256xbf16, #tpu.memory_space<vmem>>, vector<256x256xbf16>
    %1 = arith.extf %0 : vector<256x256xbf16> to vector<256x256xf32>
    %c0_1 = arith.constant 0 : index
    %c0_2 = arith.constant 0 : index
    %2 = vector.load %arg3[%c0_1, %c0_2] : memref<1x256xf32, #tpu.memory_space<vmem>>, vector<1x256xf32>
    %3 = vector.broadcast %2 : vector<1x256xf32> to vector<256x256xf32>
    %4 = arith.mulf %1, %3 : vector<256x256xf32>
    %c0_3 = arith.constant 0 : index
    %c0_4 = arith.constant 0 : index
    %5 = vector.load %arg4[%c0_3, %c0_4] : memref<1x256xf32, #tpu.memory_space<vmem>>, vector<1x256xf32>
    %6 = vector.broadcast %5 : vector<1x256xf32> to vector<256x256xf32>
    %7 = arith.addf %4, %6 : vector<256x256xf32>
    %8 = arith.truncf %7 : vector<256x256xf32> to vector<256x256xbf16>
    %c0_5 = arith.constant 0 : index
    %c0_6 = arith.constant 0 : index
    %9 = vector.load %arg5[%c0_5, %c0_6] : memref<256x128xbf16, #tpu.memory_space<vmem>>, vector<256x128xbf16>
    %cst = arith.constant dense<0.000000e+00> : vector<256x128xf32>
    %10 = tpu.matmul %8, %9, %cst {dimension_numbers = #tpu.dot_dimension_numbers<[1], [0], [0], [1], [0, 0, 1, 1], [], []>} : vector<256x256xbf16>, vector<256x128xbf16>, vector<256x128xf32> -> vector<256x128xf32>
    %11 = arith.truncf %10 : vector<256x128xf32> to vector<256x128xbf16>
    %c0_7 = arith.constant 0 : index
    %c0_8 = arith.constant 0 : index
    %12 = vector.load %arg6[%c0_7, %c0_8] : memref<256x128xbf16, #tpu.memory_space<vmem>>, vector<256x128xbf16>
    tpu.vector_store %arg6[%c0_7, %c0_8], %11 {strides = array<i32>} : memref<256x128xbf16, #tpu.memory_space<vmem>>, vector<256x128xbf16>,
    return
  }
  func.func @transform_0(%arg0: i32, %arg1: i32) -> (i32, i32) {
    %c0_i32 = arith.constant 0 : i32
    %c0_i32_0 = arith.constant 0 : i32
    return %arg0, %c0_i32 : i32, i32
  }
  func.func @transform_1(%arg0: i32, %arg1: i32) -> (i32, i32) {
    %c0_i32 = arith.constant 0 : i32
    %c0_i32_0 = arith.constant 0 : i32
    %c0_i32_1 = arith.constant 0 : i32
    return %c0_i32, %c0_i32_0 : i32, i32
  }
  func.func @transform_2(%arg0: i32, %arg1: i32) -> (i32, i32) {
    %c0_i32 = arith.constant 0 : i32
    %c0_i32_0 = arith.constant 0 : i32
    %c0_i32_1 = arith.constant 0 : i32
    return %c0_i32, %c0_i32_0 : i32, i32
  }
  func.func @transform_3(%arg0: i32, %arg1: i32) -> (i32, i32) {
    %c0_i32 = arith.constant 0 : i32
    %c0_i32_0 = arith.constant 0 : i32
    return %c0_i32, %arg1 : i32, i32
  }
  func.func @transform_4(%arg0: i32, %arg1: i32) -> (i32, i32) {
    %c0_i32 = arith.constant 0 : i32
    return %arg0, %arg1 : i32, i32
  }
}

module attributes {stable_mosaic.version = 11 : i64} {
  func.func @_he_kernel(%arg0: i32, %arg1: i32, %arg2: i32, %arg3: memref<128x256xbf16, #tpu.memory_space<vmem>>, %arg4: memref<256x128xbf16, #tpu.memory_space<vmem>>, %arg5: memref<128x1xf32, #tpu.memory_space<vmem>>, %arg6: memref<128x128xbf16, #tpu.memory_space<vmem>>, %arg7: memref<128x128xf32, #tpu.memory_space<vmem>>) attributes {dimension_semantics = [#tpu.dimension_semantics<parallel>, #tpu.dimension_semantics<parallel>, #tpu.dimension_semantics<arbitrary>], iteration_bounds = array<i64: 1, 1, 1>, scalar_prefetch = 0 : i64, scratch_operands = 1 : i64, tpu.core_type = #tpu.core_type<tc>, window_params = [{transform_indices = @transform_0, window_bounds = array<i64: 128, 256>}, {transform_indices = @transform_1, window_bounds = array<i64: 256, 128>}, {transform_indices = @transform_2, window_bounds = array<i64: 128, 1>}, {transform_indices = @transform_3, window_bounds = array<i64: 128, 128>}]} {
    %c0_i32 = arith.constant 0 : i32
    %0 = arith.cmpi eq, %arg2, %c0_i32 : i32
    %1 = arith.extui %0 : i1 to i32
    %c0_i32_0 = arith.constant 0 : i32
    %2 = arith.cmpi ne, %1, %c0_i32_0 : i32
    scf.if %2 {
      %cst_10 = arith.constant 0.000000e+00 : f32
      %12 = vector.broadcast %cst_10 : f32 to vector<128x128xf32>
      %c0_11 = arith.constant 0 : index
      %c0_12 = arith.constant 0 : index
      %13 = vector.load %arg7[%c0_11, %c0_12] : memref<128x128xf32, #tpu.memory_space<vmem>>, vector<128x128xf32>
      tpu.vector_store %arg7[%c0_11, %c0_12], %12 {strides = array<i32>} : memref<128x128xf32, #tpu.memory_space<vmem>>, vector<128x128xf32>,
    } else {
    }
    %c0 = arith.constant 0 : index
    %c0_1 = arith.constant 0 : index
    %3 = vector.load %arg7[%c0, %c0_1] : memref<128x128xf32, #tpu.memory_space<vmem>>, vector<128x128xf32>
    %c0_2 = arith.constant 0 : index
    %c0_3 = arith.constant 0 : index
    %4 = vector.load %arg3[%c0_2, %c0_3] : memref<128x256xbf16, #tpu.memory_space<vmem>>, vector<128x256xbf16>
    %c0_4 = arith.constant 0 : index
    %c0_5 = arith.constant 0 : index
    %5 = vector.load %arg4[%c0_4, %c0_5] : memref<256x128xbf16, #tpu.memory_space<vmem>>, vector<256x128xbf16>
    %cst = arith.constant dense<0.000000e+00> : vector<128x128xf32>
    %6 = tpu.matmul %4, %5, %cst {dimension_numbers = #tpu.dot_dimension_numbers<[1], [0], [0], [1], [0, 0, 1, 1], [], []>} : vector<128x256xbf16>, vector<256x128xbf16>, vector<128x128xf32> -> vector<128x128xf32>
    %7 = arith.addf %3, %6 : vector<128x128xf32>
    %c0_6 = arith.constant 0 : index
    %c0_7 = arith.constant 0 : index
    %8 = vector.load %arg7[%c0_6, %c0_7] : memref<128x128xf32, #tpu.memory_space<vmem>>, vector<128x128xf32>
    tpu.vector_store %arg7[%c0_6, %c0_7], %7 {strides = array<i32>} : memref<128x128xf32, #tpu.memory_space<vmem>>, vector<128x128xf32>,
    %c0_i32_8 = arith.constant 0 : i32
    %9 = arith.cmpi eq, %arg2, %c0_i32_8 : i32
    %10 = arith.extui %9 : i1 to i32
    %c0_i32_9 = arith.constant 0 : i32
    %11 = arith.cmpi ne, %10, %c0_i32_9 : i32
    scf.if %11 {
      %c0_10 = arith.constant 0 : index
      %c0_11 = arith.constant 0 : index
      %12 = vector.load %arg7[%c0_10, %c0_11] : memref<128x128xf32, #tpu.memory_space<vmem>>, vector<128x128xf32>
      %c0_12 = arith.constant 0 : index
      %c0_13 = arith.constant 0 : index
      %13 = vector.load %arg5[%c0_12, %c0_13] : memref<128x1xf32, #tpu.memory_space<vmem>>, vector<128x1xf32>
      %14 = vector.broadcast %13 : vector<128x1xf32> to vector<128x128xf32>
      %15 = arith.mulf %12, %14 : vector<128x128xf32>
      %16 = arith.truncf %15 : vector<128x128xf32> to vector<128x128xbf16>
      %c0_14 = arith.constant 0 : index
      %c0_15 = arith.constant 0 : index
      %17 = vector.load %arg6[%c0_14, %c0_15] : memref<128x128xbf16, #tpu.memory_space<vmem>>, vector<128x128xbf16>
      tpu.vector_store %arg6[%c0_14, %c0_15], %16 {strides = array<i32>} : memref<128x128xbf16, #tpu.memory_space<vmem>>, vector<128x128xbf16>,
    } else {
    }
    return
  }
  func.func @transform_0(%arg0: i32, %arg1: i32, %arg2: i32) -> (i32, i32) {
    %c0_i32 = arith.constant 0 : i32
    return %arg0, %arg2 : i32, i32
  }
  func.func @transform_1(%arg0: i32, %arg1: i32, %arg2: i32) -> (i32, i32) {
    %c0_i32 = arith.constant 0 : i32
    return %arg2, %arg1 : i32, i32
  }
  func.func @transform_2(%arg0: i32, %arg1: i32, %arg2: i32) -> (i32, i32) {
    %c0_i32 = arith.constant 0 : i32
    %c0_i32_0 = arith.constant 0 : i32
    return %arg0, %c0_i32 : i32, i32
  }
  func.func @transform_3(%arg0: i32, %arg1: i32, %arg2: i32) -> (i32, i32) {
    %c0_i32 = arith.constant 0 : i32
    return %arg0, %arg1 : i32, i32
  }
}

module attributes {stable_mosaic.version = 11 : i64} {
  func.func @_prop_kernel(%arg0: i32, %arg1: i32, %arg2: i32, %arg3: memref<256x128xbf16, #tpu.memory_space<vmem>>, %arg4: memref<128x128xbf16, #tpu.memory_space<vmem>>, %arg5: memref<256x1xf32, #tpu.memory_space<vmem>>, %arg6: memref<1x128xf32, #tpu.memory_space<vmem>>, %arg7: memref<256x1xf32, #tpu.memory_space<vmem>>, %arg8: memref<256x128xbf16, #tpu.memory_space<vmem>>, %arg9: memref<8x128xf32, #tpu.memory_space<vmem>>, %arg10: memref<8x128xf32, #tpu.memory_space<vmem>>, %arg11: memref<256x128xf32, #tpu.memory_space<vmem>>) attributes {dimension_semantics = [#tpu.dimension_semantics<parallel>, #tpu.dimension_semantics<parallel>, #tpu.dimension_semantics<arbitrary>], iteration_bounds = array<i64: 1, 1, 1>, scalar_prefetch = 0 : i64, scratch_operands = 1 : i64, tpu.core_type = #tpu.core_type<tc>, window_params = [{transform_indices = @transform_0, window_bounds = array<i64: 256, 128>}, {transform_indices = @transform_1, window_bounds = array<i64: 128, 128>}, {transform_indices = @transform_2, window_bounds = array<i64: 256, 1>}, {transform_indices = @transform_3, window_bounds = array<i64: 1, 128>}, {transform_indices = @transform_4, window_bounds = array<i64: 256, 1>}, {transform_indices = @transform_5, window_bounds = array<i64: 256, 128>}, {transform_indices = @transform_6, window_bounds = array<i64: 8, 128>}, {transform_indices = @transform_7, window_bounds = array<i64: 8, 128>}]} {
    %c0_i32 = arith.constant 0 : i32
    %0 = arith.cmpi eq, %arg2, %c0_i32 : i32
    %1 = arith.extui %0 : i1 to i32
    %c0_i32_0 = arith.constant 0 : i32
    %2 = arith.cmpi ne, %1, %c0_i32_0 : i32
    scf.if %2 {
      %cst_10 = arith.constant 0.000000e+00 : f32
      %12 = vector.broadcast %cst_10 : f32 to vector<256x128xf32>
      %c0_11 = arith.constant 0 : index
      %c0_12 = arith.constant 0 : index
      %13 = vector.load %arg11[%c0_11, %c0_12] : memref<256x128xf32, #tpu.memory_space<vmem>>, vector<256x128xf32>
      tpu.vector_store %arg11[%c0_11, %c0_12], %12 {strides = array<i32>} : memref<256x128xf32, #tpu.memory_space<vmem>>, vector<256x128xf32>,
    } else {
    }
    %c0 = arith.constant 0 : index
    %c0_1 = arith.constant 0 : index
    %3 = vector.load %arg11[%c0, %c0_1] : memref<256x128xf32, #tpu.memory_space<vmem>>, vector<256x128xf32>
    %c0_2 = arith.constant 0 : index
    %c0_3 = arith.constant 0 : index
    %4 = vector.load %arg3[%c0_2, %c0_3] : memref<256x128xbf16, #tpu.memory_space<vmem>>, vector<256x128xbf16>
    %c0_4 = arith.constant 0 : index
    %c0_5 = arith.constant 0 : index
    %5 = vector.load %arg4[%c0_4, %c0_5] : memref<128x128xbf16, #tpu.memory_space<vmem>>, vector<128x128xbf16>
    %cst = arith.constant dense<0.000000e+00> : vector<256x128xf32>
    %6 = tpu.matmul %4, %5, %cst {dimension_numbers = #tpu.dot_dimension_numbers<[1], [0], [0], [1], [0, 0, 1, 1], [], []>} : vector<256x128xbf16>, vector<128x128xbf16>, vector<256x128xf32> -> vector<256x128xf32>
    %7 = arith.addf %3, %6 : vector<256x128xf32>
    %c0_6 = arith.constant 0 : index
    %c0_7 = arith.constant 0 : index
    %8 = vector.load %arg11[%c0_6, %c0_7] : memref<256x128xf32, #tpu.memory_space<vmem>>, vector<256x128xf32>
    tpu.vector_store %arg11[%c0_6, %c0_7], %7 {strides = array<i32>} : memref<256x128xf32, #tpu.memory_space<vmem>>, vector<256x128xf32>,
    %c0_i32_8 = arith.constant 0 : i32
    %9 = arith.cmpi eq, %arg2, %c0_i32_8 : i32
    %10 = arith.extui %9 : i1 to i32
    %c0_i32_9 = arith.constant 0 : i32
    %11 = arith.cmpi ne, %10, %c0_i32_9 : i32
    scf.if %11 {
      %c0_10 = arith.constant 0 : index
      %c0_11 = arith.constant 0 : index
      %12 = vector.load %arg11[%c0_10, %c0_11] : memref<256x128xf32, #tpu.memory_space<vmem>>, vector<256x128xf32>
      %c0_12 = arith.constant 0 : index
      %c0_13 = arith.constant 0 : index
      %13 = vector.load %arg5[%c0_12, %c0_13] : memref<256x1xf32, #tpu.memory_space<vmem>>, vector<256x1xf32>
      %14 = vector.broadcast %13 : vector<256x1xf32> to vector<256x128xf32>
      %15 = arith.mulf %12, %14 : vector<256x128xf32>
      %c0_14 = arith.constant 0 : index
      %c0_15 = arith.constant 0 : index
      %16 = vector.load %arg6[%c0_14, %c0_15] : memref<1x128xf32, #tpu.memory_space<vmem>>, vector<1x128xf32>
      %17 = vector.broadcast %16 : vector<1x128xf32> to vector<256x128xf32>
      %18 = arith.addf %15, %17 : vector<256x128xf32>
      %cst_16 = arith.constant 0.000000e+00 : f32
      %19 = vector.broadcast %cst_16 : f32 to vector<256x128xf32>
      %20 = arith.maximumf %18, %19 : vector<256x128xf32>
      %c0_17 = arith.constant 0 : index
      %c0_18 = arith.constant 0 : index
      %21 = vector.load %arg7[%c0_17, %c0_18] : memref<256x1xf32, #tpu.memory_space<vmem>>, vector<256x1xf32>
      %22 = vector.broadcast %21 : vector<256x1xf32> to vector<256x128xf32>
      %23 = arith.mulf %20, %22 : vector<256x128xf32>
      %24 = arith.truncf %23 : vector<256x128xf32> to vector<256x128xbf16>
      %c0_19 = arith.constant 0 : index
      %c0_20 = arith.constant 0 : index
      %25 = vector.load %arg8[%c0_19, %c0_20] : memref<256x128xbf16, #tpu.memory_space<vmem>>, vector<256x128xbf16>
      tpu.vector_store %arg8[%c0_19, %c0_20], %24 {strides = array<i32>} : memref<256x128xbf16, #tpu.memory_space<vmem>>, vector<256x128xbf16>,
      %26 = tpu.iota {dimensions = array<i32: 0>} : vector<8x128xi32>
      %c0_i32_21 = arith.constant 0 : i32
      %27 = vector.broadcast %c0_i32_21 : i32 to vector<8x128xi32>
      %28 = arith.cmpi eq, %26, %27 : vector<8x128xi32>
      %29 = arith.extui %28 : vector<8x128xi1> to vector<8x128xi32>
      %30 = arith.sitofp %29 : vector<8x128xi32> to vector<8x128xf32>
      %cst_22 = arith.constant dense<0.000000e+00> : vector<128xf32>
      %31 = vector.multi_reduction <add>, %23, %cst_22 [0] : vector<256x128xf32> to vector<128xf32>
      %32 = vector.shape_cast %31 : vector<128xf32> to vector<1x128xf32>
      %33 = vector.broadcast %32 : vector<1x128xf32> to vector<8x128xf32>
      %34 = arith.mulf %30, %33 : vector<8x128xf32>
      %c0_23 = arith.constant 0 : index
      %c0_24 = arith.constant 0 : index
      %35 = vector.load %arg9[%c0_23, %c0_24] : memref<8x128xf32, #tpu.memory_space<vmem>>, vector<8x128xf32>
      tpu.vector_store %arg9[%c0_23, %c0_24], %34 {strides = array<i32>} : memref<8x128xf32, #tpu.memory_space<vmem>>, vector<8x128xf32>,
      %36 = arith.mulf %23, %23 : vector<256x128xf32>
      %cst_25 = arith.constant dense<0.000000e+00> : vector<128xf32>
      %37 = vector.multi_reduction <add>, %36, %cst_25 [0] : vector<256x128xf32> to vector<128xf32>
      %38 = vector.shape_cast %37 : vector<128xf32> to vector<1x128xf32>
      %39 = vector.broadcast %38 : vector<1x128xf32> to vector<8x128xf32>
      %40 = arith.mulf %30, %39 : vector<8x128xf32>
      %c0_26 = arith.constant 0 : index
      %c0_27 = arith.constant 0 : index
      %41 = vector.load %arg10[%c0_26, %c0_27] : memref<8x128xf32, #tpu.memory_space<vmem>>, vector<8x128xf32>
      tpu.vector_store %arg10[%c0_26, %c0_27], %40 {strides = array<i32>} : memref<8x128xf32, #tpu.memory_space<vmem>>, vector<8x128xf32>,
    } else {
    }
    return
  }
  func.func @transform_0(%arg0: i32, %arg1: i32, %arg2: i32) -> (i32, i32) {
    %c0_i32 = arith.constant 0 : i32
    return %arg0, %arg2 : i32, i32
  }
  func.func @transform_1(%arg0: i32, %arg1: i32, %arg2: i32) -> (i32, i32) {
    %c0_i32 = arith.constant 0 : i32
    return %arg2, %arg1 : i32, i32
  }
  func.func @transform_2(%arg0: i32, %arg1: i32, %arg2: i32) -> (i32, i32) {
    %c0_i32 = arith.constant 0 : i32
    %c0_i32_0 = arith.constant 0 : i32
    return %arg0, %c0_i32 : i32, i32
  }
  func.func @transform_3(%arg0: i32, %arg1: i32, %arg2: i32) -> (i32, i32) {
    %c0_i32 = arith.constant 0 : i32
    %c0_i32_0 = arith.constant 0 : i32
    return %c0_i32, %arg1 : i32, i32
  }
  func.func @transform_4(%arg0: i32, %arg1: i32, %arg2: i32) -> (i32, i32) {
    %c0_i32 = arith.constant 0 : i32
    %c0_i32_0 = arith.constant 0 : i32
    return %arg0, %c0_i32 : i32, i32
  }
  func.func @transform_5(%arg0: i32, %arg1: i32, %arg2: i32) -> (i32, i32) {
    %c0_i32 = arith.constant 0 : i32
    return %arg0, %arg1 : i32, i32
  }
  func.func @transform_6(%arg0: i32, %arg1: i32, %arg2: i32) -> (i32, i32) {
    %c0_i32 = arith.constant 0 : i32
    return %arg0, %arg1 : i32, i32
  }
  func.func @transform_7(%arg0: i32, %arg1: i32, %arg2: i32) -> (i32, i32) {
    %c0_i32 = arith.constant 0 : i32
    return %arg0, %arg1 : i32, i32
  }
}

</mosaic_0001>

<llo_original>
// kernel: hgnn_encoder_forward.9
$region0: #{hgnn_encoder_forward.9}
  #allocation0 [shape = 'u32[]', space=smem, size = 0x4, offset = 0x4, fixed_abs, tag = 'smem constant byte address 0x4 - core index']
  #allocation1 [shape = 'u32[72,128]{1,0:T(1,128)}', space=vmem, size = 0x9000, scoped, tag = 'internal scratch']
  %s0 = inlined_call_operand.vmem [shape: f32[256,64], index: 0, kind: input, shape index: {}]
  %s1 = inlined_call_operand.vmem [shape: f32[1,64], index: 1, kind: input, shape index: {}]
  %s2 = inlined_call_operand.vmem [shape: f32[1,64], index: 2, kind: input, shape index: {}]
  %s3 = inlined_call_operand.vmem [shape: bf16[64,256], index: 3, kind: input, shape index: {}]
  %s4 = inlined_call_operand.vmem [shape: bf16[256,256], index: 4, kind: output, shape index: {}]
  %s5 = sld [smem:[#allocation0]]
  $region26: #{hgnn_encoder_forward.9} parent=0
    _
  %s7 = ssub.s32 1, %s5
  %s8 = scalar_select 0, %s7, %s5
  // Predicated region
  $region2: #{hgnn_encoder_forward.9} parent=0 // pred_check
    _
  $region3: #{hgnn_encoder_forward.9} parent=0 // pred_check_branch
    %10 = sbr.rel (0) target = $region5
  $region4: #{hgnn_encoder_forward.9} parent=0 // pred_region
    _
  $region5: #{hgnn_encoder_forward.9} parent=0 // pred_fallthru
    _
  // Predicated region
  $region6: #{hgnn_encoder_forward.9} parent=0 // pred_check
    _
  $region7: #{hgnn_encoder_forward.9} parent=0 // pred_check_branch
    %12 = sbr.rel (0) target = $region9
  $region8: #{hgnn_encoder_forward.9} parent=0 // pred_region
    _
  $region9: #{hgnn_encoder_forward.9} parent=0 // pred_fallthru
    _
  // Predicated region
  $region10: #{hgnn_encoder_forward.9} parent=0 // pred_check
    _
  $region11: #{hgnn_encoder_forward.9} parent=0 // pred_check_branch
    %14 = sbr.rel (0) target = $region13
  $region12: #{hgnn_encoder_forward.9} parent=0 // pred_region
    _
  $region13: #{hgnn_encoder_forward.9} parent=0 // pred_fallthru
    _
  // Predicated region
  $region14: #{hgnn_encoder_forward.9} parent=0 // pred_check
    _
  $region15: #{hgnn_encoder_forward.9} parent=0 // pred_check_branch
    %16 = sbr.rel (0) target = $region17
  $region16: #{hgnn_encoder_forward.9} parent=0 // pred_region
    _
  $region17: #{hgnn_encoder_forward.9} parent=0 // pred_fallthru
    _
  %v18 = vld [vmem:[%s0] sm:$0xff]
  %v19 = vld [vmem:[%s0 + $0x8] sm:$0xff]
  %v20 = vld [vmem:[%s0 + $0x10] sm:$0xff]
  %v21 = vld [vmem:[%s0 + $0x18] sm:$0xff]
  %v22 = vld [vmem:[%s0 + $0x20] sm:$0xff]
  %v23 = vld [vmem:[%s0 + $0x28] sm:$0xff]
  %v24 = vld [vmem:[%s0 + $0x30] sm:$0xff]
  %v25 = vld [vmem:[%s0 + $0x38] sm:$0xff]
  %v26 = vld [vmem:[%s0 + $0x40] sm:$0xff]
  %v27 = vld [vmem:[%s0 + $0x48] sm:$0xff]
  %v28 = vld [vmem:[%s0 + $0x50] sm:$0xff]
  %v29 = vld [vmem:[%s0 + $0x58] sm:$0xff]
  %v30 = vld [vmem:[%s0 + $0x60] sm:$0xff]
  %v31 = vld [vmem:[%s0 + $0x68] sm:$0xff]
  %v32 = vld [vmem:[%s0 + $0x70] sm:$0xff]
  %v33 = vld [vmem:[%s0 + $0x78] sm:$0xff]
  %v34 = vld [vmem:[%s0 + $0x80] sm:$0xff]
  %v35 = vld [vmem:[%s0 + $0x88] sm:$0xff]
  %v36 = vld [vmem:[%s0 + $0x90] sm:$0xff]
  %v37 = vld [vmem:[%s0 + $0x98] sm:$0xff]
  %v38 = vld [vmem:[%s0 + $0xa0] sm:$0xff]
  %v39 = vld [vmem:[%s0 + $0xa8] sm:$0xff]
  %v40 = vld [vmem:[%s0 + $0xb0] sm:$0xff]
  %v41 = vld [vmem:[%s0 + $0xb8] sm:$0xff]
  %v42 = vld [vmem:[%s0 + $0xc0] sm:$0xff]
  %v43 = vld [vmem:[%s0 + $0xc8] sm:$0xff]
  %v44 = vld [vmem:[%s0 + $0xd0] sm:$0xff]
  %v45 = vld [vmem:[%s0 + $0xd8] sm:$0xff]
  %v46 = vld [vmem:[%s0 + $0xe0] sm:$0xff]
  %v47 = vld [vmem:[%s0 + $0xe8] sm:$0xff]
  %v48 = vld [vmem:[%s0 + $0xf0] sm:$0xff]
  %v49 = vld [vmem:[%s0 + $0xf8] sm:$0xff]
  %v50 = vld [vmem:[%s1] sm:$0x1]
  %v52 = vperm.slane %v50, 0
  %v54 = vmul.f32 %v18, %v52
  %v55 = vmul.f32 %v19, %v52
  %v56 = vmul.f32 %v20, %v52
  %v57 = vmul.f32 %v21, %v52
  %v58 = vmul.f32 %v22, %v52
  %v59 = vmul.f32 %v23, %v52
  %v60 = vmul.f32 %v24, %v52
  %v61 = vmul.f32 %v25, %v52
  %v62 = vmul.f32 %v26, %v52
  %v63 = vmul.f32 %v27, %v52
  %v64 = vmul.f32 %v28, %v52
  %v65 = vmul.f32 %v29, %v52
  %v66 = vmul.f32 %v30, %v52
  %v67 = vmul.f32 %v31, %v52
  %v68 = vmul.f32 %v32, %v52
  %v69 = vmul.f32 %v33, %v52
  %v70 = vmul.f32 %v34, %v52
  %v71 = vmul.f32 %v35, %v52
  %v72 = vmul.f32 %v36, %v52
  %v73 = vmul.f32 %v37, %v52
  %v74 = vmul.f32 %v38, %v52
  %v75 = vmul.f32 %v39, %v52
  %v76 = vmul.f32 %v40, %v52
  %v77 = vmul.f32 %v41, %v52
  %v78 = vmul.f32 %v42, %v52
  %v79 = vmul.f32 %v43, %v52
  %v80 = vmul.f32 %v44, %v52
  %v81 = vmul.f32 %v45, %v52
  %v82 = vmul.f32 %v46, %v52
  %v83 = vmul.f32 %v47, %v52
  %v84 = vmul.f32 %v48, %v52
  %v85 = vmul.f32 %v49, %v52
  %v86 = vld [vmem:[%s2] sm:$0x1]
  %v88 = vperm.slane %v86, 0
  %v90 = vadd.f32 %v54, %v88
  %v91 = vadd.f32 %v55, %v88
  %v92 = vadd.f32 %v56, %v88
  %v93 = vadd.f32 %v57, %v88
  %v94 = vadd.f32 %v58, %v88
  %v95 = vadd.f32 %v59, %v88
  %v96 = vadd.f32 %v60, %v88
  %v97 = vadd.f32 %v61, %v88
  %v98 = vadd.f32 %v62, %v88
  %v99 = vadd.f32 %v63, %v88
  %v100 = vadd.f32 %v64, %v88
  %v101 = vadd.f32 %v65, %v88
  %v102 = vadd.f32 %v66, %v88
  %v103 = vadd.f32 %v67, %v88
  %v104 = vadd.f32 %v68, %v88
  %v105 = vadd.f32 %v69, %v88
  %v106 = vadd.f32 %v70, %v88
  %v107 = vadd.f32 %v71, %v88
  %v108 = vadd.f32 %v72, %v88
  %v109 = vadd.f32 %v73, %v88
  %v110 = vadd.f32 %v74, %v88
  %v111 = vadd.f32 %v75, %v88
  %v112 = vadd.f32 %v76, %v88
  %v113 = vadd.f32 %v77, %v88
  %v114 = vadd.f32 %v78, %v88
  %v115 = vadd.f32 %v79, %v88
  %v116 = vadd.f32 %v80, %v88
  %v117 = vadd.f32 %v81, %v88
  %v118 = vadd.f32 %v82, %v88
  %v119 = vadd.f32 %v83, %v88
  %v120 = vadd.f32 %v84, %v88
  %v121 = vadd.f32 %v85, %v88
  %v122 = vpack.c.bf16 %v91, %v90
  %v123 = vpack.c.bf16 %v93, %v92
  %v124 = vpack.c.bf16 %v95, %v94
  %v125 = vpack.c.bf16 %v97, %v96
  %v126 = vpack.c.bf16 %v99, %v98
  %v127 = vpack.c.bf16 %v101, %v100
  %v128 = vpack.c.bf16 %v103, %v102
  %v129 = vpack.c.bf16 %v105, %v104
  %v130 = vpack.c.bf16 %v107, %v106
  %v131 = vpack.c.bf16 %v109, %v108
  %v132 = vpack.c.bf16 %v111, %v110
  %v133 = vpack.c.bf16 %v113, %v112
  %v134 = vpack.c.bf16 %v115, %v114
  %v135 = vpack.c.bf16 %v117, %v116
  %v136 = vpack.c.bf16 %v119, %v118
  %v137 = vpack.c.bf16 %v121, %v120
  %v138 = vld [vmem:[%s3] sm:$0xff]
  %v139 = vld [vmem:[%s3 + $0x8] sm:$0xff]
  %v140 = vld [vmem:[%s3 + $0x10] sm:$0xff]
  %v141 = vld [vmem:[%s3 + $0x18] sm:$0xff]
  %v142 = vld [vmem:[%s3 + $0x20] sm:$0xff]
  %v143 = vld [vmem:[%s3 + $0x28] sm:$0xff]
  %v144 = vld [vmem:[%s3 + $0x30] sm:$0xff]
  %v145 = vld [vmem:[%s3 + $0x38] sm:$0xff]
  %v154 = vunpack.c.l.b16 %v138
  %v155 = vunpack.c.h.b16 %v138
  %v156 = vunpack.c.l.b16 %v139
  %v157 = vunpack.c.h.b16 %v139
  %v158 = vunpack.c.l.b16 %v140
  %v159 = vunpack.c.h.b16 %v140
  %v160 = vunpack.c.l.b16 %v141
  %v161 = vunpack.c.h.b16 %v141
  %v162 = vunpack.c.l.b16 %v142
  %v163 = vunpack.c.h.b16 %v142
  %v164 = vunpack.c.l.b16 %v143
  %v165 = vunpack.c.h.b16 %v143
  %v166 = vunpack.c.l.b16 %v144
  %v167 = vunpack.c.h.b16 %v144
  %v168 = vunpack.c.l.b16 %v145
  %v169 = vunpack.c.h.b16 %v145
  %v170 = vpack.c.b16 %v156, %v154
  %v171 = vpack.c.b16 %v157, %v155
  %v172 = vpack.c.b16 %v160, %v158
  %v173 = vpack.c.b16 %v161, %v159
  %v174 = vpack.c.b16 %v164, %v162
  %v175 = vpack.c.b16 %v165, %v163
  %v176 = vpack.c.b16 %v168, %v166
  %v177 = vpack.c.b16 %v169, %v167
  %vm186 = vcmask 523264
  %v188 = vsel %vm186, %v122, 0
  %v191 = vsel %vm186, %v123, 0
  %v194 = vsel %vm186, %v124, 0
  %v197 = vsel %vm186, %v125, 0
  %v200 = vsel %vm186, %v126, 0
  %v203 = vsel %vm186, %v127, 0
  %v206 = vsel %vm186, %v128, 0
  %v209 = vsel %vm186, %v129, 0
  %v212 = vsel %vm186, %v130, 0
  %v215 = vsel %vm186, %v131, 0
  %v218 = vsel %vm186, %v132, 0
  %v221 = vsel %vm186, %v133, 0
  %v224 = vsel %vm186, %v134, 0
  %v227 = vsel %vm186, %v135, 0
  %v230 = vsel %vm186, %v136, 0
  %v233 = vsel %vm186, %v137, 0
  %235 = vmatpush.bf16.msra.mxu0 0
  %236 = vmatpush.bf16.msra.mxu0 0
  %237 = vmatpush.bf16.msra.mxu0 0
  %238 = vmatpush.bf16.msra.mxu0 0
  %239 = vmatpush.bf16.msra.mxu0 %v176
  %240 = vmatpush.bf16.msra.mxu0 %v174
  %241 = vmatpush.bf16.msra.mxu0 %v172
  %242 = vmatpush.bf16.msra.mxu0 %v170
  %243 = vmatmul.bf16.gmra.mxu0 %v188
  %v244 = vpop.f32.mrf.mxu0
  %v245 = vadd.f32 0.0, %v244
  %v246 = vpop.f32.mrf.mxu0
  %v247 = vadd.f32 0.0, %v246
  %248 = vmatmul.bf16.gmra.mxu0 %v191
  %v249 = vpop.f32.mrf.mxu0
  %v250 = vadd.f32 0.0, %v249
  %v251 = vpop.f32.mrf.mxu0
  %v252 = vadd.f32 0.0, %v251
  %253 = vmatmul.bf16.gmra.mxu0 %v194
  %v254 = vpop.f32.mrf.mxu0
  %v255 = vadd.f32 0.0, %v254
  %v256 = vpop.f32.mrf.mxu0
  %v257 = vadd.f32 0.0, %v256
  %258 = vmatmul.bf16.gmra.mxu0 %v197
  %v259 = vpop.f32.mrf.mxu0
  %v260 = vadd.f32 0.0, %v259
  %v261 = vpop.f32.mrf.mxu0
  %v262 = vadd.f32 0.0, %v261
  %263 = vmatmul.bf16.gmra.mxu0 %v200
  %v264 = vpop.f32.mrf.mxu0
  %v265 = vadd.f32 0.0, %v264
  %v266 = vpop.f32.mrf.mxu0
  %v267 = vadd.f32 0.0, %v266
  %268 = vmatmul.bf16.gmra.mxu0 %v203
  %v269 = vpop.f32.mrf.mxu0
  %v270 = vadd.f32 0.0, %v269
  %v271 = vpop.f32.mrf.mxu0
  %v272 = vadd.f32 0.0, %v271
  %273 = vmatmul.bf16.gmra.mxu0 %v206
  %v274 = vpop.f32.mrf.mxu0
  %v275 = vadd.f32 0.0, %v274
  %v276 = vpop.f32.mrf.mxu0
  %v277 = vadd.f32 0.0, %v276
  %278 = vmatmul.bf16.gmra.mxu0 %v209
  %v279 = vpop.f32.mrf.mxu0
  %v280 = vadd.f32 0.0, %v279
  %v281 = vpop.f32.mrf.mxu0
  %v282 = vadd.f32 0.0, %v281
  %283 = vmatmul.bf16.gmra.mxu0 %v212
  %v284 = vpop.f32.mrf.mxu0
  %v285 = vadd.f32 0.0, %v284
  %v286 = vpop.f32.mrf.mxu0
  %v287 = vadd.f32 0.0, %v286
  %288 = vmatmul.bf16.gmra.mxu0 %v215
  %v289 = vpop.f32.mrf.mxu0
  %v290 = vadd.f32 0.0, %v289
  %v291 = vpop.f32.mrf.mxu0
  %v292 = vadd.f32 0.0, %v291
  %293 = vmatmul.bf16.gmra.mxu0 %v218
  %v294 = vpop.f32.mrf.mxu0
  %v295 = vadd.f32 0.0, %v294
  %v296 = vpop.f32.mrf.mxu0
  %v297 = vadd.f32 0.0, %v296
  %298 = vmatmul.bf16.gmra.mxu0 %v221
  %v299 = vpop.f32.mrf.mxu0
  %v300 = vadd.f32 0.0, %v299
  %v301 = vpop.f32.mrf.mxu0
  %v302 = vadd.f32 0.0, %v301
  %303 = vmatmul.bf16.gmra.mxu0 %v224
  %v304 = vpop.f32.mrf.mxu0
  %v305 = vadd.f32 0.0, %v304
  %v306 = vpop.f32.mrf.mxu0
  %v307 = vadd.f32 0.0, %v306
  %308 = vmatmul.bf16.gmra.mxu0 %v227
  %v309 = vpop.f32.mrf.mxu0
  %v310 = vadd.f32 0.0, %v309
  %v311 = vpop.f32.mrf.mxu0
  %v312 = vadd.f32 0.0, %v311
  %313 = vmatmul.bf16.gmra.mxu0 %v230
  %v314 = vpop.f32.mrf.mxu0
  %v315 = vadd.f32 0.0, %v314
  %v316 = vpop.f32.mrf.mxu0
  %v317 = vadd.f32 0.0, %v316
  %318 = vmatmul.bf16.gmra.mxu0 %v233
  %v319 = vpop.f32.mrf.mxu0
  %v320 = vadd.f32 0.0, %v319
  %v321 = vpop.f32.mrf.mxu0
  %v322 = vadd.f32 0.0, %v321
  %323 = vdwg.mxu0
  %324 = vmatpush.bf16.msra.mxu0 0
  %325 = vmatpush.bf16.msra.mxu0 0
  %326 = vmatpush.bf16.msra.mxu0 0
  %327 = vmatpush.bf16.msra.mxu0 0
  %328 = vmatpush.bf16.msra.mxu0 %v177
  %329 = vmatpush.bf16.msra.mxu0 %v175
  %330 = vmatpush.bf16.msra.mxu0 %v173
  %331 = vmatpush.bf16.msra.mxu0 %v171
  %332 = vmatmul.bf16.gmra.mxu0 %v188
  %v333 = vpop.f32.mrf.mxu0
  %v334 = vadd.f32 0.0, %v333
  %v335 = vpop.f32.mrf.mxu0
  %v336 = vadd.f32 0.0, %v335
  %337 = vmatmul.bf16.gmra.mxu0 %v191
  %v338 = vpop.f32.mrf.mxu0
  %v339 = vadd.f32 0.0, %v338
  %v340 = vpop.f32.mrf.mxu0
  %v341 = vadd.f32 0.0, %v340
  %342 = vmatmul.bf16.gmra.mxu0 %v194
  %v343 = vpop.f32.mrf.mxu0
  %v344 = vadd.f32 0.0, %v343
  %v345 = vpop.f32.mrf.mxu0
  %v346 = vadd.f32 0.0, %v345
  %347 = vmatmul.bf16.gmra.mxu0 %v197
  %v348 = vpop.f32.mrf.mxu0
  %v349 = vadd.f32 0.0, %v348
  %v350 = vpop.f32.mrf.mxu0
  %v351 = vadd.f32 0.0, %v350
  %352 = vmatmul.bf16.gmra.mxu0 %v200
  %v353 = vpop.f32.mrf.mxu0
  %v354 = vadd.f32 0.0, %v353
  %v355 = vpop.f32.mrf.mxu0
  %v356 = vadd.f32 0.0, %v355
  %357 = vmatmul.bf16.gmra.mxu0 %v203
  %v358 = vpop.f32.mrf.mxu0
  %v359 = vadd.f32 0.0, %v358
  %v360 = vpop.f32.mrf.mxu0
  %v361 = vadd.f32 0.0, %v360
  %362 = vmatmul.bf16.gmra.mxu0 %v206
  %v363 = vpop.f32.mrf.mxu0
  %v364 = vadd.f32 0.0, %v363
  %v365 = vpop.f32.mrf.mxu0
  %v366 = vadd.f32 0.0, %v365
  %367 = vmatmul.bf16.gmra.mxu0 %v209
  %v368 = vpop.f32.mrf.mxu0
  %v369 = vadd.f32 0.0, %v368
  %v370 = vpop.f32.mrf.mxu0
  %v371 = vadd.f32 0.0, %v370
  %372 = vmatmul.bf16.gmra.mxu0 %v212
  %v373 = vpop.f32.mrf.mxu0
  %v374 = vadd.f32 0.0, %v373
  %v375 = vpop.f32.mrf.mxu0
  %v376 = vadd.f32 0.0, %v375
  %377 = vmatmul.bf16.gmra.mxu0 %v215
  %v378 = vpop.f32.mrf.mxu0
  %v379 = vadd.f32 0.0, %v378
  %v380 = vpop.f32.mrf.mxu0
  %v381 = vadd.f32 0.0, %v380
  %382 = vmatmul.bf16.gmra.mxu0 %v218
  %v383 = vpop.f32.mrf.mxu0
  %v384 = vadd.f32 0.0, %v383
  %v385 = vpop.f32.mrf.mxu0
  %v386 = vadd.f32 0.0, %v385
  %387 = vmatmul.bf16.gmra.mxu0 %v221
  %v388 = vpop.f32.mrf.mxu0
  %v389 = vadd.f32 0.0, %v388
  %v390 = vpop.f32.mrf.mxu0
  %v391 = vadd.f32 0.0, %v390
  %392 = vmatmul.bf16.gmra.mxu0 %v224
  %v393 = vpop.f32.mrf.mxu0
  %v394 = vadd.f32 0.0, %v393
  %v395 = vpop.f32.mrf.mxu0
  %v396 = vadd.f32 0.0, %v395
  %397 = vmatmul.bf16.gmra.mxu0 %v227
  %v398 = vpop.f32.mrf.mxu0
  %v399 = vadd.f32 0.0, %v398
  %v400 = vpop.f32.mrf.mxu0
  %v401 = vadd.f32 0.0, %v400
  %402 = vmatmul.bf16.gmra.mxu0 %v230
  %v403 = vpop.f32.mrf.mxu0
  %v404 = vadd.f32 0.0, %v403
  %v405 = vpop.f32.mrf.mxu0
  %v406 = vadd.f32 0.0, %v405
  %407 = vmatmul.bf16.gmra.mxu0 %v233
  %v408 = vpop.f32.mrf.mxu0
  %v409 = vadd.f32 0.0, %v408
  %v410 = vpop.f32.mrf.mxu0
  %v411 = vadd.f32 0.0, %v410
  %412 = vdwg.mxu0
  %v413 = vpack.c.bf16 %v334, %v245
  %v414 = vpack.c.bf16 %v336, %v247
  %v415 = vpack.c.bf16 %v339, %v250
  %v416 = vpack.c.bf16 %v341, %v252
  %v417 = vpack.c.bf16 %v344, %v255
  %v418 = vpack.c.bf16 %v346, %v257
  %v419 = vpack.c.bf16 %v349, %v260
  %v420 = vpack.c.bf16 %v351, %v262
  %v421 = vpack.c.bf16 %v354, %v265
  %v422 = vpack.c.bf16 %v356, %v267
  %v423 = vpack.c.bf16 %v359, %v270
  %v424 = vpack.c.bf16 %v361, %v272
  %v425 = vpack.c.bf16 %v364, %v275
  %v426 = vpack.c.bf16 %v366, %v277
  %v427 = vpack.c.bf16 %v369, %v280
  %v428 = vpack.c.bf16 %v371, %v282
  %v429 = vpack.c.bf16 %v374, %v285
  %v430 = vpack.c.bf16 %v376, %v287
  %v431 = vpack.c.bf16 %v379, %v290
  %v432 = vpack.c.bf16 %v381, %v292
  %v433 = vpack.c.bf16 %v384, %v295
  %v434 = vpack.c.bf16 %v386, %v297
  %v435 = vpack.c.bf16 %v389, %v300
  %v436 = vpack.c.bf16 %v391, %v302
  %v437 = vpack.c.bf16 %v394, %v305
  %v438 = vpack.c.bf16 %v396, %v307
  %v439 = vpack.c.bf16 %v399, %v310
  %v440 = vpack.c.bf16 %v401, %v312
  %v441 = vpack.c.bf16 %v404, %v315
  %v442 = vpack.c.bf16 %v406, %v317
  %v443 = vpack.c.bf16 %v409, %v320
  %v444 = vpack.c.bf16 %v411, %v322
  %445 = vst [vmem:[%s4] sm:$0xff] %v413
  %446 = vst [vmem:[%s4 + $0x8] sm:$0xff] %v414
  %447 = vst [vmem:[%s4 + $0x10] sm:$0xff] %v415
  %448 = vst [vmem:[%s4 + $0x18] sm:$0xff] %v416
  %449 = vst [vmem:[%s4 + $0x20] sm:$0xff] %v417
  %450 = vst [vmem:[%s4 + $0x28] sm:$0xff] %v418
  %451 = vst [vmem:[%s4 + $0x30] sm:$0xff] %v419
  %452 = vst [vmem:[%s4 + $0x38] sm:$0xff] %v420
  %453 = vst [vmem:[%s4 + $0x40] sm:$0xff] %v421
  %454 = vst [vmem:[%s4 + $0x48] sm:$0xff] %v422
  %455 = vst [vmem:[%s4 + $0x50] sm:$0xff] %v423
  %456 = vst [vmem:[%s4 + $0x58] sm:$0xff] %v424
  %457 = vst [vmem:[%s4 + $0x60] sm:$0xff] %v425
  %458 = vst [vmem:[%s4 + $0x68] sm:$0xff] %v426
  %459 = vst [vmem:[%s4 + $0x70] sm:$0xff] %v427
  %460 = vst [vmem:[%s4 + $0x78] sm:$0xff] %v428
  %461 = vst [vmem:[%s4 + $0x80] sm:$0xff] %v429
  %462 = vst [vmem:[%s4 + $0x88] sm:$0xff] %v430
  %463 = vst [vmem:[%s4 + $0x90] sm:$0xff] %v431
  %464 = vst [vmem:[%s4 + $0x98] sm:$0xff] %v432
  %465 = vst [vmem:[%s4 + $0xa0] sm:$0xff] %v433
  %466 = vst [vmem:[%s4 + $0xa8] sm:$0xff] %v434
  %467 = vst [vmem:[%s4 + $0xb0] sm:$0xff] %v435
  %468 = vst [vmem:[%s4 + $0xb8] sm:$0xff] %v436
  %469 = vst [vmem:[%s4 + $0xc0] sm:$0xff] %v437
  %470 = vst [vmem:[%s4 + $0xc8] sm:$0xff] %v438
  %471 = vst [vmem:[%s4 + $0xd0] sm:$0xff] %v439
  %472 = vst [vmem:[%s4 + $0xd8] sm:$0xff] %v440
  %473 = vst [vmem:[%s4 + $0xe0] sm:$0xff] %v441
  %474 = vst [vmem:[%s4 + $0xe8] sm:$0xff] %v442
  %475 = vst [vmem:[%s4 + $0xf0] sm:$0xff] %v443
  %476 = vst [vmem:[%s4 + $0xf8] sm:$0xff] %v444
  // Predicated region
  $region18: #{hgnn_encoder_forward.9} parent=0 // pred_check
    _
  $region19: #{hgnn_encoder_forward.9} parent=0 // pred_check_branch
    %478 = sbr.rel (0) target = $region21
  $region20: #{hgnn_encoder_forward.9} parent=0 // pred_region
    _
  $region21: #{hgnn_encoder_forward.9} parent=0 // pred_fallthru
    _
  // Predicated region
  $region22: #{hgnn_encoder_forward.9} parent=0 // pred_check
    _
  $region23: #{hgnn_encoder_forward.9} parent=0 // pred_check_branch
    %480 = sbr.rel (0) target = $region25
  $region24: #{hgnn_encoder_forward.9} parent=0 // pred_region
    _
  $region25: #{hgnn_encoder_forward.9} parent=0 // pred_fallthru
    _

// kernel: hgnn_encoder_forward.10
$region0: #{hgnn_encoder_forward.10}
  #allocation0 [shape = 'u32[]', space=smem, size = 0x4, offset = 0x4, fixed_abs, tag = 'smem constant byte address 0x4 - core index']
  #allocation1 [shape = 'u32[72,128]{1,0:T(1,128)}', space=vmem, size = 0x9000, scoped, tag = 'internal scratch']
  #allocation2 [shape = 'f32[128,256]{1,0:T(8,128)}', space=vmem, size = 0x20000, scoped, tag = 'scratch operand']
  %s0 = inlined_call_operand.vmem [shape: bf16[128,256], index: 0, kind: input, shape index: {}]
  %s1 = inlined_call_operand.vmem [shape: bf16[256,256], index: 1, kind: input, shape index: {}]
  %s2 = inlined_call_operand.vmem [shape: f32[128,1], index: 2, kind: input, shape index: {}]
  %s3 = inlined_call_operand.vmem [shape: bf16[128,256], index: 3, kind: output, shape index: {}]
  %s4 = sld [smem:[#allocation0]]
  $region30: #{hgnn_encoder_forward.10} parent=0
    _
  %s6 = ssub.s32 1, %s4
  %s7 = scalar_select 0, %s6, %s4
  // Predicated region
  $region2: #{hgnn_encoder_forward.10} parent=0 // pred_check
    _
  $region3: #{hgnn_encoder_forward.10} parent=0 // pred_check_branch
    %9 = sbr.rel (0) target = $region5
  $region4: #{hgnn_encoder_forward.10} parent=0 // pred_region
    _
  $region5: #{hgnn_encoder_forward.10} parent=0 // pred_fallthru
    _
  // Predicated region
  $region6: #{hgnn_encoder_forward.10} parent=0 // pred_check
    _
  $region7: #{hgnn_encoder_forward.10} parent=0 // pred_check_branch
    %11 = sbr.rel (0) target = $region9
  $region8: #{hgnn_encoder_forward.10} parent=0 // pred_region
    _
  $region9: #{hgnn_encoder_forward.10} parent=0 // pred_fallthru
    _
  // Predicated region
  $region10: #{hgnn_encoder_forward.10} parent=0 // pred_check
    _
  $region11: #{hgnn_encoder_forward.10} parent=0 // pred_check_branch
    %13 = sbr.rel (0) target = $region13
  $region12: #{hgnn_encoder_forward.10} parent=0 // pred_region
    _
  $region13: #{hgnn_encoder_forward.10} parent=0 // pred_fallthru
    _
  %p14 = scmp.eq.s32.totalorder 0, 0
  // Predicated region
  $region14: #{hgnn_encoder_forward.10} parent=0 // pred_check
    %p15 = pneg %p14
  $region15: #{hgnn_encoder_forward.10} parent=0 // pred_check_branch
    %17 = sbr.rel (%p15) target = $region17
  $region16: #{hgnn_encoder_forward.10} parent=0 // pred_region
    %18 = vst [vmem:[#allocation2] sm:$0xff] 0.0
    %19 = vst [vmem:[#allocation2 + $0x8] sm:$0xff] 0.0
    %20 = vst [vmem:[#allocation2 + $0x10] sm:$0xff] 0.0
    %21 = vst [vmem:[#allocation2 + $0x18] sm:$0xff] 0.0
    %22 = vst [vmem:[#allocation2 + $0x20] sm:$0xff] 0.0
    %23 = vst [vmem:[#allocation2 + $0x28] sm:$0xff] 0.0
    %24 = vst [vmem:[#allocation2 + $0x30] sm:$0xff] 0.0
    %25 = vst [vmem:[#allocation2 + $0x38] sm:$0xff] 0.0
    %26 = vst [vmem:[#allocation2 + $0x40] sm:$0xff] 0.0
    %27 = vst [vmem:[#allocation2 + $0x48] sm:$0xff] 0.0
    %28 = vst [vmem:[#allocation2 + $0x50] sm:$0xff] 0.0
    %29 = vst [vmem:[#allocation2 + $0x58] sm:$0xff] 0.0
    %30 = vst [vmem:[#allocation2 + $0x60] sm:$0xff] 0.0
    %31 = vst [vmem:[#allocation2 + $0x68] sm:$0xff] 0.0
    %32 = vst [vmem:[#allocation2 + $0x70] sm:$0xff] 0.0
    %33 = vst [vmem:[#allocation2 + $0x78] sm:$0xff] 0.0
    %34 = vst [vmem:[#allocation2 + $0x80] sm:$0xff] 0.0
    %35 = vst [vmem:[#allocation2 + $0x88] sm:$0xff] 0.0
    %36 = vst [vmem:[#allocation2 + $0x90] sm:$0xff] 0.0
    %37 = vst [vmem:[#allocation2 + $0x98] sm:$0xff] 0.0
    %38 = vst [vmem:[#allocation2 + $0xa0] sm:$0xff] 0.0
    %39 = vst [vmem:[#allocation2 + $0xa8] sm:$0xff] 0.0
    %40 = vst [vmem:[#allocation2 + $0xb0] sm:$0xff] 0.0
    %41 = vst [vmem:[#allocation2 + $0xb8] sm:$0xff] 0.0
    %42 = vst [vmem:[#allocation2 + $0xc0] sm:$0xff] 0.0
    %43 = vst [vmem:[#allocation2 + $0xc8] sm:$0xff] 0.0
    %44 = vst [vmem:[#allocation2 + $0xd0] sm:$0xff] 0.0
    %45 = vst [vmem:[#allocation2 + $0xd8] sm:$0xff] 0.0
    %46 = vst [vmem:[#allocation2 + $0xe0] sm:$0xff] 0.0
    %47 = vst [vmem:[#allocation2 + $0xe8] sm:$0xff] 0.0
    %48 = vst [vmem:[#allocation2 + $0xf0] sm:$0xff] 0.0
    %49 = vst [vmem:[#allocation2 + $0xf8] sm:$0xff] 0.0
  $region17: #{hgnn_encoder_forward.10} parent=0 // pred_fallthru
    _
  %v50 = vld [vmem:[#allocation2] sm:$0xff]
  %v51 = vld [vmem:[#allocation2 + $0x8] sm:$0xff]
  %v52 = vld [vmem:[#allocation2 + $0x10] sm:$0xff]
  %v53 = vld [vmem:[#allocation2 + $0x18] sm:$0xff]
  %v54 = vld [vmem:[#allocation2 + $0x20] sm:$0xff]
  %v55 = vld [vmem:[#allocation2 + $0x28] sm:$0xff]
  %v56 = vld [vmem:[#allocation2 + $0x30] sm:$0xff]
  %v57 = vld [vmem:[#allocation2 + $0x38] sm:$0xff]
  %v58 = vld [vmem:[#allocation2 + $0x40] sm:$0xff]
  %v59 = vld [vmem:[#allocation2 + $0x48] sm:$0xff]
  %v60 = vld [vmem:[#allocation2 + $0x50] sm:$0xff]
  %v61 = vld [vmem:[#allocation2 + $0x58] sm:$0xff]
  %v62 = vld [vmem:[#allocation2 + $0x60] sm:$0xff]
  %v63 = vld [vmem:[#allocation2 + $0x68] sm:$0xff]
  %v64 = vld [vmem:[#allocation2 + $0x70] sm:$0xff]
  %v65 = vld [vmem:[#allocation2 + $0x78] sm:$0xff]
  %v66 = vld [vmem:[#allocation2 + $0x80] sm:$0xff]
  %v67 = vld [vmem:[#allocation2 + $0x88] sm:$0xff]
  %v68 = vld [vmem:[#allocation2 + $0x90] sm:$0xff]
  %v69 = vld [vmem:[#allocation2 + $0x98] sm:$0xff]
  %v70 = vld [vmem:[#allocation2 + $0xa0] sm:$0xff]
  %v71 = vld [vmem:[#allocation2 + $0xa8] sm:$0xff]
  %v72 = vld [vmem:[#allocation2 + $0xb0] sm:$0xff]
  %v73 = vld [vmem:[#allocation2 + $0xb8] sm:$0xff]
  %v74 = vld [vmem:[#allocation2 + $0xc0] sm:$0xff]
  %v75 = vld [vmem:[#allocation2 + $0xc8] sm:$0xff]
  %v76 = vld [vmem:[#allocation2 + $0xd0] sm:$0xff]
  %v77 = vld [vmem:[#allocation2 + $0xd8] sm:$0xff]
  %v78 = vld [vmem:[#allocation2 + $0xe0] sm:$0xff]
  %v79 = vld [vmem:[#allocation2 + $0xe8] sm:$0xff]
  %v80 = vld [vmem:[#allocation2 + $0xf0] sm:$0xff]
  %v81 = vld [vmem:[#allocation2 + $0xf8] sm:$0xff]
  %v82 = vld [vmem:[%s0] sm:$0xff]
  %v83 = vld [vmem:[%s0 + $0x8] sm:$0xff]
  %v84 = vld [vmem:[%s0 + $0x10] sm:$0xff]
  %v85 = vld [vmem:[%s0 + $0x18] sm:$0xff]
  %v86 = vld [vmem:[%s0 + $0x20] sm:$0xff]
  %v87 = vld [vmem:[%s0 + $0x28] sm:$0xff]
  %v88 = vld [vmem:[%s0 + $0x30] sm:$0xff]
  %v89 = vld [vmem:[%s0 + $0x38] sm:$0xff]
  %v90 = vld [vmem:[%s0 + $0x40] sm:$0xff]
  %v91 = vld [vmem:[%s0 + $0x48] sm:$0xff]
  %v92 = vld [vmem:[%s0 + $0x50] sm:$0xff]
  %v93 = vld [vmem:[%s0 + $0x58] sm:$0xff]
  %v94 = vld [vmem:[%s0 + $0x60] sm:$0xff]
  %v95 = vld [vmem:[%s0 + $0x68] sm:$0xff]
  %v96 = vld [vmem:[%s0 + $0x70] sm:$0xff]
  %v97 = vld [vmem:[%s0 + $0x78] sm:$0xff]
  %v98 = vld [vmem:[%s1] sm:$0xff]
  %v99 = vld [vmem:[%s1 + $0x8] sm:$0xff]
  %v100 = vld [vmem:[%s1 + $0x10] sm:$0xff]
  %v101 = vld [vmem:[%s1 + $0x18] sm:$0xff]
  %v102 = vld [vmem:[%s1 + $0x20] sm:$0xff]
  %v103 = vld [vmem:[%s1 + $0x28] sm:$0xff]
  %v104 = vld [vmem:[%s1 + $0x30] sm:$0xff]
  %v105 = vld [vmem:[%s1 + $0x38] sm:$0xff]
  %v106 = vld [vmem:[%s1 + $0x40] sm:$0xff]
  %v107 = vld [vmem:[%s1 + $0x48] sm:$0xff]
  %v108 = vld [vmem:[%s1 + $0x50] sm:$0xff]
  %v109 = vld [vmem:[%s1 + $0x58] sm:$0xff]
  %v110 = vld [vmem:[%s1 + $0x60] sm:$0xff]
  %v111 = vld [vmem:[%s1 + $0x68] sm:$0xff]
  %v112 = vld [vmem:[%s1 + $0x70] sm:$0xff]
  %v113 = vld [vmem:[%s1 + $0x78] sm:$0xff]
  %v114 = vld [vmem:[%s1 + $0x80] sm:$0xff]
  %v115 = vld [vmem:[%s1 + $0x88] sm:$0xff]
  %v116 = vld [vmem:[%s1 + $0x90] sm:$0xff]
  %v117 = vld [vmem:[%s1 + $0x98] sm:$0xff]
  %v118 = vld [vmem:[%s1 + $0xa0] sm:$0xff]
  %v119 = vld [vmem:[%s1 + $0xa8] sm:$0xff]
  %v120 = vld [vmem:[%s1 + $0xb0] sm:$0xff]
  %v121 = vld [vmem:[%s1 + $0xb8] sm:$0xff]
  %v122 = vld [vmem:[%s1 + $0xc0] sm:$0xff]
  %v123 = vld [vmem:[%s1 + $0xc8] sm:$0xff]
  %v124 = vld [vmem:[%s1 + $0xd0] sm:$0xff]
  %v125 = vld [vmem:[%s1 + $0xd8] sm:$0xff]
  %v126 = vld [vmem:[%s1 + $0xe0] sm:$0xff]
  %v127 = vld [vmem:[%s1 + $0xe8] sm:$0xff]
  %v128 = vld [vmem:[%s1 + $0xf0] sm:$0xff]
  %v129 = vld [vmem:[%s1 + $0xf8] sm:$0xff]
  %v146 = vunpack.c.l.b16 %v82
  %v147 = vunpack.c.h.b16 %v82
  %v148 = vunpack.c.l.b16 %v83
  %v149 = vunpack.c.h.b16 %v83
  %v150 = vunpack.c.l.b16 %v84
  %v151 = vunpack.c.h.b16 %v84
  %v152 = vunpack.c.l.b16 %v85
  %v153 = vunpack.c.h.b16 %v85
  %v154 = vunpack.c.l.b16 %v86
  %v155 = vunpack.c.h.b16 %v86
  %v156 = vunpack.c.l.b16 %v87
  %v157 = vunpack.c.h.b16 %v87
  %v158 = vunpack.c.l.b16 %v88
  %v159 = vunpack.c.h.b16 %v88
  %v160 = vunpack.c.l.b16 %v89
  %v161 = vunpack.c.h.b16 %v89
  %v162 = vunpack.c.l.b16 %v90
  %v163 = vunpack.c.h.b16 %v90
  %v164 = vunpack.c.l.b16 %v91
  %v165 = vunpack.c.h.b16 %v91
  %v166 = vunpack.c.l.b16 %v92
  %v167 = vunpack.c.h.b16 %v92
  %v168 = vunpack.c.l.b16 %v93
  %v169 = vunpack.c.h.b16 %v93
  %v170 = vunpack.c.l.b16 %v94
  %v171 = vunpack.c.h.b16 %v94
  %v172 = vunpack.c.l.b16 %v95
  %v173 = vunpack.c.h.b16 %v95
  %v174 = vunpack.c.l.b16 %v96
  %v175 = vunpack.c.h.b16 %v96
  %v176 = vunpack.c.l.b16 %v97
  %v177 = vunpack.c.h.b16 %v97
  %v178 = vpack.c.b16 %v148, %v146
  %v179 = vpack.c.b16 %v149, %v147
  %v180 = vpack.c.b16 %v152, %v150
  %v181 = vpack.c.b16 %v153, %v151
  %v182 = vpack.c.b16 %v156, %v154
  %v183 = vpack.c.b16 %v157, %v155
  %v184 = vpack.c.b16 %v160, %v158
  %v185 = vpack.c.b16 %v161, %v159
  %v186 = vpack.c.b16 %v164, %v162
  %v187 = vpack.c.b16 %v165, %v163
  %v188 = vpack.c.b16 %v168, %v166
  %v189 = vpack.c.b16 %v169, %v167
  %v190 = vpack.c.b16 %v172, %v170
  %v191 = vpack.c.b16 %v173, %v171
  %v192 = vpack.c.b16 %v176, %v174
  %v193 = vpack.c.b16 %v177, %v175
  %v242 = vunpack.c.l.b16 %v98
  %v243 = vunpack.c.h.b16 %v98
  %v244 = vunpack.c.l.b16 %v99
  %v245 = vunpack.c.h.b16 %v99
  %v246 = vunpack.c.l.b16 %v100
  %v247 = vunpack.c.h.b16 %v100
  %v248 = vunpack.c.l.b16 %v101
  %v249 = vunpack.c.h.b16 %v101
  %v250 = vunpack.c.l.b16 %v102
  %v251 = vunpack.c.h.b16 %v102
  %v252 = vunpack.c.l.b16 %v103
  %v253 = vunpack.c.h.b16 %v103
  %v254 = vunpack.c.l.b16 %v104
  %v255 = vunpack.c.h.b16 %v104
  %v256 = vunpack.c.l.b16 %v105
  %v257 = vunpack.c.h.b16 %v105
  %v258 = vunpack.c.l.b16 %v106
  %v259 = vunpack.c.h.b16 %v106
  %v260 = vunpack.c.l.b16 %v107
  %v261 = vunpack.c.h.b16 %v107
  %v262 = vunpack.c.l.b16 %v108
  %v263 = vunpack.c.h.b16 %v108
  %v264 = vunpack.c.l.b16 %v109
  %v265 = vunpack.c.h.b16 %v109
  %v266 = vunpack.c.l.b16 %v110
  %v267 = vunpack.c.h.b16 %v110
  %v268 = vunpack.c.l.b16 %v111
  %v269 = vunpack.c.h.b16 %v111
  %v270 = vunpack.c.l.b16 %v112
  %v271 = vunpack.c.h.b16 %v112
  %v272 = vunpack.c.l.b16 %v113
  %v273 = vunpack.c.h.b16 %v113
  %v274 = vunpack.c.l.b16 %v114
  %v275 = vunpack.c.h.b16 %v114
  %v276 = vunpack.c.l.b16 %v115
  %v277 = vunpack.c.h.b16 %v115
  %v278 = vunpack.c.l.b16 %v116
  %v279 = vunpack.c.h.b16 %v116
  %v280 = vunpack.c.l.b16 %v117
  %v281 = vunpack.c.h.b16 %v117
  %v282 = vunpack.c.l.b16 %v118
  %v283 = vunpack.c.h.b16 %v118
  %v284 = vunpack.c.l.b16 %v119
  %v285 = vunpack.c.h.b16 %v119
  %v286 = vunpack.c.l.b16 %v120
  %v287 = vunpack.c.h.b16 %v120
  %v288 = vunpack.c.l.b16 %v121
  %v289 = vunpack.c.h.b16 %v121
  %v290 = vunpack.c.l.b16 %v122
  %v291 = vunpack.c.h.b16 %v122
  %v292 = vunpack.c.l.b16 %v123
  %v293 = vunpack.c.h.b16 %v123
  %v294 = vunpack.c.l.b16 %v124
  %v295 = vunpack.c.h.b16 %v124
  %v296 = vunpack.c.l.b16 %v125
  %v297 = vunpack.c.h.b16 %v125
  %v298 = vunpack.c.l.b16 %v126
  %v299 = vunpack.c.h.b16 %v126
  %v300 = vunpack.c.l.b16 %v127
  %v301 = vunpack.c.h.b16 %v127
  %v302 = vunpack.c.l.b16 %v128
  %v303 = vunpack.c.h.b16 %v128
  %v304 = vunpack.c.l.b16 %v129
  %v305 = vunpack.c.h.b16 %v129
  %v306 = vpack.c.b16 %v244, %v242
  %v307 = vpack.c.b16 %v245, %v243
  %v308 = vpack.c.b16 %v248, %v246
  %v309 = vpack.c.b16 %v249, %v247
  %v310 = vpack.c.b16 %v252, %v250
  %v311 = vpack.c.b16 %v253, %v251
  %v312 = vpack.c.b16 %v256, %v254
  %v313 = vpack.c.b16 %v257, %v255
  %v314 = vpack.c.b16 %v260, %v258
  %v315 = vpack.c.b16 %v261, %v259
  %v316 = vpack.c.b16 %v264, %v262
  %v317 = vpack.c.b16 %v265, %v263
  %v318 = vpack.c.b16 %v268, %v266
  %v319 = vpack.c.b16 %v269, %v267
  %v320 = vpack.c.b16 %v272, %v270
  %v321 = vpack.c.b16 %v273, %v271
  %v322 = vpack.c.b16 %v276, %v274
  %v323 = vpack.c.b16 %v277, %v275
  %v324 = vpack.c.b16 %v280, %v278
  %v325 = vpack.c.b16 %v281, %v279
  %v326 = vpack.c.b16 %v284, %v282
  %v327 = vpack.c.b16 %v285, %v283
  %v328 = vpack.c.b16 %v288, %v286
  %v329 = vpack.c.b16 %v289, %v287
  %v330 = vpack.c.b16 %v292, %v290
  %v331 = vpack.c.b16 %v293, %v291
  %v332 = vpack.c.b16 %v296, %v294
  %v333 = vpack.c.b16 %v297, %v295
  %v334 = vpack.c.b16 %v300, %v298
  %v335 = vpack.c.b16 %v301, %v299
  %v336 = vpack.c.b16 %v304, %v302
  %v337 = vpack.c.b16 %v305, %v303
  %370 = vmatpush.bf16.msra.mxu0 %v320
  %371 = vmatpush.bf16.msra.mxu0 %v318
  %372 = vmatpush.bf16.msra.mxu0 %v316
  %373 = vmatpush.bf16.msra.mxu0 %v314
  %374 = vmatpush.bf16.msra.mxu0 %v312
  %375 = vmatpush.bf16.msra.mxu0 %v310
  %376 = vmatpush.bf16.msra.mxu0 %v308
  %377 = vmatpush.bf16.msra.mxu0 %v306
  %378 = vmatmul.bf16.gmra.mxu0 %v178
  %v379 = vpop.f32.mrf.mxu0
  %v380 = vadd.f32 0.0, %v379
  %v381 = vpop.f32.mrf.mxu0
  %v382 = vadd.f32 0.0, %v381
  %383 = vmatmul.bf16.gmra.mxu0 %v180
  %v384 = vpop.f32.mrf.mxu0
  %v385 = vadd.f32 0.0, %v384
  %v386 = vpop.f32.mrf.mxu0
  %v387 = vadd.f32 0.0, %v386
  %388 = vmatmul.bf16.gmra.mxu0 %v182
  %v389 = vpop.f32.mrf.mxu0
  %v390 = vadd.f32 0.0, %v389
  %v391 = vpop.f32.mrf.mxu0
  %v392 = vadd.f32 0.0, %v391
  %393 = vmatmul.bf16.gmra.mxu0 %v184
  %v394 = vpop.f32.mrf.mxu0
  %v395 = vadd.f32 0.0, %v394
  %v396 = vpop.f32.mrf.mxu0
  %v397 = vadd.f32 0.0, %v396
  %398 = vmatmul.bf16.gmra.mxu0 %v186
  %v399 = vpop.f32.mrf.mxu0
  %v400 = vadd.f32 0.0, %v399
  %v401 = vpop.f32.mrf.mxu0
  %v402 = vadd.f32 0.0, %v401
  %403 = vmatmul.bf16.gmra.mxu0 %v188
  %v404 = vpop.f32.mrf.mxu0
  %v405 = vadd.f32 0.0, %v404
  %v406 = vpop.f32.mrf.mxu0
  %v407 = vadd.f32 0.0, %v406
  %408 = vmatmul.bf16.gmra.mxu0 %v190
  %v409 = vpop.f32.mrf.mxu0
  %v410 = vadd.f32 0.0, %v409
  %v411 = vpop.f32.mrf.mxu0
  %v412 = vadd.f32 0.0, %v411
  %413 = vmatmul.bf16.gmra.mxu0 %v192
  %v414 = vpop.f32.mrf.mxu0
  %v415 = vadd.f32 0.0, %v414
  %v416 = vpop.f32.mrf.mxu0
  %v417 = vadd.f32 0.0, %v416
  %418 = vdwg.mxu0
  %419 = vmatpush.bf16.msra.mxu0 %v336
  %420 = vmatpush.bf16.msra.mxu0 %v334
  %421 = vmatpush.bf16.msra.mxu0 %v332
  %422 = vmatpush.bf16.msra.mxu0 %v330
  %423 = vmatpush.bf16.msra.mxu0 %v328
  %424 = vmatpush.bf16.msra.mxu0 %v326
  %425 = vmatpush.bf16.msra.mxu0 %v324
  %426 = vmatpush.bf16.msra.mxu0 %v322
  %427 = vmatmul.bf16.gmra.mxu0 %v179
  %v428 = vpop.f32.mrf.mxu0
  %v429 = vadd.f32 %v380, %v428
  %v430 = vpop.f32.mrf.mxu0
  %v431 = vadd.f32 %v382, %v430
  %432 = vmatmul.bf16.gmra.mxu0 %v181
  %v433 = vpop.f32.mrf.mxu0
  %v434 = vadd.f32 %v385, %v433
  %v435 = vpop.f32.mrf.mxu0
  %v436 = vadd.f32 %v387, %v435
  %437 = vmatmul.bf16.gmra.mxu0 %v183
  %v438 = vpop.f32.mrf.mxu0
  %v439 = vadd.f32 %v390, %v438
  %v440 = vpop.f32.mrf.mxu0
  %v441 = vadd.f32 %v392, %v440
  %442 = vmatmul.bf16.gmra.mxu0 %v185
  %v443 = vpop.f32.mrf.mxu0
  %v444 = vadd.f32 %v395, %v443
  %v445 = vpop.f32.mrf.mxu0
  %v446 = vadd.f32 %v397, %v445
  %447 = vmatmul.bf16.gmra.mxu0 %v187
  %v448 = vpop.f32.mrf.mxu0
  %v449 = vadd.f32 %v400, %v448
  %v450 = vpop.f32.mrf.mxu0
  %v451 = vadd.f32 %v402, %v450
  %452 = vmatmul.bf16.gmra.mxu0 %v189
  %v453 = vpop.f32.mrf.mxu0
  %v454 = vadd.f32 %v405, %v453
  %v455 = vpop.f32.mrf.mxu0
  %v456 = vadd.f32 %v407, %v455
  %457 = vmatmul.bf16.gmra.mxu0 %v191
  %v458 = vpop.f32.mrf.mxu0
  %v459 = vadd.f32 %v410, %v458
  %v460 = vpop.f32.mrf.mxu0
  %v461 = vadd.f32 %v412, %v460
  %462 = vmatmul.bf16.gmra.mxu0 %v193
  %v463 = vpop.f32.mrf.mxu0
  %v464 = vadd.f32 %v415, %v463
  %v465 = vpop.f32.mrf.mxu0
  %v466 = vadd.f32 %v417, %v465
  %467 = vdwg.mxu0
  %468 = vmatpush.bf16.msra.mxu0 %v321
  %469 = vmatpush.bf16.msra.mxu0 %v319
  %470 = vmatpush.bf16.msra.mxu0 %v317
  %471 = vmatpush.bf16.msra.mxu0 %v315
  %472 = vmatpush.bf16.msra.mxu0 %v313
  %473 = vmatpush.bf16.msra.mxu0 %v311
  %474 = vmatpush.bf16.msra.mxu0 %v309
  %475 = vmatpush.bf16.msra.mxu0 %v307
  %476 = vmatmul.bf16.gmra.mxu0 %v178
  %v477 = vpop.f32.mrf.mxu0
  %v478 = vadd.f32 0.0, %v477
  %v479 = vpop.f32.mrf.mxu0
  %v480 = vadd.f32 0.0, %v479
  %481 = vmatmul.bf16.gmra.mxu0 %v180
  %v482 = vpop.f32.mrf.mxu0
  %v483 = vadd.f32 0.0, %v482
  %v484 = vpop.f32.mrf.mxu0
  %v485 = vadd.f32 0.0, %v484
  %486 = vmatmul.bf16.gmra.mxu0 %v182
  %v487 = vpop.f32.mrf.mxu0
  %v488 = vadd.f32 0.0, %v487
  %v489 = vpop.f32.mrf.mxu0
  %v490 = vadd.f32 0.0, %v489
  %491 = vmatmul.bf16.gmra.mxu0 %v184
  %v492 = vpop.f32.mrf.mxu0
  %v493 = vadd.f32 0.0, %v492
  %v494 = vpop.f32.mrf.mxu0
  %v495 = vadd.f32 0.0, %v494
  %496 = vmatmul.bf16.gmra.mxu0 %v186
  %v497 = vpop.f32.mrf.mxu0
  %v498 = vadd.f32 0.0, %v497
  %v499 = vpop.f32.mrf.mxu0
  %v500 = vadd.f32 0.0, %v499
  %501 = vmatmul.bf16.gmra.mxu0 %v188
  %v502 = vpop.f32.mrf.mxu0
  %v503 = vadd.f32 0.0, %v502
  %v504 = vpop.f32.mrf.mxu0
  %v505 = vadd.f32 0.0, %v504
  %506 = vmatmul.bf16.gmra.mxu0 %v190
  %v507 = vpop.f32.mrf.mxu0
  %v508 = vadd.f32 0.0, %v507
  %v509 = vpop.f32.mrf.mxu0
  %v510 = vadd.f32 0.0, %v509
  %511 = vmatmul.bf16.gmra.mxu0 %v192
  %v512 = vpop.f32.mrf.mxu0
  %v513 = vadd.f32 0.0, %v512
  %v514 = vpop.f32.mrf.mxu0
  %v515 = vadd.f32 0.0, %v514
  %516 = vdwg.mxu0
  %517 = vmatpush.bf16.msra.mxu0 %v337
  %518 = vmatpush.bf16.msra.mxu0 %v335
  %519 = vmatpush.bf16.msra.mxu0 %v333
  %520 = vmatpush.bf16.msra.mxu0 %v331
  %521 = vmatpush.bf16.msra.mxu0 %v329
  %522 = vmatpush.bf16.msra.mxu0 %v327
  %523 = vmatpush.bf16.msra.mxu0 %v325
  %524 = vmatpush.bf16.msra.mxu0 %v323
  %525 = vmatmul.bf16.gmra.mxu0 %v179
  %v526 = vpop.f32.mrf.mxu0
  %v527 = vadd.f32 %v478, %v526
  %v528 = vpop.f32.mrf.mxu0
  %v529 = vadd.f32 %v480, %v528
  %530 = vmatmul.bf16.gmra.mxu0 %v181
  %v531 = vpop.f32.mrf.mxu0
  %v532 = vadd.f32 %v483, %v531
  %v533 = vpop.f32.mrf.mxu0
  %v534 = vadd.f32 %v485, %v533
  %535 = vmatmul.bf16.gmra.mxu0 %v183
  %v536 = vpop.f32.mrf.mxu0
  %v537 = vadd.f32 %v488, %v536
  %v538 = vpop.f32.mrf.mxu0
  %v539 = vadd.f32 %v490, %v538
  %540 = vmatmul.bf16.gmra.mxu0 %v185
  %v541 = vpop.f32.mrf.mxu0
  %v542 = vadd.f32 %v493, %v541
  %v543 = vpop.f32.mrf.mxu0
  %v544 = vadd.f32 %v495, %v543
  %545 = vmatmul.bf16.gmra.mxu0 %v187
  %v546 = vpop.f32.mrf.mxu0
  %v547 = vadd.f32 %v498, %v546
  %v548 = vpop.f32.mrf.mxu0
  %v549 = vadd.f32 %v500, %v548
  %550 = vmatmul.bf16.gmra.mxu0 %v189
  %v551 = vpop.f32.mrf.mxu0
  %v552 = vadd.f32 %v503, %v551
  %v553 = vpop.f32.mrf.mxu0
  %v554 = vadd.f32 %v505, %v553
  %555 = vmatmul.bf16.gmra.mxu0 %v191
  %v556 = vpop.f32.mrf.mxu0
  %v557 = vadd.f32 %v508, %v556
  %v558 = vpop.f32.mrf.mxu0
  %v559 = vadd.f32 %v510, %v558
  %560 = vmatmul.bf16.gmra.mxu0 %v193
  %v561 = vpop.f32.mrf.mxu0
  %v562 = vadd.f32 %v513, %v561
  %v563 = vpop.f32.mrf.mxu0
  %v564 = vadd.f32 %v515, %v563
  %565 = vdwg.mxu0
  %v566 = vadd.f32 %v50, %v429
  %v567 = vadd.f32 %v51, %v527
  %v568 = vadd.f32 %v52, %v431
  %v569 = vadd.f32 %v53, %v529
  %v570 = vadd.f32 %v54, %v434
  %v571 = vadd.f32 %v55, %v532
  %v572 = vadd.f32 %v56, %v436
  %v573 = vadd.f32 %v57, %v534
  %v574 = vadd.f32 %v58, %v439
  %v575 = vadd.f32 %v59, %v537
  %v576 = vadd.f32 %v60, %v441
  %v577 = vadd.f32 %v61, %v539
  %v578 = vadd.f32 %v62, %v444
  %v579 = vadd.f32 %v63, %v542
  %v580 = vadd.f32 %v64, %v446
  %v581 = vadd.f32 %v65, %v544
  %v582 = vadd.f32 %v66, %v449
  %v583 = vadd.f32 %v67, %v547
  %v584 = vadd.f32 %v68, %v451
  %v585 = vadd.f32 %v69, %v549
  %v586 = vadd.f32 %v70, %v454
  %v587 = vadd.f32 %v71, %v552
  %v588 = vadd.f32 %v72, %v456
  %v589 = vadd.f32 %v73, %v554
  %v590 = vadd.f32 %v74, %v459
  %v591 = vadd.f32 %v75, %v557
  %v592 = vadd.f32 %v76, %v461
  %v593 = vadd.f32 %v77, %v559
  %v594 = vadd.f32 %v78, %v464
  %v595 = vadd.f32 %v79, %v562
  %v596 = vadd.f32 %v80, %v466
  %v597 = vadd.f32 %v81, %v564
  %598 = vst [vmem:[#allocation2] sm:$0xff] %v566
  %599 = vst [vmem:[#allocation2 + $0x8] sm:$0xff] %v567
  %600 = vst [vmem:[#allocation2 + $0x10] sm:$0xff] %v568
  %601 = vst [vmem:[#allocation2 + $0x18] sm:$0xff] %v569
  %602 = vst [vmem:[#allocation2 + $0x20] sm:$0xff] %v570
  %603 = vst [vmem:[#allocation2 + $0x28] sm:$0xff] %v571
  %604 = vst [vmem:[#allocation2 + $0x30] sm:$0xff] %v572
  %605 = vst [vmem:[#allocation2 + $0x38] sm:$0xff] %v573
  %606 = vst [vmem:[#allocation2 + $0x40] sm:$0xff] %v574
  %607 = vst [vmem:[#allocation2 + $0x48] sm:$0xff] %v575
  %608 = vst [vmem:[#allocation2 + $0x50] sm:$0xff] %v576
  %609 = vst [vmem:[#allocation2 + $0x58] sm:$0xff] %v577
  %610 = vst [vmem:[#allocation2 + $0x60] sm:$0xff] %v578
  %611 = vst [vmem:[#allocation2 + $0x68] sm:$0xff] %v579
  %612 = vst [vmem:[#allocation2 + $0x70] sm:$0xff] %v580
  %613 = vst [vmem:[#allocation2 + $0x78] sm:$0xff] %v581
  %614 = vst [vmem:[#allocation2 + $0x80] sm:$0xff] %v582
  %615 = vst [vmem:[#allocation2 + $0x88] sm:$0xff] %v583
  %616 = vst [vmem:[#allocation2 + $0x90] sm:$0xff] %v584
  %617 = vst [vmem:[#allocation2 + $0x98] sm:$0xff] %v585
  %618 = vst [vmem:[#allocation2 + $0xa0] sm:$0xff] %v586
  %619 = vst [vmem:[#allocation2 + $0xa8] sm:$0xff] %v587
  %620 = vst [vmem:[#allocation2 + $0xb0] sm:$0xff] %v588
  %621 = vst [vmem:[#allocation2 + $0xb8] sm:$0xff] %v589
  %622 = vst [vmem:[#allocation2 + $0xc0] sm:$0xff] %v590
  %623 = vst [vmem:[#allocation2 + $0xc8] sm:$0xff] %v591
  %624 = vst [vmem:[#allocation2 + $0xd0] sm:$0xff] %v592
  %625 = vst [vmem:[#allocation2 + $0xd8] sm:$0xff] %v593
  %626 = vst [vmem:[#allocation2 + $0xe0] sm:$0xff] %v594
  %627 = vst [vmem:[#allocation2 + $0xe8] sm:$0xff] %v595
  %628 = vst [vmem:[#allocation2 + $0xf0] sm:$0xff] %v596
  %629 = vst [vmem:[#allocation2 + $0xf8] sm:$0xff] %v597
  // Predicated region
  $region18: #{hgnn_encoder_forward.10} parent=0 // pred_check
    %p630 = pneg %p14
  $region19: #{hgnn_encoder_forward.10} parent=0 // pred_check_branch
    %632 = sbr.rel (%p630) target = $region21
  $region20: #{hgnn_encoder_forward.10} parent=0 // pred_region
    %v633 = vld [vmem:[#allocation2] sm:$0xff]
    %v634 = vld [vmem:[#allocation2 + $0x8] sm:$0xff]
    %v635 = vld [vmem:[#allocation2 + $0x10] sm:$0xff]
    %v636 = vld [vmem:[#allocation2 + $0x18] sm:$0xff]
    %v637 = vld [vmem:[#allocation2 + $0x20] sm:$0xff]
    %v638 = vld [vmem:[#allocation2 + $0x28] sm:$0xff]
    %v639 = vld [vmem:[#allocation2 + $0x30] sm:$0xff]
    %v640 = vld [vmem:[#allocation2 + $0x38] sm:$0xff]
    %v641 = vld [vmem:[#allocation2 + $0x40] sm:$0xff]
    %v642 = vld [vmem:[#allocation2 + $0x48] sm:$0xff]
    %v643 = vld [vmem:[#allocation2 + $0x50] sm:$0xff]
    %v644 = vld [vmem:[#allocation2 + $0x58] sm:$0xff]
    %v645 = vld [vmem:[#allocation2 + $0x60] sm:$0xff]
    %v646 = vld [vmem:[#allocation2 + $0x68] sm:$0xff]
    %v647 = vld [vmem:[#allocation2 + $0x70] sm:$0xff]
    %v648 = vld [vmem:[#allocation2 + $0x78] sm:$0xff]
    %v649 = vld [vmem:[#allocation2 + $0x80] sm:$0xff]
    %v650 = vld [vmem:[#allocation2 + $0x88] sm:$0xff]
    %v651 = vld [vmem:[#allocation2 + $0x90] sm:$0xff]
    %v652 = vld [vmem:[#allocation2 + $0x98] sm:$0xff]
    %v653 = vld [vmem:[#allocation2 + $0xa0] sm:$0xff]
    %v654 = vld [vmem:[#allocation2 + $0xa8] sm:$0xff]
    %v655 = vld [vmem:[#allocation2 + $0xb0] sm:$0xff]
    %v656 = vld [vmem:[#allocation2 + $0xb8] sm:$0xff]
    %v657 = vld [vmem:[#allocation2 + $0xc0] sm:$0xff]
    %v658 = vld [vmem:[#allocation2 + $0xc8] sm:$0xff]
    %v659 = vld [vmem:[#allocation2 + $0xd0] sm:$0xff]
    %v660 = vld [vmem:[#allocation2 + $0xd8] sm:$0xff]
    %v661 = vld [vmem:[#allocation2 + $0xe0] sm:$0xff]
    %v662 = vld [vmem:[#allocation2 + $0xe8] sm:$0xff]
    %v663 = vld [vmem:[#allocation2 + $0xf0] sm:$0xff]
    %v664 = vld [vmem:[#allocation2 + $0xf8] sm:$0xff]
    %v665 = vld [vmem:[%s2] sm:$0xff]
    %v666 = vld [vmem:[%s2 + $0x8] sm:$0xff]
    %v667 = vld [vmem:[%s2 + $0x10] sm:$0xff]
    %v668 = vld [vmem:[%s2 + $0x18] sm:$0xff]
    %v669 = vld [vmem:[%s2 + $0x20] sm:$0xff]
    %v670 = vld [vmem:[%s2 + $0x28] sm:$0xff]
    %v671 = vld [vmem:[%s2 + $0x30] sm:$0xff]
    %v672 = vld [vmem:[%s2 + $0x38] sm:$0xff]
    %v673 = vld [vmem:[%s2 + $0x40] sm:$0xff]
    %v674 = vld [vmem:[%s2 + $0x48] sm:$0xff]
    %v675 = vld [vmem:[%s2 + $0x50] sm:$0xff]
    %v676 = vld [vmem:[%s2 + $0x58] sm:$0xff]
    %v677 = vld [vmem:[%s2 + $0x60] sm:$0xff]
    %v678 = vld [vmem:[%s2 + $0x68] sm:$0xff]
    %v679 = vld [vmem:[%s2 + $0x70] sm:$0xff]
    %v680 = vld [vmem:[%s2 + $0x78] sm:$0xff]
    %682 = vset.pattern.permute.xlu0 0
    %683 = vperm.xlu0 %682, %v665
    %v684 = vpop.permute.xlu0 %683
    %687 = vset.pattern.permute.xlu0 0
    %688 = vperm.xlu0 %687, %v666
    %v689 = vpop.permute.xlu0 %688
    %692 = vset.pattern.permute.xlu0 0
    %693 = vperm.xlu0 %692, %v667
    %v694 = vpop.permute.xlu0 %693
    %697 = vset.pattern.permute.xlu0 0
    %698 = vperm.xlu0 %697, %v668
    %v699 = vpop.permute.xlu0 %698
    %702 = vset.pattern.permute.xlu0 0
    %703 = vperm.xlu0 %702, %v669
    %v704 = vpop.permute.xlu0 %703
    %707 = vset.pattern.permute.xlu0 0
    %708 = vperm.xlu0 %707, %v670
    %v709 = vpop.permute.xlu0 %708
    %712 = vset.pattern.permute.xlu0 0
    %713 = vperm.xlu0 %712, %v671
    %v714 = vpop.permute.xlu0 %713
    %717 = vset.pattern.permute.xlu0 0
    %718 = vperm.xlu0 %717, %v672
    %v719 = vpop.permute.xlu0 %718
    %722 = vset.pattern.permute.xlu0 0
    %723 = vperm.xlu0 %722, %v673
    %v724 = vpop.permute.xlu0 %723
    %727 = vset.pattern.permute.xlu0 0
    %728 = vperm.xlu0 %727, %v674
    %v729 = vpop.permute.xlu0 %728
    %732 = vset.pattern.permute.xlu0 0
    %733 = vperm.xlu0 %732, %v675
    %v734 = vpop.permute.xlu0 %733
    %737 = vset.pattern.permute.xlu0 0
    %738 = vperm.xlu0 %737, %v676
    %v739 = vpop.permute.xlu0 %738
    %742 = vset.pattern.permute.xlu0 0
    %743 = vperm.xlu0 %742, %v677
    %v744 = vpop.permute.xlu0 %743
    %747 = vset.pattern.permute.xlu0 0
    %748 = vperm.xlu0 %747, %v678
    %v749 = vpop.permute.xlu0 %748
    %752 = vset.pattern.permute.xlu0 0
    %753 = vperm.xlu0 %752, %v679
    %v754 = vpop.permute.xlu0 %753
    %757 = vset.pattern.permute.xlu0 0
    %758 = vperm.xlu0 %757, %v680
    %v759 = vpop.permute.xlu0 %758
    %v761 = vmul.f32 %v633, %v684
    %v762 = vmul.f32 %v634, %v684
    %v763 = vmul.f32 %v635, %v689
    %v764 = vmul.f32 %v636, %v689
    %v765 = vmul.f32 %v637, %v694
    %v766 = vmul.f32 %v638, %v694
    %v767 = vmul.f32 %v639, %v699
    %v768 = vmul.f32 %v640, %v699
    %v769 = vmul.f32 %v641, %v704
    %v770 = vmul.f32 %v642, %v704
    %v771 = vmul.f32 %v643, %v709
    %v772 = vmul.f32 %v644, %v709
    %v773 = vmul.f32 %v645, %v714
    %v774 = vmul.f32 %v646, %v714
    %v775 = vmul.f32 %v647, %v719
    %v776 = vmul.f32 %v648, %v719
    %v777 = vmul.f32 %v649, %v724
    %v778 = vmul.f32 %v650, %v724
    %v779 = vmul.f32 %v651, %v729
    %v780 = vmul.f32 %v652, %v729
    %v781 = vmul.f32 %v653, %v734
    %v782 = vmul.f32 %v654, %v734
    %v783 = vmul.f32 %v655, %v739
    %v784 = vmul.f32 %v656, %v739
    %v785 = vmul.f32 %v657, %v744
    %v786 = vmul.f32 %v658, %v744
    %v787 = vmul.f32 %v659, %v749
    %v788 = vmul.f32 %v660, %v749
    %v789 = vmul.f32 %v661, %v754
    %v790 = vmul.f32 %v662, %v754
    %v791 = vmul.f32 %v663, %v759
    %v792 = vmul.f32 %v664, %v759
    %v793 = vpack.c.bf16 %v762, %v761
    %v794 = vpack.c.bf16 %v764, %v763
    %v795 = vpack.c.bf16 %v766, %v765
    %v796 = vpack.c.bf16 %v768, %v767
    %v797 = vpack.c.bf16 %v770, %v769
    %v798 = vpack.c.bf16 %v772, %v771
    %v799 = vpack.c.bf16 %v774, %v773
    %v800 = vpack.c.bf16 %v776, %v775
    %v801 = vpack.c.bf16 %v778, %v777
    %v802 = vpack.c.bf16 %v780, %v779
    %v803 = vpack.c.bf16 %v782, %v781
    %v804 = vpack.c.bf16 %v784, %v783
    %v805 = vpack.c.bf16 %v786, %v785
    %v806 = vpack.c.bf16 %v788, %v787
    %v807 = vpack.c.bf16 %v790, %v789
    %v808 = vpack.c.bf16 %v792, %v791
    %809 = vst [vmem:[%s3] sm:$0xff] %v793
    %810 = vst [vmem:[%s3 + $0x8] sm:$0xff] %v794
    %811 = vst [vmem:[%s3 + $0x10] sm:$0xff] %v795
    %812 = vst [vmem:[%s3 + $0x18] sm:$0xff] %v796
    %813 = vst [vmem:[%s3 + $0x20] sm:$0xff] %v797
    %814 = vst [vmem:[%s3 + $0x28] sm:$0xff] %v798
    %815 = vst [vmem:[%s3 + $0x30] sm:$0xff] %v799
    %816 = vst [vmem:[%s3 + $0x38] sm:$0xff] %v800
    %817 = vst [vmem:[%s3 + $0x40] sm:$0xff] %v801
    %818 = vst [vmem:[%s3 + $0x48] sm:$0xff] %v802
    %819 = vst [vmem:[%s3 + $0x50] sm:$0xff] %v803
    %820 = vst [vmem:[%s3 + $0x58] sm:$0xff] %v804
    %821 = vst [vmem:[%s3 + $0x60] sm:$0xff] %v805
    %822 = vst [vmem:[%s3 + $0x68] sm:$0xff] %v806
    %823 = vst [vmem:[%s3 + $0x70] sm:$0xff] %v807
    %824 = vst [vmem:[%s3 + $0x78] sm:$0xff] %v808
  $region21: #{hgnn_encoder_forward.10} parent=0 // pred_fallthru
    _
  // Predicated region
  $region22: #{hgnn_encoder_forward.10} parent=0 // pred_check
    _
  $region23: #{hgnn_encoder_forward.10} parent=0 // pred_check_branch
    %826 = sbr.rel (0) target = $region25
  $region24: #{hgnn_encoder_forward.10} parent=0 // pred_region
    _
  $region25: #{hgnn_encoder_forward.10} parent=0 // pred_fallthru
    _
  // Predicated region
  $region26: #{hgnn_encoder_forward.10} parent=0 // pred_check
    _
  $region27: #{hgnn_encoder_forward.10} parent=0 // pred_check_branch
    %828 = sbr.rel (0) target = $region29
  $region28: #{hgnn_encoder_forward.10} parent=0 // pred_region
    _
  $region29: #{hgnn_encoder_forward.10} parent=0 // pred_fallthru
    _

// kernel: hgnn_encoder_forward.12
$region0: #{hgnn_encoder_forward.12}
  #allocation0 [shape = 'u32[]', space=smem, size = 0x4, offset = 0x4, fixed_abs, tag = 'smem constant byte address 0x4 - core index']
  #allocation1 [shape = 'u32[72,128]{1,0:T(1,128)}', space=vmem, size = 0x9000, scoped, tag = 'internal scratch']
  %s0 = inlined_call_operand.vmem [shape: bf16[256,256], index: 0, kind: input, shape index: {}]
  %s1 = inlined_call_operand.vmem [shape: f32[1,256], index: 1, kind: input, shape index: {}]
  %s2 = inlined_call_operand.vmem [shape: f32[1,256], index: 2, kind: input, shape index: {}]
  %s3 = inlined_call_operand.vmem [shape: bf16[256,256], index: 3, kind: input, shape index: {}]
  %s4 = inlined_call_operand.vmem [shape: bf16[256,256], index: 4, kind: output, shape index: {}]
  %s5 = sld [smem:[#allocation0]]
  $region26: #{hgnn_encoder_forward.12} parent=0
    _
  %s7 = ssub.s32 1, %s5
  %s8 = scalar_select 0, %s7, %s5
  // Predicated region
  $region2: #{hgnn_encoder_forward.12} parent=0 // pred_check
    _
  $region3: #{hgnn_encoder_forward.12} parent=0 // pred_check_branch
    %10 = sbr.rel (0) target = $region5
  $region4: #{hgnn_encoder_forward.12} parent=0 // pred_region
    _
  $region5: #{hgnn_encoder_forward.12} parent=0 // pred_fallthru
    _
  // Predicated region
  $region6: #{hgnn_encoder_forward.12} parent=0 // pred_check
    _
  $region7: #{hgnn_encoder_forward.12} parent=0 // pred_check_branch
    %12 = sbr.rel (0) target = $region9
  $region8: #{hgnn_encoder_forward.12} parent=0 // pred_region
    _
  $region9: #{hgnn_encoder_forward.12} parent=0 // pred_fallthru
    _
  // Predicated region
  $region10: #{hgnn_encoder_forward.12} parent=0 // pred_check
    _
  $region11: #{hgnn_encoder_forward.12} parent=0 // pred_check_branch
    %14 = sbr.rel (0) target = $region13
  $region12: #{hgnn_encoder_forward.12} parent=0 // pred_region
    _
  $region13: #{hgnn_encoder_forward.12} parent=0 // pred_fallthru
    _
  // Predicated region
  $region14: #{hgnn_encoder_forward.12} parent=0 // pred_check
    _
  $region15: #{hgnn_encoder_forward.12} parent=0 // pred_check_branch
    %16 = sbr.rel (0) target = $region17
  $region16: #{hgnn_encoder_forward.12} parent=0 // pred_region
    _
  $region17: #{hgnn_encoder_forward.12} parent=0 // pred_fallthru
    _
  %v17 = vld [vmem:[%s0] sm:$0xff]
  %v18 = vld [vmem:[%s0 + $0x8] sm:$0xff]
  %v19 = vld [vmem:[%s0 + $0x10] sm:$0xff]
  %v20 = vld [vmem:[%s0 + $0x18] sm:$0xff]
  %v21 = vld [vmem:[%s0 + $0x20] sm:$0xff]
  %v22 = vld [vmem:[%s0 + $0x28] sm:$0xff]
  %v23 = vld [vmem:[%s0 + $0x30] sm:$0xff]
  %v24 = vld [vmem:[%s0 + $0x38] sm:$0xff]
  %v25 = vld [vmem:[%s0 + $0x40] sm:$0xff]
  %v26 = vld [vmem:[%s0 + $0x48] sm:$0xff]
  %v27 = vld [vmem:[%s0 + $0x50] sm:$0xff]
  %v28 = vld [vmem:[%s0 + $0x58] sm:$0xff]
  %v29 = vld [vmem:[%s0 + $0x60] sm:$0xff]
  %v30 = vld [vmem:[%s0 + $0x68] sm:$0xff]
  %v31 = vld [vmem:[%s0 + $0x70] sm:$0xff]
  %v32 = vld [vmem:[%s0 + $0x78] sm:$0xff]
  %v33 = vld [vmem:[%s0 + $0x80] sm:$0xff]
  %v34 = vld [vmem:[%s0 + $0x88] sm:$0xff]
  %v35 = vld [vmem:[%s0 + $0x90] sm:$0xff]
  %v36 = vld [vmem:[%s0 + $0x98] sm:$0xff]
  %v37 = vld [vmem:[%s0 + $0xa0] sm:$0xff]
  %v38 = vld [vmem:[%s0 + $0xa8] sm:$0xff]
  %v39 = vld [vmem:[%s0 + $0xb0] sm:$0xff]
  %v40 = vld [vmem:[%s0 + $0xb8] sm:$0xff]
  %v41 = vld [vmem:[%s0 + $0xc0] sm:$0xff]
  %v42 = vld [vmem:[%s0 + $0xc8] sm:$0xff]
  %v43 = vld [vmem:[%s0 + $0xd0] sm:$0xff]
  %v44 = vld [vmem:[%s0 + $0xd8] sm:$0xff]
  %v45 = vld [vmem:[%s0 + $0xe0] sm:$0xff]
  %v46 = vld [vmem:[%s0 + $0xe8] sm:$0xff]
  %v47 = vld [vmem:[%s0 + $0xf0] sm:$0xff]
  %v48 = vld [vmem:[%s0 + $0xf8] sm:$0xff]
  %v49 = vunpack.c.l.bf16 %v17
  %v50 = vunpack.c.h.bf16 %v17
  %v51 = vunpack.c.l.bf16 %v18
  %v52 = vunpack.c.h.bf16 %v18
  %v53 = vunpack.c.l.bf16 %v19
  %v54 = vunpack.c.h.bf16 %v19
  %v55 = vunpack.c.l.bf16 %v20
  %v56 = vunpack.c.h.bf16 %v20
  %v57 = vunpack.c.l.bf16 %v21
  %v58 = vunpack.c.h.bf16 %v21
  %v59 = vunpack.c.l.bf16 %v22
  %v60 = vunpack.c.h.bf16 %v22
  %v61 = vunpack.c.l.bf16 %v23
  %v62 = vunpack.c.h.bf16 %v23
  %v63 = vunpack.c.l.bf16 %v24
  %v64 = vunpack.c.h.bf16 %v24
  %v65 = vunpack.c.l.bf16 %v25
  %v66 = vunpack.c.h.bf16 %v25
  %v67 = vunpack.c.l.bf16 %v26
  %v68 = vunpack.c.h.bf16 %v26
  %v69 = vunpack.c.l.bf16 %v27
  %v70 = vunpack.c.h.bf16 %v27
  %v71 = vunpack.c.l.bf16 %v28
  %v72 = vunpack.c.h.bf16 %v28
  %v73 = vunpack.c.l.bf16 %v29
  %v74 = vunpack.c.h.bf16 %v29
  %v75 = vunpack.c.l.bf16 %v30
  %v76 = vunpack.c.h.bf16 %v30
  %v77 = vunpack.c.l.bf16 %v31
  %v78 = vunpack.c.h.bf16 %v31
  %v79 = vunpack.c.l.bf16 %v32
  %v80 = vunpack.c.h.bf16 %v32
  %v81 = vunpack.c.l.bf16 %v33
  %v82 = vunpack.c.h.bf16 %v33
  %v83 = vunpack.c.l.bf16 %v34
  %v84 = vunpack.c.h.bf16 %v34
  %v85 = vunpack.c.l.bf16 %v35
  %v86 = vunpack.c.h.bf16 %v35
  %v87 = vunpack.c.l.bf16 %v36
  %v88 = vunpack.c.h.bf16 %v36
  %v89 = vunpack.c.l.bf16 %v37
  %v90 = vunpack.c.h.bf16 %v37
  %v91 = vunpack.c.l.bf16 %v38
  %v92 = vunpack.c.h.bf16 %v38
  %v93 = vunpack.c.l.bf16 %v39
  %v94 = vunpack.c.h.bf16 %v39
  %v95 = vunpack.c.l.bf16 %v40
  %v96 = vunpack.c.h.bf16 %v40
  %v97 = vunpack.c.l.bf16 %v41
  %v98 = vunpack.c.h.bf16 %v41
  %v99 = vunpack.c.l.bf16 %v42
  %v100 = vunpack.c.h.bf16 %v42
  %v101 = vunpack.c.l.bf16 %v43
  %v102 = vunpack.c.h.bf16 %v43
  %v103 = vunpack.c.l.bf16 %v44
  %v104 = vunpack.c.h.bf16 %v44
  %v105 = vunpack.c.l.bf16 %v45
  %v106 = vunpack.c.h.bf16 %v45
  %v107 = vunpack.c.l.bf16 %v46
  %v108 = vunpack.c.h.bf16 %v46
  %v109 = vunpack.c.l.bf16 %v47
  %v110 = vunpack.c.h.bf16 %v47
  %v111 = vunpack.c.l.bf16 %v48
  %v112 = vunpack.c.h.bf16 %v48
  %v113 = vld [vmem:[%s1] sm:$0x3]
  %v115 = vperm.slane %v113, 0
  %v116 = vperm.slane %v113, 1
  %v119 = vmul.f32 %v49, %v115
  %v120 = vmul.f32 %v50, %v116
  %v121 = vmul.f32 %v51, %v115
  %v122 = vmul.f32 %v52, %v116
  %v123 = vmul.f32 %v53, %v115
  %v124 = vmul.f32 %v54, %v116
  %v125 = vmul.f32 %v55, %v115
  %v126 = vmul.f32 %v56, %v116
  %v127 = vmul.f32 %v57, %v115
  %v128 = vmul.f32 %v58, %v116
  %v129 = vmul.f32 %v59, %v115
  %v130 = vmul.f32 %v60, %v116
  %v131 = vmul.f32 %v61, %v115
  %v132 = vmul.f32 %v62, %v116
  %v133 = vmul.f32 %v63, %v115
  %v134 = vmul.f32 %v64, %v116
  %v135 = vmul.f32 %v65, %v115
  %v136 = vmul.f32 %v66, %v116
  %v137 = vmul.f32 %v67, %v115
  %v138 = vmul.f32 %v68, %v116
  %v139 = vmul.f32 %v69, %v115
  %v140 = vmul.f32 %v70, %v116
  %v141 = vmul.f32 %v71, %v115
  %v142 = vmul.f32 %v72, %v116
  %v143 = vmul.f32 %v73, %v115
  %v144 = vmul.f32 %v74, %v116
  %v145 = vmul.f32 %v75, %v115
  %v146 = vmul.f32 %v76, %v116
  %v147 = vmul.f32 %v77, %v115
  %v148 = vmul.f32 %v78, %v116
  %v149 = vmul.f32 %v79, %v115
  %v150 = vmul.f32 %v80, %v116
  %v151 = vmul.f32 %v81, %v115
  %v152 = vmul.f32 %v82, %v116
  %v153 = vmul.f32 %v83, %v115
  %v154 = vmul.f32 %v84, %v116
  %v155 = vmul.f32 %v85, %v115
  %v156 = vmul.f32 %v86, %v116
  %v157 = vmul.f32 %v87, %v115
  %v158 = vmul.f32 %v88, %v116
  %v159 = vmul.f32 %v89, %v115
  %v160 = vmul.f32 %v90, %v116
  %v161 = vmul.f32 %v91, %v115
  %v162 = vmul.f32 %v92, %v116
  %v163 = vmul.f32 %v93, %v115
  %v164 = vmul.f32 %v94, %v116
  %v165 = vmul.f32 %v95, %v115
  %v166 = vmul.f32 %v96, %v116
  %v167 = vmul.f32 %v97, %v115
  %v168 = vmul.f32 %v98, %v116
  %v169 = vmul.f32 %v99, %v115
  %v170 = vmul.f32 %v100, %v116
  %v171 = vmul.f32 %v101, %v115
  %v172 = vmul.f32 %v102, %v116
  %v173 = vmul.f32 %v103, %v115
  %v174 = vmul.f32 %v104, %v116
  %v175 = vmul.f32 %v105, %v115
  %v176 = vmul.f32 %v106, %v116
  %v177 = vmul.f32 %v107, %v115
  %v178 = vmul.f32 %v108, %v116
  %v179 = vmul.f32 %v109, %v115
  %v180 = vmul.f32 %v110, %v116
  %v181 = vmul.f32 %v111, %v115
  %v182 = vmul.f32 %v112, %v116
  %v183 = vld [vmem:[%s2] sm:$0x3]
  %v185 = vperm.slane %v183, 0
  %v186 = vperm.slane %v183, 1
  %v189 = vadd.f32 %v119, %v185
  %v190 = vadd.f32 %v120, %v186
  %v191 = vadd.f32 %v121, %v185
  %v192 = vadd.f32 %v122, %v186
  %v193 = vadd.f32 %v123, %v185
  %v194 = vadd.f32 %v124, %v186
  %v195 = vadd.f32 %v125, %v185
  %v196 = vadd.f32 %v126, %v186
  %v197 = vadd.f32 %v127, %v185
  %v198 = vadd.f32 %v128, %v186
  %v199 = vadd.f32 %v129, %v185
  %v200 = vadd.f32 %v130, %v186
  %v201 = vadd.f32 %v131, %v185
  %v202 = vadd.f32 %v132, %v186
  %v203 = vadd.f32 %v133, %v185
  %v204 = vadd.f32 %v134, %v186
  %v205 = vadd.f32 %v135, %v185
  %v206 = vadd.f32 %v136, %v186
  %v207 = vadd.f32 %v137, %v185
  %v208 = vadd.f32 %v138, %v186
  %v209 = vadd.f32 %v139, %v185
  %v210 = vadd.f32 %v140, %v186
  %v211 = vadd.f32 %v141, %v185
  %v212 = vadd.f32 %v142, %v186
  %v213 = vadd.f32 %v143, %v185
  %v214 = vadd.f32 %v144, %v186
  %v215 = vadd.f32 %v145, %v185
  %v216 = vadd.f32 %v146, %v186
  %v217 = vadd.f32 %v147, %v185
  %v218 = vadd.f32 %v148, %v186
  %v219 = vadd.f32 %v149, %v185
  %v220 = vadd.f32 %v150, %v186
  %v221 = vadd.f32 %v151, %v185
  %v222 = vadd.f32 %v152, %v186
  %v223 = vadd.f32 %v153, %v185
  %v224 = vadd.f32 %v154, %v186
  %v225 = vadd.f32 %v155, %v185
  %v226 = vadd.f32 %v156, %v186
  %v227 = vadd.f32 %v157, %v185
  %v228 = vadd.f32 %v158, %v186
  %v229 = vadd.f32 %v159, %v185
  %v230 = vadd.f32 %v160, %v186
  %v231 = vadd.f32 %v161, %v185
  %v232 = vadd.f32 %v162, %v186
  %v233 = vadd.f32 %v163, %v185
  %v234 = vadd.f32 %v164, %v186
  %v235 = vadd.f32 %v165, %v185
  %v236 = vadd.f32 %v166, %v186
  %v237 = vadd.f32 %v167, %v185
  %v238 = vadd.f32 %v168, %v186
  %v239 = vadd.f32 %v169, %v185
  %v240 = vadd.f32 %v170, %v186
  %v241 = vadd.f32 %v171, %v185
  %v242 = vadd.f32 %v172, %v186
  %v243 = vadd.f32 %v173, %v185
  %v244 = vadd.f32 %v174, %v186
  %v245 = vadd.f32 %v175, %v185
  %v246 = vadd.f32 %v176, %v186
  %v247 = vadd.f32 %v177, %v185
  %v248 = vadd.f32 %v178, %v186
  %v249 = vadd.f32 %v179, %v185
  %v250 = vadd.f32 %v180, %v186
  %v251 = vadd.f32 %v181, %v185
  %v252 = vadd.f32 %v182, %v186
  %v253 = vpack.c.bf16 %v191, %v189
  %v254 = vpack.c.bf16 %v192, %v190
  %v255 = vpack.c.bf16 %v195, %v193
  %v256 = vpack.c.bf16 %v196, %v194
  %v257 = vpack.c.bf16 %v199, %v197
  %v258 = vpack.c.bf16 %v200, %v198
  %v259 = vpack.c.bf16 %v203, %v201
  %v260 = vpack.c.bf16 %v204, %v202
  %v261 = vpack.c.bf16 %v207, %v205
  %v262 = vpack.c.bf16 %v208, %v206
  %v263 = vpack.c.bf16 %v211, %v209
  %v264 = vpack.c.bf16 %v212, %v210
  %v265 = vpack.c.bf16 %v215, %v213
  %v266 = vpack.c.bf16 %v216, %v214
  %v267 = vpack.c.bf16 %v219, %v217
  %v268 = vpack.c.bf16 %v220, %v218
  %v269 = vpack.c.bf16 %v223, %v221
  %v270 = vpack.c.bf16 %v224, %v222
  %v271 = vpack.c.bf16 %v227, %v225
  %v272 = vpack.c.bf16 %v228, %v226
  %v273 = vpack.c.bf16 %v231, %v229
  %v274 = vpack.c.bf16 %v232, %v230
  %v275 = vpack.c.bf16 %v235, %v233
  %v276 = vpack.c.bf16 %v236, %v234
  %v277 = vpack.c.bf16 %v239, %v237
  %v278 = vpack.c.bf16 %v240, %v238
  %v279 = vpack.c.bf16 %v243, %v241
  %v280 = vpack.c.bf16 %v244, %v242
  %v281 = vpack.c.bf16 %v247, %v245
  %v282 = vpack.c.bf16 %v248, %v246
  %v283 = vpack.c.bf16 %v251, %v249
  %v284 = vpack.c.bf16 %v252, %v250
  %v285 = vld [vmem:[%s3] sm:$0xff]
  %v286 = vld [vmem:[%s3 + $0x8] sm:$0xff]
  %v287 = vld [vmem:[%s3 + $0x10] sm:$0xff]
  %v288 = vld [vmem:[%s3 + $0x18] sm:$0xff]
  %v289 = vld [vmem:[%s3 + $0x20] sm:$0xff]
  %v290 = vld [vmem:[%s3 + $0x28] sm:$0xff]
  %v291 = vld [vmem:[%s3 + $0x30] sm:$0xff]
  %v292 = vld [vmem:[%s3 + $0x38] sm:$0xff]
  %v293 = vld [vmem:[%s3 + $0x40] sm:$0xff]
  %v294 = vld [vmem:[%s3 + $0x48] sm:$0xff]
  %v295 = vld [vmem:[%s3 + $0x50] sm:$0xff]
  %v296 = vld [vmem:[%s3 + $0x58] sm:$0xff]
  %v297 = vld [vmem:[%s3 + $0x60] sm:$0xff]
  %v298 = vld [vmem:[%s3 + $0x68] sm:$0xff]
  %v299 = vld [vmem:[%s3 + $0x70] sm:$0xff]
  %v300 = vld [vmem:[%s3 + $0x78] sm:$0xff]
  %v301 = vld [vmem:[%s3 + $0x80] sm:$0xff]
  %v302 = vld [vmem:[%s3 + $0x88] sm:$0xff]
  %v303 = vld [vmem:[%s3 + $0x90] sm:$0xff]
  %v304 = vld [vmem:[%s3 + $0x98] sm:$0xff]
  %v305 = vld [vmem:[%s3 + $0xa0] sm:$0xff]
  %v306 = vld [vmem:[%s3 + $0xa8] sm:$0xff]
  %v307 = vld [vmem:[%s3 + $0xb0] sm:$0xff]
  %v308 = vld [vmem:[%s3 + $0xb8] sm:$0xff]
  %v309 = vld [vmem:[%s3 + $0xc0] sm:$0xff]
  %v310 = vld [vmem:[%s3 + $0xc8] sm:$0xff]
  %v311 = vld [vmem:[%s3 + $0xd0] sm:$0xff]
  %v312 = vld [vmem:[%s3 + $0xd8] sm:$0xff]
  %v313 = vld [vmem:[%s3 + $0xe0] sm:$0xff]
  %v314 = vld [vmem:[%s3 + $0xe8] sm:$0xff]
  %v315 = vld [vmem:[%s3 + $0xf0] sm:$0xff]
  %v316 = vld [vmem:[%s3 + $0xf8] sm:$0xff]
  %v349 = vunpack.c.l.b16 %v285
  %v350 = vunpack.c.h.b16 %v285
  %v351 = vunpack.c.l.b16 %v286
  %v352 = vunpack.c.h.b16 %v286
  %v353 = vunpack.c.l.b16 %v287
  %v354 = vunpack.c.h.b16 %v287
  %v355 = vunpack.c.l.b16 %v288
  %v356 = vunpack.c.h.b16 %v288
  %v357 = vunpack.c.l.b16 %v289
  %v358 = vunpack.c.h.b16 %v289
  %v359 = vunpack.c.l.b16 %v290
  %v360 = vunpack.c.h.b16 %v290
  %v361 = vunpack.c.l.b16 %v291
  %v362 = vunpack.c.h.b16 %v291
  %v363 = vunpack.c.l.b16 %v292
  %v364 = vunpack.c.h.b16 %v292
  %v365 = vunpack.c.l.b16 %v293
  %v366 = vunpack.c.h.b16 %v293
  %v367 = vunpack.c.l.b16 %v294
  %v368 = vunpack.c.h.b16 %v294
  %v369 = vunpack.c.l.b16 %v295
  %v370 = vunpack.c.h.b16 %v295
  %v371 = vunpack.c.l.b16 %v296
  %v372 = vunpack.c.h.b16 %v296
  %v373 = vunpack.c.l.b16 %v297
  %v374 = vunpack.c.h.b16 %v297
  %v375 = vunpack.c.l.b16 %v298
  %v376 = vunpack.c.h.b16 %v298
  %v377 = vunpack.c.l.b16 %v299
  %v378 = vunpack.c.h.b16 %v299
  %v379 = vunpack.c.l.b16 %v300
  %v380 = vunpack.c.h.b16 %v300
  %v381 = vunpack.c.l.b16 %v301
  %v382 = vunpack.c.h.b16 %v301
  %v383 = vunpack.c.l.b16 %v302
  %v384 = vunpack.c.h.b16 %v302
  %v385 = vunpack.c.l.b16 %v303
  %v386 = vunpack.c.h.b16 %v303
  %v387 = vunpack.c.l.b16 %v304
  %v388 = vunpack.c.h.b16 %v304
  %v389 = vunpack.c.l.b16 %v305
  %v390 = vunpack.c.h.b16 %v305
  %v391 = vunpack.c.l.b16 %v306
  %v392 = vunpack.c.h.b16 %v306
  %v393 = vunpack.c.l.b16 %v307
  %v394 = vunpack.c.h.b16 %v307
  %v395 = vunpack.c.l.b16 %v308
  %v396 = vunpack.c.h.b16 %v308
  %v397 = vunpack.c.l.b16 %v309
  %v398 = vunpack.c.h.b16 %v309
  %v399 = vunpack.c.l.b16 %v310
  %v400 = vunpack.c.h.b16 %v310
  %v401 = vunpack.c.l.b16 %v311
  %v402 = vunpack.c.h.b16 %v311
  %v403 = vunpack.c.l.b16 %v312
  %v404 = vunpack.c.h.b16 %v312
  %v405 = vunpack.c.l.b16 %v313
  %v406 = vunpack.c.h.b16 %v313
  %v407 = vunpack.c.l.b16 %v314
  %v408 = vunpack.c.h.b16 %v314
  %v409 = vunpack.c.l.b16 %v315
  %v410 = vunpack.c.h.b16 %v315
  %v411 = vunpack.c.l.b16 %v316
  %v412 = vunpack.c.h.b16 %v316
  %v413 = vpack.c.b16 %v351, %v349
  %v414 = vpack.c.b16 %v352, %v350
  %v415 = vpack.c.b16 %v355, %v353
  %v416 = vpack.c.b16 %v356, %v354
  %v417 = vpack.c.b16 %v359, %v357
  %v418 = vpack.c.b16 %v360, %v358
  %v419 = vpack.c.b16 %v363, %v361
  %v420 = vpack.c.b16 %v364, %v362
  %v421 = vpack.c.b16 %v367, %v365
  %v422 = vpack.c.b16 %v368, %v366
  %v423 = vpack.c.b16 %v371, %v369
  %v424 = vpack.c.b16 %v372, %v370
  %v425 = vpack.c.b16 %v375, %v373
  %v426 = vpack.c.b16 %v376, %v374
  %v427 = vpack.c.b16 %v379, %v377
  %v428 = vpack.c.b16 %v380, %v378
  %v429 = vpack.c.b16 %v383, %v381
  %v430 = vpack.c.b16 %v384, %v382
  %v431 = vpack.c.b16 %v387, %v385
  %v432 = vpack.c.b16 %v388, %v386
  %v433 = vpack.c.b16 %v391, %v389
  %v434 = vpack.c.b16 %v392, %v390
  %v435 = vpack.c.b16 %v395, %v393
  %v436 = vpack.c.b16 %v396, %v394
  %v437 = vpack.c.b16 %v399, %v397
  %v438 = vpack.c.b16 %v400, %v398
  %v439 = vpack.c.b16 %v403, %v401
  %v440 = vpack.c.b16 %v404, %v402
  %v441 = vpack.c.b16 %v407, %v405
  %v442 = vpack.c.b16 %v408, %v406
  %v443 = vpack.c.b16 %v411, %v409
  %v444 = vpack.c.b16 %v412, %v410
  %477 = vmatpush.bf16.msra.mxu0 %v427
  %478 = vmatpush.bf16.msra.mxu0 %v425
  %479 = vmatpush.bf16.msra.mxu0 %v423
  %480 = vmatpush.bf16.msra.mxu0 %v421
  %481 = vmatpush.bf16.msra.mxu0 %v419
  %482 = vmatpush.bf16.msra.mxu0 %v417
  %483 = vmatpush.bf16.msra.mxu0 %v415
  %484 = vmatpush.bf16.msra.mxu0 %v413
  %485 = vmatmul.bf16.gmra.mxu0 %v253
  %v486 = vpop.f32.mrf.mxu0
  %v487 = vadd.f32 0.0, %v486
  %v488 = vpop.f32.mrf.mxu0
  %v489 = vadd.f32 0.0, %v488
  %490 = vmatmul.bf16.gmra.mxu0 %v255
  %v491 = vpop.f32.mrf.mxu0
  %v492 = vadd.f32 0.0, %v491
  %v493 = vpop.f32.mrf.mxu0
  %v494 = vadd.f32 0.0, %v493
  %495 = vmatmul.bf16.gmra.mxu0 %v257
  %v496 = vpop.f32.mrf.mxu0
  %v497 = vadd.f32 0.0, %v496
  %v498 = vpop.f32.mrf.mxu0
  %v499 = vadd.f32 0.0, %v498
  %500 = vmatmul.bf16.gmra.mxu0 %v259
  %v501 = vpop.f32.mrf.mxu0
  %v502 = vadd.f32 0.0, %v501
  %v503 = vpop.f32.mrf.mxu0
  %v504 = vadd.f32 0.0, %v503
  %505 = vmatmul.bf16.gmra.mxu0 %v261
  %v506 = vpop.f32.mrf.mxu0
  %v507 = vadd.f32 0.0, %v506
  %v508 = vpop.f32.mrf.mxu0
  %v509 = vadd.f32 0.0, %v508
  %510 = vmatmul.bf16.gmra.mxu0 %v263
  %v511 = vpop.f32.mrf.mxu0
  %v512 = vadd.f32 0.0, %v511
  %v513 = vpop.f32.mrf.mxu0
  %v514 = vadd.f32 0.0, %v513
  %515 = vmatmul.bf16.gmra.mxu0 %v265
  %v516 = vpop.f32.mrf.mxu0
  %v517 = vadd.f32 0.0, %v516
  %v518 = vpop.f32.mrf.mxu0
  %v519 = vadd.f32 0.0, %v518
  %520 = vmatmul.bf16.gmra.mxu0 %v267
  %v521 = vpop.f32.mrf.mxu0
  %v522 = vadd.f32 0.0, %v521
  %v523 = vpop.f32.mrf.mxu0
  %v524 = vadd.f32 0.0, %v523
  %525 = vmatmul.bf16.gmra.mxu0 %v269
  %v526 = vpop.f32.mrf.mxu0
  %v527 = vadd.f32 0.0, %v526
  %v528 = vpop.f32.mrf.mxu0
  %v529 = vadd.f32 0.0, %v528
  %530 = vmatmul.bf16.gmra.mxu0 %v271
  %v531 = vpop.f32.mrf.mxu0
  %v532 = vadd.f32 0.0, %v531
  %v533 = vpop.f32.mrf.mxu0
  %v534 = vadd.f32 0.0, %v533
  %535 = vmatmul.bf16.gmra.mxu0 %v273
  %v536 = vpop.f32.mrf.mxu0
  %v537 = vadd.f32 0.0, %v536
  %v538 = vpop.f32.mrf.mxu0
  %v539 = vadd.f32 0.0, %v538
  %540 = vmatmul.bf16.gmra.mxu0 %v275
  %v541 = vpop.f32.mrf.mxu0
  %v542 = vadd.f32 0.0, %v541
  %v543 = vpop.f32.mrf.mxu0
  %v544 = vadd.f32 0.0, %v543
  %545 = vmatmul.bf16.gmra.mxu0 %v277
  %v546 = vpop.f32.mrf.mxu0
  %v547 = vadd.f32 0.0, %v546
  %v548 = vpop.f32.mrf.mxu0
  %v549 = vadd.f32 0.0, %v548
  %550 = vmatmul.bf16.gmra.mxu0 %v279
  %v551 = vpop.f32.mrf.mxu0
  %v552 = vadd.f32 0.0, %v551
  %v553 = vpop.f32.mrf.mxu0
  %v554 = vadd.f32 0.0, %v553
  %555 = vmatmul.bf16.gmra.mxu0 %v281
  %v556 = vpop.f32.mrf.mxu0
  %v557 = vadd.f32 0.0, %v556
  %v558 = vpop.f32.mrf.mxu0
  %v559 = vadd.f32 0.0, %v558
  %560 = vmatmul.bf16.gmra.mxu0 %v283
  %v561 = vpop.f32.mrf.mxu0
  %v562 = vadd.f32 0.0, %v561
  %v563 = vpop.f32.mrf.mxu0
  %v564 = vadd.f32 0.0, %v563
  %565 = vdwg.mxu0
  %566 = vmatpush.bf16.msra.mxu0 %v443
  %567 = vmatpush.bf16.msra.mxu0 %v441
  %568 = vmatpush.bf16.msra.mxu0 %v439
  %569 = vmatpush.bf16.msra.mxu0 %v437
  %570 = vmatpush.bf16.msra.mxu0 %v435
  %571 = vmatpush.bf16.msra.mxu0 %v433
  %572 = vmatpush.bf16.msra.mxu0 %v431
  %573 = vmatpush.bf16.msra.mxu0 %v429
  %574 = vmatmul.bf16.gmra.mxu0 %v254
  %v575 = vpop.f32.mrf.mxu0
  %v576 = vadd.f32 %v487, %v575
  %v577 = vpop.f32.mrf.mxu0
  %v578 = vadd.f32 %v489, %v577
  %579 = vmatmul.bf16.gmra.mxu0 %v256
  %v580 = vpop.f32.mrf.mxu0
  %v581 = vadd.f32 %v492, %v580
  %v582 = vpop.f32.mrf.mxu0
  %v583 = vadd.f32 %v494, %v582
  %584 = vmatmul.bf16.gmra.mxu0 %v258
  %v585 = vpop.f32.mrf.mxu0
  %v586 = vadd.f32 %v497, %v585
  %v587 = vpop.f32.mrf.mxu0
  %v588 = vadd.f32 %v499, %v587
  %589 = vmatmul.bf16.gmra.mxu0 %v260
  %v590 = vpop.f32.mrf.mxu0
  %v591 = vadd.f32 %v502, %v590
  %v592 = vpop.f32.mrf.mxu0
  %v593 = vadd.f32 %v504, %v592
  %594 = vmatmul.bf16.gmra.mxu0 %v262
  %v595 = vpop.f32.mrf.mxu0
  %v596 = vadd.f32 %v507, %v595
  %v597 = vpop.f32.mrf.mxu0
  %v598 = vadd.f32 %v509, %v597
  %599 = vmatmul.bf16.gmra.mxu0 %v264
  %v600 = vpop.f32.mrf.mxu0
  %v601 = vadd.f32 %v512, %v600
  %v602 = vpop.f32.mrf.mxu0
  %v603 = vadd.f32 %v514, %v602
  %604 = vmatmul.bf16.gmra.mxu0 %v266
  %v605 = vpop.f32.mrf.mxu0
  %v606 = vadd.f32 %v517, %v605
  %v607 = vpop.f32.mrf.mxu0
  %v608 = vadd.f32 %v519, %v607
  %609 = vmatmul.bf16.gmra.mxu0 %v268
  %v610 = vpop.f32.mrf.mxu0
  %v611 = vadd.f32 %v522, %v610
  %v612 = vpop.f32.mrf.mxu0
  %v613 = vadd.f32 %v524, %v612
  %614 = vmatmul.bf16.gmra.mxu0 %v270
  %v615 = vpop.f32.mrf.mxu0
  %v616 = vadd.f32 %v527, %v615
  %v617 = vpop.f32.mrf.mxu0
  %v618 = vadd.f32 %v529, %v617
  %619 = vmatmul.bf16.gmra.mxu0 %v272
  %v620 = vpop.f32.mrf.mxu0
  %v621 = vadd.f32 %v532, %v620
  %v622 = vpop.f32.mrf.mxu0
  %v623 = vadd.f32 %v534, %v622
  %624 = vmatmul.bf16.gmra.mxu0 %v274
  %v625 = vpop.f32.mrf.mxu0
  %v626 = vadd.f32 %v537, %v625
  %v627 = vpop.f32.mrf.mxu0
  %v628 = vadd.f32 %v539, %v627
  %629 = vmatmul.bf16.gmra.mxu0 %v276
  %v630 = vpop.f32.mrf.mxu0
  %v631 = vadd.f32 %v542, %v630
  %v632 = vpop.f32.mrf.mxu0
  %v633 = vadd.f32 %v544, %v632
  %634 = vmatmul.bf16.gmra.mxu0 %v278
  %v635 = vpop.f32.mrf.mxu0
  %v636 = vadd.f32 %v547, %v635
  %v637 = vpop.f32.mrf.mxu0
  %v638 = vadd.f32 %v549, %v637
  %639 = vmatmul.bf16.gmra.mxu0 %v280
  %v640 = vpop.f32.mrf.mxu0
  %v641 = vadd.f32 %v552, %v640
  %v642 = vpop.f32.mrf.mxu0
  %v643 = vadd.f32 %v554, %v642
  %644 = vmatmul.bf16.gmra.mxu0 %v282
  %v645 = vpop.f32.mrf.mxu0
  %v646 = vadd.f32 %v557, %v645
  %v647 = vpop.f32.mrf.mxu0
  %v648 = vadd.f32 %v559, %v647
  %649 = vmatmul.bf16.gmra.mxu0 %v284
  %v650 = vpop.f32.mrf.mxu0
  %v651 = vadd.f32 %v562, %v650
  %v652 = vpop.f32.mrf.mxu0
  %v653 = vadd.f32 %v564, %v652
  %654 = vdwg.mxu0
  %655 = vmatpush.bf16.msra.mxu0 %v428
  %656 = vmatpush.bf16.msra.mxu0 %v426
  %657 = vmatpush.bf16.msra.mxu0 %v424
  %658 = vmatpush.bf16.msra.mxu0 %v422
  %659 = vmatpush.bf16.msra.mxu0 %v420
  %660 = vmatpush.bf16.msra.mxu0 %v418
  %661 = vmatpush.bf16.msra.mxu0 %v416
  %662 = vmatpush.bf16.msra.mxu0 %v414
  %663 = vmatmul.bf16.gmra.mxu0 %v253
  %v664 = vpop.f32.mrf.mxu0
  %v665 = vadd.f32 0.0, %v664
  %v666 = vpop.f32.mrf.mxu0
  %v667 = vadd.f32 0.0, %v666
  %668 = vmatmul.bf16.gmra.mxu0 %v255
  %v669 = vpop.f32.mrf.mxu0
  %v670 = vadd.f32 0.0, %v669
  %v671 = vpop.f32.mrf.mxu0
  %v672 = vadd.f32 0.0, %v671
  %673 = vmatmul.bf16.gmra.mxu0 %v257
  %v674 = vpop.f32.mrf.mxu0
  %v675 = vadd.f32 0.0, %v674
  %v676 = vpop.f32.mrf.mxu0
  %v677 = vadd.f32 0.0, %v676
  %678 = vmatmul.bf16.gmra.mxu0 %v259
  %v679 = vpop.f32.mrf.mxu0
  %v680 = vadd.f32 0.0, %v679
  %v681 = vpop.f32.mrf.mxu0
  %v682 = vadd.f32 0.0, %v681
  %683 = vmatmul.bf16.gmra.mxu0 %v261
  %v684 = vpop.f32.mrf.mxu0
  %v685 = vadd.f32 0.0, %v684
  %v686 = vpop.f32.mrf.mxu0
  %v687 = vadd.f32 0.0, %v686
  %688 = vmatmul.bf16.gmra.mxu0 %v263
  %v689 = vpop.f32.mrf.mxu0
  %v690 = vadd.f32 0.0, %v689
  %v691 = vpop.f32.mrf.mxu0
  %v692 = vadd.f32 0.0, %v691
  %693 = vmatmul.bf16.gmra.mxu0 %v265
  %v694 = vpop.f32.mrf.mxu0
  %v695 = vadd.f32 0.0, %v694
  %v696 = vpop.f32.mrf.mxu0
  %v697 = vadd.f32 0.0, %v696
  %698 = vmatmul.bf16.gmra.mxu0 %v267
  %v699 = vpop.f32.mrf.mxu0
  %v700 = vadd.f32 0.0, %v699
  %v701 = vpop.f32.mrf.mxu0
  %v702 = vadd.f32 0.0, %v701
  %703 = vmatmul.bf16.gmra.mxu0 %v269
  %v704 = vpop.f32.mrf.mxu0
  %v705 = vadd.f32 0.0, %v704
  %v706 = vpop.f32.mrf.mxu0
  %v707 = vadd.f32 0.0, %v706
  %708 = vmatmul.bf16.gmra.mxu0 %v271
  %v709 = vpop.f32.mrf.mxu0
  %v710 = vadd.f32 0.0, %v709
  %v711 = vpop.f32.mrf.mxu0
  %v712 = vadd.f32 0.0, %v711
  %713 = vmatmul.bf16.gmra.mxu0 %v273
  %v714 = vpop.f32.mrf.mxu0
  %v715 = vadd.f32 0.0, %v714
  %v716 = vpop.f32.mrf.mxu0
  %v717 = vadd.f32 0.0, %v716
  %718 = vmatmul.bf16.gmra.mxu0 %v275
  %v719 = vpop.f32.mrf.mxu0
  %v720 = vadd.f32 0.0, %v719
  %v721 = vpop.f32.mrf.mxu0
  %v722 = vadd.f32 0.0, %v721
  %723 = vmatmul.bf16.gmra.mxu0 %v277
  %v724 = vpop.f32.mrf.mxu0
  %v725 = vadd.f32 0.0, %v724
  %v726 = vpop.f32.mrf.mxu0
  %v727 = vadd.f32 0.0, %v726
  %728 = vmatmul.bf16.gmra.mxu0 %v279
  %v729 = vpop.f32.mrf.mxu0
  %v730 = vadd.f32 0.0, %v729
  %v731 = vpop.f32.mrf.mxu0
  %v732 = vadd.f32 0.0, %v731
  %733 = vmatmul.bf16.gmra.mxu0 %v281
  %v734 = vpop.f32.mrf.mxu0
  %v735 = vadd.f32 0.0, %v734
  %v736 = vpop.f32.mrf.mxu0
  %v737 = vadd.f32 0.0, %v736
  %738 = vmatmul.bf16.gmra.mxu0 %v283
  %v739 = vpop.f32.mrf.mxu0
  %v740 = vadd.f32 0.0, %v739
  %v741 = vpop.f32.mrf.mxu0
  %v742 = vadd.f32 0.0, %v741
  %743 = vdwg.mxu0
  %744 = vmatpush.bf16.msra.mxu0 %v444
  %745 = vmatpush.bf16.msra.mxu0 %v442
  %746 = vmatpush.bf16.msra.mxu0 %v440
  %747 = vmatpush.bf16.msra.mxu0 %v438
  %748 = vmatpush.bf16.msra.mxu0 %v436
  %749 = vmatpush.bf16.msra.mxu0 %v434
  %750 = vmatpush.bf16.msra.mxu0 %v432
  %751 = vmatpush.bf16.msra.mxu0 %v430
  %752 = vmatmul.bf16.gmra.mxu0 %v254
  %v753 = vpop.f32.mrf.mxu0
  %v754 = vadd.f32 %v665, %v753
  %v755 = vpop.f32.mrf.mxu0
  %v756 = vadd.f32 %v667, %v755
  %757 = vmatmul.bf16.gmra.mxu0 %v256
  %v758 = vpop.f32.mrf.mxu0
  %v759 = vadd.f32 %v670, %v758
  %v760 = vpop.f32.mrf.mxu0
  %v761 = vadd.f32 %v672, %v760
  %762 = vmatmul.bf16.gmra.mxu0 %v258
  %v763 = vpop.f32.mrf.mxu0
  %v764 = vadd.f32 %v675, %v763
  %v765 = vpop.f32.mrf.mxu0
  %v766 = vadd.f32 %v677, %v765
  %767 = vmatmul.bf16.gmra.mxu0 %v260
  %v768 = vpop.f32.mrf.mxu0
  %v769 = vadd.f32 %v680, %v768
  %v770 = vpop.f32.mrf.mxu0
  %v771 = vadd.f32 %v682, %v770
  %772 = vmatmul.bf16.gmra.mxu0 %v262
  %v773 = vpop.f32.mrf.mxu0
  %v774 = vadd.f32 %v685, %v773
  %v775 = vpop.f32.mrf.mxu0
  %v776 = vadd.f32 %v687, %v775
  %777 = vmatmul.bf16.gmra.mxu0 %v264
  %v778 = vpop.f32.mrf.mxu0
  %v779 = vadd.f32 %v690, %v778
  %v780 = vpop.f32.mrf.mxu0
  %v781 = vadd.f32 %v692, %v780
  %782 = vmatmul.bf16.gmra.mxu0 %v266
  %v783 = vpop.f32.mrf.mxu0
  %v784 = vadd.f32 %v695, %v783
  %v785 = vpop.f32.mrf.mxu0
  %v786 = vadd.f32 %v697, %v785
  %787 = vmatmul.bf16.gmra.mxu0 %v268
  %v788 = vpop.f32.mrf.mxu0
  %v789 = vadd.f32 %v700, %v788
  %v790 = vpop.f32.mrf.mxu0
  %v791 = vadd.f32 %v702, %v790
  %792 = vmatmul.bf16.gmra.mxu0 %v270
  %v793 = vpop.f32.mrf.mxu0
  %v794 = vadd.f32 %v705, %v793
  %v795 = vpop.f32.mrf.mxu0
  %v796 = vadd.f32 %v707, %v795
  %797 = vmatmul.bf16.gmra.mxu0 %v272
  %v798 = vpop.f32.mrf.mxu0
  %v799 = vadd.f32 %v710, %v798
  %v800 = vpop.f32.mrf.mxu0
  %v801 = vadd.f32 %v712, %v800
  %802 = vmatmul.bf16.gmra.mxu0 %v274
  %v803 = vpop.f32.mrf.mxu0
  %v804 = vadd.f32 %v715, %v803
  %v805 = vpop.f32.mrf.mxu0
  %v806 = vadd.f32 %v717, %v805
  %807 = vmatmul.bf16.gmra.mxu0 %v276
  %v808 = vpop.f32.mrf.mxu0
  %v809 = vadd.f32 %v720, %v808
  %v810 = vpop.f32.mrf.mxu0
  %v811 = vadd.f32 %v722, %v810
  %812 = vmatmul.bf16.gmra.mxu0 %v278
  %v813 = vpop.f32.mrf.mxu0
  %v814 = vadd.f32 %v725, %v813
  %v815 = vpop.f32.mrf.mxu0
  %v816 = vadd.f32 %v727, %v815
  %817 = vmatmul.bf16.gmra.mxu0 %v280
  %v818 = vpop.f32.mrf.mxu0
  %v819 = vadd.f32 %v730, %v818
  %v820 = vpop.f32.mrf.mxu0
  %v821 = vadd.f32 %v732, %v820
  %822 = vmatmul.bf16.gmra.mxu0 %v282
  %v823 = vpop.f32.mrf.mxu0
  %v824 = vadd.f32 %v735, %v823
  %v825 = vpop.f32.mrf.mxu0
  %v826 = vadd.f32 %v737, %v825
  %827 = vmatmul.bf16.gmra.mxu0 %v284
  %v828 = vpop.f32.mrf.mxu0
  %v829 = vadd.f32 %v740, %v828
  %v830 = vpop.f32.mrf.mxu0
  %v831 = vadd.f32 %v742, %v830
  %832 = vdwg.mxu0
  %v833 = vpack.c.bf16 %v754, %v576
  %v834 = vpack.c.bf16 %v756, %v578
  %v835 = vpack.c.bf16 %v759, %v581
  %v836 = vpack.c.bf16 %v761, %v583
  %v837 = vpack.c.bf16 %v764, %v586
  %v838 = vpack.c.bf16 %v766, %v588
  %v839 = vpack.c.bf16 %v769, %v591
  %v840 = vpack.c.bf16 %v771, %v593
  %v841 = vpack.c.bf16 %v774, %v596
  %v842 = vpack.c.bf16 %v776, %v598
  %v843 = vpack.c.bf16 %v779, %v601
  %v844 = vpack.c.bf16 %v781, %v603
  %v845 = vpack.c.bf16 %v784, %v606
  %v846 = vpack.c.bf16 %v786, %v608
  %v847 = vpack.c.bf16 %v789, %v611
  %v848 = vpack.c.bf16 %v791, %v613
  %v849 = vpack.c.bf16 %v794, %v616
  %v850 = vpack.c.bf16 %v796, %v618
  %v851 = vpack.c.bf16 %v799, %v621
  %v852 = vpack.c.bf16 %v801, %v623
  %v853 = vpack.c.bf16 %v804, %v626
  %v854 = vpack.c.bf16 %v806, %v628
  %v855 = vpack.c.bf16 %v809, %v631
  %v856 = vpack.c.bf16 %v811, %v633
  %v857 = vpack.c.bf16 %v814, %v636
  %v858 = vpack.c.bf16 %v816, %v638
  %v859 = vpack.c.bf16 %v819, %v641
  %v860 = vpack.c.bf16 %v821, %v643
  %v861 = vpack.c.bf16 %v824, %v646
  %v862 = vpack.c.bf16 %v826, %v648
  %v863 = vpack.c.bf16 %v829, %v651
  %v864 = vpack.c.bf16 %v831, %v653
  %865 = vst [vmem:[%s4] sm:$0xff] %v833
  %866 = vst [vmem:[%s4 + $0x8] sm:$0xff] %v834
  %867 = vst [vmem:[%s4 + $0x10] sm:$0xff] %v835
  %868 = vst [vmem:[%s4 + $0x18] sm:$0xff] %v836
  %869 = vst [vmem:[%s4 + $0x20] sm:$0xff] %v837
  %870 = vst [vmem:[%s4 + $0x28] sm:$0xff] %v838
  %871 = vst [vmem:[%s4 + $0x30] sm:$0xff] %v839
  %872 = vst [vmem:[%s4 + $0x38] sm:$0xff] %v840
  %873 = vst [vmem:[%s4 + $0x40] sm:$0xff] %v841
  %874 = vst [vmem:[%s4 + $0x48] sm:$0xff] %v842
  %875 = vst [vmem:[%s4 + $0x50] sm:$0xff] %v843
  %876 = vst [vmem:[%s4 + $0x58] sm:$0xff] %v844
  %877 = vst [vmem:[%s4 + $0x60] sm:$0xff] %v845
  %878 = vst [vmem:[%s4 + $0x68] sm:$0xff] %v846
  %879 = vst [vmem:[%s4 + $0x70] sm:$0xff] %v847
  %880 = vst [vmem:[%s4 + $0x78] sm:$0xff] %v848
  %881 = vst [vmem:[%s4 + $0x80] sm:$0xff] %v849
  %882 = vst [vmem:[%s4 + $0x88] sm:$0xff] %v850
  %883 = vst [vmem:[%s4 + $0x90] sm:$0xff] %v851
  %884 = vst [vmem:[%s4 + $0x98] sm:$0xff] %v852
  %885 = vst [vmem:[%s4 + $0xa0] sm:$0xff] %v853
  %886 = vst [vmem:[%s4 + $0xa8] sm:$0xff] %v854
  %887 = vst [vmem:[%s4 + $0xb0] sm:$0xff] %v855
  %888 = vst [vmem:[%s4 + $0xb8] sm:$0xff] %v856
  %889 = vst [vmem:[%s4 + $0xc0] sm:$0xff] %v857
  %890 = vst [vmem:[%s4 + $0xc8] sm:$0xff] %v858
  %891 = vst [vmem:[%s4 + $0xd0] sm:$0xff] %v859
  %892 = vst [vmem:[%s4 + $0xd8] sm:$0xff] %v860
  %893 = vst [vmem:[%s4 + $0xe0] sm:$0xff] %v861
  %894 = vst [vmem:[%s4 + $0xe8] sm:$0xff] %v862
  %895 = vst [vmem:[%s4 + $0xf0] sm:$0xff] %v863
  %896 = vst [vmem:[%s4 + $0xf8] sm:$0xff] %v864
  // Predicated region
  $region18: #{hgnn_encoder_forward.12} parent=0 // pred_check
    _
  $region19: #{hgnn_encoder_forward.12} parent=0 // pred_check_branch
    %898 = sbr.rel (0) target = $region21
  $region20: #{hgnn_encoder_forward.12} parent=0 // pred_region
    _
  $region21: #{hgnn_encoder_forward.12} parent=0 // pred_fallthru
    _
  // Predicated region
  $region22: #{hgnn_encoder_forward.12} parent=0 // pred_check
    _
  $region23: #{hgnn_encoder_forward.12} parent=0 // pred_check_branch
    %900 = sbr.rel (0) target = $region25
  $region24: #{hgnn_encoder_forward.12} parent=0 // pred_region
    _
  $region25: #{hgnn_encoder_forward.12} parent=0 // pred_fallthru
    _

// kernel: hgnn_encoder_forward.11
$region0: #{hgnn_encoder_forward.11}
  #allocation0 [shape = 'u32[]', space=smem, size = 0x4, offset = 0x4, fixed_abs, tag = 'smem constant byte address 0x4 - core index']
  #allocation1 [shape = 'u32[72,128]{1,0:T(1,128)}', space=vmem, size = 0x9000, scoped, tag = 'internal scratch']
  #allocation2 [shape = 'f32[256,256]{1,0:T(8,128)}', space=vmem, size = 0x40000, scoped, tag = 'scratch operand']
  %s0 = inlined_call_operand.vmem [shape: bf16[256,128], index: 0, kind: input, shape index: {}]
  %s1 = inlined_call_operand.vmem [shape: bf16[128,256], index: 1, kind: input, shape index: {}]
  %s2 = inlined_call_operand.vmem [shape: f32[256,1], index: 2, kind: input, shape index: {}]
  %s3 = inlined_call_operand.vmem [shape: f32[1,256], index: 3, kind: input, shape index: {}]
  %s4 = inlined_call_operand.vmem [shape: f32[256,1], index: 4, kind: input, shape index: {}]
  %s5 = inlined_call_operand.vmem [shape: bf16[256,256], index: 5, kind: output, shape index: {0}]
  %s6 = inlined_call_operand.vmem [shape: f32[8,256], index: 6, kind: output, shape index: {1}]
  %s7 = inlined_call_operand.vmem [shape: f32[8,256], index: 7, kind: output, shape index: {2}]
  %8 = xla_tuple %s5, %s6, %s7
  %s9 = sld [smem:[#allocation0]]
  $region54: #{hgnn_encoder_forward.11} parent=0
    _
  %s11 = ssub.s32 1, %s9
  %s12 = scalar_select 0, %s11, %s9
  // Predicated region
  $region2: #{hgnn_encoder_forward.11} parent=0 // pred_check
    _
  $region3: #{hgnn_encoder_forward.11} parent=0 // pred_check_branch
    %14 = sbr.rel (0) target = $region5
  $region4: #{hgnn_encoder_forward.11} parent=0 // pred_region
    _
  $region5: #{hgnn_encoder_forward.11} parent=0 // pred_fallthru
    _
  // Predicated region
  $region6: #{hgnn_encoder_forward.11} parent=0 // pred_check
    _
  $region7: #{hgnn_encoder_forward.11} parent=0 // pred_check_branch
    %16 = sbr.rel (0) target = $region9
  $region8: #{hgnn_encoder_forward.11} parent=0 // pred_region
    _
  $region9: #{hgnn_encoder_forward.11} parent=0 // pred_fallthru
    _
  // Predicated region
  $region10: #{hgnn_encoder_forward.11} parent=0 // pred_check
    _
  $region11: #{hgnn_encoder_forward.11} parent=0 // pred_check_branch
    %18 = sbr.rel (0) target = $region13
  $region12: #{hgnn_encoder_forward.11} parent=0 // pred_region
    _
  $region13: #{hgnn_encoder_forward.11} parent=0 // pred_fallthru
    _
  // Predicated region
  $region14: #{hgnn_encoder_forward.11} parent=0 // pred_check
    _
  $region15: #{hgnn_encoder_forward.11} parent=0 // pred_check_branch
    %20 = sbr.rel (0) target = $region17
  $region16: #{hgnn_encoder_forward.11} parent=0 // pred_region
    _
  $region17: #{hgnn_encoder_forward.11} parent=0 // pred_fallthru
    _
  // Predicated region
  $region18: #{hgnn_encoder_forward.11} parent=0 // pred_check
    _
  $region19: #{hgnn_encoder_forward.11} parent=0 // pred_check_branch
    %22 = sbr.rel (0) target = $region21
  $region20: #{hgnn_encoder_forward.11} parent=0 // pred_region
    _
  $region21: #{hgnn_encoder_forward.11} parent=0 // pred_fallthru
    _
  %p23 = scmp.eq.s32.totalorder 0, 0
  // Predicated region
  $region22: #{hgnn_encoder_forward.11} parent=0 // pred_check
    %p24 = pneg %p23
  $region23: #{hgnn_encoder_forward.11} parent=0 // pred_check_branch
    %26 = sbr.rel (%p24) target = $region25
  $region24: #{hgnn_encoder_forward.11} parent=0 // pred_region
    %27 = vst [vmem:[#allocation2] sm:$0xff] 0.0
    %28 = vst [vmem:[#allocation2 + $0x8] sm:$0xff] 0.0
    %29 = vst [vmem:[#allocation2 + $0x10] sm:$0xff] 0.0
    %30 = vst [vmem:[#allocation2 + $0x18] sm:$0xff] 0.0
    %31 = vst [vmem:[#allocation2 + $0x20] sm:$0xff] 0.0
    %32 = vst [vmem:[#allocation2 + $0x28] sm:$0xff] 0.0
    %33 = vst [vmem:[#allocation2 + $0x30] sm:$0xff] 0.0
    %34 = vst [vmem:[#allocation2 + $0x38] sm:$0xff] 0.0
    %35 = vst [vmem:[#allocation2 + $0x40] sm:$0xff] 0.0
    %36 = vst [vmem:[#allocation2 + $0x48] sm:$0xff] 0.0
    %37 = vst [vmem:[#allocation2 + $0x50] sm:$0xff] 0.0
    %38 = vst [vmem:[#allocation2 + $0x58] sm:$0xff] 0.0
    %39 = vst [vmem:[#allocation2 + $0x60] sm:$0xff] 0.0
    %40 = vst [vmem:[#allocation2 + $0x68] sm:$0xff] 0.0
    %41 = vst [vmem:[#allocation2 + $0x70] sm:$0xff] 0.0
    %42 = vst [vmem:[#allocation2 + $0x78] sm:$0xff] 0.0
    %43 = vst [vmem:[#allocation2 + $0x80] sm:$0xff] 0.0
    %44 = vst [vmem:[#allocation2 + $0x88] sm:$0xff] 0.0
    %45 = vst [vmem:[#allocation2 + $0x90] sm:$0xff] 0.0
    %46 = vst [vmem:[#allocation2 + $0x98] sm:$0xff] 0.0
    %47 = vst [vmem:[#allocation2 + $0xa0] sm:$0xff] 0.0
    %48 = vst [vmem:[#allocation2 + $0xa8] sm:$0xff] 0.0
    %49 = vst [vmem:[#allocation2 + $0xb0] sm:$0xff] 0.0
    %50 = vst [vmem:[#allocation2 + $0xb8] sm:$0xff] 0.0
    %51 = vst [vmem:[#allocation2 + $0xc0] sm:$0xff] 0.0
    %52 = vst [vmem:[#allocation2 + $0xc8] sm:$0xff] 0.0
    %53 = vst [vmem:[#allocation2 + $0xd0] sm:$0xff] 0.0
    %54 = vst [vmem:[#allocation2 + $0xd8] sm:$0xff] 0.0
    %55 = vst [vmem:[#allocation2 + $0xe0] sm:$0xff] 0.0
    %56 = vst [vmem:[#allocation2 + $0xe8] sm:$0xff] 0.0
    %57 = vst [vmem:[#allocation2 + $0xf0] sm:$0xff] 0.0
    %58 = vst [vmem:[#allocation2 + $0xf8] sm:$0xff] 0.0
    %59 = vst [vmem:[#allocation2 + $0x100] sm:$0xff] 0.0
    %60 = vst [vmem:[#allocation2 + $0x108] sm:$0xff] 0.0
    %61 = vst [vmem:[#allocation2 + $0x110] sm:$0xff] 0.0
    %62 = vst [vmem:[#allocation2 + $0x118] sm:$0xff] 0.0
    %63 = vst [vmem:[#allocation2 + $0x120] sm:$0xff] 0.0
    %64 = vst [vmem:[#allocation2 + $0x128] sm:$0xff] 0.0
    %65 = vst [vmem:[#allocation2 + $0x130] sm:$0xff] 0.0
    %66 = vst [vmem:[#allocation2 + $0x138] sm:$0xff] 0.0
    %67 = vst [vmem:[#allocation2 + $0x140] sm:$0xff] 0.0
    %68 = vst [vmem:[#allocation2 + $0x148] sm:$0xff] 0.0
    %69 = vst [vmem:[#allocation2 + $0x150] sm:$0xff] 0.0
    %70 = vst [vmem:[#allocation2 + $0x158] sm:$0xff] 0.0
    %71 = vst [vmem:[#allocation2 + $0x160] sm:$0xff] 0.0
    %72 = vst [vmem:[#allocation2 + $0x168] sm:$0xff] 0.0
    %73 = vst [vmem:[#allocation2 + $0x170] sm:$0xff] 0.0
    %74 = vst [vmem:[#allocation2 + $0x178] sm:$0xff] 0.0
    %75 = vst [vmem:[#allocation2 + $0x180] sm:$0xff] 0.0
    %76 = vst [vmem:[#allocation2 + $0x188] sm:$0xff] 0.0
    %77 = vst [vmem:[#allocation2 + $0x190] sm:$0xff] 0.0
    %78 = vst [vmem:[#allocation2 + $0x198] sm:$0xff] 0.0
    %79 = vst [vmem:[#allocation2 + $0x1a0] sm:$0xff] 0.0
    %80 = vst [vmem:[#allocation2 + $0x1a8] sm:$0xff] 0.0
    %81 = vst [vmem:[#allocation2 + $0x1b0] sm:$0xff] 0.0
    %82 = vst [vmem:[#allocation2 + $0x1b8] sm:$0xff] 0.0
    %83 = vst [vmem:[#allocation2 + $0x1c0] sm:$0xff] 0.0
    %84 = vst [vmem:[#allocation2 + $0x1c8] sm:$0xff] 0.0
    %85 = vst [vmem:[#allocation2 + $0x1d0] sm:$0xff] 0.0
    %86 = vst [vmem:[#allocation2 + $0x1d8] sm:$0xff] 0.0
    %87 = vst [vmem:[#allocation2 + $0x1e0] sm:$0xff] 0.0
    %88 = vst [vmem:[#allocation2 + $0x1e8] sm:$0xff] 0.0
    %89 = vst [vmem:[#allocation2 + $0x1f0] sm:$0xff] 0.0
    %90 = vst [vmem:[#allocation2 + $0x1f8] sm:$0xff] 0.0
  $region25: #{hgnn_encoder_forward.11} parent=0 // pred_fallthru
    _
  %v91 = vld [vmem:[#allocation2] sm:$0xff]
  %v92 = vld [vmem:[#allocation2 + $0x8] sm:$0xff]
  %v93 = vld [vmem:[#allocation2 + $0x10] sm:$0xff]
  %v94 = vld [vmem:[#allocation2 + $0x18] sm:$0xff]
  %v95 = vld [vmem:[#allocation2 + $0x20] sm:$0xff]
  %v96 = vld [vmem:[#allocation2 + $0x28] sm:$0xff]
  %v97 = vld [vmem:[#allocation2 + $0x30] sm:$0xff]
  %v98 = vld [vmem:[#allocation2 + $0x38] sm:$0xff]
  %v99 = vld [vmem:[#allocation2 + $0x40] sm:$0xff]
  %v100 = vld [vmem:[#allocation2 + $0x48] sm:$0xff]
  %v101 = vld [vmem:[#allocation2 + $0x50] sm:$0xff]
  %v102 = vld [vmem:[#allocation2 + $0x58] sm:$0xff]
  %v103 = vld [vmem:[#allocation2 + $0x60] sm:$0xff]
  %v104 = vld [vmem:[#allocation2 + $0x68] sm:$0xff]
  %v105 = vld [vmem:[#allocation2 + $0x70] sm:$0xff]
  %v106 = vld [vmem:[#allocation2 + $0x78] sm:$0xff]
  %v107 = vld [vmem:[#allocation2 + $0x80] sm:$0xff]
  %v108 = vld [vmem:[#allocation2 + $0x88] sm:$0xff]
  %v109 = vld [vmem:[#allocation2 + $0x90] sm:$0xff]
  %v110 = vld [vmem:[#allocation2 + $0x98] sm:$0xff]
  %v111 = vld [vmem:[#allocation2 + $0xa0] sm:$0xff]
  %v112 = vld [vmem:[#allocation2 + $0xa8] sm:$0xff]
  %v113 = vld [vmem:[#allocation2 + $0xb0] sm:$0xff]
  %v114 = vld [vmem:[#allocation2 + $0xb8] sm:$0xff]
  %v115 = vld [vmem:[#allocation2 + $0xc0] sm:$0xff]
  %v116 = vld [vmem:[#allocation2 + $0xc8] sm:$0xff]
  %v117 = vld [vmem:[#allocation2 + $0xd0] sm:$0xff]
  %v118 = vld [vmem:[#allocation2 + $0xd8] sm:$0xff]
  %v119 = vld [vmem:[#allocation2 + $0xe0] sm:$0xff]
  %v120 = vld [vmem:[#allocation2 + $0xe8] sm:$0xff]
  %v121 = vld [vmem:[#allocation2 + $0xf0] sm:$0xff]
  %v122 = vld [vmem:[#allocation2 + $0xf8] sm:$0xff]
  %v123 = vld [vmem:[#allocation2 + $0x100] sm:$0xff]
  %v124 = vld [vmem:[#allocation2 + $0x108] sm:$0xff]
  %v125 = vld [vmem:[#allocation2 + $0x110] sm:$0xff]
  %v126 = vld [vmem:[#allocation2 + $0x118] sm:$0xff]
  %v127 = vld [vmem:[#allocation2 + $0x120] sm:$0xff]
  %v128 = vld [vmem:[#allocation2 + $0x128] sm:$0xff]
  %v129 = vld [vmem:[#allocation2 + $0x130] sm:$0xff]
  %v130 = vld [vmem:[#allocation2 + $0x138] sm:$0xff]
  %v131 = vld [vmem:[#allocation2 + $0x140] sm:$0xff]
  %v132 = vld [vmem:[#allocation2 + $0x148] sm:$0xff]
  %v133 = vld [vmem:[#allocation2 + $0x150] sm:$0xff]
  %v134 = vld [vmem:[#allocation2 + $0x158] sm:$0xff]
  %v135 = vld [vmem:[#allocation2 + $0x160] sm:$0xff]
  %v136 = vld [vmem:[#allocation2 + $0x168] sm:$0xff]
  %v137 = vld [vmem:[#allocation2 + $0x170] sm:$0xff]
  %v138 = vld [vmem:[#allocation2 + $0x178] sm:$0xff]
  %v139 = vld [vmem:[#allocation2 + $0x180] sm:$0xff]
  %v140 = vld [vmem:[#allocation2 + $0x188] sm:$0xff]
  %v141 = vld [vmem:[#allocation2 + $0x190] sm:$0xff]
  %v142 = vld [vmem:[#allocation2 + $0x198] sm:$0xff]
  %v143 = vld [vmem:[#allocation2 + $0x1a0] sm:$0xff]
  %v144 = vld [vmem:[#allocation2 + $0x1a8] sm:$0xff]
  %v145 = vld [vmem:[#allocation2 + $0x1b0] sm:$0xff]
  %v146 = vld [vmem:[#allocation2 + $0x1b8] sm:$0xff]
  %v147 = vld [vmem:[#allocation2 + $0x1c0] sm:$0xff]
  %v148 = vld [vmem:[#allocation2 + $0x1c8] sm:$0xff]
  %v149 = vld [vmem:[#allocation2 + $0x1d0] sm:$0xff]
  %v150 = vld [vmem:[#allocation2 + $0x1d8] sm:$0xff]
  %v151 = vld [vmem:[#allocation2 + $0x1e0] sm:$0xff]
  %v152 = vld [vmem:[#allocation2 + $0x1e8] sm:$0xff]
  %v153 = vld [vmem:[#allocation2 + $0x1f0] sm:$0xff]
  %v154 = vld [vmem:[#allocation2 + $0x1f8] sm:$0xff]
  %v155 = vld [vmem:[%s0] sm:$0xf]
  %v156 = vld [vmem:[%s0 + $0x4] sm:$0xf]
  %v157 = vld [vmem:[%s0 + $0x8] sm:$0xf]
  %v158 = vld [vmem:[%s0 + $0xc] sm:$0xf]
  %v159 = vld [vmem:[%s0 + $0x10] sm:$0xf]
  %v160 = vld [vmem:[%s0 + $0x14] sm:$0xf]
  %v161 = vld [vmem:[%s0 + $0x18] sm:$0xf]
  %v162 = vld [vmem:[%s0 + $0x1c] sm:$0xf]
  %v163 = vld [vmem:[%s0 + $0x20] sm:$0xf]
  %v164 = vld [vmem:[%s0 + $0x24] sm:$0xf]
  %v165 = vld [vmem:[%s0 + $0x28] sm:$0xf]
  %v166 = vld [vmem:[%s0 + $0x2c] sm:$0xf]
  %v167 = vld [vmem:[%s0 + $0x30] sm:$0xf]
  %v168 = vld [vmem:[%s0 + $0x34] sm:$0xf]
  %v169 = vld [vmem:[%s0 + $0x38] sm:$0xf]
  %v170 = vld [vmem:[%s0 + $0x3c] sm:$0xf]
  %v171 = vld [vmem:[%s0 + $0x40] sm:$0xf]
  %v172 = vld [vmem:[%s0 + $0x44] sm:$0xf]
  %v173 = vld [vmem:[%s0 + $0x48] sm:$0xf]
  %v174 = vld [vmem:[%s0 + $0x4c] sm:$0xf]
  %v175 = vld [vmem:[%s0 + $0x50] sm:$0xf]
  %v176 = vld [vmem:[%s0 + $0x54] sm:$0xf]
  %v177 = vld [vmem:[%s0 + $0x58] sm:$0xf]
  %v178 = vld [vmem:[%s0 + $0x5c] sm:$0xf]
  %v179 = vld [vmem:[%s0 + $0x60] sm:$0xf]
  %v180 = vld [vmem:[%s0 + $0x64] sm:$0xf]
  %v181 = vld [vmem:[%s0 + $0x68] sm:$0xf]
  %v182 = vld [vmem:[%s0 + $0x6c] sm:$0xf]
  %v183 = vld [vmem:[%s0 + $0x70] sm:$0xf]
  %v184 = vld [vmem:[%s0 + $0x74] sm:$0xf]
  %v185 = vld [vmem:[%s0 + $0x78] sm:$0xf]
  %v186 = vld [vmem:[%s0 + $0x7c] sm:$0xf]
  %v187 = vld [vmem:[%s1] sm:$0xff]
  %v188 = vld [vmem:[%s1 + $0x8] sm:$0xff]
  %v189 = vld [vmem:[%s1 + $0x10] sm:$0xff]
  %v190 = vld [vmem:[%s1 + $0x18] sm:$0xff]
  %v191 = vld [vmem:[%s1 + $0x20] sm:$0xff]
  %v192 = vld [vmem:[%s1 + $0x28] sm:$0xff]
  %v193 = vld [vmem:[%s1 + $0x30] sm:$0xff]
  %v194 = vld [vmem:[%s1 + $0x38] sm:$0xff]
  %v195 = vld [vmem:[%s1 + $0x40] sm:$0xff]
  %v196 = vld [vmem:[%s1 + $0x48] sm:$0xff]
  %v197 = vld [vmem:[%s1 + $0x50] sm:$0xff]
  %v198 = vld [vmem:[%s1 + $0x58] sm:$0xff]
  %v199 = vld [vmem:[%s1 + $0x60] sm:$0xff]
  %v200 = vld [vmem:[%s1 + $0x68] sm:$0xff]
  %v201 = vld [vmem:[%s1 + $0x70] sm:$0xff]
  %v202 = vld [vmem:[%s1 + $0x78] sm:$0xff]
  %v235 = vunpack.c.l.b16 %v155
  %v236 = vunpack.c.l.b16 %v156
  %v237 = vunpack.c.l.b16 %v157
  %v238 = vunpack.c.l.b16 %v158
  %v239 = vunpack.c.l.b16 %v159
  %v240 = vunpack.c.l.b16 %v160
  %v241 = vunpack.c.l.b16 %v161
  %v242 = vunpack.c.l.b16 %v162
  %v243 = vunpack.c.l.b16 %v163
  %v244 = vunpack.c.l.b16 %v164
  %v245 = vunpack.c.l.b16 %v165
  %v246 = vunpack.c.l.b16 %v166
  %v247 = vunpack.c.l.b16 %v167
  %v248 = vunpack.c.l.b16 %v168
  %v249 = vunpack.c.l.b16 %v169
  %v250 = vunpack.c.l.b16 %v170
  %v251 = vunpack.c.l.b16 %v171
  %v252 = vunpack.c.l.b16 %v172
  %v253 = vunpack.c.l.b16 %v173
  %v254 = vunpack.c.l.b16 %v174
  %v255 = vunpack.c.l.b16 %v175
  %v256 = vunpack.c.l.b16 %v176
  %v257 = vunpack.c.l.b16 %v177
  %v258 = vunpack.c.l.b16 %v178
  %v259 = vunpack.c.l.b16 %v179
  %v260 = vunpack.c.l.b16 %v180
  %v261 = vunpack.c.l.b16 %v181
  %v262 = vunpack.c.l.b16 %v182
  %v263 = vunpack.c.l.b16 %v183
  %v264 = vunpack.c.l.b16 %v184
  %v265 = vunpack.c.l.b16 %v185
  %v266 = vunpack.c.l.b16 %v186
  %v267 = vpack.c.b16 %v236, %v235
  %v268 = vpack.c.b16 %v238, %v237
  %v269 = vpack.c.b16 %v240, %v239
  %v270 = vpack.c.b16 %v242, %v241
  %v271 = vpack.c.b16 %v244, %v243
  %v272 = vpack.c.b16 %v246, %v245
  %v273 = vpack.c.b16 %v248, %v247
  %v274 = vpack.c.b16 %v250, %v249
  %v275 = vpack.c.b16 %v252, %v251
  %v276 = vpack.c.b16 %v254, %v253
  %v277 = vpack.c.b16 %v256, %v255
  %v278 = vpack.c.b16 %v258, %v257
  %v279 = vpack.c.b16 %v260, %v259
  %v280 = vpack.c.b16 %v262, %v261
  %v281 = vpack.c.b16 %v264, %v263
  %v282 = vpack.c.b16 %v266, %v265
  %v315 = vunpack.c.l.b16 %v187
  %v316 = vunpack.c.h.b16 %v187
  %v317 = vunpack.c.l.b16 %v188
  %v318 = vunpack.c.h.b16 %v188
  %v319 = vunpack.c.l.b16 %v189
  %v320 = vunpack.c.h.b16 %v189
  %v321 = vunpack.c.l.b16 %v190
  %v322 = vunpack.c.h.b16 %v190
  %v323 = vunpack.c.l.b16 %v191
  %v324 = vunpack.c.h.b16 %v191
  %v325 = vunpack.c.l.b16 %v192
  %v326 = vunpack.c.h.b16 %v192
  %v327 = vunpack.c.l.b16 %v193
  %v328 = vunpack.c.h.b16 %v193
  %v329 = vunpack.c.l.b16 %v194
  %v330 = vunpack.c.h.b16 %v194
  %v331 = vunpack.c.l.b16 %v195
  %v332 = vunpack.c.h.b16 %v195
  %v333 = vunpack.c.l.b16 %v196
  %v334 = vunpack.c.h.b16 %v196
  %v335 = vunpack.c.l.b16 %v197
  %v336 = vunpack.c.h.b16 %v197
  %v337 = vunpack.c.l.b16 %v198
  %v338 = vunpack.c.h.b16 %v198
  %v339 = vunpack.c.l.b16 %v199
  %v340 = vunpack.c.h.b16 %v199
  %v341 = vunpack.c.l.b16 %v200
  %v342 = vunpack.c.h.b16 %v200
  %v343 = vunpack.c.l.b16 %v201
  %v344 = vunpack.c.h.b16 %v201
  %v345 = vunpack.c.l.b16 %v202
  %v346 = vunpack.c.h.b16 %v202
  %v347 = vpack.c.b16 %v317, %v315
  %v348 = vpack.c.b16 %v318, %v316
  %v349 = vpack.c.b16 %v321, %v319
  %v350 = vpack.c.b16 %v322, %v320
  %v351 = vpack.c.b16 %v325, %v323
  %v352 = vpack.c.b16 %v326, %v324
  %v353 = vpack.c.b16 %v329, %v327
  %v354 = vpack.c.b16 %v330, %v328
  %v355 = vpack.c.b16 %v333, %v331
  %v356 = vpack.c.b16 %v334, %v332
  %v357 = vpack.c.b16 %v337, %v335
  %v358 = vpack.c.b16 %v338, %v336
  %v359 = vpack.c.b16 %v341, %v339
  %v360 = vpack.c.b16 %v342, %v340
  %v361 = vpack.c.b16 %v345, %v343
  %v362 = vpack.c.b16 %v346, %v344
  %379 = vmatpush.bf16.msra.mxu0 %v361
  %380 = vmatpush.bf16.msra.mxu0 %v359
  %381 = vmatpush.bf16.msra.mxu0 %v357
  %382 = vmatpush.bf16.msra.mxu0 %v355
  %383 = vmatpush.bf16.msra.mxu0 %v353
  %384 = vmatpush.bf16.msra.mxu0 %v351
  %385 = vmatpush.bf16.msra.mxu0 %v349
  %386 = vmatpush.bf16.msra.mxu0 %v347
  %387 = vmatmul.bf16.gmra.mxu0 %v267
  %v388 = vpop.f32.mrf.mxu0
  %v389 = vadd.f32 0.0, %v388
  %v390 = vpop.f32.mrf.mxu0
  %v391 = vadd.f32 0.0, %v390
  %392 = vmatmul.bf16.gmra.mxu0 %v268
  %v393 = vpop.f32.mrf.mxu0
  %v394 = vadd.f32 0.0, %v393
  %v395 = vpop.f32.mrf.mxu0
  %v396 = vadd.f32 0.0, %v395
  %397 = vmatmul.bf16.gmra.mxu0 %v269
  %v398 = vpop.f32.mrf.mxu0
  %v399 = vadd.f32 0.0, %v398
  %v400 = vpop.f32.mrf.mxu0
  %v401 = vadd.f32 0.0, %v400
  %402 = vmatmul.bf16.gmra.mxu0 %v270
  %v403 = vpop.f32.mrf.mxu0
  %v404 = vadd.f32 0.0, %v403
  %v405 = vpop.f32.mrf.mxu0
  %v406 = vadd.f32 0.0, %v405
  %407 = vmatmul.bf16.gmra.mxu0 %v271
  %v408 = vpop.f32.mrf.mxu0
  %v409 = vadd.f32 0.0, %v408
  %v410 = vpop.f32.mrf.mxu0
  %v411 = vadd.f32 0.0, %v410
  %412 = vmatmul.bf16.gmra.mxu0 %v272
  %v413 = vpop.f32.mrf.mxu0
  %v414 = vadd.f32 0.0, %v413
  %v415 = vpop.f32.mrf.mxu0
  %v416 = vadd.f32 0.0, %v415
  %417 = vmatmul.bf16.gmra.mxu0 %v273
  %v418 = vpop.f32.mrf.mxu0
  %v419 = vadd.f32 0.0, %v418
  %v420 = vpop.f32.mrf.mxu0
  %v421 = vadd.f32 0.0, %v420
  %422 = vmatmul.bf16.gmra.mxu0 %v274
  %v423 = vpop.f32.mrf.mxu0
  %v424 = vadd.f32 0.0, %v423
  %v425 = vpop.f32.mrf.mxu0
  %v426 = vadd.f32 0.0, %v425
  %427 = vmatmul.bf16.gmra.mxu0 %v275
  %v428 = vpop.f32.mrf.mxu0
  %v429 = vadd.f32 0.0, %v428
  %v430 = vpop.f32.mrf.mxu0
  %v431 = vadd.f32 0.0, %v430
  %432 = vmatmul.bf16.gmra.mxu0 %v276
  %v433 = vpop.f32.mrf.mxu0
  %v434 = vadd.f32 0.0, %v433
  %v435 = vpop.f32.mrf.mxu0
  %v436 = vadd.f32 0.0, %v435
  %437 = vmatmul.bf16.gmra.mxu0 %v277
  %v438 = vpop.f32.mrf.mxu0
  %v439 = vadd.f32 0.0, %v438
  %v440 = vpop.f32.mrf.mxu0
  %v441 = vadd.f32 0.0, %v440
  %442 = vmatmul.bf16.gmra.mxu0 %v278
  %v443 = vpop.f32.mrf.mxu0
  %v444 = vadd.f32 0.0, %v443
  %v445 = vpop.f32.mrf.mxu0
  %v446 = vadd.f32 0.0, %v445
  %447 = vmatmul.bf16.gmra.mxu0 %v279
  %v448 = vpop.f32.mrf.mxu0
  %v449 = vadd.f32 0.0, %v448
  %v450 = vpop.f32.mrf.mxu0
  %v451 = vadd.f32 0.0, %v450
  %452 = vmatmul.bf16.gmra.mxu0 %v280
  %v453 = vpop.f32.mrf.mxu0
  %v454 = vadd.f32 0.0, %v453
  %v455 = vpop.f32.mrf.mxu0
  %v456 = vadd.f32 0.0, %v455
  %457 = vmatmul.bf16.gmra.mxu0 %v281
  %v458 = vpop.f32.mrf.mxu0
  %v459 = vadd.f32 0.0, %v458
  %v460 = vpop.f32.mrf.mxu0
  %v461 = vadd.f32 0.0, %v460
  %462 = vmatmul.bf16.gmra.mxu0 %v282
  %v463 = vpop.f32.mrf.mxu0
  %v464 = vadd.f32 0.0, %v463
  %v465 = vpop.f32.mrf.mxu0
  %v466 = vadd.f32 0.0, %v465
  %467 = vdwg.mxu0
  %468 = vmatpush.bf16.msra.mxu0 %v362
  %469 = vmatpush.bf16.msra.mxu0 %v360
  %470 = vmatpush.bf16.msra.mxu0 %v358
  %471 = vmatpush.bf16.msra.mxu0 %v356
  %472 = vmatpush.bf16.msra.mxu0 %v354
  %473 = vmatpush.bf16.msra.mxu0 %v352
  %474 = vmatpush.bf16.msra.mxu0 %v350
  %475 = vmatpush.bf16.msra.mxu0 %v348
  %476 = vmatmul.bf16.gmra.mxu0 %v267
  %v477 = vpop.f32.mrf.mxu0
  %v478 = vadd.f32 0.0, %v477
  %v479 = vpop.f32.mrf.mxu0
  %v480 = vadd.f32 0.0, %v479
  %481 = vmatmul.bf16.gmra.mxu0 %v268
  %v482 = vpop.f32.mrf.mxu0
  %v483 = vadd.f32 0.0, %v482
  %v484 = vpop.f32.mrf.mxu0
  %v485 = vadd.f32 0.0, %v484
  %486 = vmatmul.bf16.gmra.mxu0 %v269
  %v487 = vpop.f32.mrf.mxu0
  %v488 = vadd.f32 0.0, %v487
  %v489 = vpop.f32.mrf.mxu0
  %v490 = vadd.f32 0.0, %v489
  %491 = vmatmul.bf16.gmra.mxu0 %v270
  %v492 = vpop.f32.mrf.mxu0
  %v493 = vadd.f32 0.0, %v492
  %v494 = vpop.f32.mrf.mxu0
  %v495 = vadd.f32 0.0, %v494
  %496 = vmatmul.bf16.gmra.mxu0 %v271
  %v497 = vpop.f32.mrf.mxu0
  %v498 = vadd.f32 0.0, %v497
  %v499 = vpop.f32.mrf.mxu0
  %v500 = vadd.f32 0.0, %v499
  %501 = vmatmul.bf16.gmra.mxu0 %v272
  %v502 = vpop.f32.mrf.mxu0
  %v503 = vadd.f32 0.0, %v502
  %v504 = vpop.f32.mrf.mxu0
  %v505 = vadd.f32 0.0, %v504
  %506 = vmatmul.bf16.gmra.mxu0 %v273
  %v507 = vpop.f32.mrf.mxu0
  %v508 = vadd.f32 0.0, %v507
  %v509 = vpop.f32.mrf.mxu0
  %v510 = vadd.f32 0.0, %v509
  %511 = vmatmul.bf16.gmra.mxu0 %v274
  %v512 = vpop.f32.mrf.mxu0
  %v513 = vadd.f32 0.0, %v512
  %v514 = vpop.f32.mrf.mxu0
  %v515 = vadd.f32 0.0, %v514
  %516 = vmatmul.bf16.gmra.mxu0 %v275
  %v517 = vpop.f32.mrf.mxu0
  %v518 = vadd.f32 0.0, %v517
  %v519 = vpop.f32.mrf.mxu0
  %v520 = vadd.f32 0.0, %v519
  %521 = vmatmul.bf16.gmra.mxu0 %v276
  %v522 = vpop.f32.mrf.mxu0
  %v523 = vadd.f32 0.0, %v522
  %v524 = vpop.f32.mrf.mxu0
  %v525 = vadd.f32 0.0, %v524
  %526 = vmatmul.bf16.gmra.mxu0 %v277
  %v527 = vpop.f32.mrf.mxu0
  %v528 = vadd.f32 0.0, %v527
  %v529 = vpop.f32.mrf.mxu0
  %v530 = vadd.f32 0.0, %v529
  %531 = vmatmul.bf16.gmra.mxu0 %v278
  %v532 = vpop.f32.mrf.mxu0
  %v533 = vadd.f32 0.0, %v532
  %v534 = vpop.f32.mrf.mxu0
  %v535 = vadd.f32 0.0, %v534
  %536 = vmatmul.bf16.gmra.mxu0 %v279
  %v537 = vpop.f32.mrf.mxu0
  %v538 = vadd.f32 0.0, %v537
  %v539 = vpop.f32.mrf.mxu0
  %v540 = vadd.f32 0.0, %v539
  %541 = vmatmul.bf16.gmra.mxu0 %v280
  %v542 = vpop.f32.mrf.mxu0
  %v543 = vadd.f32 0.0, %v542
  %v544 = vpop.f32.mrf.mxu0
  %v545 = vadd.f32 0.0, %v544
  %546 = vmatmul.bf16.gmra.mxu0 %v281
  %v547 = vpop.f32.mrf.mxu0
  %v548 = vadd.f32 0.0, %v547
  %v549 = vpop.f32.mrf.mxu0
  %v550 = vadd.f32 0.0, %v549
  %551 = vmatmul.bf16.gmra.mxu0 %v282
  %v552 = vpop.f32.mrf.mxu0
  %v553 = vadd.f32 0.0, %v552
  %v554 = vpop.f32.mrf.mxu0
  %v555 = vadd.f32 0.0, %v554
  %556 = vdwg.mxu0
  %v557 = vadd.f32 %v91, %v389
  %v558 = vadd.f32 %v92, %v478
  %v559 = vadd.f32 %v93, %v391
  %v560 = vadd.f32 %v94, %v480
  %v561 = vadd.f32 %v95, %v394
  %v562 = vadd.f32 %v96, %v483
  %v563 = vadd.f32 %v97, %v396
  %v564 = vadd.f32 %v98, %v485
  %v565 = vadd.f32 %v99, %v399
  %v566 = vadd.f32 %v100, %v488
  %v567 = vadd.f32 %v101, %v401
  %v568 = vadd.f32 %v102, %v490
  %v569 = vadd.f32 %v103, %v404
  %v570 = vadd.f32 %v104, %v493
  %v571 = vadd.f32 %v105, %v406
  %v572 = vadd.f32 %v106, %v495
  %v573 = vadd.f32 %v107, %v409
  %v574 = vadd.f32 %v108, %v498
  %v575 = vadd.f32 %v109, %v411
  %v576 = vadd.f32 %v110, %v500
  %v577 = vadd.f32 %v111, %v414
  %v578 = vadd.f32 %v112, %v503
  %v579 = vadd.f32 %v113, %v416
  %v580 = vadd.f32 %v114, %v505
  %v581 = vadd.f32 %v115, %v419
  %v582 = vadd.f32 %v116, %v508
  %v583 = vadd.f32 %v117, %v421
  %v584 = vadd.f32 %v118, %v510
  %v585 = vadd.f32 %v119, %v424
  %v586 = vadd.f32 %v120, %v513
  %v587 = vadd.f32 %v121, %v426
  %v588 = vadd.f32 %v122, %v515
  %v589 = vadd.f32 %v123, %v429
  %v590 = vadd.f32 %v124, %v518
  %v591 = vadd.f32 %v125, %v431
  %v592 = vadd.f32 %v126, %v520
  %v593 = vadd.f32 %v127, %v434
  %v594 = vadd.f32 %v128, %v523
  %v595 = vadd.f32 %v129, %v436
  %v596 = vadd.f32 %v130, %v525
  %v597 = vadd.f32 %v131, %v439
  %v598 = vadd.f32 %v132, %v528
  %v599 = vadd.f32 %v133, %v441
  %v600 = vadd.f32 %v134, %v530
  %v601 = vadd.f32 %v135, %v444
  %v602 = vadd.f32 %v136, %v533
  %v603 = vadd.f32 %v137, %v446
  %v604 = vadd.f32 %v138, %v535
  %v605 = vadd.f32 %v139, %v449
  %v606 = vadd.f32 %v140, %v538
  %v607 = vadd.f32 %v141, %v451
  %v608 = vadd.f32 %v142, %v540
  %v609 = vadd.f32 %v143, %v454
  %v610 = vadd.f32 %v144, %v543
  %v611 = vadd.f32 %v145, %v456
  %v612 = vadd.f32 %v146, %v545
  %v613 = vadd.f32 %v147, %v459
  %v614 = vadd.f32 %v148, %v548
  %v615 = vadd.f32 %v149, %v461
  %v616 = vadd.f32 %v150, %v550
  %v617 = vadd.f32 %v151, %v464
  %v618 = vadd.f32 %v152, %v553
  %v619 = vadd.f32 %v153, %v466
  %v620 = vadd.f32 %v154, %v555
  %621 = vst [vmem:[#allocation2] sm:$0xff] %v557
  %622 = vst [vmem:[#allocation2 + $0x8] sm:$0xff] %v558
  %623 = vst [vmem:[#allocation2 + $0x10] sm:$0xff] %v559
  %624 = vst [vmem:[#allocation2 + $0x18] sm:$0xff] %v560
  %625 = vst [vmem:[#allocation2 + $0x20] sm:$0xff] %v561
  %626 = vst [vmem:[#allocation2 + $0x28] sm:$0xff] %v562
  %627 = vst [vmem:[#allocation2 + $0x30] sm:$0xff] %v563
  %628 = vst [vmem:[#allocation2 + $0x38] sm:$0xff] %v564
  %629 = vst [vmem:[#allocation2 + $0x40] sm:$0xff] %v565
  %630 = vst [vmem:[#allocation2 + $0x48] sm:$0xff] %v566
  %631 = vst [vmem:[#allocation2 + $0x50] sm:$0xff] %v567
  %632 = vst [vmem:[#allocation2 + $0x58] sm:$0xff] %v568
  %633 = vst [vmem:[#allocation2 + $0x60] sm:$0xff] %v569
  %634 = vst [vmem:[#allocation2 + $0x68] sm:$0xff] %v570
  %635 = vst [vmem:[#allocation2 + $0x70] sm:$0xff] %v571
  %636 = vst [vmem:[#allocation2 + $0x78] sm:$0xff] %v572
  %637 = vst [vmem:[#allocation2 + $0x80] sm:$0xff] %v573
  %638 = vst [vmem:[#allocation2 + $0x88] sm:$0xff] %v574
  %639 = vst [vmem:[#allocation2 + $0x90] sm:$0xff] %v575
  %640 = vst [vmem:[#allocation2 + $0x98] sm:$0xff] %v576
  %641 = vst [vmem:[#allocation2 + $0xa0] sm:$0xff] %v577
  %642 = vst [vmem:[#allocation2 + $0xa8] sm:$0xff] %v578
  %643 = vst [vmem:[#allocation2 + $0xb0] sm:$0xff] %v579
  %644 = vst [vmem:[#allocation2 + $0xb8] sm:$0xff] %v580
  %645 = vst [vmem:[#allocation2 + $0xc0] sm:$0xff] %v581
  %646 = vst [vmem:[#allocation2 + $0xc8] sm:$0xff] %v582
  %647 = vst [vmem:[#allocation2 + $0xd0] sm:$0xff] %v583
  %648 = vst [vmem:[#allocation2 + $0xd8] sm:$0xff] %v584
  %649 = vst [vmem:[#allocation2 + $0xe0] sm:$0xff] %v585
  %650 = vst [vmem:[#allocation2 + $0xe8] sm:$0xff] %v586
  %651 = vst [vmem:[#allocation2 + $0xf0] sm:$0xff] %v587
  %652 = vst [vmem:[#allocation2 + $0xf8] sm:$0xff] %v588
  %653 = vst [vmem:[#allocation2 + $0x100] sm:$0xff] %v589
  %654 = vst [vmem:[#allocation2 + $0x108] sm:$0xff] %v590
  %655 = vst [vmem:[#allocation2 + $0x110] sm:$0xff] %v591
  %656 = vst [vmem:[#allocation2 + $0x118] sm:$0xff] %v592
  %657 = vst [vmem:[#allocation2 + $0x120] sm:$0xff] %v593
  %658 = vst [vmem:[#allocation2 + $0x128] sm:$0xff] %v594
  %659 = vst [vmem:[#allocation2 + $0x130] sm:$0xff] %v595
  %660 = vst [vmem:[#allocation2 + $0x138] sm:$0xff] %v596
  %661 = vst [vmem:[#allocation2 + $0x140] sm:$0xff] %v597
  %662 = vst [vmem:[#allocation2 + $0x148] sm:$0xff] %v598
  %663 = vst [vmem:[#allocation2 + $0x150] sm:$0xff] %v599
  %664 = vst [vmem:[#allocation2 + $0x158] sm:$0xff] %v600
  %665 = vst [vmem:[#allocation2 + $0x160] sm:$0xff] %v601
  %666 = vst [vmem:[#allocation2 + $0x168] sm:$0xff] %v602
  %667 = vst [vmem:[#allocation2 + $0x170] sm:$0xff] %v603
  %668 = vst [vmem:[#allocation2 + $0x178] sm:$0xff] %v604
  %669 = vst [vmem:[#allocation2 + $0x180] sm:$0xff] %v605
  %670 = vst [vmem:[#allocation2 + $0x188] sm:$0xff] %v606
  %671 = vst [vmem:[#allocation2 + $0x190] sm:$0xff] %v607
  %672 = vst [vmem:[#allocation2 + $0x198] sm:$0xff] %v608
  %673 = vst [vmem:[#allocation2 + $0x1a0] sm:$0xff] %v609
  %674 = vst [vmem:[#allocation2 + $0x1a8] sm:$0xff] %v610
  %675 = vst [vmem:[#allocation2 + $0x1b0] sm:$0xff] %v611
  %676 = vst [vmem:[#allocation2 + $0x1b8] sm:$0xff] %v612
  %677 = vst [vmem:[#allocation2 + $0x1c0] sm:$0xff] %v613
  %678 = vst [vmem:[#allocation2 + $0x1c8] sm:$0xff] %v614
  %679 = vst [vmem:[#allocation2 + $0x1d0] sm:$0xff] %v615
  %680 = vst [vmem:[#allocation2 + $0x1d8] sm:$0xff] %v616
  %681 = vst [vmem:[#allocation2 + $0x1e0] sm:$0xff] %v617
  %682 = vst [vmem:[#allocation2 + $0x1e8] sm:$0xff] %v618
  %683 = vst [vmem:[#allocation2 + $0x1f0] sm:$0xff] %v619
  %684 = vst [vmem:[#allocation2 + $0x1f8] sm:$0xff] %v620
  // Predicated region
  $region26: #{hgnn_encoder_forward.11} parent=0 // pred_check
    %p685 = pneg %p23
  $region27: #{hgnn_encoder_forward.11} parent=0 // pred_check_branch
    %687 = sbr.rel (%p685) target = $region29
  $region28: #{hgnn_encoder_forward.11} parent=0 // pred_region
    %v688 = vld [vmem:[#allocation2] sm:$0xff]
    %v689 = vld [vmem:[#allocation2 + $0x8] sm:$0xff]
    %v690 = vld [vmem:[#allocation2 + $0x10] sm:$0xff]
    %v691 = vld [vmem:[#allocation2 + $0x18] sm:$0xff]
    %v692 = vld [vmem:[#allocation2 + $0x20] sm:$0xff]
    %v693 = vld [vmem:[#allocation2 + $0x28] sm:$0xff]
    %v694 = vld [vmem:[#allocation2 + $0x30] sm:$0xff]
    %v695 = vld [vmem:[#allocation2 + $0x38] sm:$0xff]
    %v696 = vld [vmem:[#allocation2 + $0x40] sm:$0xff]
    %v697 = vld [vmem:[#allocation2 + $0x48] sm:$0xff]
    %v698 = vld [vmem:[#allocation2 + $0x50] sm:$0xff]
    %v699 = vld [vmem:[#allocation2 + $0x58] sm:$0xff]
    %v700 = vld [vmem:[#allocation2 + $0x60] sm:$0xff]
    %v701 = vld [vmem:[#allocation2 + $0x68] sm:$0xff]
    %v702 = vld [vmem:[#allocation2 + $0x70] sm:$0xff]
    %v703 = vld [vmem:[#allocation2 + $0x78] sm:$0xff]
    %v704 = vld [vmem:[#allocation2 + $0x80] sm:$0xff]
    %v705 = vld [vmem:[#allocation2 + $0x88] sm:$0xff]
    %v706 = vld [vmem:[#allocation2 + $0x90] sm:$0xff]
    %v707 = vld [vmem:[#allocation2 + $0x98] sm:$0xff]
    %v708 = vld [vmem:[#allocation2 + $0xa0] sm:$0xff]
    %v709 = vld [vmem:[#allocation2 + $0xa8] sm:$0xff]
    %v710 = vld [vmem:[#allocation2 + $0xb0] sm:$0xff]
    %v711 = vld [vmem:[#allocation2 + $0xb8] sm:$0xff]
    %v712 = vld [vmem:[#allocation2 + $0xc0] sm:$0xff]
    %v713 = vld [vmem:[#allocation2 + $0xc8] sm:$0xff]
    %v714 = vld [vmem:[#allocation2 + $0xd0] sm:$0xff]
    %v715 = vld [vmem:[#allocation2 + $0xd8] sm:$0xff]
    %v716 = vld [vmem:[#allocation2 + $0xe0] sm:$0xff]
    %v717 = vld [vmem:[#allocation2 + $0xe8] sm:$0xff]
    %v718 = vld [vmem:[#allocation2 + $0xf0] sm:$0xff]
    %v719 = vld [vmem:[#allocation2 + $0xf8] sm:$0xff]
    %v720 = vld [vmem:[#allocation2 + $0x100] sm:$0xff]
    %v721 = vld [vmem:[#allocation2 + $0x108] sm:$0xff]
    %v722 = vld [vmem:[#allocation2 + $0x110] sm:$0xff]
    %v723 = vld [vmem:[#allocation2 + $0x118] sm:$0xff]
    %v724 = vld [vmem:[#allocation2 + $0x120] sm:$0xff]
    %v725 = vld [vmem:[#allocation2 + $0x128] sm:$0xff]
    %v726 = vld [vmem:[#allocation2 + $0x130] sm:$0xff]
    %v727 = vld [vmem:[#allocation2 + $0x138] sm:$0xff]
    %v728 = vld [vmem:[#allocation2 + $0x140] sm:$0xff]
    %v729 = vld [vmem:[#allocation2 + $0x148] sm:$0xff]
    %v730 = vld [vmem:[#allocation2 + $0x150] sm:$0xff]
    %v731 = vld [vmem:[#allocation2 + $0x158] sm:$0xff]
    %v732 = vld [vmem:[#allocation2 + $0x160] sm:$0xff]
    %v733 = vld [vmem:[#allocation2 + $0x168] sm:$0xff]
    %v734 = vld [vmem:[#allocation2 + $0x170] sm:$0xff]
    %v735 = vld [vmem:[#allocation2 + $0x178] sm:$0xff]
    %v736 = vld [vmem:[#allocation2 + $0x180] sm:$0xff]
    %v737 = vld [vmem:[#allocation2 + $0x188] sm:$0xff]
    %v738 = vld [vmem:[#allocation2 + $0x190] sm:$0xff]
    %v739 = vld [vmem:[#allocation2 + $0x198] sm:$0xff]
    %v740 = vld [vmem:[#allocation2 + $0x1a0] sm:$0xff]
    %v741 = vld [vmem:[#allocation2 + $0x1a8] sm:$0xff]
    %v742 = vld [vmem:[#allocation2 + $0x1b0] sm:$0xff]
    %v743 = vld [vmem:[#allocation2 + $0x1b8] sm:$0xff]
    %v744 = vld [vmem:[#allocation2 + $0x1c0] sm:$0xff]
    %v745 = vld [vmem:[#allocation2 + $0x1c8] sm:$0xff]
    %v746 = vld [vmem:[#allocation2 + $0x1d0] sm:$0xff]
    %v747 = vld [vmem:[#allocation2 + $0x1d8] sm:$0xff]
    %v748 = vld [vmem:[#allocation2 + $0x1e0] sm:$0xff]
    %v749 = vld [vmem:[#allocation2 + $0x1e8] sm:$0xff]
    %v750 = vld [vmem:[#allocation2 + $0x1f0] sm:$0xff]
    %v751 = vld [vmem:[#allocation2 + $0x1f8] sm:$0xff]
    %v752 = vld [vmem:[%s2] sm:$0xff]
    %v753 = vld [vmem:[%s2 + $0x8] sm:$0xff]
    %v754 = vld [vmem:[%s2 + $0x10] sm:$0xff]
    %v755 = vld [vmem:[%s2 + $0x18] sm:$0xff]
    %v756 = vld [vmem:[%s2 + $0x20] sm:$0xff]
    %v757 = vld [vmem:[%s2 + $0x28] sm:$0xff]
    %v758 = vld [vmem:[%s2 + $0x30] sm:$0xff]
    %v759 = vld [vmem:[%s2 + $0x38] sm:$0xff]
    %v760 = vld [vmem:[%s2 + $0x40] sm:$0xff]
    %v761 = vld [vmem:[%s2 + $0x48] sm:$0xff]
    %v762 = vld [vmem:[%s2 + $0x50] sm:$0xff]
    %v763 = vld [vmem:[%s2 + $0x58] sm:$0xff]
    %v764 = vld [vmem:[%s2 + $0x60] sm:$0xff]
    %v765 = vld [vmem:[%s2 + $0x68] sm:$0xff]
    %v766 = vld [vmem:[%s2 + $0x70] sm:$0xff]
    %v767 = vld [vmem:[%s2 + $0x78] sm:$0xff]
    %v768 = vld [vmem:[%s2 + $0x80] sm:$0xff]
    %v769 = vld [vmem:[%s2 + $0x88] sm:$0xff]
    %v770 = vld [vmem:[%s2 + $0x90] sm:$0xff]
    %v771 = vld [vmem:[%s2 + $0x98] sm:$0xff]
    %v772 = vld [vmem:[%s2 + $0xa0] sm:$0xff]
    %v773 = vld [vmem:[%s2 + $0xa8] sm:$0xff]
    %v774 = vld [vmem:[%s2 + $0xb0] sm:$0xff]
    %v775 = vld [vmem:[%s2 + $0xb8] sm:$0xff]
    %v776 = vld [vmem:[%s2 + $0xc0] sm:$0xff]
    %v777 = vld [vmem:[%s2 + $0xc8] sm:$0xff]
    %v778 = vld [vmem:[%s2 + $0xd0] sm:$0xff]
    %v779 = vld [vmem:[%s2 + $0xd8] sm:$0xff]
    %v780 = vld [vmem:[%s2 + $0xe0] sm:$0xff]
    %v781 = vld [vmem:[%s2 + $0xe8] sm:$0xff]
    %v782 = vld [vmem:[%s2 + $0xf0] sm:$0xff]
    %v783 = vld [vmem:[%s2 + $0xf8] sm:$0xff]
    %785 = vset.pattern.permute.xlu0 0
    %786 = vperm.xlu0 %785, %v752
    %v787 = vpop.permute.xlu0 %786
    %790 = vset.pattern.permute.xlu0 0
    %791 = vperm.xlu0 %790, %v753
    %v792 = vpop.permute.xlu0 %791
    %795 = vset.pattern.permute.xlu0 0
    %796 = vperm.xlu0 %795, %v754
    %v797 = vpop.permute.xlu0 %796
    %800 = vset.pattern.permute.xlu0 0
    %801 = vperm.xlu0 %800, %v755
    %v802 = vpop.permute.xlu0 %801
    %805 = vset.pattern.permute.xlu0 0
    %806 = vperm.xlu0 %805, %v756
    %v807 = vpop.permute.xlu0 %806
    %810 = vset.pattern.permute.xlu0 0
    %811 = vperm.xlu0 %810, %v757
    %v812 = vpop.permute.xlu0 %811
    %815 = vset.pattern.permute.xlu0 0
    %816 = vperm.xlu0 %815, %v758
    %v817 = vpop.permute.xlu0 %816
    %820 = vset.pattern.permute.xlu0 0
    %821 = vperm.xlu0 %820, %v759
    %v822 = vpop.permute.xlu0 %821
    %825 = vset.pattern.permute.xlu0 0
    %826 = vperm.xlu0 %825, %v760
    %v827 = vpop.permute.xlu0 %826
    %830 = vset.pattern.permute.xlu0 0
    %831 = vperm.xlu0 %830, %v761
    %v832 = vpop.permute.xlu0 %831
    %835 = vset.pattern.permute.xlu0 0
    %836 = vperm.xlu0 %835, %v762
    %v837 = vpop.permute.xlu0 %836
    %840 = vset.pattern.permute.xlu0 0
    %841 = vperm.xlu0 %840, %v763
    %v842 = vpop.permute.xlu0 %841
    %845 = vset.pattern.permute.xlu0 0
    %846 = vperm.xlu0 %845, %v764
    %v847 = vpop.permute.xlu0 %846
    %850 = vset.pattern.permute.xlu0 0
    %851 = vperm.xlu0 %850, %v765
    %v852 = vpop.permute.xlu0 %851
    %855 = vset.pattern.permute.xlu0 0
    %856 = vperm.xlu0 %855, %v766
    %v857 = vpop.permute.xlu0 %856
    %860 = vset.pattern.permute.xlu0 0
    %861 = vperm.xlu0 %860, %v767
    %v862 = vpop.permute.xlu0 %861
    %865 = vset.pattern.permute.xlu0 0
    %866 = vperm.xlu0 %865, %v768
    %v867 = vpop.permute.xlu0 %866
    %870 = vset.pattern.permute.xlu0 0
    %871 = vperm.xlu0 %870, %v769
    %v872 = vpop.permute.xlu0 %871
    %875 = vset.pattern.permute.xlu0 0
    %876 = vperm.xlu0 %875, %v770
    %v877 = vpop.permute.xlu0 %876
    %880 = vset.pattern.permute.xlu0 0
    %881 = vperm.xlu0 %880, %v771
    %v882 = vpop.permute.xlu0 %881
    %885 = vset.pattern.permute.xlu0 0
    %886 = vperm.xlu0 %885, %v772
    %v887 = vpop.permute.xlu0 %886
    %890 = vset.pattern.permute.xlu0 0
    %891 = vperm.xlu0 %890, %v773
    %v892 = vpop.permute.xlu0 %891
    %895 = vset.pattern.permute.xlu0 0
    %896 = vperm.xlu0 %895, %v774
    %v897 = vpop.permute.xlu0 %896
    %900 = vset.pattern.permute.xlu0 0
    %901 = vperm.xlu0 %900, %v775
    %v902 = vpop.permute.xlu0 %901
    %905 = vset.pattern.permute.xlu0 0
    %906 = vperm.xlu0 %905, %v776
    %v907 = vpop.permute.xlu0 %906
    %910 = vset.pattern.permute.xlu0 0
    %911 = vperm.xlu0 %910, %v777
    %v912 = vpop.permute.xlu0 %911
    %915 = vset.pattern.permute.xlu0 0
    %916 = vperm.xlu0 %915, %v778
    %v917 = vpop.permute.xlu0 %916
    %920 = vset.pattern.permute.xlu0 0
    %921 = vperm.xlu0 %920, %v779
    %v922 = vpop.permute.xlu0 %921
    %925 = vset.pattern.permute.xlu0 0
    %926 = vperm.xlu0 %925, %v780
    %v927 = vpop.permute.xlu0 %926
    %930 = vset.pattern.permute.xlu0 0
    %931 = vperm.xlu0 %930, %v781
    %v932 = vpop.permute.xlu0 %931
    %935 = vset.pattern.permute.xlu0 0
    %936 = vperm.xlu0 %935, %v782
    %v937 = vpop.permute.xlu0 %936
    %940 = vset.pattern.permute.xlu0 0
    %941 = vperm.xlu0 %940, %v783
    %v942 = vpop.permute.xlu0 %941
    %v944 = vmul.f32 %v688, %v787
    %v945 = vmul.f32 %v689, %v787
    %v946 = vmul.f32 %v690, %v792
    %v947 = vmul.f32 %v691, %v792
    %v948 = vmul.f32 %v692, %v797
    %v949 = vmul.f32 %v693, %v797
    %v950 = vmul.f32 %v694, %v802
    %v951 = vmul.f32 %v695, %v802
    %v952 = vmul.f32 %v696, %v807
    %v953 = vmul.f32 %v697, %v807
    %v954 = vmul.f32 %v698, %v812
    %v955 = vmul.f32 %v699, %v812
    %v956 = vmul.f32 %v700, %v817
    %v957 = vmul.f32 %v701, %v817
    %v958 = vmul.f32 %v702, %v822
    %v959 = vmul.f32 %v703, %v822
    %v960 = vmul.f32 %v704, %v827
    %v961 = vmul.f32 %v705, %v827
    %v962 = vmul.f32 %v706, %v832
    %v963 = vmul.f32 %v707, %v832
    %v964 = vmul.f32 %v708, %v837
    %v965 = vmul.f32 %v709, %v837
    %v966 = vmul.f32 %v710, %v842
    %v967 = vmul.f32 %v711, %v842
    %v968 = vmul.f32 %v712, %v847
    %v969 = vmul.f32 %v713, %v847
    %v970 = vmul.f32 %v714, %v852
    %v971 = vmul.f32 %v715, %v852
    %v972 = vmul.f32 %v716, %v857
    %v973 = vmul.f32 %v717, %v857
    %v974 = vmul.f32 %v718, %v862
    %v975 = vmul.f32 %v719, %v862
    %v976 = vmul.f32 %v720, %v867
    %v977 = vmul.f32 %v721, %v867
    %v978 = vmul.f32 %v722, %v872
    %v979 = vmul.f32 %v723, %v872
    %v980 = vmul.f32 %v724, %v877
    %v981 = vmul.f32 %v725, %v877
    %v982 = vmul.f32 %v726, %v882
    %v983 = vmul.f32 %v727, %v882
    %v984 = vmul.f32 %v728, %v887
    %v985 = vmul.f32 %v729, %v887
    %v986 = vmul.f32 %v730, %v892
    %v987 = vmul.f32 %v731, %v892
    %v988 = vmul.f32 %v732, %v897
    %v989 = vmul.f32 %v733, %v897
    %v990 = vmul.f32 %v734, %v902
    %v991 = vmul.f32 %v735, %v902
    %v992 = vmul.f32 %v736, %v907
    %v993 = vmul.f32 %v737, %v907
    %v994 = vmul.f32 %v738, %v912
    %v995 = vmul.f32 %v739, %v912
    %v996 = vmul.f32 %v740, %v917
    %v997 = vmul.f32 %v741, %v917
    %v998 = vmul.f32 %v742, %v922
    %v999 = vmul.f32 %v743, %v922
    %v1000 = vmul.f32 %v744, %v927
    %v1001 = vmul.f32 %v745, %v927
    %v1002 = vmul.f32 %v746, %v932
    %v1003 = vmul.f32 %v747, %v932
    %v1004 = vmul.f32 %v748, %v937
    %v1005 = vmul.f32 %v749, %v937
    %v1006 = vmul.f32 %v750, %v942
    %v1007 = vmul.f32 %v751, %v942
    %v1008 = vld [vmem:[%s3] sm:$0x3]
    %v1010 = vperm.slane %v1008, 0
    %v1011 = vperm.slane %v1008, 1
    %v1014 = vadd.f32 %v944, %v1010
    %v1015 = vadd.f32 %v945, %v1011
    %v1016 = vadd.f32 %v946, %v1010
    %v1017 = vadd.f32 %v947, %v1011
    %v1018 = vadd.f32 %v948, %v1010
    %v1019 = vadd.f32 %v949, %v1011
    %v1020 = vadd.f32 %v950, %v1010
    %v1021 = vadd.f32 %v951, %v1011
    %v1022 = vadd.f32 %v952, %v1010
    %v1023 = vadd.f32 %v953, %v1011
    %v1024 = vadd.f32 %v954, %v1010
    %v1025 = vadd.f32 %v955, %v1011
    %v1026 = vadd.f32 %v956, %v1010
    %v1027 = vadd.f32 %v957, %v1011
    %v1028 = vadd.f32 %v958, %v1010
    %v1029 = vadd.f32 %v959, %v1011
    %v1030 = vadd.f32 %v960, %v1010
    %v1031 = vadd.f32 %v961, %v1011
    %v1032 = vadd.f32 %v962, %v1010
    %v1033 = vadd.f32 %v963, %v1011
    %v1034 = vadd.f32 %v964, %v1010
    %v1035 = vadd.f32 %v965, %v1011
    %v1036 = vadd.f32 %v966, %v1010
    %v1037 = vadd.f32 %v967, %v1011
    %v1038 = vadd.f32 %v968, %v1010
    %v1039 = vadd.f32 %v969, %v1011
    %v1040 = vadd.f32 %v970, %v1010
    %v1041 = vadd.f32 %v971, %v1011
    %v1042 = vadd.f32 %v972, %v1010
    %v1043 = vadd.f32 %v973, %v1011
    %v1044 = vadd.f32 %v974, %v1010
    %v1045 = vadd.f32 %v975, %v1011
    %v1046 = vadd.f32 %v976, %v1010
    %v1047 = vadd.f32 %v977, %v1011
    %v1048 = vadd.f32 %v978, %v1010
    %v1049 = vadd.f32 %v979, %v1011
    %v1050 = vadd.f32 %v980, %v1010
    %v1051 = vadd.f32 %v981, %v1011
    %v1052 = vadd.f32 %v982, %v1010
    %v1053 = vadd.f32 %v983, %v1011
    %v1054 = vadd.f32 %v984, %v1010
    %v1055 = vadd.f32 %v985, %v1011
    %v1056 = vadd.f32 %v986, %v1010
    %v1057 = vadd.f32 %v987, %v1011
    %v1058 = vadd.f32 %v988, %v1010
    %v1059 = vadd.f32 %v989, %v1011
    %v1060 = vadd.f32 %v990, %v1010
    %v1061 = vadd.f32 %v991, %v1011
    %v1062 = vadd.f32 %v992, %v1010
    %v1063 = vadd.f32 %v993, %v1011
    %v1064 = vadd.f32 %v994, %v1010
    %v1065 = vadd.f32 %v995, %v1011
    %v1066 = vadd.f32 %v996, %v1010
    %v1067 = vadd.f32 %v997, %v1011
    %v1068 = vadd.f32 %v998, %v1010
    %v1069 = vadd.f32 %v999, %v1011
    %v1070 = vadd.f32 %v1000, %v1010
    %v1071 = vadd.f32 %v1001, %v1011
    %v1072 = vadd.f32 %v1002, %v1010
    %v1073 = vadd.f32 %v1003, %v1011
    %v1074 = vadd.f32 %v1004, %v1010
    %v1075 = vadd.f32 %v1005, %v1011
    %v1076 = vadd.f32 %v1006, %v1010
    %v1077 = vadd.f32 %v1007, %v1011
    %v1078 = vmax.f32 %v1014, 0.0
    %v1079 = vmax.f32 %v1015, 0.0
    %v1080 = vmax.f32 %v1016, 0.0
    %v1081 = vmax.f32 %v1017, 0.0
    %v1082 = vmax.f32 %v1018, 0.0
    %v1083 = vmax.f32 %v1019, 0.0
    %v1084 = vmax.f32 %v1020, 0.0
    %v1085 = vmax.f32 %v1021, 0.0
    %v1086 = vmax.f32 %v1022, 0.0
    %v1087 = vmax.f32 %v1023, 0.0
    %v1088 = vmax.f32 %v1024, 0.0
    %v1089 = vmax.f32 %v1025, 0.0
    %v1090 = vmax.f32 %v1026, 0.0
    %v1091 = vmax.f32 %v1027, 0.0
    %v1092 = vmax.f32 %v1028, 0.0
    %v1093 = vmax.f32 %v1029, 0.0
    %v1094 = vmax.f32 %v1030, 0.0
    %v1095 = vmax.f32 %v1031, 0.0
    %v1096 = vmax.f32 %v1032, 0.0
    %v1097 = vmax.f32 %v1033, 0.0
    %v1098 = vmax.f32 %v1034, 0.0
    %v1099 = vmax.f32 %v1035, 0.0
    %v1100 = vmax.f32 %v1036, 0.0
    %v1101 = vmax.f32 %v1037, 0.0
    %v1102 = vmax.f32 %v1038, 0.0
    %v1103 = vmax.f32 %v1039, 0.0
    %v1104 = vmax.f32 %v1040, 0.0
    %v1105 = vmax.f32 %v1041, 0.0
    %v1106 = vmax.f32 %v1042, 0.0
    %v1107 = vmax.f32 %v1043, 0.0
    %v1108 = vmax.f32 %v1044, 0.0
    %v1109 = vmax.f32 %v1045, 0.0
    %v1110 = vmax.f32 %v1046, 0.0
    %v1111 = vmax.f32 %v1047, 0.0
    %v1112 = vmax.f32 %v1048, 0.0
    %v1113 = vmax.f32 %v1049, 0.0
    %v1114 = vmax.f32 %v1050, 0.0
    %v1115 = vmax.f32 %v1051, 0.0
    %v1116 = vmax.f32 %v1052, 0.0
    %v1117 = vmax.f32 %v1053, 0.0
    %v1118 = vmax.f32 %v1054, 0.0
    %v1119 = vmax.f32 %v1055, 0.0
    %v1120 = vmax.f32 %v1056, 0.0
    %v1121 = vmax.f32 %v1057, 0.0
    %v1122 = vmax.f32 %v1058, 0.0
    %v1123 = vmax.f32 %v1059, 0.0
    %v1124 = vmax.f32 %v1060, 0.0
    %v1125 = vmax.f32 %v1061, 0.0
    %v1126 = vmax.f32 %v1062, 0.0
    %v1127 = vmax.f32 %v1063, 0.0
    %v1128 = vmax.f32 %v1064, 0.0
    %v1129 = vmax.f32 %v1065, 0.0
    %v1130 = vmax.f32 %v1066, 0.0
    %v1131 = vmax.f32 %v1067, 0.0
    %v1132 = vmax.f32 %v1068, 0.0
    %v1133 = vmax.f32 %v1069, 0.0
    %v1134 = vmax.f32 %v1070, 0.0
    %v1135 = vmax.f32 %v1071, 0.0
    %v1136 = vmax.f32 %v1072, 0.0
    %v1137 = vmax.f32 %v1073, 0.0
    %v1138 = vmax.f32 %v1074, 0.0
    %v1139 = vmax.f32 %v1075, 0.0
    %v1140 = vmax.f32 %v1076, 0.0
    %v1141 = vmax.f32 %v1077, 0.0
    %v1142 = vld [vmem:[%s4] sm:$0xff]
    %v1143 = vld [vmem:[%s4 + $0x8] sm:$0xff]
    %v1144 = vld [vmem:[%s4 + $0x10] sm:$0xff]
    %v1145 = vld [vmem:[%s4 + $0x18] sm:$0xff]
    %v1146 = vld [vmem:[%s4 + $0x20] sm:$0xff]
    %v1147 = vld [vmem:[%s4 + $0x28] sm:$0xff]
    %v1148 = vld [vmem:[%s4 + $0x30] sm:$0xff]
    %v1149 = vld [vmem:[%s4 + $0x38] sm:$0xff]
    %v1150 = vld [vmem:[%s4 + $0x40] sm:$0xff]
    %v1151 = vld [vmem:[%s4 + $0x48] sm:$0xff]
    %v1152 = vld [vmem:[%s4 + $0x50] sm:$0xff]
    %v1153 = vld [vmem:[%s4 + $0x58] sm:$0xff]
    %v1154 = vld [vmem:[%s4 + $0x60] sm:$0xff]
    %v1155 = vld [vmem:[%s4 + $0x68] sm:$0xff]
    %v1156 = vld [vmem:[%s4 + $0x70] sm:$0xff]
    %v1157 = vld [vmem:[%s4 + $0x78] sm:$0xff]
    %v1158 = vld [vmem:[%s4 + $0x80] sm:$0xff]
    %v1159 = vld [vmem:[%s4 + $0x88] sm:$0xff]
    %v1160 = vld [vmem:[%s4 + $0x90] sm:$0xff]
    %v1161 = vld [vmem:[%s4 + $0x98] sm:$0xff]
    %v1162 = vld [vmem:[%s4 + $0xa0] sm:$0xff]
    %v1163 = vld [vmem:[%s4 + $0xa8] sm:$0xff]
    %v1164 = vld [vmem:[%s4 + $0xb0] sm:$0xff]
    %v1165 = vld [vmem:[%s4 + $0xb8] sm:$0xff]
    %v1166 = vld [vmem:[%s4 + $0xc0] sm:$0xff]
    %v1167 = vld [vmem:[%s4 + $0xc8] sm:$0xff]
    %v1168 = vld [vmem:[%s4 + $0xd0] sm:$0xff]
    %v1169 = vld [vmem:[%s4 + $0xd8] sm:$0xff]
    %v1170 = vld [vmem:[%s4 + $0xe0] sm:$0xff]
    %v1171 = vld [vmem:[%s4 + $0xe8] sm:$0xff]
    %v1172 = vld [vmem:[%s4 + $0xf0] sm:$0xff]
    %v1173 = vld [vmem:[%s4 + $0xf8] sm:$0xff]
    %1175 = vset.pattern.permute.xlu0 0
    %1176 = vperm.xlu0 %1175, %v1142
    %v1177 = vpop.permute.xlu0 %1176
    %1180 = vset.pattern.permute.xlu0 0
    %1181 = vperm.xlu0 %1180, %v1143
    %v1182 = vpop.permute.xlu0 %1181
    %1185 = vset.pattern.permute.xlu0 0
    %1186 = vperm.xlu0 %1185, %v1144
    %v1187 = vpop.permute.xlu0 %1186
    %1190 = vset.pattern.permute.xlu0 0
    %1191 = vperm.xlu0 %1190, %v1145
    %v1192 = vpop.permute.xlu0 %1191
    %1195 = vset.pattern.permute.xlu0 0
    %1196 = vperm.xlu0 %1195, %v1146
    %v1197 = vpop.permute.xlu0 %1196
    %1200 = vset.pattern.permute.xlu0 0
    %1201 = vperm.xlu0 %1200, %v1147
    %v1202 = vpop.permute.xlu0 %1201
    %1205 = vset.pattern.permute.xlu0 0
    %1206 = vperm.xlu0 %1205, %v1148
    %v1207 = vpop.permute.xlu0 %1206
    %1210 = vset.pattern.permute.xlu0 0
    %1211 = vperm.xlu0 %1210, %v1149
    %v1212 = vpop.permute.xlu0 %1211
    %1215 = vset.pattern.permute.xlu0 0
    %1216 = vperm.xlu0 %1215, %v1150
    %v1217 = vpop.permute.xlu0 %1216
    %1220 = vset.pattern.permute.xlu0 0
    %1221 = vperm.xlu0 %1220, %v1151
    %v1222 = vpop.permute.xlu0 %1221
    %1225 = vset.pattern.permute.xlu0 0
    %1226 = vperm.xlu0 %1225, %v1152
    %v1227 = vpop.permute.xlu0 %1226
    %1230 = vset.pattern.permute.xlu0 0
    %1231 = vperm.xlu0 %1230, %v1153
    %v1232 = vpop.permute.xlu0 %1231
    %1235 = vset.pattern.permute.xlu0 0
    %1236 = vperm.xlu0 %1235, %v1154
    %v1237 = vpop.permute.xlu0 %1236
    %1240 = vset.pattern.permute.xlu0 0
    %1241 = vperm.xlu0 %1240, %v1155
    %v1242 = vpop.permute.xlu0 %1241
    %1245 = vset.pattern.permute.xlu0 0
    %1246 = vperm.xlu0 %1245, %v1156
    %v1247 = vpop.permute.xlu0 %1246
    %1250 = vset.pattern.permute.xlu0 0
    %1251 = vperm.xlu0 %1250, %v1157
    %v1252 = vpop.permute.xlu0 %1251
    %1255 = vset.pattern.permute.xlu0 0
    %1256 = vperm.xlu0 %1255, %v1158
    %v1257 = vpop.permute.xlu0 %1256
    %1260 = vset.pattern.permute.xlu0 0
    %1261 = vperm.xlu0 %1260, %v1159
    %v1262 = vpop.permute.xlu0 %1261
    %1265 = vset.pattern.permute.xlu0 0
    %1266 = vperm.xlu0 %1265, %v1160
    %v1267 = vpop.permute.xlu0 %1266
    %1270 = vset.pattern.permute.xlu0 0
    %1271 = vperm.xlu0 %1270, %v1161
    %v1272 = vpop.permute.xlu0 %1271
    %1275 = vset.pattern.permute.xlu0 0
    %1276 = vperm.xlu0 %1275, %v1162
    %v1277 = vpop.permute.xlu0 %1276
    %1280 = vset.pattern.permute.xlu0 0
    %1281 = vperm.xlu0 %1280, %v1163
    %v1282 = vpop.permute.xlu0 %1281
    %1285 = vset.pattern.permute.xlu0 0
    %1286 = vperm.xlu0 %1285, %v1164
    %v1287 = vpop.permute.xlu0 %1286
    %1290 = vset.pattern.permute.xlu0 0
    %1291 = vperm.xlu0 %1290, %v1165
    %v1292 = vpop.permute.xlu0 %1291
    %1295 = vset.pattern.permute.xlu0 0
    %1296 = vperm.xlu0 %1295, %v1166
    %v1297 = vpop.permute.xlu0 %1296
    %1300 = vset.pattern.permute.xlu0 0
    %1301 = vperm.xlu0 %1300, %v1167
    %v1302 = vpop.permute.xlu0 %1301
    %1305 = vset.pattern.permute.xlu0 0
    %1306 = vperm.xlu0 %1305, %v1168
    %v1307 = vpop.permute.xlu0 %1306
    %1310 = vset.pattern.permute.xlu0 0
    %1311 = vperm.xlu0 %1310, %v1169
    %v1312 = vpop.permute.xlu0 %1311
    %1315 = vset.pattern.permute.xlu0 0
    %1316 = vperm.xlu0 %1315, %v1170
    %v1317 = vpop.permute.xlu0 %1316
    %1320 = vset.pattern.permute.xlu0 0
    %1321 = vperm.xlu0 %1320, %v1171
    %v1322 = vpop.permute.xlu0 %1321
    %1325 = vset.pattern.permute.xlu0 0
    %1326 = vperm.xlu0 %1325, %v1172
    %v1327 = vpop.permute.xlu0 %1326
    %1330 = vset.pattern.permute.xlu0 0
    %1331 = vperm.xlu0 %1330, %v1173
    %v1332 = vpop.permute.xlu0 %1331
    %v1334 = vmul.f32 %v1078, %v1177
    %v1335 = vmul.f32 %v1079, %v1177
    %v1336 = vmul.f32 %v1080, %v1182
    %v1337 = vmul.f32 %v1081, %v1182
    %v1338 = vmul.f32 %v1082, %v1187
    %v1339 = vmul.f32 %v1083, %v1187
    %v1340 = vmul.f32 %v1084, %v1192
    %v1341 = vmul.f32 %v1085, %v1192
    %v1342 = vmul.f32 %v1086, %v1197
    %v1343 = vmul.f32 %v1087, %v1197
    %v1344 = vmul.f32 %v1088, %v1202
    %v1345 = vmul.f32 %v1089, %v1202
    %v1346 = vmul.f32 %v1090, %v1207
    %v1347 = vmul.f32 %v1091, %v1207
    %v1348 = vmul.f32 %v1092, %v1212
    %v1349 = vmul.f32 %v1093, %v1212
    %v1350 = vmul.f32 %v1094, %v1217
    %v1351 = vmul.f32 %v1095, %v1217
    %v1352 = vmul.f32 %v1096, %v1222
    %v1353 = vmul.f32 %v1097, %v1222
    %v1354 = vmul.f32 %v1098, %v1227
    %v1355 = vmul.f32 %v1099, %v1227
    %v1356 = vmul.f32 %v1100, %v1232
    %v1357 = vmul.f32 %v1101, %v1232
    %v1358 = vmul.f32 %v1102, %v1237
    %v1359 = vmul.f32 %v1103, %v1237
    %v1360 = vmul.f32 %v1104, %v1242
    %v1361 = vmul.f32 %v1105, %v1242
    %v1362 = vmul.f32 %v1106, %v1247
    %v1363 = vmul.f32 %v1107, %v1247
    %v1364 = vmul.f32 %v1108, %v1252
    %v1365 = vmul.f32 %v1109, %v1252
    %v1366 = vmul.f32 %v1110, %v1257
    %v1367 = vmul.f32 %v1111, %v1257
    %v1368 = vmul.f32 %v1112, %v1262
    %v1369 = vmul.f32 %v1113, %v1262
    %v1370 = vmul.f32 %v1114, %v1267
    %v1371 = vmul.f32 %v1115, %v1267
    %v1372 = vmul.f32 %v1116, %v1272
    %v1373 = vmul.f32 %v1117, %v1272
    %v1374 = vmul.f32 %v1118, %v1277
    %v1375 = vmul.f32 %v1119, %v1277
    %v1376 = vmul.f32 %v1120, %v1282
    %v1377 = vmul.f32 %v1121, %v1282
    %v1378 = vmul.f32 %v1122, %v1287
    %v1379 = vmul.f32 %v1123, %v1287
    %v1380 = vmul.f32 %v1124, %v1292
    %v1381 = vmul.f32 %v1125, %v1292
    %v1382 = vmul.f32 %v1126, %v1297
    %v1383 = vmul.f32 %v1127, %v1297
    %v1384 = vmul.f32 %v1128, %v1302
    %v1385 = vmul.f32 %v1129, %v1302
    %v1386 = vmul.f32 %v1130, %v1307
    %v1387 = vmul.f32 %v1131, %v1307
    %v1388 = vmul.f32 %v1132, %v1312
    %v1389 = vmul.f32 %v1133, %v1312
    %v1390 = vmul.f32 %v1134, %v1317
    %v1391 = vmul.f32 %v1135, %v1317
    %v1392 = vmul.f32 %v1136, %v1322
    %v1393 = vmul.f32 %v1137, %v1322
    %v1394 = vmul.f32 %v1138, %v1327
    %v1395 = vmul.f32 %v1139, %v1327
    %v1396 = vmul.f32 %v1140, %v1332
    %v1397 = vmul.f32 %v1141, %v1332
    %v1398 = vpack.c.bf16 %v1335, %v1334
    %v1399 = vpack.c.bf16 %v1337, %v1336
    %v1400 = vpack.c.bf16 %v1339, %v1338
    %v1401 = vpack.c.bf16 %v1341, %v1340
    %v1402 = vpack.c.bf16 %v1343, %v1342
    %v1403 = vpack.c.bf16 %v1345, %v1344
    %v1404 = vpack.c.bf16 %v1347, %v1346
    %v1405 = vpack.c.bf16 %v1349, %v1348
    %v1406 = vpack.c.bf16 %v1351, %v1350
    %v1407 = vpack.c.bf16 %v1353, %v1352
    %v1408 = vpack.c.bf16 %v1355, %v1354
    %v1409 = vpack.c.bf16 %v1357, %v1356
    %v1410 = vpack.c.bf16 %v1359, %v1358
    %v1411 = vpack.c.bf16 %v1361, %v1360
    %v1412 = vpack.c.bf16 %v1363, %v1362
    %v1413 = vpack.c.bf16 %v1365, %v1364
    %v1414 = vpack.c.bf16 %v1367, %v1366
    %v1415 = vpack.c.bf16 %v1369, %v1368
    %v1416 = vpack.c.bf16 %v1371, %v1370
    %v1417 = vpack.c.bf16 %v1373, %v1372
    %v1418 = vpack.c.bf16 %v1375, %v1374
    %v1419 = vpack.c.bf16 %v1377, %v1376
    %v1420 = vpack.c.bf16 %v1379, %v1378
    %v1421 = vpack.c.bf16 %v1381, %v1380
    %v1422 = vpack.c.bf16 %v1383, %v1382
    %v1423 = vpack.c.bf16 %v1385, %v1384
    %v1424 = vpack.c.bf16 %v1387, %v1386
    %v1425 = vpack.c.bf16 %v1389, %v1388
    %v1426 = vpack.c.bf16 %v1391, %v1390
    %v1427 = vpack.c.bf16 %v1393, %v1392
    %v1428 = vpack.c.bf16 %v1395, %v1394
    %v1429 = vpack.c.bf16 %v1397, %v1396
    %1430 = vst [vmem:[%s5] sm:$0xff] %v1398
    %1431 = vst [vmem:[%s5 + $0x8] sm:$0xff] %v1399
    %1432 = vst [vmem:[%s5 + $0x10] sm:$0xff] %v1400
    %1433 = vst [vmem:[%s5 + $0x18] sm:$0xff] %v1401
    %1434 = vst [vmem:[%s5 + $0x20] sm:$0xff] %v1402
    %1435 = vst [vmem:[%s5 + $0x28] sm:$0xff] %v1403
    %1436 = vst [vmem:[%s5 + $0x30] sm:$0xff] %v1404
    %1437 = vst [vmem:[%s5 + $0x38] sm:$0xff] %v1405
    %1438 = vst [vmem:[%s5 + $0x40] sm:$0xff] %v1406
    %1439 = vst [vmem:[%s5 + $0x48] sm:$0xff] %v1407
    %1440 = vst [vmem:[%s5 + $0x50] sm:$0xff] %v1408
    %1441 = vst [vmem:[%s5 + $0x58] sm:$0xff] %v1409
    %1442 = vst [vmem:[%s5 + $0x60] sm:$0xff] %v1410
    %1443 = vst [vmem:[%s5 + $0x68] sm:$0xff] %v1411
    %1444 = vst [vmem:[%s5 + $0x70] sm:$0xff] %v1412
    %1445 = vst [vmem:[%s5 + $0x78] sm:$0xff] %v1413
    %1446 = vst [vmem:[%s5 + $0x80] sm:$0xff] %v1414
    %1447 = vst [vmem:[%s5 + $0x88] sm:$0xff] %v1415
    %1448 = vst [vmem:[%s5 + $0x90] sm:$0xff] %v1416
    %1449 = vst [vmem:[%s5 + $0x98] sm:$0xff] %v1417
    %1450 = vst [vmem:[%s5 + $0xa0] sm:$0xff] %v1418
    %1451 = vst [vmem:[%s5 + $0xa8] sm:$0xff] %v1419
    %1452 = vst [vmem:[%s5 + $0xb0] sm:$0xff] %v1420
    %1453 = vst [vmem:[%s5 + $0xb8] sm:$0xff] %v1421
    %1454 = vst [vmem:[%s5 + $0xc0] sm:$0xff] %v1422
    %1455 = vst [vmem:[%s5 + $0xc8] sm:$0xff] %v1423
    %1456 = vst [vmem:[%s5 + $0xd0] sm:$0xff] %v1424
    %1457 = vst [vmem:[%s5 + $0xd8] sm:$0xff] %v1425
    %1458 = vst [vmem:[%s5 + $0xe0] sm:$0xff] %v1426
    %1459 = vst [vmem:[%s5 + $0xe8] sm:$0xff] %v1427
    %1460 = vst [vmem:[%s5 + $0xf0] sm:$0xff] %v1428
    %1461 = vst [vmem:[%s5 + $0xf8] sm:$0xff] %v1429
    %v1462 = vlaneseq
    %v1463 = vshrl.u32 %v1462, 7
    %vm1464 = vcmp.eq.s32.totalorder %v1463, 0
    %v1465 = vsel %vm1464, 1, 0
    %v1466 = vcvt.s32.f32 %v1465
    %v1467 = vadd.f32 %v1334, %v1336
    %v1468 = vadd.f32 %v1467, %v1338
    %v1469 = vadd.f32 %v1468, %v1340
    %v1470 = vadd.f32 %v1469, %v1342
    %v1471 = vadd.f32 %v1470, %v1344
    %v1472 = vadd.f32 %v1471, %v1346
    %v1473 = vadd.f32 %v1472, %v1348
    %v1474 = vadd.f32 %v1473, %v1350
    %v1475 = vadd.f32 %v1474, %v1352
    %v1476 = vadd.f32 %v1475, %v1354
    %v1477 = vadd.f32 %v1476, %v1356
    %v1478 = vadd.f32 %v1477, %v1358
    %v1479 = vadd.f32 %v1478, %v1360
    %v1480 = vadd.f32 %v1479, %v1362
    %v1481 = vadd.f32 %v1480, %v1364
    %v1482 = vadd.f32 %v1481, %v1366
    %v1483 = vadd.f32 %v1482, %v1368
    %v1484 = vadd.f32 %v1483, %v1370
    %v1485 = vadd.f32 %v1484, %v1372
    %v1486 = vadd.f32 %v1485, %v1374
    %v1487 = vadd.f32 %v1486, %v1376
    %v1488 = vadd.f32 %v1487, %v1378
    %v1489 = vadd.f32 %v1488, %v1380
    %v1490 = vadd.f32 %v1489, %v1382
    %v1491 = vadd.f32 %v1490, %v1384
    %v1492 = vadd.f32 %v1491, %v1386
    %v1493 = vadd.f32 %v1492, %v1388
    %v1494 = vadd.f32 %v1493, %v1390
    %v1495 = vadd.f32 %v1494, %v1392
    %v1496 = vadd.f32 %v1495, %v1394
    %v1497 = vadd.f32 %v1496, %v1396
    %v1498 = vrot.slane %v1497, 4
    %v1499 = vadd.f32 %v1497, %v1498
    %v1500 = vrot.slane %v1499, 2
    %v1501 = vadd.f32 %v1499, %v1500
    %v1502 = vrot.slane %v1501, 1
    %v1503 = vadd.f32 %v1501, %v1502
    %v1504 = vadd.f32 %v1335, %v1337
    %v1505 = vadd.f32 %v1504, %v1339
    %v1506 = vadd.f32 %v1505, %v1341
    %v1507 = vadd.f32 %v1506, %v1343
    %v1508 = vadd.f32 %v1507, %v1345
    %v1509 = vadd.f32 %v1508, %v1347
    %v1510 = vadd.f32 %v1509, %v1349
    %v1511 = vadd.f32 %v1510, %v1351
    %v1512 = vadd.f32 %v1511, %v1353
    %v1513 = vadd.f32 %v1512, %v1355
    %v1514 = vadd.f32 %v1513, %v1357
    %v1515 = vadd.f32 %v1514, %v1359
    %v1516 = vadd.f32 %v1515, %v1361
    %v1517 = vadd.f32 %v1516, %v1363
    %v1518 = vadd.f32 %v1517, %v1365
    %v1519 = vadd.f32 %v1518, %v1367
    %v1520 = vadd.f32 %v1519, %v1369
    %v1521 = vadd.f32 %v1520, %v1371
    %v1522 = vadd.f32 %v1521, %v1373
    %v1523 = vadd.f32 %v1522, %v1375
    %v1524 = vadd.f32 %v1523, %v1377
    %v1525 = vadd.f32 %v1524, %v1379
    %v1526 = vadd.f32 %v1525, %v1381
    %v1527 = vadd.f32 %v1526, %v1383
    %v1528 = vadd.f32 %v1527, %v1385
    %v1529 = vadd.f32 %v1528, %v1387
    %v1530 = vadd.f32 %v1529, %v1389
    %v1531 = vadd.f32 %v1530, %v1391
    %v1532 = vadd.f32 %v1531, %v1393
    %v1533 = vadd.f32 %v1532, %v1395
    %v1534 = vadd.f32 %v1533, %v1397
    %v1535 = vrot.slane %v1534, 4
    %v1536 = vadd.f32 %v1534, %v1535
    %v1537 = vrot.slane %v1536, 2
    %v1538 = vadd.f32 %v1536, %v1537
    %v1539 = vrot.slane %v1538, 1
    %v1540 = vadd.f32 %v1538, %v1539
    %v1541 = vmul.f32 %v1466, %v1503
    %v1542 = vmul.f32 %v1466, %v1540
    %1543 = vst [vmem:[%s6] sm:$0xff] %v1541
    %1544 = vst [vmem:[%s6 + $0x8] sm:$0xff] %v1542
    %v1545 = vmul.f32 %v1334, %v1334
    %v1546 = vmul.f32 %v1335, %v1335
    %v1547 = vmul.f32 %v1336, %v1336
    %v1548 = vmul.f32 %v1337, %v1337
    %v1549 = vmul.f32 %v1338, %v1338
    %v1550 = vmul.f32 %v1339, %v1339
    %v1551 = vmul.f32 %v1340, %v1340
    %v1552 = vmul.f32 %v1341, %v1341
    %v1553 = vmul.f32 %v1342, %v1342
    %v1554 = vmul.f32 %v1343, %v1343
    %v1555 = vmul.f32 %v1344, %v1344
    %v1556 = vmul.f32 %v1345, %v1345
    %v1557 = vmul.f32 %v1346, %v1346
    %v1558 = vmul.f32 %v1347, %v1347
    %v1559 = vmul.f32 %v1348, %v1348
    %v1560 = vmul.f32 %v1349, %v1349
    %v1561 = vmul.f32 %v1350, %v1350
    %v1562 = vmul.f32 %v1351, %v1351
    %v1563 = vmul.f32 %v1352, %v1352
    %v1564 = vmul.f32 %v1353, %v1353
    %v1565 = vmul.f32 %v1354, %v1354
    %v1566 = vmul.f32 %v1355, %v1355
    %v1567 = vmul.f32 %v1356, %v1356
    %v1568 = vmul.f32 %v1357, %v1357
    %v1569 = vmul.f32 %v1358, %v1358
    %v1570 = vmul.f32 %v1359, %v1359
    %v1571 = vmul.f32 %v1360, %v1360
    %v1572 = vmul.f32 %v1361, %v1361
    %v1573 = vmul.f32 %v1362, %v1362
    %v1574 = vmul.f32 %v1363, %v1363
    %v1575 = vmul.f32 %v1364, %v1364
    %v1576 = vmul.f32 %v1365, %v1365
    %v1577 = vmul.f32 %v1366, %v1366
    %v1578 = vmul.f32 %v1367, %v1367
    %v1579 = vmul.f32 %v1368, %v1368
    %v1580 = vmul.f32 %v1369, %v1369
    %v1581 = vmul.f32 %v1370, %v1370
    %v1582 = vmul.f32 %v1371, %v1371
    %v1583 = vmul.f32 %v1372, %v1372
    %v1584 = vmul.f32 %v1373, %v1373
    %v1585 = vmul.f32 %v1374, %v1374
    %v1586 = vmul.f32 %v1375, %v1375
    %v1587 = vmul.f32 %v1376, %v1376
    %v1588 = vmul.f32 %v1377, %v1377
    %v1589 = vmul.f32 %v1378, %v1378
    %v1590 = vmul.f32 %v1379, %v1379
    %v1591 = vmul.f32 %v1380, %v1380
    %v1592 = vmul.f32 %v1381, %v1381
    %v1593 = vmul.f32 %v1382, %v1382
    %v1594 = vmul.f32 %v1383, %v1383
    %v1595 = vmul.f32 %v1384, %v1384
    %v1596 = vmul.f32 %v1385, %v1385
    %v1597 = vmul.f32 %v1386, %v1386
    %v1598 = vmul.f32 %v1387, %v1387
    %v1599 = vmul.f32 %v1388, %v1388
    %v1600 = vmul.f32 %v1389, %v1389
    %v1601 = vmul.f32 %v1390, %v1390
    %v1602 = vmul.f32 %v1391, %v1391
    %v1603 = vmul.f32 %v1392, %v1392
    %v1604 = vmul.f32 %v1393, %v1393
    %v1605 = vmul.f32 %v1394, %v1394
    %v1606 = vmul.f32 %v1395, %v1395
    %v1607 = vmul.f32 %v1396, %v1396
    %v1608 = vmul.f32 %v1397, %v1397
    %v1609 = vadd.f32 %v1545, %v1547
    %v1610 = vadd.f32 %v1609, %v1549
    %v1611 = vadd.f32 %v1610, %v1551
    %v1612 = vadd.f32 %v1611, %v1553
    %v1613 = vadd.f32 %v1612, %v1555
    %v1614 = vadd.f32 %v1613, %v1557
    %v1615 = vadd.f32 %v1614, %v1559
    %v1616 = vadd.f32 %v1615, %v1561
    %v1617 = vadd.f32 %v1616, %v1563
    %v1618 = vadd.f32 %v1617, %v1565
    %v1619 = vadd.f32 %v1618, %v1567
    %v1620 = vadd.f32 %v1619, %v1569
    %v1621 = vadd.f32 %v1620, %v1571
    %v1622 = vadd.f32 %v1621, %v1573
    %v1623 = vadd.f32 %v1622, %v1575
    %v1624 = vadd.f32 %v1623, %v1577
    %v1625 = vadd.f32 %v1624, %v1579
    %v1626 = vadd.f32 %v1625, %v1581
    %v1627 = vadd.f32 %v1626, %v1583
    %v1628 = vadd.f32 %v1627, %v1585
    %v1629 = vadd.f32 %v1628, %v1587
    %v1630 = vadd.f32 %v1629, %v1589
    %v1631 = vadd.f32 %v1630, %v1591
    %v1632 = vadd.f32 %v1631, %v1593
    %v1633 = vadd.f32 %v1632, %v1595
    %v1634 = vadd.f32 %v1633, %v1597
    %v1635 = vadd.f32 %v1634, %v1599
    %v1636 = vadd.f32 %v1635, %v1601
    %v1637 = vadd.f32 %v1636, %v1603
    %v1638 = vadd.f32 %v1637, %v1605
    %v1639 = vadd.f32 %v1638, %v1607
    %v1640 = vrot.slane %v1639, 4
    %v1641 = vadd.f32 %v1639, %v1640
    %v1642 = vrot.slane %v1641, 2
    %v1643 = vadd.f32 %v1641, %v1642
    %v1644 = vrot.slane %v1643, 1
    %v1645 = vadd.f32 %v1643, %v1644
    %v1646 = vadd.f32 %v1546, %v1548
    %v1647 = vadd.f32 %v1646, %v1550
    %v1648 = vadd.f32 %v1647, %v1552
    %v1649 = vadd.f32 %v1648, %v1554
    %v1650 = vadd.f32 %v1649, %v1556
    %v1651 = vadd.f32 %v1650, %v1558
    %v1652 = vadd.f32 %v1651, %v1560
    %v1653 = vadd.f32 %v1652, %v1562
    %v1654 = vadd.f32 %v1653, %v1564
    %v1655 = vadd.f32 %v1654, %v1566
    %v1656 = vadd.f32 %v1655, %v1568
    %v1657 = vadd.f32 %v1656, %v1570
    %v1658 = vadd.f32 %v1657, %v1572
    %v1659 = vadd.f32 %v1658, %v1574
    %v1660 = vadd.f32 %v1659, %v1576
    %v1661 = vadd.f32 %v1660, %v1578
    %v1662 = vadd.f32 %v1661, %v1580
    %v1663 = vadd.f32 %v1662, %v1582
    %v1664 = vadd.f32 %v1663, %v1584
    %v1665 = vadd.f32 %v1664, %v1586
    %v1666 = vadd.f32 %v1665, %v1588
    %v1667 = vadd.f32 %v1666, %v1590
    %v1668 = vadd.f32 %v1667, %v1592
    %v1669 = vadd.f32 %v1668, %v1594
    %v1670 = vadd.f32 %v1669, %v1596
    %v1671 = vadd.f32 %v1670, %v1598
    %v1672 = vadd.f32 %v1671, %v1600
    %v1673 = vadd.f32 %v1672, %v1602
    %v1674 = vadd.f32 %v1673, %v1604
    %v1675 = vadd.f32 %v1674, %v1606
    %v1676 = vadd.f32 %v1675, %v1608
    %v1677 = vrot.slane %v1676, 4
    %v1678 = vadd.f32 %v1676, %v1677
    %v1679 = vrot.slane %v1678, 2
    %v1680 = vadd.f32 %v1678, %v1679
    %v1681 = vrot.slane %v1680, 1
    %v1682 = vadd.f32 %v1680, %v1681
    %v1683 = vmul.f32 %v1466, %v1645
    %v1684 = vmul.f32 %v1466, %v1682
    %1685 = vst [vmem:[%s7] sm:$0xff] %v1683
    %1686 = vst [vmem:[%s7 + $0x8] sm:$0xff] %v1684
  $region29: #{hgnn_encoder_forward.11} parent=0 // pred_fallthru
    _
  // Predicated region
  $region30: #{hgnn_encoder_forward.11} parent=0 // pred_check
    _
  $region31: #{hgnn_encoder_forward.11} parent=0 // pred_check_branch
    %1688 = sbr.rel (0) target = $region33
  $region32: #{hgnn_encoder_forward.11} parent=0 // pred_region
    _
  $region33: #{hgnn_encoder_forward.11} parent=0 // pred_fallthru
    _
  // Predicated region
  $region34: #{hgnn_encoder_forward.11} parent=0 // pred_check
    _
  $region35: #{hgnn_encoder_forward.11} parent=0 // pred_check_branch
    %1690 = sbr.rel (0) target = $region37
  $region36: #{hgnn_encoder_forward.11} parent=0 // pred_region
    _
  $region37: #{hgnn_encoder_forward.11} parent=0 // pred_fallthru
    _
  // Predicated region
  $region38: #{hgnn_encoder_forward.11} parent=0 // pred_check
    _
  $region39: #{hgnn_encoder_forward.11} parent=0 // pred_check_branch
    %1692 = sbr.rel (0) target = $region41
  $region40: #{hgnn_encoder_forward.11} parent=0 // pred_region
    _
  $region41: #{hgnn_encoder_forward.11} parent=0 // pred_fallthru
    _
  // Predicated region
  $region42: #{hgnn_encoder_forward.11} parent=0 // pred_check
    _
  $region43: #{hgnn_encoder_forward.11} parent=0 // pred_check_branch
    %1694 = sbr.rel (0) target = $region45
  $region44: #{hgnn_encoder_forward.11} parent=0 // pred_region
    _
  $region45: #{hgnn_encoder_forward.11} parent=0 // pred_fallthru
    _
  // Predicated region
  $region46: #{hgnn_encoder_forward.11} parent=0 // pred_check
    _
  $region47: #{hgnn_encoder_forward.11} parent=0 // pred_check_branch
    %1696 = sbr.rel (0) target = $region49
  $region48: #{hgnn_encoder_forward.11} parent=0 // pred_region
    _
  $region49: #{hgnn_encoder_forward.11} parent=0 // pred_fallthru
    _
  // Predicated region
  $region50: #{hgnn_encoder_forward.11} parent=0 // pred_check
    _
  $region51: #{hgnn_encoder_forward.11} parent=0 // pred_check_branch
    %1698 = sbr.rel (0) target = $region53
  $region52: #{hgnn_encoder_forward.11} parent=0 // pred_region
    _
  $region53: #{hgnn_encoder_forward.11} parent=0 // pred_fallthru
    _

// kernel: hgnn_encoder_forward.15
$region0: #{hgnn_encoder_forward.15}
  #allocation0 [shape = 'u32[]', space=smem, size = 0x4, offset = 0x4, fixed_abs, tag = 'smem constant byte address 0x4 - core index']
  #allocation1 [shape = 'u32[72,128]{1,0:T(1,128)}', space=vmem, size = 0x9000, scoped, tag = 'internal scratch']
  %s0 = inlined_call_operand.vmem [shape: bf16[256,256], index: 0, kind: input, shape index: {}]
  %s1 = inlined_call_operand.vmem [shape: f32[1,256], index: 1, kind: input, shape index: {}]
  %s2 = inlined_call_operand.vmem [shape: f32[1,256], index: 2, kind: input, shape index: {}]
  %s3 = inlined_call_operand.vmem [shape: bf16[256,128], index: 3, kind: input, shape index: {}]
  %s4 = inlined_call_operand.vmem [shape: bf16[256,128], index: 4, kind: output, shape index: {}]
  %s5 = sld [smem:[#allocation0]]
  $region26: #{hgnn_encoder_forward.15} parent=0
    _
  %s7 = ssub.s32 1, %s5
  %s8 = scalar_select 0, %s7, %s5
  // Predicated region
  $region2: #{hgnn_encoder_forward.15} parent=0 // pred_check
    _
  $region3: #{hgnn_encoder_forward.15} parent=0 // pred_check_branch
    %10 = sbr.rel (0) target = $region5
  $region4: #{hgnn_encoder_forward.15} parent=0 // pred_region
    _
  $region5: #{hgnn_encoder_forward.15} parent=0 // pred_fallthru
    _
  // Predicated region
  $region6: #{hgnn_encoder_forward.15} parent=0 // pred_check
    _
  $region7: #{hgnn_encoder_forward.15} parent=0 // pred_check_branch
    %12 = sbr.rel (0) target = $region9
  $region8: #{hgnn_encoder_forward.15} parent=0 // pred_region
    _
  $region9: #{hgnn_encoder_forward.15} parent=0 // pred_fallthru
    _
  // Predicated region
  $region10: #{hgnn_encoder_forward.15} parent=0 // pred_check
    _
  $region11: #{hgnn_encoder_forward.15} parent=0 // pred_check_branch
    %14 = sbr.rel (0) target = $region13
  $region12: #{hgnn_encoder_forward.15} parent=0 // pred_region
    _
  $region13: #{hgnn_encoder_forward.15} parent=0 // pred_fallthru
    _
  // Predicated region
  $region14: #{hgnn_encoder_forward.15} parent=0 // pred_check
    _
  $region15: #{hgnn_encoder_forward.15} parent=0 // pred_check_branch
    %16 = sbr.rel (0) target = $region17
  $region16: #{hgnn_encoder_forward.15} parent=0 // pred_region
    _
  $region17: #{hgnn_encoder_forward.15} parent=0 // pred_fallthru
    _
  %v17 = vld [vmem:[%s0] sm:$0xff]
  %v18 = vld [vmem:[%s0 + $0x8] sm:$0xff]
  %v19 = vld [vmem:[%s0 + $0x10] sm:$0xff]
  %v20 = vld [vmem:[%s0 + $0x18] sm:$0xff]
  %v21 = vld [vmem:[%s0 + $0x20] sm:$0xff]
  %v22 = vld [vmem:[%s0 + $0x28] sm:$0xff]
  %v23 = vld [vmem:[%s0 + $0x30] sm:$0xff]
  %v24 = vld [vmem:[%s0 + $0x38] sm:$0xff]
  %v25 = vld [vmem:[%s0 + $0x40] sm:$0xff]
  %v26 = vld [vmem:[%s0 + $0x48] sm:$0xff]
  %v27 = vld [vmem:[%s0 + $0x50] sm:$0xff]
  %v28 = vld [vmem:[%s0 + $0x58] sm:$0xff]
  %v29 = vld [vmem:[%s0 + $0x60] sm:$0xff]
  %v30 = vld [vmem:[%s0 + $0x68] sm:$0xff]
  %v31 = vld [vmem:[%s0 + $0x70] sm:$0xff]
  %v32 = vld [vmem:[%s0 + $0x78] sm:$0xff]
  %v33 = vld [vmem:[%s0 + $0x80] sm:$0xff]
  %v34 = vld [vmem:[%s0 + $0x88] sm:$0xff]
  %v35 = vld [vmem:[%s0 + $0x90] sm:$0xff]
  %v36 = vld [vmem:[%s0 + $0x98] sm:$0xff]
  %v37 = vld [vmem:[%s0 + $0xa0] sm:$0xff]
  %v38 = vld [vmem:[%s0 + $0xa8] sm:$0xff]
  %v39 = vld [vmem:[%s0 + $0xb0] sm:$0xff]
  %v40 = vld [vmem:[%s0 + $0xb8] sm:$0xff]
  %v41 = vld [vmem:[%s0 + $0xc0] sm:$0xff]
  %v42 = vld [vmem:[%s0 + $0xc8] sm:$0xff]
  %v43 = vld [vmem:[%s0 + $0xd0] sm:$0xff]
  %v44 = vld [vmem:[%s0 + $0xd8] sm:$0xff]
  %v45 = vld [vmem:[%s0 + $0xe0] sm:$0xff]
  %v46 = vld [vmem:[%s0 + $0xe8] sm:$0xff]
  %v47 = vld [vmem:[%s0 + $0xf0] sm:$0xff]
  %v48 = vld [vmem:[%s0 + $0xf8] sm:$0xff]
  %v49 = vunpack.c.l.bf16 %v17
  %v50 = vunpack.c.h.bf16 %v17
  %v51 = vunpack.c.l.bf16 %v18
  %v52 = vunpack.c.h.bf16 %v18
  %v53 = vunpack.c.l.bf16 %v19
  %v54 = vunpack.c.h.bf16 %v19
  %v55 = vunpack.c.l.bf16 %v20
  %v56 = vunpack.c.h.bf16 %v20
  %v57 = vunpack.c.l.bf16 %v21
  %v58 = vunpack.c.h.bf16 %v21
  %v59 = vunpack.c.l.bf16 %v22
  %v60 = vunpack.c.h.bf16 %v22
  %v61 = vunpack.c.l.bf16 %v23
  %v62 = vunpack.c.h.bf16 %v23
  %v63 = vunpack.c.l.bf16 %v24
  %v64 = vunpack.c.h.bf16 %v24
  %v65 = vunpack.c.l.bf16 %v25
  %v66 = vunpack.c.h.bf16 %v25
  %v67 = vunpack.c.l.bf16 %v26
  %v68 = vunpack.c.h.bf16 %v26
  %v69 = vunpack.c.l.bf16 %v27
  %v70 = vunpack.c.h.bf16 %v27
  %v71 = vunpack.c.l.bf16 %v28
  %v72 = vunpack.c.h.bf16 %v28
  %v73 = vunpack.c.l.bf16 %v29
  %v74 = vunpack.c.h.bf16 %v29
  %v75 = vunpack.c.l.bf16 %v30
  %v76 = vunpack.c.h.bf16 %v30
  %v77 = vunpack.c.l.bf16 %v31
  %v78 = vunpack.c.h.bf16 %v31
  %v79 = vunpack.c.l.bf16 %v32
  %v80 = vunpack.c.h.bf16 %v32
  %v81 = vunpack.c.l.bf16 %v33
  %v82 = vunpack.c.h.bf16 %v33
  %v83 = vunpack.c.l.bf16 %v34
  %v84 = vunpack.c.h.bf16 %v34
  %v85 = vunpack.c.l.bf16 %v35
  %v86 = vunpack.c.h.bf16 %v35
  %v87 = vunpack.c.l.bf16 %v36
  %v88 = vunpack.c.h.bf16 %v36
  %v89 = vunpack.c.l.bf16 %v37
  %v90 = vunpack.c.h.bf16 %v37
  %v91 = vunpack.c.l.bf16 %v38
  %v92 = vunpack.c.h.bf16 %v38
  %v93 = vunpack.c.l.bf16 %v39
  %v94 = vunpack.c.h.bf16 %v39
  %v95 = vunpack.c.l.bf16 %v40
  %v96 = vunpack.c.h.bf16 %v40
  %v97 = vunpack.c.l.bf16 %v41
  %v98 = vunpack.c.h.bf16 %v41
  %v99 = vunpack.c.l.bf16 %v42
  %v100 = vunpack.c.h.bf16 %v42
  %v101 = vunpack.c.l.bf16 %v43
  %v102 = vunpack.c.h.bf16 %v43
  %v103 = vunpack.c.l.bf16 %v44
  %v104 = vunpack.c.h.bf16 %v44
  %v105 = vunpack.c.l.bf16 %v45
  %v106 = vunpack.c.h.bf16 %v45
  %v107 = vunpack.c.l.bf16 %v46
  %v108 = vunpack.c.h.bf16 %v46
  %v109 = vunpack.c.l.bf16 %v47
  %v110 = vunpack.c.h.bf16 %v47
  %v111 = vunpack.c.l.bf16 %v48
  %v112 = vunpack.c.h.bf16 %v48
  %v113 = vld [vmem:[%s1] sm:$0x3]
  %v115 = vperm.slane %v113, 0
  %v116 = vperm.slane %v113, 1
  %v119 = vmul.f32 %v49, %v115
  %v120 = vmul.f32 %v50, %v116
  %v121 = vmul.f32 %v51, %v115
  %v122 = vmul.f32 %v52, %v116
  %v123 = vmul.f32 %v53, %v115
  %v124 = vmul.f32 %v54, %v116
  %v125 = vmul.f32 %v55, %v115
  %v126 = vmul.f32 %v56, %v116
  %v127 = vmul.f32 %v57, %v115
  %v128 = vmul.f32 %v58, %v116
  %v129 = vmul.f32 %v59, %v115
  %v130 = vmul.f32 %v60, %v116
  %v131 = vmul.f32 %v61, %v115
  %v132 = vmul.f32 %v62, %v116
  %v133 = vmul.f32 %v63, %v115
  %v134 = vmul.f32 %v64, %v116
  %v135 = vmul.f32 %v65, %v115
  %v136 = vmul.f32 %v66, %v116
  %v137 = vmul.f32 %v67, %v115
  %v138 = vmul.f32 %v68, %v116
  %v139 = vmul.f32 %v69, %v115
  %v140 = vmul.f32 %v70, %v116
  %v141 = vmul.f32 %v71, %v115
  %v142 = vmul.f32 %v72, %v116
  %v143 = vmul.f32 %v73, %v115
  %v144 = vmul.f32 %v74, %v116
  %v145 = vmul.f32 %v75, %v115
  %v146 = vmul.f32 %v76, %v116
  %v147 = vmul.f32 %v77, %v115
  %v148 = vmul.f32 %v78, %v116
  %v149 = vmul.f32 %v79, %v115
  %v150 = vmul.f32 %v80, %v116
  %v151 = vmul.f32 %v81, %v115
  %v152 = vmul.f32 %v82, %v116
  %v153 = vmul.f32 %v83, %v115
  %v154 = vmul.f32 %v84, %v116
  %v155 = vmul.f32 %v85, %v115
  %v156 = vmul.f32 %v86, %v116
  %v157 = vmul.f32 %v87, %v115
  %v158 = vmul.f32 %v88, %v116
  %v159 = vmul.f32 %v89, %v115
  %v160 = vmul.f32 %v90, %v116
  %v161 = vmul.f32 %v91, %v115
  %v162 = vmul.f32 %v92, %v116
  %v163 = vmul.f32 %v93, %v115
  %v164 = vmul.f32 %v94, %v116
  %v165 = vmul.f32 %v95, %v115
  %v166 = vmul.f32 %v96, %v116
  %v167 = vmul.f32 %v97, %v115
  %v168 = vmul.f32 %v98, %v116
  %v169 = vmul.f32 %v99, %v115
  %v170 = vmul.f32 %v100, %v116
  %v171 = vmul.f32 %v101, %v115
  %v172 = vmul.f32 %v102, %v116
  %v173 = vmul.f32 %v103, %v115
  %v174 = vmul.f32 %v104, %v116
  %v175 = vmul.f32 %v105, %v115
  %v176 = vmul.f32 %v106, %v116
  %v177 = vmul.f32 %v107, %v115
  %v178 = vmul.f32 %v108, %v116
  %v179 = vmul.f32 %v109, %v115
  %v180 = vmul.f32 %v110, %v116
  %v181 = vmul.f32 %v111, %v115
  %v182 = vmul.f32 %v112, %v116
  %v183 = vld [vmem:[%s2] sm:$0x3]
  %v185 = vperm.slane %v183, 0
  %v186 = vperm.slane %v183, 1
  %v189 = vadd.f32 %v119, %v185
  %v190 = vadd.f32 %v120, %v186
  %v191 = vadd.f32 %v121, %v185
  %v192 = vadd.f32 %v122, %v186
  %v193 = vadd.f32 %v123, %v185
  %v194 = vadd.f32 %v124, %v186
  %v195 = vadd.f32 %v125, %v185
  %v196 = vadd.f32 %v126, %v186
  %v197 = vadd.f32 %v127, %v185
  %v198 = vadd.f32 %v128, %v186
  %v199 = vadd.f32 %v129, %v185
  %v200 = vadd.f32 %v130, %v186
  %v201 = vadd.f32 %v131, %v185
  %v202 = vadd.f32 %v132, %v186
  %v203 = vadd.f32 %v133, %v185
  %v204 = vadd.f32 %v134, %v186
  %v205 = vadd.f32 %v135, %v185
  %v206 = vadd.f32 %v136, %v186
  %v207 = vadd.f32 %v137, %v185
  %v208 = vadd.f32 %v138, %v186
  %v209 = vadd.f32 %v139, %v185
  %v210 = vadd.f32 %v140, %v186
  %v211 = vadd.f32 %v141, %v185
  %v212 = vadd.f32 %v142, %v186
  %v213 = vadd.f32 %v143, %v185
  %v214 = vadd.f32 %v144, %v186
  %v215 = vadd.f32 %v145, %v185
  %v216 = vadd.f32 %v146, %v186
  %v217 = vadd.f32 %v147, %v185
  %v218 = vadd.f32 %v148, %v186
  %v219 = vadd.f32 %v149, %v185
  %v220 = vadd.f32 %v150, %v186
  %v221 = vadd.f32 %v151, %v185
  %v222 = vadd.f32 %v152, %v186
  %v223 = vadd.f32 %v153, %v185
  %v224 = vadd.f32 %v154, %v186
  %v225 = vadd.f32 %v155, %v185
  %v226 = vadd.f32 %v156, %v186
  %v227 = vadd.f32 %v157, %v185
  %v228 = vadd.f32 %v158, %v186
  %v229 = vadd.f32 %v159, %v185
  %v230 = vadd.f32 %v160, %v186
  %v231 = vadd.f32 %v161, %v185
  %v232 = vadd.f32 %v162, %v186
  %v233 = vadd.f32 %v163, %v185
  %v234 = vadd.f32 %v164, %v186
  %v235 = vadd.f32 %v165, %v185
  %v236 = vadd.f32 %v166, %v186
  %v237 = vadd.f32 %v167, %v185
  %v238 = vadd.f32 %v168, %v186
  %v239 = vadd.f32 %v169, %v185
  %v240 = vadd.f32 %v170, %v186
  %v241 = vadd.f32 %v171, %v185
  %v242 = vadd.f32 %v172, %v186
  %v243 = vadd.f32 %v173, %v185
  %v244 = vadd.f32 %v174, %v186
  %v245 = vadd.f32 %v175, %v185
  %v246 = vadd.f32 %v176, %v186
  %v247 = vadd.f32 %v177, %v185
  %v248 = vadd.f32 %v178, %v186
  %v249 = vadd.f32 %v179, %v185
  %v250 = vadd.f32 %v180, %v186
  %v251 = vadd.f32 %v181, %v185
  %v252 = vadd.f32 %v182, %v186
  %v253 = vpack.c.bf16 %v191, %v189
  %v254 = vpack.c.bf16 %v192, %v190
  %v255 = vpack.c.bf16 %v195, %v193
  %v256 = vpack.c.bf16 %v196, %v194
  %v257 = vpack.c.bf16 %v199, %v197
  %v258 = vpack.c.bf16 %v200, %v198
  %v259 = vpack.c.bf16 %v203, %v201
  %v260 = vpack.c.bf16 %v204, %v202
  %v261 = vpack.c.bf16 %v207, %v205
  %v262 = vpack.c.bf16 %v208, %v206
  %v263 = vpack.c.bf16 %v211, %v209
  %v264 = vpack.c.bf16 %v212, %v210
  %v265 = vpack.c.bf16 %v215, %v213
  %v266 = vpack.c.bf16 %v216, %v214
  %v267 = vpack.c.bf16 %v219, %v217
  %v268 = vpack.c.bf16 %v220, %v218
  %v269 = vpack.c.bf16 %v223, %v221
  %v270 = vpack.c.bf16 %v224, %v222
  %v271 = vpack.c.bf16 %v227, %v225
  %v272 = vpack.c.bf16 %v228, %v226
  %v273 = vpack.c.bf16 %v231, %v229
  %v274 = vpack.c.bf16 %v232, %v230
  %v275 = vpack.c.bf16 %v235, %v233
  %v276 = vpack.c.bf16 %v236, %v234
  %v277 = vpack.c.bf16 %v239, %v237
  %v278 = vpack.c.bf16 %v240, %v238
  %v279 = vpack.c.bf16 %v243, %v241
  %v280 = vpack.c.bf16 %v244, %v242
  %v281 = vpack.c.bf16 %v247, %v245
  %v282 = vpack.c.bf16 %v248, %v246
  %v283 = vpack.c.bf16 %v251, %v249
  %v284 = vpack.c.bf16 %v252, %v250
  %v285 = vld [vmem:[%s3] sm:$0xf]
  %v286 = vld [vmem:[%s3 + $0x4] sm:$0xf]
  %v287 = vld [vmem:[%s3 + $0x8] sm:$0xf]
  %v288 = vld [vmem:[%s3 + $0xc] sm:$0xf]
  %v289 = vld [vmem:[%s3 + $0x10] sm:$0xf]
  %v290 = vld [vmem:[%s3 + $0x14] sm:$0xf]
  %v291 = vld [vmem:[%s3 + $0x18] sm:$0xf]
  %v292 = vld [vmem:[%s3 + $0x1c] sm:$0xf]
  %v293 = vld [vmem:[%s3 + $0x20] sm:$0xf]
  %v294 = vld [vmem:[%s3 + $0x24] sm:$0xf]
  %v295 = vld [vmem:[%s3 + $0x28] sm:$0xf]
  %v296 = vld [vmem:[%s3 + $0x2c] sm:$0xf]
  %v297 = vld [vmem:[%s3 + $0x30] sm:$0xf]
  %v298 = vld [vmem:[%s3 + $0x34] sm:$0xf]
  %v299 = vld [vmem:[%s3 + $0x38] sm:$0xf]
  %v300 = vld [vmem:[%s3 + $0x3c] sm:$0xf]
  %v301 = vld [vmem:[%s3 + $0x40] sm:$0xf]
  %v302 = vld [vmem:[%s3 + $0x44] sm:$0xf]
  %v303 = vld [vmem:[%s3 + $0x48] sm:$0xf]
  %v304 = vld [vmem:[%s3 + $0x4c] sm:$0xf]
  %v305 = vld [vmem:[%s3 + $0x50] sm:$0xf]
  %v306 = vld [vmem:[%s3 + $0x54] sm:$0xf]
  %v307 = vld [vmem:[%s3 + $0x58] sm:$0xf]
  %v308 = vld [vmem:[%s3 + $0x5c] sm:$0xf]
  %v309 = vld [vmem:[%s3 + $0x60] sm:$0xf]
  %v310 = vld [vmem:[%s3 + $0x64] sm:$0xf]
  %v311 = vld [vmem:[%s3 + $0x68] sm:$0xf]
  %v312 = vld [vmem:[%s3 + $0x6c] sm:$0xf]
  %v313 = vld [vmem:[%s3 + $0x70] sm:$0xf]
  %v314 = vld [vmem:[%s3 + $0x74] sm:$0xf]
  %v315 = vld [vmem:[%s3 + $0x78] sm:$0xf]
  %v316 = vld [vmem:[%s3 + $0x7c] sm:$0xf]
  %v349 = vunpack.c.l.b16 %v285
  %v350 = vunpack.c.l.b16 %v286
  %v351 = vunpack.c.l.b16 %v287
  %v352 = vunpack.c.l.b16 %v288
  %v353 = vunpack.c.l.b16 %v289
  %v354 = vunpack.c.l.b16 %v290
  %v355 = vunpack.c.l.b16 %v291
  %v356 = vunpack.c.l.b16 %v292
  %v357 = vunpack.c.l.b16 %v293
  %v358 = vunpack.c.l.b16 %v294
  %v359 = vunpack.c.l.b16 %v295
  %v360 = vunpack.c.l.b16 %v296
  %v361 = vunpack.c.l.b16 %v297
  %v362 = vunpack.c.l.b16 %v298
  %v363 = vunpack.c.l.b16 %v299
  %v364 = vunpack.c.l.b16 %v300
  %v365 = vunpack.c.l.b16 %v301
  %v366 = vunpack.c.l.b16 %v302
  %v367 = vunpack.c.l.b16 %v303
  %v368 = vunpack.c.l.b16 %v304
  %v369 = vunpack.c.l.b16 %v305
  %v370 = vunpack.c.l.b16 %v306
  %v371 = vunpack.c.l.b16 %v307
  %v372 = vunpack.c.l.b16 %v308
  %v373 = vunpack.c.l.b16 %v309
  %v374 = vunpack.c.l.b16 %v310
  %v375 = vunpack.c.l.b16 %v311
  %v376 = vunpack.c.l.b16 %v312
  %v377 = vunpack.c.l.b16 %v313
  %v378 = vunpack.c.l.b16 %v314
  %v379 = vunpack.c.l.b16 %v315
  %v380 = vunpack.c.l.b16 %v316
  %v381 = vpack.c.b16 %v350, %v349
  %v382 = vpack.c.b16 %v352, %v351
  %v383 = vpack.c.b16 %v354, %v353
  %v384 = vpack.c.b16 %v356, %v355
  %v385 = vpack.c.b16 %v358, %v357
  %v386 = vpack.c.b16 %v360, %v359
  %v387 = vpack.c.b16 %v362, %v361
  %v388 = vpack.c.b16 %v364, %v363
  %v389 = vpack.c.b16 %v366, %v365
  %v390 = vpack.c.b16 %v368, %v367
  %v391 = vpack.c.b16 %v370, %v369
  %v392 = vpack.c.b16 %v372, %v371
  %v393 = vpack.c.b16 %v374, %v373
  %v394 = vpack.c.b16 %v376, %v375
  %v395 = vpack.c.b16 %v378, %v377
  %v396 = vpack.c.b16 %v380, %v379
  %413 = vmatpush.bf16.msra.mxu0 %v388
  %414 = vmatpush.bf16.msra.mxu0 %v387
  %415 = vmatpush.bf16.msra.mxu0 %v386
  %416 = vmatpush.bf16.msra.mxu0 %v385
  %417 = vmatpush.bf16.msra.mxu0 %v384
  %418 = vmatpush.bf16.msra.mxu0 %v383
  %419 = vmatpush.bf16.msra.mxu0 %v382
  %420 = vmatpush.bf16.msra.mxu0 %v381
  %421 = vmatmul.bf16.gmra.mxu0 %v253
  %v422 = vpop.f32.mrf.mxu0
  %v423 = vadd.f32 0.0, %v422
  %v424 = vpop.f32.mrf.mxu0
  %v425 = vadd.f32 0.0, %v424
  %426 = vmatmul.bf16.gmra.mxu0 %v255
  %v427 = vpop.f32.mrf.mxu0
  %v428 = vadd.f32 0.0, %v427
  %v429 = vpop.f32.mrf.mxu0
  %v430 = vadd.f32 0.0, %v429
  %431 = vmatmul.bf16.gmra.mxu0 %v257
  %v432 = vpop.f32.mrf.mxu0
  %v433 = vadd.f32 0.0, %v432
  %v434 = vpop.f32.mrf.mxu0
  %v435 = vadd.f32 0.0, %v434
  %436 = vmatmul.bf16.gmra.mxu0 %v259
  %v437 = vpop.f32.mrf.mxu0
  %v438 = vadd.f32 0.0, %v437
  %v439 = vpop.f32.mrf.mxu0
  %v440 = vadd.f32 0.0, %v439
  %441 = vmatmul.bf16.gmra.mxu0 %v261
  %v442 = vpop.f32.mrf.mxu0
  %v443 = vadd.f32 0.0, %v442
  %v444 = vpop.f32.mrf.mxu0
  %v445 = vadd.f32 0.0, %v444
  %446 = vmatmul.bf16.gmra.mxu0 %v263
  %v447 = vpop.f32.mrf.mxu0
  %v448 = vadd.f32 0.0, %v447
  %v449 = vpop.f32.mrf.mxu0
  %v450 = vadd.f32 0.0, %v449
  %451 = vmatmul.bf16.gmra.mxu0 %v265
  %v452 = vpop.f32.mrf.mxu0
  %v453 = vadd.f32 0.0, %v452
  %v454 = vpop.f32.mrf.mxu0
  %v455 = vadd.f32 0.0, %v454
  %456 = vmatmul.bf16.gmra.mxu0 %v267
  %v457 = vpop.f32.mrf.mxu0
  %v458 = vadd.f32 0.0, %v457
  %v459 = vpop.f32.mrf.mxu0
  %v460 = vadd.f32 0.0, %v459
  %461 = vmatmul.bf16.gmra.mxu0 %v269
  %v462 = vpop.f32.mrf.mxu0
  %v463 = vadd.f32 0.0, %v462
  %v464 = vpop.f32.mrf.mxu0
  %v465 = vadd.f32 0.0, %v464
  %466 = vmatmul.bf16.gmra.mxu0 %v271
  %v467 = vpop.f32.mrf.mxu0
  %v468 = vadd.f32 0.0, %v467
  %v469 = vpop.f32.mrf.mxu0
  %v470 = vadd.f32 0.0, %v469
  %471 = vmatmul.bf16.gmra.mxu0 %v273
  %v472 = vpop.f32.mrf.mxu0
  %v473 = vadd.f32 0.0, %v472
  %v474 = vpop.f32.mrf.mxu0
  %v475 = vadd.f32 0.0, %v474
  %476 = vmatmul.bf16.gmra.mxu0 %v275
  %v477 = vpop.f32.mrf.mxu0
  %v478 = vadd.f32 0.0, %v477
  %v479 = vpop.f32.mrf.mxu0
  %v480 = vadd.f32 0.0, %v479
  %481 = vmatmul.bf16.gmra.mxu0 %v277
  %v482 = vpop.f32.mrf.mxu0
  %v483 = vadd.f32 0.0, %v482
  %v484 = vpop.f32.mrf.mxu0
  %v485 = vadd.f32 0.0, %v484
  %486 = vmatmul.bf16.gmra.mxu0 %v279
  %v487 = vpop.f32.mrf.mxu0
  %v488 = vadd.f32 0.0, %v487
  %v489 = vpop.f32.mrf.mxu0
  %v490 = vadd.f32 0.0, %v489
  %491 = vmatmul.bf16.gmra.mxu0 %v281
  %v492 = vpop.f32.mrf.mxu0
  %v493 = vadd.f32 0.0, %v492
  %v494 = vpop.f32.mrf.mxu0
  %v495 = vadd.f32 0.0, %v494
  %496 = vmatmul.bf16.gmra.mxu0 %v283
  %v497 = vpop.f32.mrf.mxu0
  %v498 = vadd.f32 0.0, %v497
  %v499 = vpop.f32.mrf.mxu0
  %v500 = vadd.f32 0.0, %v499
  %501 = vdwg.mxu0
  %502 = vmatpush.bf16.msra.mxu0 %v396
  %503 = vmatpush.bf16.msra.mxu0 %v395
  %504 = vmatpush.bf16.msra.mxu0 %v394
  %505 = vmatpush.bf16.msra.mxu0 %v393
  %506 = vmatpush.bf16.msra.mxu0 %v392
  %507 = vmatpush.bf16.msra.mxu0 %v391
  %508 = vmatpush.bf16.msra.mxu0 %v390
  %509 = vmatpush.bf16.msra.mxu0 %v389
  %510 = vmatmul.bf16.gmra.mxu0 %v254
  %v511 = vpop.f32.mrf.mxu0
  %v512 = vadd.f32 %v423, %v511
  %v513 = vpop.f32.mrf.mxu0
  %v514 = vadd.f32 %v425, %v513
  %515 = vmatmul.bf16.gmra.mxu0 %v256
  %v516 = vpop.f32.mrf.mxu0
  %v517 = vadd.f32 %v428, %v516
  %v518 = vpop.f32.mrf.mxu0
  %v519 = vadd.f32 %v430, %v518
  %520 = vmatmul.bf16.gmra.mxu0 %v258
  %v521 = vpop.f32.mrf.mxu0
  %v522 = vadd.f32 %v433, %v521
  %v523 = vpop.f32.mrf.mxu0
  %v524 = vadd.f32 %v435, %v523
  %525 = vmatmul.bf16.gmra.mxu0 %v260
  %v526 = vpop.f32.mrf.mxu0
  %v527 = vadd.f32 %v438, %v526
  %v528 = vpop.f32.mrf.mxu0
  %v529 = vadd.f32 %v440, %v528
  %530 = vmatmul.bf16.gmra.mxu0 %v262
  %v531 = vpop.f32.mrf.mxu0
  %v532 = vadd.f32 %v443, %v531
  %v533 = vpop.f32.mrf.mxu0
  %v534 = vadd.f32 %v445, %v533
  %535 = vmatmul.bf16.gmra.mxu0 %v264
  %v536 = vpop.f32.mrf.mxu0
  %v537 = vadd.f32 %v448, %v536
  %v538 = vpop.f32.mrf.mxu0
  %v539 = vadd.f32 %v450, %v538
  %540 = vmatmul.bf16.gmra.mxu0 %v266
  %v541 = vpop.f32.mrf.mxu0
  %v542 = vadd.f32 %v453, %v541
  %v543 = vpop.f32.mrf.mxu0
  %v544 = vadd.f32 %v455, %v543
  %545 = vmatmul.bf16.gmra.mxu0 %v268
  %v546 = vpop.f32.mrf.mxu0
  %v547 = vadd.f32 %v458, %v546
  %v548 = vpop.f32.mrf.mxu0
  %v549 = vadd.f32 %v460, %v548
  %550 = vmatmul.bf16.gmra.mxu0 %v270
  %v551 = vpop.f32.mrf.mxu0
  %v552 = vadd.f32 %v463, %v551
  %v553 = vpop.f32.mrf.mxu0
  %v554 = vadd.f32 %v465, %v553
  %555 = vmatmul.bf16.gmra.mxu0 %v272
  %v556 = vpop.f32.mrf.mxu0
  %v557 = vadd.f32 %v468, %v556
  %v558 = vpop.f32.mrf.mxu0
  %v559 = vadd.f32 %v470, %v558
  %560 = vmatmul.bf16.gmra.mxu0 %v274
  %v561 = vpop.f32.mrf.mxu0
  %v562 = vadd.f32 %v473, %v561
  %v563 = vpop.f32.mrf.mxu0
  %v564 = vadd.f32 %v475, %v563
  %565 = vmatmul.bf16.gmra.mxu0 %v276
  %v566 = vpop.f32.mrf.mxu0
  %v567 = vadd.f32 %v478, %v566
  %v568 = vpop.f32.mrf.mxu0
  %v569 = vadd.f32 %v480, %v568
  %570 = vmatmul.bf16.gmra.mxu0 %v278
  %v571 = vpop.f32.mrf.mxu0
  %v572 = vadd.f32 %v483, %v571
  %v573 = vpop.f32.mrf.mxu0
  %v574 = vadd.f32 %v485, %v573
  %575 = vmatmul.bf16.gmra.mxu0 %v280
  %v576 = vpop.f32.mrf.mxu0
  %v577 = vadd.f32 %v488, %v576
  %v578 = vpop.f32.mrf.mxu0
  %v579 = vadd.f32 %v490, %v578
  %580 = vmatmul.bf16.gmra.mxu0 %v282
  %v581 = vpop.f32.mrf.mxu0
  %v582 = vadd.f32 %v493, %v581
  %v583 = vpop.f32.mrf.mxu0
  %v584 = vadd.f32 %v495, %v583
  %585 = vmatmul.bf16.gmra.mxu0 %v284
  %v586 = vpop.f32.mrf.mxu0
  %v587 = vadd.f32 %v498, %v586
  %v588 = vpop.f32.mrf.mxu0
  %v589 = vadd.f32 %v500, %v588
  %590 = vdwg.mxu0
  %v591 = vpack.c.bf16 %v512, %v512
  %v592 = vpack.c.bf16 %v514, %v514
  %v593 = vpack.c.bf16 %v517, %v517
  %v594 = vpack.c.bf16 %v519, %v519
  %v595 = vpack.c.bf16 %v522, %v522
  %v596 = vpack.c.bf16 %v524, %v524
  %v597 = vpack.c.bf16 %v527, %v527
  %v598 = vpack.c.bf16 %v529, %v529
  %v599 = vpack.c.bf16 %v532, %v532
  %v600 = vpack.c.bf16 %v534, %v534
  %v601 = vpack.c.bf16 %v537, %v537
  %v602 = vpack.c.bf16 %v539, %v539
  %v603 = vpack.c.bf16 %v542, %v542
  %v604 = vpack.c.bf16 %v544, %v544
  %v605 = vpack.c.bf16 %v547, %v547
  %v606 = vpack.c.bf16 %v549, %v549
  %v607 = vpack.c.bf16 %v552, %v552
  %v608 = vpack.c.bf16 %v554, %v554
  %v609 = vpack.c.bf16 %v557, %v557
  %v610 = vpack.c.bf16 %v559, %v559
  %v611 = vpack.c.bf16 %v562, %v562
  %v612 = vpack.c.bf16 %v564, %v564
  %v613 = vpack.c.bf16 %v567, %v567
  %v614 = vpack.c.bf16 %v569, %v569
  %v615 = vpack.c.bf16 %v572, %v572
  %v616 = vpack.c.bf16 %v574, %v574
  %v617 = vpack.c.bf16 %v577, %v577
  %v618 = vpack.c.bf16 %v579, %v579
  %v619 = vpack.c.bf16 %v582, %v582
  %v620 = vpack.c.bf16 %v584, %v584
  %v621 = vpack.c.bf16 %v587, %v587
  %v622 = vpack.c.bf16 %v589, %v589
  %623 = vst [vmem:[%s4] sm:$0xf] %v591
  %624 = vst [vmem:[%s4 + $0x4] sm:$0xf] %v592
  %625 = vst [vmem:[%s4 + $0x8] sm:$0xf] %v593
  %626 = vst [vmem:[%s4 + $0xc] sm:$0xf] %v594
  %627 = vst [vmem:[%s4 + $0x10] sm:$0xf] %v595
  %628 = vst [vmem:[%s4 + $0x14] sm:$0xf] %v596
  %629 = vst [vmem:[%s4 + $0x18] sm:$0xf] %v597
  %630 = vst [vmem:[%s4 + $0x1c] sm:$0xf] %v598
  %631 = vst [vmem:[%s4 + $0x20] sm:$0xf] %v599
  %632 = vst [vmem:[%s4 + $0x24] sm:$0xf] %v600
  %633 = vst [vmem:[%s4 + $0x28] sm:$0xf] %v601
  %634 = vst [vmem:[%s4 + $0x2c] sm:$0xf] %v602
  %635 = vst [vmem:[%s4 + $0x30] sm:$0xf] %v603
  %636 = vst [vmem:[%s4 + $0x34] sm:$0xf] %v604
  %637 = vst [vmem:[%s4 + $0x38] sm:$0xf] %v605
  %638 = vst [vmem:[%s4 + $0x3c] sm:$0xf] %v606
  %639 = vst [vmem:[%s4 + $0x40] sm:$0xf] %v607
  %640 = vst [vmem:[%s4 + $0x44] sm:$0xf] %v608
  %641 = vst [vmem:[%s4 + $0x48] sm:$0xf] %v609
  %642 = vst [vmem:[%s4 + $0x4c] sm:$0xf] %v610
  %643 = vst [vmem:[%s4 + $0x50] sm:$0xf] %v611
  %644 = vst [vmem:[%s4 + $0x54] sm:$0xf] %v612
  %645 = vst [vmem:[%s4 + $0x58] sm:$0xf] %v613
  %646 = vst [vmem:[%s4 + $0x5c] sm:$0xf] %v614
  %647 = vst [vmem:[%s4 + $0x60] sm:$0xf] %v615
  %648 = vst [vmem:[%s4 + $0x64] sm:$0xf] %v616
  %649 = vst [vmem:[%s4 + $0x68] sm:$0xf] %v617
  %650 = vst [vmem:[%s4 + $0x6c] sm:$0xf] %v618
  %651 = vst [vmem:[%s4 + $0x70] sm:$0xf] %v619
  %652 = vst [vmem:[%s4 + $0x74] sm:$0xf] %v620
  %653 = vst [vmem:[%s4 + $0x78] sm:$0xf] %v621
  %654 = vst [vmem:[%s4 + $0x7c] sm:$0xf] %v622
  // Predicated region
  $region18: #{hgnn_encoder_forward.15} parent=0 // pred_check
    _
  $region19: #{hgnn_encoder_forward.15} parent=0 // pred_check_branch
    %656 = sbr.rel (0) target = $region21
  $region20: #{hgnn_encoder_forward.15} parent=0 // pred_region
    _
  $region21: #{hgnn_encoder_forward.15} parent=0 // pred_fallthru
    _
  // Predicated region
  $region22: #{hgnn_encoder_forward.15} parent=0 // pred_check
    _
  $region23: #{hgnn_encoder_forward.15} parent=0 // pred_check_branch
    %658 = sbr.rel (0) target = $region25
  $region24: #{hgnn_encoder_forward.15} parent=0 // pred_region
    _
  $region25: #{hgnn_encoder_forward.15} parent=0 // pred_fallthru
    _

// kernel: hgnn_encoder_forward.16
$region0: #{hgnn_encoder_forward.16}
  #allocation0 [shape = 'u32[]', space=smem, size = 0x4, offset = 0x4, fixed_abs, tag = 'smem constant byte address 0x4 - core index']
  #allocation1 [shape = 'u32[72,128]{1,0:T(1,128)}', space=vmem, size = 0x9000, scoped, tag = 'internal scratch']
  #allocation2 [shape = 'f32[128,128]{1,0:T(8,128)}', space=vmem, size = 0x10000, scoped, tag = 'scratch operand']
  %s0 = inlined_call_operand.vmem [shape: bf16[128,256], index: 0, kind: input, shape index: {}]
  %s1 = inlined_call_operand.vmem [shape: bf16[256,128], index: 1, kind: input, shape index: {}]
  %s2 = inlined_call_operand.vmem [shape: f32[128,1], index: 2, kind: input, shape index: {}]
  %s3 = inlined_call_operand.vmem [shape: bf16[128,128], index: 3, kind: output, shape index: {}]
  %s4 = sld [smem:[#allocation0]]
  $region30: #{hgnn_encoder_forward.16} parent=0
    _
  %s6 = ssub.s32 1, %s4
  %s7 = scalar_select 0, %s6, %s4
  // Predicated region
  $region2: #{hgnn_encoder_forward.16} parent=0 // pred_check
    _
  $region3: #{hgnn_encoder_forward.16} parent=0 // pred_check_branch
    %9 = sbr.rel (0) target = $region5
  $region4: #{hgnn_encoder_forward.16} parent=0 // pred_region
    _
  $region5: #{hgnn_encoder_forward.16} parent=0 // pred_fallthru
    _
  // Predicated region
  $region6: #{hgnn_encoder_forward.16} parent=0 // pred_check
    _
  $region7: #{hgnn_encoder_forward.16} parent=0 // pred_check_branch
    %11 = sbr.rel (0) target = $region9
  $region8: #{hgnn_encoder_forward.16} parent=0 // pred_region
    _
  $region9: #{hgnn_encoder_forward.16} parent=0 // pred_fallthru
    _
  // Predicated region
  $region10: #{hgnn_encoder_forward.16} parent=0 // pred_check
    _
  $region11: #{hgnn_encoder_forward.16} parent=0 // pred_check_branch
    %13 = sbr.rel (0) target = $region13
  $region12: #{hgnn_encoder_forward.16} parent=0 // pred_region
    _
  $region13: #{hgnn_encoder_forward.16} parent=0 // pred_fallthru
    _
  %p14 = scmp.eq.s32.totalorder 0, 0
  // Predicated region
  $region14: #{hgnn_encoder_forward.16} parent=0 // pred_check
    %p15 = pneg %p14
  $region15: #{hgnn_encoder_forward.16} parent=0 // pred_check_branch
    %17 = sbr.rel (%p15) target = $region17
  $region16: #{hgnn_encoder_forward.16} parent=0 // pred_region
    %18 = vst [vmem:[#allocation2] sm:$0xff] 0.0
    %19 = vst [vmem:[#allocation2 + $0x8] sm:$0xff] 0.0
    %20 = vst [vmem:[#allocation2 + $0x10] sm:$0xff] 0.0
    %21 = vst [vmem:[#allocation2 + $0x18] sm:$0xff] 0.0
    %22 = vst [vmem:[#allocation2 + $0x20] sm:$0xff] 0.0
    %23 = vst [vmem:[#allocation2 + $0x28] sm:$0xff] 0.0
    %24 = vst [vmem:[#allocation2 + $0x30] sm:$0xff] 0.0
    %25 = vst [vmem:[#allocation2 + $0x38] sm:$0xff] 0.0
    %26 = vst [vmem:[#allocation2 + $0x40] sm:$0xff] 0.0
    %27 = vst [vmem:[#allocation2 + $0x48] sm:$0xff] 0.0
    %28 = vst [vmem:[#allocation2 + $0x50] sm:$0xff] 0.0
    %29 = vst [vmem:[#allocation2 + $0x58] sm:$0xff] 0.0
    %30 = vst [vmem:[#allocation2 + $0x60] sm:$0xff] 0.0
    %31 = vst [vmem:[#allocation2 + $0x68] sm:$0xff] 0.0
    %32 = vst [vmem:[#allocation2 + $0x70] sm:$0xff] 0.0
    %33 = vst [vmem:[#allocation2 + $0x78] sm:$0xff] 0.0
  $region17: #{hgnn_encoder_forward.16} parent=0 // pred_fallthru
    _
  %v34 = vld [vmem:[#allocation2] sm:$0xff]
  %v35 = vld [vmem:[#allocation2 + $0x8] sm:$0xff]
  %v36 = vld [vmem:[#allocation2 + $0x10] sm:$0xff]
  %v37 = vld [vmem:[#allocation2 + $0x18] sm:$0xff]
  %v38 = vld [vmem:[#allocation2 + $0x20] sm:$0xff]
  %v39 = vld [vmem:[#allocation2 + $0x28] sm:$0xff]
  %v40 = vld [vmem:[#allocation2 + $0x30] sm:$0xff]
  %v41 = vld [vmem:[#allocation2 + $0x38] sm:$0xff]
  %v42 = vld [vmem:[#allocation2 + $0x40] sm:$0xff]
  %v43 = vld [vmem:[#allocation2 + $0x48] sm:$0xff]
  %v44 = vld [vmem:[#allocation2 + $0x50] sm:$0xff]
  %v45 = vld [vmem:[#allocation2 + $0x58] sm:$0xff]
  %v46 = vld [vmem:[#allocation2 + $0x60] sm:$0xff]
  %v47 = vld [vmem:[#allocation2 + $0x68] sm:$0xff]
  %v48 = vld [vmem:[#allocation2 + $0x70] sm:$0xff]
  %v49 = vld [vmem:[#allocation2 + $0x78] sm:$0xff]
  %v50 = vld [vmem:[%s0] sm:$0xff]
  %v51 = vld [vmem:[%s0 + $0x8] sm:$0xff]
  %v52 = vld [vmem:[%s0 + $0x10] sm:$0xff]
  %v53 = vld [vmem:[%s0 + $0x18] sm:$0xff]
  %v54 = vld [vmem:[%s0 + $0x20] sm:$0xff]
  %v55 = vld [vmem:[%s0 + $0x28] sm:$0xff]
  %v56 = vld [vmem:[%s0 + $0x30] sm:$0xff]
  %v57 = vld [vmem:[%s0 + $0x38] sm:$0xff]
  %v58 = vld [vmem:[%s0 + $0x40] sm:$0xff]
  %v59 = vld [vmem:[%s0 + $0x48] sm:$0xff]
  %v60 = vld [vmem:[%s0 + $0x50] sm:$0xff]
  %v61 = vld [vmem:[%s0 + $0x58] sm:$0xff]
  %v62 = vld [vmem:[%s0 + $0x60] sm:$0xff]
  %v63 = vld [vmem:[%s0 + $0x68] sm:$0xff]
  %v64 = vld [vmem:[%s0 + $0x70] sm:$0xff]
  %v65 = vld [vmem:[%s0 + $0x78] sm:$0xff]
  %v66 = vld [vmem:[%s1] sm:$0xf]
  %v67 = vld [vmem:[%s1 + $0x4] sm:$0xf]
  %v68 = vld [vmem:[%s1 + $0x8] sm:$0xf]
  %v69 = vld [vmem:[%s1 + $0xc] sm:$0xf]
  %v70 = vld [vmem:[%s1 + $0x10] sm:$0xf]
  %v71 = vld [vmem:[%s1 + $0x14] sm:$0xf]
  %v72 = vld [vmem:[%s1 + $0x18] sm:$0xf]
  %v73 = vld [vmem:[%s1 + $0x1c] sm:$0xf]
  %v74 = vld [vmem:[%s1 + $0x20] sm:$0xf]
  %v75 = vld [vmem:[%s1 + $0x24] sm:$0xf]
  %v76 = vld [vmem:[%s1 + $0x28] sm:$0xf]
  %v77 = vld [vmem:[%s1 + $0x2c] sm:$0xf]
  %v78 = vld [vmem:[%s1 + $0x30] sm:$0xf]
  %v79 = vld [vmem:[%s1 + $0x34] sm:$0xf]
  %v80 = vld [vmem:[%s1 + $0x38] sm:$0xf]
  %v81 = vld [vmem:[%s1 + $0x3c] sm:$0xf]
  %v82 = vld [vmem:[%s1 + $0x40] sm:$0xf]
  %v83 = vld [vmem:[%s1 + $0x44] sm:$0xf]
  %v84 = vld [vmem:[%s1 + $0x48] sm:$0xf]
  %v85 = vld [vmem:[%s1 + $0x4c] sm:$0xf]
  %v86 = vld [vmem:[%s1 + $0x50] sm:$0xf]
  %v87 = vld [vmem:[%s1 + $0x54] sm:$0xf]
  %v88 = vld [vmem:[%s1 + $0x58] sm:$0xf]
  %v89 = vld [vmem:[%s1 + $0x5c] sm:$0xf]
  %v90 = vld [vmem:[%s1 + $0x60] sm:$0xf]
  %v91 = vld [vmem:[%s1 + $0x64] sm:$0xf]
  %v92 = vld [vmem:[%s1 + $0x68] sm:$0xf]
  %v93 = vld [vmem:[%s1 + $0x6c] sm:$0xf]
  %v94 = vld [vmem:[%s1 + $0x70] sm:$0xf]
  %v95 = vld [vmem:[%s1 + $0x74] sm:$0xf]
  %v96 = vld [vmem:[%s1 + $0x78] sm:$0xf]
  %v97 = vld [vmem:[%s1 + $0x7c] sm:$0xf]
  %v114 = vunpack.c.l.b16 %v50
  %v115 = vunpack.c.h.b16 %v50
  %v116 = vunpack.c.l.b16 %v51
  %v117 = vunpack.c.h.b16 %v51
  %v118 = vunpack.c.l.b16 %v52
  %v119 = vunpack.c.h.b16 %v52
  %v120 = vunpack.c.l.b16 %v53
  %v121 = vunpack.c.h.b16 %v53
  %v122 = vunpack.c.l.b16 %v54
  %v123 = vunpack.c.h.b16 %v54
  %v124 = vunpack.c.l.b16 %v55
  %v125 = vunpack.c.h.b16 %v55
  %v126 = vunpack.c.l.b16 %v56
  %v127 = vunpack.c.h.b16 %v56
  %v128 = vunpack.c.l.b16 %v57
  %v129 = vunpack.c.h.b16 %v57
  %v130 = vunpack.c.l.b16 %v58
  %v131 = vunpack.c.h.b16 %v58
  %v132 = vunpack.c.l.b16 %v59
  %v133 = vunpack.c.h.b16 %v59
  %v134 = vunpack.c.l.b16 %v60
  %v135 = vunpack.c.h.b16 %v60
  %v136 = vunpack.c.l.b16 %v61
  %v137 = vunpack.c.h.b16 %v61
  %v138 = vunpack.c.l.b16 %v62
  %v139 = vunpack.c.h.b16 %v62
  %v140 = vunpack.c.l.b16 %v63
  %v141 = vunpack.c.h.b16 %v63
  %v142 = vunpack.c.l.b16 %v64
  %v143 = vunpack.c.h.b16 %v64
  %v144 = vunpack.c.l.b16 %v65
  %v145 = vunpack.c.h.b16 %v65
  %v146 = vpack.c.b16 %v116, %v114
  %v147 = vpack.c.b16 %v117, %v115
  %v148 = vpack.c.b16 %v120, %v118
  %v149 = vpack.c.b16 %v121, %v119
  %v150 = vpack.c.b16 %v124, %v122
  %v151 = vpack.c.b16 %v125, %v123
  %v152 = vpack.c.b16 %v128, %v126
  %v153 = vpack.c.b16 %v129, %v127
  %v154 = vpack.c.b16 %v132, %v130
  %v155 = vpack.c.b16 %v133, %v131
  %v156 = vpack.c.b16 %v136, %v134
  %v157 = vpack.c.b16 %v137, %v135
  %v158 = vpack.c.b16 %v140, %v138
  %v159 = vpack.c.b16 %v141, %v139
  %v160 = vpack.c.b16 %v144, %v142
  %v161 = vpack.c.b16 %v145, %v143
  %v210 = vunpack.c.l.b16 %v66
  %v211 = vunpack.c.l.b16 %v67
  %v212 = vunpack.c.l.b16 %v68
  %v213 = vunpack.c.l.b16 %v69
  %v214 = vunpack.c.l.b16 %v70
  %v215 = vunpack.c.l.b16 %v71
  %v216 = vunpack.c.l.b16 %v72
  %v217 = vunpack.c.l.b16 %v73
  %v218 = vunpack.c.l.b16 %v74
  %v219 = vunpack.c.l.b16 %v75
  %v220 = vunpack.c.l.b16 %v76
  %v221 = vunpack.c.l.b16 %v77
  %v222 = vunpack.c.l.b16 %v78
  %v223 = vunpack.c.l.b16 %v79
  %v224 = vunpack.c.l.b16 %v80
  %v225 = vunpack.c.l.b16 %v81
  %v226 = vunpack.c.l.b16 %v82
  %v227 = vunpack.c.l.b16 %v83
  %v228 = vunpack.c.l.b16 %v84
  %v229 = vunpack.c.l.b16 %v85
  %v230 = vunpack.c.l.b16 %v86
  %v231 = vunpack.c.l.b16 %v87
  %v232 = vunpack.c.l.b16 %v88
  %v233 = vunpack.c.l.b16 %v89
  %v234 = vunpack.c.l.b16 %v90
  %v235 = vunpack.c.l.b16 %v91
  %v236 = vunpack.c.l.b16 %v92
  %v237 = vunpack.c.l.b16 %v93
  %v238 = vunpack.c.l.b16 %v94
  %v239 = vunpack.c.l.b16 %v95
  %v240 = vunpack.c.l.b16 %v96
  %v241 = vunpack.c.l.b16 %v97
  %v242 = vpack.c.b16 %v211, %v210
  %v243 = vpack.c.b16 %v213, %v212
  %v244 = vpack.c.b16 %v215, %v214
  %v245 = vpack.c.b16 %v217, %v216
  %v246 = vpack.c.b16 %v219, %v218
  %v247 = vpack.c.b16 %v221, %v220
  %v248 = vpack.c.b16 %v223, %v222
  %v249 = vpack.c.b16 %v225, %v224
  %v250 = vpack.c.b16 %v227, %v226
  %v251 = vpack.c.b16 %v229, %v228
  %v252 = vpack.c.b16 %v231, %v230
  %v253 = vpack.c.b16 %v233, %v232
  %v254 = vpack.c.b16 %v235, %v234
  %v255 = vpack.c.b16 %v237, %v236
  %v256 = vpack.c.b16 %v239, %v238
  %v257 = vpack.c.b16 %v241, %v240
  %274 = vmatpush.bf16.msra.mxu0 %v249
  %275 = vmatpush.bf16.msra.mxu0 %v248
  %276 = vmatpush.bf16.msra.mxu0 %v247
  %277 = vmatpush.bf16.msra.mxu0 %v246
  %278 = vmatpush.bf16.msra.mxu0 %v245
  %279 = vmatpush.bf16.msra.mxu0 %v244
  %280 = vmatpush.bf16.msra.mxu0 %v243
  %281 = vmatpush.bf16.msra.mxu0 %v242
  %282 = vmatmul.bf16.gmra.mxu0 %v146
  %v283 = vpop.f32.mrf.mxu0
  %v284 = vadd.f32 0.0, %v283
  %v285 = vpop.f32.mrf.mxu0
  %v286 = vadd.f32 0.0, %v285
  %287 = vmatmul.bf16.gmra.mxu0 %v148
  %v288 = vpop.f32.mrf.mxu0
  %v289 = vadd.f32 0.0, %v288
  %v290 = vpop.f32.mrf.mxu0
  %v291 = vadd.f32 0.0, %v290
  %292 = vmatmul.bf16.gmra.mxu0 %v150
  %v293 = vpop.f32.mrf.mxu0
  %v294 = vadd.f32 0.0, %v293
  %v295 = vpop.f32.mrf.mxu0
  %v296 = vadd.f32 0.0, %v295
  %297 = vmatmul.bf16.gmra.mxu0 %v152
  %v298 = vpop.f32.mrf.mxu0
  %v299 = vadd.f32 0.0, %v298
  %v300 = vpop.f32.mrf.mxu0
  %v301 = vadd.f32 0.0, %v300
  %302 = vmatmul.bf16.gmra.mxu0 %v154
  %v303 = vpop.f32.mrf.mxu0
  %v304 = vadd.f32 0.0, %v303
  %v305 = vpop.f32.mrf.mxu0
  %v306 = vadd.f32 0.0, %v305
  %307 = vmatmul.bf16.gmra.mxu0 %v156
  %v308 = vpop.f32.mrf.mxu0
  %v309 = vadd.f32 0.0, %v308
  %v310 = vpop.f32.mrf.mxu0
  %v311 = vadd.f32 0.0, %v310
  %312 = vmatmul.bf16.gmra.mxu0 %v158
  %v313 = vpop.f32.mrf.mxu0
  %v314 = vadd.f32 0.0, %v313
  %v315 = vpop.f32.mrf.mxu0
  %v316 = vadd.f32 0.0, %v315
  %317 = vmatmul.bf16.gmra.mxu0 %v160
  %v318 = vpop.f32.mrf.mxu0
  %v319 = vadd.f32 0.0, %v318
  %v320 = vpop.f32.mrf.mxu0
  %v321 = vadd.f32 0.0, %v320
  %322 = vdwg.mxu0
  %323 = vmatpush.bf16.msra.mxu0 %v257
  %324 = vmatpush.bf16.msra.mxu0 %v256
  %325 = vmatpush.bf16.msra.mxu0 %v255
  %326 = vmatpush.bf16.msra.mxu0 %v254
  %327 = vmatpush.bf16.msra.mxu0 %v253
  %328 = vmatpush.bf16.msra.mxu0 %v252
  %329 = vmatpush.bf16.msra.mxu0 %v251
  %330 = vmatpush.bf16.msra.mxu0 %v250
  %331 = vmatmul.bf16.gmra.mxu0 %v147
  %v332 = vpop.f32.mrf.mxu0
  %v333 = vadd.f32 %v284, %v332
  %v334 = vpop.f32.mrf.mxu0
  %v335 = vadd.f32 %v286, %v334
  %336 = vmatmul.bf16.gmra.mxu0 %v149
  %v337 = vpop.f32.mrf.mxu0
  %v338 = vadd.f32 %v289, %v337
  %v339 = vpop.f32.mrf.mxu0
  %v340 = vadd.f32 %v291, %v339
  %341 = vmatmul.bf16.gmra.mxu0 %v151
  %v342 = vpop.f32.mrf.mxu0
  %v343 = vadd.f32 %v294, %v342
  %v344 = vpop.f32.mrf.mxu0
  %v345 = vadd.f32 %v296, %v344
  %346 = vmatmul.bf16.gmra.mxu0 %v153
  %v347 = vpop.f32.mrf.mxu0
  %v348 = vadd.f32 %v299, %v347
  %v349 = vpop.f32.mrf.mxu0
  %v350 = vadd.f32 %v301, %v349
  %351 = vmatmul.bf16.gmra.mxu0 %v155
  %v352 = vpop.f32.mrf.mxu0
  %v353 = vadd.f32 %v304, %v352
  %v354 = vpop.f32.mrf.mxu0
  %v355 = vadd.f32 %v306, %v354
  %356 = vmatmul.bf16.gmra.mxu0 %v157
  %v357 = vpop.f32.mrf.mxu0
  %v358 = vadd.f32 %v309, %v357
  %v359 = vpop.f32.mrf.mxu0
  %v360 = vadd.f32 %v311, %v359
  %361 = vmatmul.bf16.gmra.mxu0 %v159
  %v362 = vpop.f32.mrf.mxu0
  %v363 = vadd.f32 %v314, %v362
  %v364 = vpop.f32.mrf.mxu0
  %v365 = vadd.f32 %v316, %v364
  %366 = vmatmul.bf16.gmra.mxu0 %v161
  %v367 = vpop.f32.mrf.mxu0
  %v368 = vadd.f32 %v319, %v367
  %v369 = vpop.f32.mrf.mxu0
  %v370 = vadd.f32 %v321, %v369
  %371 = vdwg.mxu0
  %v372 = vadd.f32 %v34, %v333
  %v373 = vadd.f32 %v35, %v335
  %v374 = vadd.f32 %v36, %v338
  %v375 = vadd.f32 %v37, %v340
  %v376 = vadd.f32 %v38, %v343
  %v377 = vadd.f32 %v39, %v345
  %v378 = vadd.f32 %v40, %v348
  %v379 = vadd.f32 %v41, %v350
  %v380 = vadd.f32 %v42, %v353
  %v381 = vadd.f32 %v43, %v355
  %v382 = vadd.f32 %v44, %v358
  %v383 = vadd.f32 %v45, %v360
  %v384 = vadd.f32 %v46, %v363
  %v385 = vadd.f32 %v47, %v365
  %v386 = vadd.f32 %v48, %v368
  %v387 = vadd.f32 %v49, %v370
  %388 = vst [vmem:[#allocation2] sm:$0xff] %v372
  %389 = vst [vmem:[#allocation2 + $0x8] sm:$0xff] %v373
  %390 = vst [vmem:[#allocation2 + $0x10] sm:$0xff] %v374
  %391 = vst [vmem:[#allocation2 + $0x18] sm:$0xff] %v375
  %392 = vst [vmem:[#allocation2 + $0x20] sm:$0xff] %v376
  %393 = vst [vmem:[#allocation2 + $0x28] sm:$0xff] %v377
  %394 = vst [vmem:[#allocation2 + $0x30] sm:$0xff] %v378
  %395 = vst [vmem:[#allocation2 + $0x38] sm:$0xff] %v379
  %396 = vst [vmem:[#allocation2 + $0x40] sm:$0xff] %v380
  %397 = vst [vmem:[#allocation2 + $0x48] sm:$0xff] %v381
  %398 = vst [vmem:[#allocation2 + $0x50] sm:$0xff] %v382
  %399 = vst [vmem:[#allocation2 + $0x58] sm:$0xff] %v383
  %400 = vst [vmem:[#allocation2 + $0x60] sm:$0xff] %v384
  %401 = vst [vmem:[#allocation2 + $0x68] sm:$0xff] %v385
  %402 = vst [vmem:[#allocation2 + $0x70] sm:$0xff] %v386
  %403 = vst [vmem:[#allocation2 + $0x78] sm:$0xff] %v387
  // Predicated region
  $region18: #{hgnn_encoder_forward.16} parent=0 // pred_check
    %p404 = pneg %p14
  $region19: #{hgnn_encoder_forward.16} parent=0 // pred_check_branch
    %406 = sbr.rel (%p404) target = $region21
  $region20: #{hgnn_encoder_forward.16} parent=0 // pred_region
    %v407 = vld [vmem:[#allocation2] sm:$0xff]
    %v408 = vld [vmem:[#allocation2 + $0x8] sm:$0xff]
    %v409 = vld [vmem:[#allocation2 + $0x10] sm:$0xff]
    %v410 = vld [vmem:[#allocation2 + $0x18] sm:$0xff]
    %v411 = vld [vmem:[#allocation2 + $0x20] sm:$0xff]
    %v412 = vld [vmem:[#allocation2 + $0x28] sm:$0xff]
    %v413 = vld [vmem:[#allocation2 + $0x30] sm:$0xff]
    %v414 = vld [vmem:[#allocation2 + $0x38] sm:$0xff]
    %v415 = vld [vmem:[#allocation2 + $0x40] sm:$0xff]
    %v416 = vld [vmem:[#allocation2 + $0x48] sm:$0xff]
    %v417 = vld [vmem:[#allocation2 + $0x50] sm:$0xff]
    %v418 = vld [vmem:[#allocation2 + $0x58] sm:$0xff]
    %v419 = vld [vmem:[#allocation2 + $0x60] sm:$0xff]
    %v420 = vld [vmem:[#allocation2 + $0x68] sm:$0xff]
    %v421 = vld [vmem:[#allocation2 + $0x70] sm:$0xff]
    %v422 = vld [vmem:[#allocation2 + $0x78] sm:$0xff]
    %v423 = vld [vmem:[%s2] sm:$0xff]
    %v424 = vld [vmem:[%s2 + $0x8] sm:$0xff]
    %v425 = vld [vmem:[%s2 + $0x10] sm:$0xff]
    %v426 = vld [vmem:[%s2 + $0x18] sm:$0xff]
    %v427 = vld [vmem:[%s2 + $0x20] sm:$0xff]
    %v428 = vld [vmem:[%s2 + $0x28] sm:$0xff]
    %v429 = vld [vmem:[%s2 + $0x30] sm:$0xff]
    %v430 = vld [vmem:[%s2 + $0x38] sm:$0xff]
    %v431 = vld [vmem:[%s2 + $0x40] sm:$0xff]
    %v432 = vld [vmem:[%s2 + $0x48] sm:$0xff]
    %v433 = vld [vmem:[%s2 + $0x50] sm:$0xff]
    %v434 = vld [vmem:[%s2 + $0x58] sm:$0xff]
    %v435 = vld [vmem:[%s2 + $0x60] sm:$0xff]
    %v436 = vld [vmem:[%s2 + $0x68] sm:$0xff]
    %v437 = vld [vmem:[%s2 + $0x70] sm:$0xff]
    %v438 = vld [vmem:[%s2 + $0x78] sm:$0xff]
    %440 = vset.pattern.permute.xlu0 0
    %441 = vperm.xlu0 %440, %v423
    %v442 = vpop.permute.xlu0 %441
    %445 = vset.pattern.permute.xlu0 0
    %446 = vperm.xlu0 %445, %v424
    %v447 = vpop.permute.xlu0 %446
    %450 = vset.pattern.permute.xlu0 0
    %451 = vperm.xlu0 %450, %v425
    %v452 = vpop.permute.xlu0 %451
    %455 = vset.pattern.permute.xlu0 0
    %456 = vperm.xlu0 %455, %v426
    %v457 = vpop.permute.xlu0 %456
    %460 = vset.pattern.permute.xlu0 0
    %461 = vperm.xlu0 %460, %v427
    %v462 = vpop.permute.xlu0 %461
    %465 = vset.pattern.permute.xlu0 0
    %466 = vperm.xlu0 %465, %v428
    %v467 = vpop.permute.xlu0 %466
    %470 = vset.pattern.permute.xlu0 0
    %471 = vperm.xlu0 %470, %v429
    %v472 = vpop.permute.xlu0 %471
    %475 = vset.pattern.permute.xlu0 0
    %476 = vperm.xlu0 %475, %v430
    %v477 = vpop.permute.xlu0 %476
    %480 = vset.pattern.permute.xlu0 0
    %481 = vperm.xlu0 %480, %v431
    %v482 = vpop.permute.xlu0 %481
    %485 = vset.pattern.permute.xlu0 0
    %486 = vperm.xlu0 %485, %v432
    %v487 = vpop.permute.xlu0 %486
    %490 = vset.pattern.permute.xlu0 0
    %491 = vperm.xlu0 %490, %v433
    %v492 = vpop.permute.xlu0 %491
    %495 = vset.pattern.permute.xlu0 0
    %496 = vperm.xlu0 %495, %v434
    %v497 = vpop.permute.xlu0 %496
    %500 = vset.pattern.permute.xlu0 0
    %501 = vperm.xlu0 %500, %v435
    %v502 = vpop.permute.xlu0 %501
    %505 = vset.pattern.permute.xlu0 0
    %506 = vperm.xlu0 %505, %v436
    %v507 = vpop.permute.xlu0 %506
    %510 = vset.pattern.permute.xlu0 0
    %511 = vperm.xlu0 %510, %v437
    %v512 = vpop.permute.xlu0 %511
    %515 = vset.pattern.permute.xlu0 0
    %516 = vperm.xlu0 %515, %v438
    %v517 = vpop.permute.xlu0 %516
    %v519 = vmul.f32 %v407, %v442
    %v520 = vmul.f32 %v408, %v447
    %v521 = vmul.f32 %v409, %v452
    %v522 = vmul.f32 %v410, %v457
    %v523 = vmul.f32 %v411, %v462
    %v524 = vmul.f32 %v412, %v467
    %v525 = vmul.f32 %v413, %v472
    %v526 = vmul.f32 %v414, %v477
    %v527 = vmul.f32 %v415, %v482
    %v528 = vmul.f32 %v416, %v487
    %v529 = vmul.f32 %v417, %v492
    %v530 = vmul.f32 %v418, %v497
    %v531 = vmul.f32 %v419, %v502
    %v532 = vmul.f32 %v420, %v507
    %v533 = vmul.f32 %v421, %v512
    %v534 = vmul.f32 %v422, %v517
    %v535 = vpack.c.bf16 %v519, %v519
    %v536 = vpack.c.bf16 %v520, %v520
    %v537 = vpack.c.bf16 %v521, %v521
    %v538 = vpack.c.bf16 %v522, %v522
    %v539 = vpack.c.bf16 %v523, %v523
    %v540 = vpack.c.bf16 %v524, %v524
    %v541 = vpack.c.bf16 %v525, %v525
    %v542 = vpack.c.bf16 %v526, %v526
    %v543 = vpack.c.bf16 %v527, %v527
    %v544 = vpack.c.bf16 %v528, %v528
    %v545 = vpack.c.bf16 %v529, %v529
    %v546 = vpack.c.bf16 %v530, %v530
    %v547 = vpack.c.bf16 %v531, %v531
    %v548 = vpack.c.bf16 %v532, %v532
    %v549 = vpack.c.bf16 %v533, %v533
    %v550 = vpack.c.bf16 %v534, %v534
    %551 = vst [vmem:[%s3] sm:$0xf] %v535
    %552 = vst [vmem:[%s3 + $0x4] sm:$0xf] %v536
    %553 = vst [vmem:[%s3 + $0x8] sm:$0xf] %v537
    %554 = vst [vmem:[%s3 + $0xc] sm:$0xf] %v538
    %555 = vst [vmem:[%s3 + $0x10] sm:$0xf] %v539
    %556 = vst [vmem:[%s3 + $0x14] sm:$0xf] %v540
    %557 = vst [vmem:[%s3 + $0x18] sm:$0xf] %v541
    %558 = vst [vmem:[%s3 + $0x1c] sm:$0xf] %v542
    %559 = vst [vmem:[%s3 + $0x20] sm:$0xf] %v543
    %560 = vst [vmem:[%s3 + $0x24] sm:$0xf] %v544
    %561 = vst [vmem:[%s3 + $0x28] sm:$0xf] %v545
    %562 = vst [vmem:[%s3 + $0x2c] sm:$0xf] %v546
    %563 = vst [vmem:[%s3 + $0x30] sm:$0xf] %v547
    %564 = vst [vmem:[%s3 + $0x34] sm:$0xf] %v548
    %565 = vst [vmem:[%s3 + $0x38] sm:$0xf] %v549
    %566 = vst [vmem:[%s3 + $0x3c] sm:$0xf] %v550
  $region21: #{hgnn_encoder_forward.16} parent=0 // pred_fallthru
    _
  // Predicated region
  $region22: #{hgnn_encoder_forward.16} parent=0 // pred_check
    _
  $region23: #{hgnn_encoder_forward.16} parent=0 // pred_check_branch
    %568 = sbr.rel (0) target = $region25
  $region24: #{hgnn_encoder_forward.16} parent=0 // pred_region
    _
  $region25: #{hgnn_encoder_forward.16} parent=0 // pred_fallthru
    _
  // Predicated region
  $region26: #{hgnn_encoder_forward.16} parent=0 // pred_check
    _
  $region27: #{hgnn_encoder_forward.16} parent=0 // pred_check_branch
    %570 = sbr.rel (0) target = $region29
  $region28: #{hgnn_encoder_forward.16} parent=0 // pred_region
    _
  $region29: #{hgnn_encoder_forward.16} parent=0 // pred_fallthru
    _

// kernel: hgnn_encoder_forward.17
$region0: #{hgnn_encoder_forward.17}
  #allocation0 [shape = 'u32[]', space=smem, size = 0x4, offset = 0x4, fixed_abs, tag = 'smem constant byte address 0x4 - core index']
  #allocation1 [shape = 'u32[72,128]{1,0:T(1,128)}', space=vmem, size = 0x9000, scoped, tag = 'internal scratch']
  #allocation2 [shape = 'f32[256,128]{1,0:T(8,128)}', space=vmem, size = 0x20000, scoped, tag = 'scratch operand']
  %s0 = inlined_call_operand.vmem [shape: bf16[256,128], index: 0, kind: input, shape index: {}]
  %s1 = inlined_call_operand.vmem [shape: bf16[128,128], index: 1, kind: input, shape index: {}]
  %s2 = inlined_call_operand.vmem [shape: f32[256,1], index: 2, kind: input, shape index: {}]
  %s3 = inlined_call_operand.vmem [shape: f32[1,128], index: 3, kind: input, shape index: {}]
  %s4 = inlined_call_operand.vmem [shape: f32[256,1], index: 4, kind: input, shape index: {}]
  %s5 = inlined_call_operand.vmem [shape: bf16[256,128], index: 5, kind: output, shape index: {0}]
  %s6 = inlined_call_operand.hbm [shape: f32[8,128], index: 6, kind: output, shape index: {1}]
  %s7 = inlined_call_operand.hbm [shape: f32[8,128], index: 7, kind: output, shape index: {2}]
  %8 = xla_tuple %s5, %s6, %s7
  %s9 = sld [smem:[#allocation0]]
  $region54: #{hgnn_encoder_forward.17} parent=0
    _
  %s11 = ssub.s32 1, %s9
  %s12 = scalar_select 0, %s11, %s9
  $region1: #{hgnn_encoder_forward.17} parent=0
    #allocation3 [shape = 'u8[4096]{0}', space=vmem, size = 0x1000, scoped, tag = 'output window, operand 1, single buffered']
    #allocation4 [shape = 's32[1]{0}', space=sflag, size = 0x4, scoped, tag = 'scoped memory for hgnn_encoder_forward.17']
    #allocation5 [shape = 'u8[4096]{0}', space=vmem, size = 0x1000, scoped, tag = 'output window, operand 2, single buffered']
    #allocation6 [shape = 's32[1]{0}', space=sflag, size = 0x4, scoped, tag = 'scoped memory for hgnn_encoder_forward.17']
    %13 = vsyncpa [#allocation4], 0
    %14 = vsyncpa [#allocation6], 0
    // Predicated region
    $region2: #{hgnn_encoder_forward.17} parent=1 // pred_check
      _
    $region3: #{hgnn_encoder_forward.17} parent=1 // pred_check_branch
      %16 = sbr.rel (0) target = $region5
    $region4: #{hgnn_encoder_forward.17} parent=1 // pred_region
      _
    $region5: #{hgnn_encoder_forward.17} parent=1 // pred_fallthru
      _
    // Predicated region
    $region6: #{hgnn_encoder_forward.17} parent=1 // pred_check
      _
    $region7: #{hgnn_encoder_forward.17} parent=1 // pred_check_branch
      %18 = sbr.rel (0) target = $region9
    $region8: #{hgnn_encoder_forward.17} parent=1 // pred_region
      _
    $region9: #{hgnn_encoder_forward.17} parent=1 // pred_fallthru
      _
    // Predicated region
    $region10: #{hgnn_encoder_forward.17} parent=1 // pred_check
      _
    $region11: #{hgnn_encoder_forward.17} parent=1 // pred_check_branch
      %20 = sbr.rel (0) target = $region13
    $region12: #{hgnn_encoder_forward.17} parent=1 // pred_region
      _
    $region13: #{hgnn_encoder_forward.17} parent=1 // pred_fallthru
      _
    // Predicated region
    $region14: #{hgnn_encoder_forward.17} parent=1 // pred_check
      _
    $region15: #{hgnn_encoder_forward.17} parent=1 // pred_check_branch
      %22 = sbr.rel (0) target = $region17
    $region16: #{hgnn_encoder_forward.17} parent=1 // pred_region
      _
    $region17: #{hgnn_encoder_forward.17} parent=1 // pred_fallthru
      _
    // Predicated region
    $region18: #{hgnn_encoder_forward.17} parent=1 // pred_check
      _
    $region19: #{hgnn_encoder_forward.17} parent=1 // pred_check_branch
      %24 = sbr.rel (0) target = $region21
    $region20: #{hgnn_encoder_forward.17} parent=1 // pred_region
      _
    $region21: #{hgnn_encoder_forward.17} parent=1 // pred_fallthru
      _
    %p25 = scmp.eq.s32.totalorder 0, 0
    // Predicated region
    $region22: #{hgnn_encoder_forward.17} parent=1 // pred_check
      %p26 = pneg %p25
    $region23: #{hgnn_encoder_forward.17} parent=1 // pred_check_branch
      %28 = sbr.rel (%p26) target = $region25
    $region24: #{hgnn_encoder_forward.17} parent=1 // pred_region
      %29 = vst [vmem:[#allocation2] sm:$0xff] 0.0
      %30 = vst [vmem:[#allocation2 + $0x8] sm:$0xff] 0.0
      %31 = vst [vmem:[#allocation2 + $0x10] sm:$0xff] 0.0
      %32 = vst [vmem:[#allocation2 + $0x18] sm:$0xff] 0.0
      %33 = vst [vmem:[#allocation2 + $0x20] sm:$0xff] 0.0
      %34 = vst [vmem:[#allocation2 + $0x28] sm:$0xff] 0.0
      %35 = vst [vmem:[#allocation2 + $0x30] sm:$0xff] 0.0
      %36 = vst [vmem:[#allocation2 + $0x38] sm:$0xff] 0.0
      %37 = vst [vmem:[#allocation2 + $0x40] sm:$0xff] 0.0
      %38 = vst [vmem:[#allocation2 + $0x48] sm:$0xff] 0.0
      %39 = vst [vmem:[#allocation2 + $0x50] sm:$0xff] 0.0
      %40 = vst [vmem:[#allocation2 + $0x58] sm:$0xff] 0.0
      %41 = vst [vmem:[#allocation2 + $0x60] sm:$0xff] 0.0
      %42 = vst [vmem:[#allocation2 + $0x68] sm:$0xff] 0.0
      %43 = vst [vmem:[#allocation2 + $0x70] sm:$0xff] 0.0
      %44 = vst [vmem:[#allocation2 + $0x78] sm:$0xff] 0.0
      %45 = vst [vmem:[#allocation2 + $0x80] sm:$0xff] 0.0
      %46 = vst [vmem:[#allocation2 + $0x88] sm:$0xff] 0.0
      %47 = vst [vmem:[#allocation2 + $0x90] sm:$0xff] 0.0
      %48 = vst [vmem:[#allocation2 + $0x98] sm:$0xff] 0.0
      %49 = vst [vmem:[#allocation2 + $0xa0] sm:$0xff] 0.0
      %50 = vst [vmem:[#allocation2 + $0xa8] sm:$0xff] 0.0
      %51 = vst [vmem:[#allocation2 + $0xb0] sm:$0xff] 0.0
      %52 = vst [vmem:[#allocation2 + $0xb8] sm:$0xff] 0.0
      %53 = vst [vmem:[#allocation2 + $0xc0] sm:$0xff] 0.0
      %54 = vst [vmem:[#allocation2 + $0xc8] sm:$0xff] 0.0
      %55 = vst [vmem:[#allocation2 + $0xd0] sm:$0xff] 0.0
      %56 = vst [vmem:[#allocation2 + $0xd8] sm:$0xff] 0.0
      %57 = vst [vmem:[#allocation2 + $0xe0] sm:$0xff] 0.0
      %58 = vst [vmem:[#allocation2 + $0xe8] sm:$0xff] 0.0
      %59 = vst [vmem:[#allocation2 + $0xf0] sm:$0xff] 0.0
      %60 = vst [vmem:[#allocation2 + $0xf8] sm:$0xff] 0.0
    $region25: #{hgnn_encoder_forward.17} parent=1 // pred_fallthru
      _
    %v61 = vld [vmem:[#allocation2] sm:$0xff]
    %v62 = vld [vmem:[#allocation2 + $0x8] sm:$0xff]
    %v63 = vld [vmem:[#allocation2 + $0x10] sm:$0xff]
    %v64 = vld [vmem:[#allocation2 + $0x18] sm:$0xff]
    %v65 = vld [vmem:[#allocation2 + $0x20] sm:$0xff]
    %v66 = vld [vmem:[#allocation2 + $0x28] sm:$0xff]
    %v67 = vld [vmem:[#allocation2 + $0x30] sm:$0xff]
    %v68 = vld [vmem:[#allocation2 + $0x38] sm:$0xff]
    %v69 = vld [vmem:[#allocation2 + $0x40] sm:$0xff]
    %v70 = vld [vmem:[#allocation2 + $0x48] sm:$0xff]
    %v71 = vld [vmem:[#allocation2 + $0x50] sm:$0xff]
    %v72 = vld [vmem:[#allocation2 + $0x58] sm:$0xff]
    %v73 = vld [vmem:[#allocation2 + $0x60] sm:$0xff]
    %v74 = vld [vmem:[#allocation2 + $0x68] sm:$0xff]
    %v75 = vld [vmem:[#allocation2 + $0x70] sm:$0xff]
    %v76 = vld [vmem:[#allocation2 + $0x78] sm:$0xff]
    %v77 = vld [vmem:[#allocation2 + $0x80] sm:$0xff]
    %v78 = vld [vmem:[#allocation2 + $0x88] sm:$0xff]
    %v79 = vld [vmem:[#allocation2 + $0x90] sm:$0xff]
    %v80 = vld [vmem:[#allocation2 + $0x98] sm:$0xff]
    %v81 = vld [vmem:[#allocation2 + $0xa0] sm:$0xff]
    %v82 = vld [vmem:[#allocation2 + $0xa8] sm:$0xff]
    %v83 = vld [vmem:[#allocation2 + $0xb0] sm:$0xff]
    %v84 = vld [vmem:[#allocation2 + $0xb8] sm:$0xff]
    %v85 = vld [vmem:[#allocation2 + $0xc0] sm:$0xff]
    %v86 = vld [vmem:[#allocation2 + $0xc8] sm:$0xff]
    %v87 = vld [vmem:[#allocation2 + $0xd0] sm:$0xff]
    %v88 = vld [vmem:[#allocation2 + $0xd8] sm:$0xff]
    %v89 = vld [vmem:[#allocation2 + $0xe0] sm:$0xff]
    %v90 = vld [vmem:[#allocation2 + $0xe8] sm:$0xff]
    %v91 = vld [vmem:[#allocation2 + $0xf0] sm:$0xff]
    %v92 = vld [vmem:[#allocation2 + $0xf8] sm:$0xff]
    %v93 = vld [vmem:[%s0] sm:$0xf]
    %v94 = vld [vmem:[%s0 + $0x4] sm:$0xf]
    %v95 = vld [vmem:[%s0 + $0x8] sm:$0xf]
    %v96 = vld [vmem:[%s0 + $0xc] sm:$0xf]
    %v97 = vld [vmem:[%s0 + $0x10] sm:$0xf]
    %v98 = vld [vmem:[%s0 + $0x14] sm:$0xf]
    %v99 = vld [vmem:[%s0 + $0x18] sm:$0xf]
    %v100 = vld [vmem:[%s0 + $0x1c] sm:$0xf]
    %v101 = vld [vmem:[%s0 + $0x20] sm:$0xf]
    %v102 = vld [vmem:[%s0 + $0x24] sm:$0xf]
    %v103 = vld [vmem:[%s0 + $0x28] sm:$0xf]
    %v104 = vld [vmem:[%s0 + $0x2c] sm:$0xf]
    %v105 = vld [vmem:[%s0 + $0x30] sm:$0xf]
    %v106 = vld [vmem:[%s0 + $0x34] sm:$0xf]
    %v107 = vld [vmem:[%s0 + $0x38] sm:$0xf]
    %v108 = vld [vmem:[%s0 + $0x3c] sm:$0xf]
    %v109 = vld [vmem:[%s0 + $0x40] sm:$0xf]
    %v110 = vld [vmem:[%s0 + $0x44] sm:$0xf]
    %v111 = vld [vmem:[%s0 + $0x48] sm:$0xf]
    %v112 = vld [vmem:[%s0 + $0x4c] sm:$0xf]
    %v113 = vld [vmem:[%s0 + $0x50] sm:$0xf]
    %v114 = vld [vmem:[%s0 + $0x54] sm:$0xf]
    %v115 = vld [vmem:[%s0 + $0x58] sm:$0xf]
    %v116 = vld [vmem:[%s0 + $0x5c] sm:$0xf]
    %v117 = vld [vmem:[%s0 + $0x60] sm:$0xf]
    %v118 = vld [vmem:[%s0 + $0x64] sm:$0xf]
    %v119 = vld [vmem:[%s0 + $0x68] sm:$0xf]
    %v120 = vld [vmem:[%s0 + $0x6c] sm:$0xf]
    %v121 = vld [vmem:[%s0 + $0x70] sm:$0xf]
    %v122 = vld [vmem:[%s0 + $0x74] sm:$0xf]
    %v123 = vld [vmem:[%s0 + $0x78] sm:$0xf]
    %v124 = vld [vmem:[%s0 + $0x7c] sm:$0xf]
    %v125 = vld [vmem:[%s1] sm:$0xf]
    %v126 = vld [vmem:[%s1 + $0x4] sm:$0xf]
    %v127 = vld [vmem:[%s1 + $0x8] sm:$0xf]
    %v128 = vld [vmem:[%s1 + $0xc] sm:$0xf]
    %v129 = vld [vmem:[%s1 + $0x10] sm:$0xf]
    %v130 = vld [vmem:[%s1 + $0x14] sm:$0xf]
    %v131 = vld [vmem:[%s1 + $0x18] sm:$0xf]
    %v132 = vld [vmem:[%s1 + $0x1c] sm:$0xf]
    %v133 = vld [vmem:[%s1 + $0x20] sm:$0xf]
    %v134 = vld [vmem:[%s1 + $0x24] sm:$0xf]
    %v135 = vld [vmem:[%s1 + $0x28] sm:$0xf]
    %v136 = vld [vmem:[%s1 + $0x2c] sm:$0xf]
    %v137 = vld [vmem:[%s1 + $0x30] sm:$0xf]
    %v138 = vld [vmem:[%s1 + $0x34] sm:$0xf]
    %v139 = vld [vmem:[%s1 + $0x38] sm:$0xf]
    %v140 = vld [vmem:[%s1 + $0x3c] sm:$0xf]
    %v173 = vunpack.c.l.b16 %v93
    %v174 = vunpack.c.l.b16 %v94
    %v175 = vunpack.c.l.b16 %v95
    %v176 = vunpack.c.l.b16 %v96
    %v177 = vunpack.c.l.b16 %v97
    %v178 = vunpack.c.l.b16 %v98
    %v179 = vunpack.c.l.b16 %v99
    %v180 = vunpack.c.l.b16 %v100
    %v181 = vunpack.c.l.b16 %v101
    %v182 = vunpack.c.l.b16 %v102
    %v183 = vunpack.c.l.b16 %v103
    %v184 = vunpack.c.l.b16 %v104
    %v185 = vunpack.c.l.b16 %v105
    %v186 = vunpack.c.l.b16 %v106
    %v187 = vunpack.c.l.b16 %v107
    %v188 = vunpack.c.l.b16 %v108
    %v189 = vunpack.c.l.b16 %v109
    %v190 = vunpack.c.l.b16 %v110
    %v191 = vunpack.c.l.b16 %v111
    %v192 = vunpack.c.l.b16 %v112
    %v193 = vunpack.c.l.b16 %v113
    %v194 = vunpack.c.l.b16 %v114
    %v195 = vunpack.c.l.b16 %v115
    %v196 = vunpack.c.l.b16 %v116
    %v197 = vunpack.c.l.b16 %v117
    %v198 = vunpack.c.l.b16 %v118
    %v199 = vunpack.c.l.b16 %v119
    %v200 = vunpack.c.l.b16 %v120
    %v201 = vunpack.c.l.b16 %v121
    %v202 = vunpack.c.l.b16 %v122
    %v203 = vunpack.c.l.b16 %v123
    %v204 = vunpack.c.l.b16 %v124
    %v205 = vpack.c.b16 %v174, %v173
    %v206 = vpack.c.b16 %v176, %v175
    %v207 = vpack.c.b16 %v178, %v177
    %v208 = vpack.c.b16 %v180, %v179
    %v209 = vpack.c.b16 %v182, %v181
    %v210 = vpack.c.b16 %v184, %v183
    %v211 = vpack.c.b16 %v186, %v185
    %v212 = vpack.c.b16 %v188, %v187
    %v213 = vpack.c.b16 %v190, %v189
    %v214 = vpack.c.b16 %v192, %v191
    %v215 = vpack.c.b16 %v194, %v193
    %v216 = vpack.c.b16 %v196, %v195
    %v217 = vpack.c.b16 %v198, %v197
    %v218 = vpack.c.b16 %v200, %v199
    %v219 = vpack.c.b16 %v202, %v201
    %v220 = vpack.c.b16 %v204, %v203
    %v253 = vunpack.c.l.b16 %v125
    %v254 = vunpack.c.l.b16 %v126
    %v255 = vunpack.c.l.b16 %v127
    %v256 = vunpack.c.l.b16 %v128
    %v257 = vunpack.c.l.b16 %v129
    %v258 = vunpack.c.l.b16 %v130
    %v259 = vunpack.c.l.b16 %v131
    %v260 = vunpack.c.l.b16 %v132
    %v261 = vunpack.c.l.b16 %v133
    %v262 = vunpack.c.l.b16 %v134
    %v263 = vunpack.c.l.b16 %v135
    %v264 = vunpack.c.l.b16 %v136
    %v265 = vunpack.c.l.b16 %v137
    %v266 = vunpack.c.l.b16 %v138
    %v267 = vunpack.c.l.b16 %v139
    %v268 = vunpack.c.l.b16 %v140
    %v269 = vpack.c.b16 %v254, %v253
    %v270 = vpack.c.b16 %v256, %v255
    %v271 = vpack.c.b16 %v258, %v257
    %v272 = vpack.c.b16 %v260, %v259
    %v273 = vpack.c.b16 %v262, %v261
    %v274 = vpack.c.b16 %v264, %v263
    %v275 = vpack.c.b16 %v266, %v265
    %v276 = vpack.c.b16 %v268, %v267
    %285 = vmatpush.bf16.msra.mxu0 %v276
    %286 = vmatpush.bf16.msra.mxu0 %v275
    %287 = vmatpush.bf16.msra.mxu0 %v274
    %288 = vmatpush.bf16.msra.mxu0 %v273
    %289 = vmatpush.bf16.msra.mxu0 %v272
    %290 = vmatpush.bf16.msra.mxu0 %v271
    %291 = vmatpush.bf16.msra.mxu0 %v270
    %292 = vmatpush.bf16.msra.mxu0 %v269
    %293 = vmatmul.bf16.gmra.mxu0 %v205
    %v294 = vpop.f32.mrf.mxu0
    %v295 = vadd.f32 0.0, %v294
    %v296 = vpop.f32.mrf.mxu0
    %v297 = vadd.f32 0.0, %v296
    %298 = vmatmul.bf16.gmra.mxu0 %v206
    %v299 = vpop.f32.mrf.mxu0
    %v300 = vadd.f32 0.0, %v299
    %v301 = vpop.f32.mrf.mxu0
    %v302 = vadd.f32 0.0, %v301
    %303 = vmatmul.bf16.gmra.mxu0 %v207
    %v304 = vpop.f32.mrf.mxu0
    %v305 = vadd.f32 0.0, %v304
    %v306 = vpop.f32.mrf.mxu0
    %v307 = vadd.f32 0.0, %v306
    %308 = vmatmul.bf16.gmra.mxu0 %v208
    %v309 = vpop.f32.mrf.mxu0
    %v310 = vadd.f32 0.0, %v309
    %v311 = vpop.f32.mrf.mxu0
    %v312 = vadd.f32 0.0, %v311
    %313 = vmatmul.bf16.gmra.mxu0 %v209
    %v314 = vpop.f32.mrf.mxu0
    %v315 = vadd.f32 0.0, %v314
    %v316 = vpop.f32.mrf.mxu0
    %v317 = vadd.f32 0.0, %v316
    %318 = vmatmul.bf16.gmra.mxu0 %v210
    %v319 = vpop.f32.mrf.mxu0
    %v320 = vadd.f32 0.0, %v319
    %v321 = vpop.f32.mrf.mxu0
    %v322 = vadd.f32 0.0, %v321
    %323 = vmatmul.bf16.gmra.mxu0 %v211
    %v324 = vpop.f32.mrf.mxu0
    %v325 = vadd.f32 0.0, %v324
    %v326 = vpop.f32.mrf.mxu0
    %v327 = vadd.f32 0.0, %v326
    %328 = vmatmul.bf16.gmra.mxu0 %v212
    %v329 = vpop.f32.mrf.mxu0
    %v330 = vadd.f32 0.0, %v329
    %v331 = vpop.f32.mrf.mxu0
    %v332 = vadd.f32 0.0, %v331
    %333 = vmatmul.bf16.gmra.mxu0 %v213
    %v334 = vpop.f32.mrf.mxu0
    %v335 = vadd.f32 0.0, %v334
    %v336 = vpop.f32.mrf.mxu0
    %v337 = vadd.f32 0.0, %v336
    %338 = vmatmul.bf16.gmra.mxu0 %v214
    %v339 = vpop.f32.mrf.mxu0
    %v340 = vadd.f32 0.0, %v339
    %v341 = vpop.f32.mrf.mxu0
    %v342 = vadd.f32 0.0, %v341
    %343 = vmatmul.bf16.gmra.mxu0 %v215
    %v344 = vpop.f32.mrf.mxu0
    %v345 = vadd.f32 0.0, %v344
    %v346 = vpop.f32.mrf.mxu0
    %v347 = vadd.f32 0.0, %v346
    %348 = vmatmul.bf16.gmra.mxu0 %v216
    %v349 = vpop.f32.mrf.mxu0
    %v350 = vadd.f32 0.0, %v349
    %v351 = vpop.f32.mrf.mxu0
    %v352 = vadd.f32 0.0, %v351
    %353 = vmatmul.bf16.gmra.mxu0 %v217
    %v354 = vpop.f32.mrf.mxu0
    %v355 = vadd.f32 0.0, %v354
    %v356 = vpop.f32.mrf.mxu0
    %v357 = vadd.f32 0.0, %v356
    %358 = vmatmul.bf16.gmra.mxu0 %v218
    %v359 = vpop.f32.mrf.mxu0
    %v360 = vadd.f32 0.0, %v359
    %v361 = vpop.f32.mrf.mxu0
    %v362 = vadd.f32 0.0, %v361
    %363 = vmatmul.bf16.gmra.mxu0 %v219
    %v364 = vpop.f32.mrf.mxu0
    %v365 = vadd.f32 0.0, %v364
    %v366 = vpop.f32.mrf.mxu0
    %v367 = vadd.f32 0.0, %v366
    %368 = vmatmul.bf16.gmra.mxu0 %v220
    %v369 = vpop.f32.mrf.mxu0
    %v370 = vadd.f32 0.0, %v369
    %v371 = vpop.f32.mrf.mxu0
    %v372 = vadd.f32 0.0, %v371
    %373 = vdwg.mxu0
    %v374 = vadd.f32 %v61, %v295
    %v375 = vadd.f32 %v62, %v297
    %v376 = vadd.f32 %v63, %v300
    %v377 = vadd.f32 %v64, %v302
    %v378 = vadd.f32 %v65, %v305
    %v379 = vadd.f32 %v66, %v307
    %v380 = vadd.f32 %v67, %v310
    %v381 = vadd.f32 %v68, %v312
    %v382 = vadd.f32 %v69, %v315
    %v383 = vadd.f32 %v70, %v317
    %v384 = vadd.f32 %v71, %v320
    %v385 = vadd.f32 %v72, %v322
    %v386 = vadd.f32 %v73, %v325
    %v387 = vadd.f32 %v74, %v327
    %v388 = vadd.f32 %v75, %v330
    %v389 = vadd.f32 %v76, %v332
    %v390 = vadd.f32 %v77, %v335
    %v391 = vadd.f32 %v78, %v337
    %v392 = vadd.f32 %v79, %v340
    %v393 = vadd.f32 %v80, %v342
    %v394 = vadd.f32 %v81, %v345
    %v395 = vadd.f32 %v82, %v347
    %v396 = vadd.f32 %v83, %v350
    %v397 = vadd.f32 %v84, %v352
    %v398 = vadd.f32 %v85, %v355
    %v399 = vadd.f32 %v86, %v357
    %v400 = vadd.f32 %v87, %v360
    %v401 = vadd.f32 %v88, %v362
    %v402 = vadd.f32 %v89, %v365
    %v403 = vadd.f32 %v90, %v367
    %v404 = vadd.f32 %v91, %v370
    %v405 = vadd.f32 %v92, %v372
    %406 = vst [vmem:[#allocation2] sm:$0xff] %v374
    %407 = vst [vmem:[#allocation2 + $0x8] sm:$0xff] %v375
    %408 = vst [vmem:[#allocation2 + $0x10] sm:$0xff] %v376
    %409 = vst [vmem:[#allocation2 + $0x18] sm:$0xff] %v377
    %410 = vst [vmem:[#allocation2 + $0x20] sm:$0xff] %v378
    %411 = vst [vmem:[#allocation2 + $0x28] sm:$0xff] %v379
    %412 = vst [vmem:[#allocation2 + $0x30] sm:$0xff] %v380
    %413 = vst [vmem:[#allocation2 + $0x38] sm:$0xff] %v381
    %414 = vst [vmem:[#allocation2 + $0x40] sm:$0xff] %v382
    %415 = vst [vmem:[#allocation2 + $0x48] sm:$0xff] %v383
    %416 = vst [vmem:[#allocation2 + $0x50] sm:$0xff] %v384
    %417 = vst [vmem:[#allocation2 + $0x58] sm:$0xff] %v385
    %418 = vst [vmem:[#allocation2 + $0x60] sm:$0xff] %v386
    %419 = vst [vmem:[#allocation2 + $0x68] sm:$0xff] %v387
    %420 = vst [vmem:[#allocation2 + $0x70] sm:$0xff] %v388
    %421 = vst [vmem:[#allocation2 + $0x78] sm:$0xff] %v389
    %422 = vst [vmem:[#allocation2 + $0x80] sm:$0xff] %v390
    %423 = vst [vmem:[#allocation2 + $0x88] sm:$0xff] %v391
    %424 = vst [vmem:[#allocation2 + $0x90] sm:$0xff] %v392
    %425 = vst [vmem:[#allocation2 + $0x98] sm:$0xff] %v393
    %426 = vst [vmem:[#allocation2 + $0xa0] sm:$0xff] %v394
    %427 = vst [vmem:[#allocation2 + $0xa8] sm:$0xff] %v395
    %428 = vst [vmem:[#allocation2 + $0xb0] sm:$0xff] %v396
    %429 = vst [vmem:[#allocation2 + $0xb8] sm:$0xff] %v397
    %430 = vst [vmem:[#allocation2 + $0xc0] sm:$0xff] %v398
    %431 = vst [vmem:[#allocation2 + $0xc8] sm:$0xff] %v399
    %432 = vst [vmem:[#allocation2 + $0xd0] sm:$0xff] %v400
    %433 = vst [vmem:[#allocation2 + $0xd8] sm:$0xff] %v401
    %434 = vst [vmem:[#allocation2 + $0xe0] sm:$0xff] %v402
    %435 = vst [vmem:[#allocation2 + $0xe8] sm:$0xff] %v403
    %436 = vst [vmem:[#allocation2 + $0xf0] sm:$0xff] %v404
    %437 = vst [vmem:[#allocation2 + $0xf8] sm:$0xff] %v405
    // Predicated region
    $region26: #{hgnn_encoder_forward.17} parent=1 // pred_check
      %p438 = pneg %p25
    $region27: #{hgnn_encoder_forward.17} parent=1 // pred_check_branch
      %440 = sbr.rel (%p438) target = $region29
    $region28: #{hgnn_encoder_forward.17} parent=1 // pred_region
      %v441 = vld [vmem:[#allocation2] sm:$0xff]
      %v442 = vld [vmem:[#allocation2 + $0x8] sm:$0xff]
      %v443 = vld [vmem:[#allocation2 + $0x10] sm:$0xff]
      %v444 = vld [vmem:[#allocation2 + $0x18] sm:$0xff]
      %v445 = vld [vmem:[#allocation2 + $0x20] sm:$0xff]
      %v446 = vld [vmem:[#allocation2 + $0x28] sm:$0xff]
      %v447 = vld [vmem:[#allocation2 + $0x30] sm:$0xff]
      %v448 = vld [vmem:[#allocation2 + $0x38] sm:$0xff]
      %v449 = vld [vmem:[#allocation2 + $0x40] sm:$0xff]
      %v450 = vld [vmem:[#allocation2 + $0x48] sm:$0xff]
      %v451 = vld [vmem:[#allocation2 + $0x50] sm:$0xff]
      %v452 = vld [vmem:[#allocation2 + $0x58] sm:$0xff]
      %v453 = vld [vmem:[#allocation2 + $0x60] sm:$0xff]
      %v454 = vld [vmem:[#allocation2 + $0x68] sm:$0xff]
      %v455 = vld [vmem:[#allocation2 + $0x70] sm:$0xff]
      %v456 = vld [vmem:[#allocation2 + $0x78] sm:$0xff]
      %v457 = vld [vmem:[#allocation2 + $0x80] sm:$0xff]
      %v458 = vld [vmem:[#allocation2 + $0x88] sm:$0xff]
      %v459 = vld [vmem:[#allocation2 + $0x90] sm:$0xff]
      %v460 = vld [vmem:[#allocation2 + $0x98] sm:$0xff]
      %v461 = vld [vmem:[#allocation2 + $0xa0] sm:$0xff]
      %v462 = vld [vmem:[#allocation2 + $0xa8] sm:$0xff]
      %v463 = vld [vmem:[#allocation2 + $0xb0] sm:$0xff]
      %v464 = vld [vmem:[#allocation2 + $0xb8] sm:$0xff]
      %v465 = vld [vmem:[#allocation2 + $0xc0] sm:$0xff]
      %v466 = vld [vmem:[#allocation2 + $0xc8] sm:$0xff]
      %v467 = vld [vmem:[#allocation2 + $0xd0] sm:$0xff]
      %v468 = vld [vmem:[#allocation2 + $0xd8] sm:$0xff]
      %v469 = vld [vmem:[#allocation2 + $0xe0] sm:$0xff]
      %v470 = vld [vmem:[#allocation2 + $0xe8] sm:$0xff]
      %v471 = vld [vmem:[#allocation2 + $0xf0] sm:$0xff]
      %v472 = vld [vmem:[#allocation2 + $0xf8] sm:$0xff]
      %v473 = vld [vmem:[%s2] sm:$0xff]
      %v474 = vld [vmem:[%s2 + $0x8] sm:$0xff]
      %v475 = vld [vmem:[%s2 + $0x10] sm:$0xff]
      %v476 = vld [vmem:[%s2 + $0x18] sm:$0xff]
      %v477 = vld [vmem:[%s2 + $0x20] sm:$0xff]
      %v478 = vld [vmem:[%s2 + $0x28] sm:$0xff]
      %v479 = vld [vmem:[%s2 + $0x30] sm:$0xff]
      %v480 = vld [vmem:[%s2 + $0x38] sm:$0xff]
      %v481 = vld [vmem:[%s2 + $0x40] sm:$0xff]
      %v482 = vld [vmem:[%s2 + $0x48] sm:$0xff]
      %v483 = vld [vmem:[%s2 + $0x50] sm:$0xff]
      %v484 = vld [vmem:[%s2 + $0x58] sm:$0xff]
      %v485 = vld [vmem:[%s2 + $0x60] sm:$0xff]
      %v486 = vld [vmem:[%s2 + $0x68] sm:$0xff]
      %v487 = vld [vmem:[%s2 + $0x70] sm:$0xff]
      %v488 = vld [vmem:[%s2 + $0x78] sm:$0xff]
      %v489 = vld [vmem:[%s2 + $0x80] sm:$0xff]
      %v490 = vld [vmem:[%s2 + $0x88] sm:$0xff]
      %v491 = vld [vmem:[%s2 + $0x90] sm:$0xff]
      %v492 = vld [vmem:[%s2 + $0x98] sm:$0xff]
      %v493 = vld [vmem:[%s2 + $0xa0] sm:$0xff]
      %v494 = vld [vmem:[%s2 + $0xa8] sm:$0xff]
      %v495 = vld [vmem:[%s2 + $0xb0] sm:$0xff]
      %v496 = vld [vmem:[%s2 + $0xb8] sm:$0xff]
      %v497 = vld [vmem:[%s2 + $0xc0] sm:$0xff]
      %v498 = vld [vmem:[%s2 + $0xc8] sm:$0xff]
      %v499 = vld [vmem:[%s2 + $0xd0] sm:$0xff]
      %v500 = vld [vmem:[%s2 + $0xd8] sm:$0xff]
      %v501 = vld [vmem:[%s2 + $0xe0] sm:$0xff]
      %v502 = vld [vmem:[%s2 + $0xe8] sm:$0xff]
      %v503 = vld [vmem:[%s2 + $0xf0] sm:$0xff]
      %v504 = vld [vmem:[%s2 + $0xf8] sm:$0xff]
      %506 = vset.pattern.permute.xlu0 0
      %507 = vperm.xlu0 %506, %v473
      %v508 = vpop.permute.xlu0 %507
      %511 = vset.pattern.permute.xlu0 0
      %512 = vperm.xlu0 %511, %v474
      %v513 = vpop.permute.xlu0 %512
      %516 = vset.pattern.permute.xlu0 0
      %517 = vperm.xlu0 %516, %v475
      %v518 = vpop.permute.xlu0 %517
      %521 = vset.pattern.permute.xlu0 0
      %522 = vperm.xlu0 %521, %v476
      %v523 = vpop.permute.xlu0 %522
      %526 = vset.pattern.permute.xlu0 0
      %527 = vperm.xlu0 %526, %v477
      %v528 = vpop.permute.xlu0 %527
      %531 = vset.pattern.permute.xlu0 0
      %532 = vperm.xlu0 %531, %v478
      %v533 = vpop.permute.xlu0 %532
      %536 = vset.pattern.permute.xlu0 0
      %537 = vperm.xlu0 %536, %v479
      %v538 = vpop.permute.xlu0 %537
      %541 = vset.pattern.permute.xlu0 0
      %542 = vperm.xlu0 %541, %v480
      %v543 = vpop.permute.xlu0 %542
      %546 = vset.pattern.permute.xlu0 0
      %547 = vperm.xlu0 %546, %v481
      %v548 = vpop.permute.xlu0 %547
      %551 = vset.pattern.permute.xlu0 0
      %552 = vperm.xlu0 %551, %v482
      %v553 = vpop.permute.xlu0 %552
      %556 = vset.pattern.permute.xlu0 0
      %557 = vperm.xlu0 %556, %v483
      %v558 = vpop.permute.xlu0 %557
      %561 = vset.pattern.permute.xlu0 0
      %562 = vperm.xlu0 %561, %v484
      %v563 = vpop.permute.xlu0 %562
      %566 = vset.pattern.permute.xlu0 0
      %567 = vperm.xlu0 %566, %v485
      %v568 = vpop.permute.xlu0 %567
      %571 = vset.pattern.permute.xlu0 0
      %572 = vperm.xlu0 %571, %v486
      %v573 = vpop.permute.xlu0 %572
      %576 = vset.pattern.permute.xlu0 0
      %577 = vperm.xlu0 %576, %v487
      %v578 = vpop.permute.xlu0 %577
      %581 = vset.pattern.permute.xlu0 0
      %582 = vperm.xlu0 %581, %v488
      %v583 = vpop.permute.xlu0 %582
      %586 = vset.pattern.permute.xlu0 0
      %587 = vperm.xlu0 %586, %v489
      %v588 = vpop.permute.xlu0 %587
      %591 = vset.pattern.permute.xlu0 0
      %592 = vperm.xlu0 %591, %v490
      %v593 = vpop.permute.xlu0 %592
      %596 = vset.pattern.permute.xlu0 0
      %597 = vperm.xlu0 %596, %v491
      %v598 = vpop.permute.xlu0 %597
      %601 = vset.pattern.permute.xlu0 0
      %602 = vperm.xlu0 %601, %v492
      %v603 = vpop.permute.xlu0 %602
      %606 = vset.pattern.permute.xlu0 0
      %607 = vperm.xlu0 %606, %v493
      %v608 = vpop.permute.xlu0 %607
      %611 = vset.pattern.permute.xlu0 0
      %612 = vperm.xlu0 %611, %v494
      %v613 = vpop.permute.xlu0 %612
      %616 = vset.pattern.permute.xlu0 0
      %617 = vperm.xlu0 %616, %v495
      %v618 = vpop.permute.xlu0 %617
      %621 = vset.pattern.permute.xlu0 0
      %622 = vperm.xlu0 %621, %v496
      %v623 = vpop.permute.xlu0 %622
      %626 = vset.pattern.permute.xlu0 0
      %627 = vperm.xlu0 %626, %v497
      %v628 = vpop.permute.xlu0 %627
      %631 = vset.pattern.permute.xlu0 0
      %632 = vperm.xlu0 %631, %v498
      %v633 = vpop.permute.xlu0 %632
      %636 = vset.pattern.permute.xlu0 0
      %637 = vperm.xlu0 %636, %v499
      %v638 = vpop.permute.xlu0 %637
      %641 = vset.pattern.permute.xlu0 0
      %642 = vperm.xlu0 %641, %v500
      %v643 = vpop.permute.xlu0 %642
      %646 = vset.pattern.permute.xlu0 0
      %647 = vperm.xlu0 %646, %v501
      %v648 = vpop.permute.xlu0 %647
      %651 = vset.pattern.permute.xlu0 0
      %652 = vperm.xlu0 %651, %v502
      %v653 = vpop.permute.xlu0 %652
      %656 = vset.pattern.permute.xlu0 0
      %657 = vperm.xlu0 %656, %v503
      %v658 = vpop.permute.xlu0 %657
      %661 = vset.pattern.permute.xlu0 0
      %662 = vperm.xlu0 %661, %v504
      %v663 = vpop.permute.xlu0 %662
      %v665 = vmul.f32 %v441, %v508
      %v666 = vmul.f32 %v442, %v513
      %v667 = vmul.f32 %v443, %v518
      %v668 = vmul.f32 %v444, %v523
      %v669 = vmul.f32 %v445, %v528
      %v670 = vmul.f32 %v446, %v533
      %v671 = vmul.f32 %v447, %v538
      %v672 = vmul.f32 %v448, %v543
      %v673 = vmul.f32 %v449, %v548
      %v674 = vmul.f32 %v450, %v553
      %v675 = vmul.f32 %v451, %v558
      %v676 = vmul.f32 %v452, %v563
      %v677 = vmul.f32 %v453, %v568
      %v678 = vmul.f32 %v454, %v573
      %v679 = vmul.f32 %v455, %v578
      %v680 = vmul.f32 %v456, %v583
      %v681 = vmul.f32 %v457, %v588
      %v682 = vmul.f32 %v458, %v593
      %v683 = vmul.f32 %v459, %v598
      %v684 = vmul.f32 %v460, %v603
      %v685 = vmul.f32 %v461, %v608
      %v686 = vmul.f32 %v462, %v613
      %v687 = vmul.f32 %v463, %v618
      %v688 = vmul.f32 %v464, %v623
      %v689 = vmul.f32 %v465, %v628
      %v690 = vmul.f32 %v466, %v633
      %v691 = vmul.f32 %v467, %v638
      %v692 = vmul.f32 %v468, %v643
      %v693 = vmul.f32 %v469, %v648
      %v694 = vmul.f32 %v470, %v653
      %v695 = vmul.f32 %v471, %v658
      %v696 = vmul.f32 %v472, %v663
      %v697 = vld [vmem:[%s3] sm:$0x1]
      %v699 = vperm.slane %v697, 0
      %v701 = vadd.f32 %v665, %v699
      %v702 = vadd.f32 %v666, %v699
      %v703 = vadd.f32 %v667, %v699
      %v704 = vadd.f32 %v668, %v699
      %v705 = vadd.f32 %v669, %v699
      %v706 = vadd.f32 %v670, %v699
      %v707 = vadd.f32 %v671, %v699
      %v708 = vadd.f32 %v672, %v699
      %v709 = vadd.f32 %v673, %v699
      %v710 = vadd.f32 %v674, %v699
      %v711 = vadd.f32 %v675, %v699
      %v712 = vadd.f32 %v676, %v699
      %v713 = vadd.f32 %v677, %v699
      %v714 = vadd.f32 %v678, %v699
      %v715 = vadd.f32 %v679, %v699
      %v716 = vadd.f32 %v680, %v699
      %v717 = vadd.f32 %v681, %v699
      %v718 = vadd.f32 %v682, %v699
      %v719 = vadd.f32 %v683, %v699
      %v720 = vadd.f32 %v684, %v699
      %v721 = vadd.f32 %v685, %v699
      %v722 = vadd.f32 %v686, %v699
      %v723 = vadd.f32 %v687, %v699
      %v724 = vadd.f32 %v688, %v699
      %v725 = vadd.f32 %v689, %v699
      %v726 = vadd.f32 %v690, %v699
      %v727 = vadd.f32 %v691, %v699
      %v728 = vadd.f32 %v692, %v699
      %v729 = vadd.f32 %v693, %v699
      %v730 = vadd.f32 %v694, %v699
      %v731 = vadd.f32 %v695, %v699
      %v732 = vadd.f32 %v696, %v699
      %v733 = vmax.f32 %v701, 0.0
      %v734 = vmax.f32 %v702, 0.0
      %v735 = vmax.f32 %v703, 0.0
      %v736 = vmax.f32 %v704, 0.0
      %v737 = vmax.f32 %v705, 0.0
      %v738 = vmax.f32 %v706, 0.0
      %v739 = vmax.f32 %v707, 0.0
      %v740 = vmax.f32 %v708, 0.0
      %v741 = vmax.f32 %v709, 0.0
      %v742 = vmax.f32 %v710, 0.0
      %v743 = vmax.f32 %v711, 0.0
      %v744 = vmax.f32 %v712, 0.0
      %v745 = vmax.f32 %v713, 0.0
      %v746 = vmax.f32 %v714, 0.0
      %v747 = vmax.f32 %v715, 0.0
      %v748 = vmax.f32 %v716, 0.0
      %v749 = vmax.f32 %v717, 0.0
      %v750 = vmax.f32 %v718, 0.0
      %v751 = vmax.f32 %v719, 0.0
      %v752 = vmax.f32 %v720, 0.0
      %v753 = vmax.f32 %v721, 0.0
      %v754 = vmax.f32 %v722, 0.0
      %v755 = vmax.f32 %v723, 0.0
      %v756 = vmax.f32 %v724, 0.0
      %v757 = vmax.f32 %v725, 0.0
      %v758 = vmax.f32 %v726, 0.0
      %v759 = vmax.f32 %v727, 0.0
      %v760 = vmax.f32 %v728, 0.0
      %v761 = vmax.f32 %v729, 0.0
      %v762 = vmax.f32 %v730, 0.0
      %v763 = vmax.f32 %v731, 0.0
      %v764 = vmax.f32 %v732, 0.0
      %v765 = vld [vmem:[%s4] sm:$0xff]
      %v766 = vld [vmem:[%s4 + $0x8] sm:$0xff]
      %v767 = vld [vmem:[%s4 + $0x10] sm:$0xff]
      %v768 = vld [vmem:[%s4 + $0x18] sm:$0xff]
      %v769 = vld [vmem:[%s4 + $0x20] sm:$0xff]
      %v770 = vld [vmem:[%s4 + $0x28] sm:$0xff]
      %v771 = vld [vmem:[%s4 + $0x30] sm:$0xff]
      %v772 = vld [vmem:[%s4 + $0x38] sm:$0xff]
      %v773 = vld [vmem:[%s4 + $0x40] sm:$0xff]
      %v774 = vld [vmem:[%s4 + $0x48] sm:$0xff]
      %v775 = vld [vmem:[%s4 + $0x50] sm:$0xff]
      %v776 = vld [vmem:[%s4 + $0x58] sm:$0xff]
      %v777 = vld [vmem:[%s4 + $0x60] sm:$0xff]
      %v778 = vld [vmem:[%s4 + $0x68] sm:$0xff]
      %v779 = vld [vmem:[%s4 + $0x70] sm:$0xff]
      %v780 = vld [vmem:[%s4 + $0x78] sm:$0xff]
      %v781 = vld [vmem:[%s4 + $0x80] sm:$0xff]
      %v782 = vld [vmem:[%s4 + $0x88] sm:$0xff]
      %v783 = vld [vmem:[%s4 + $0x90] sm:$0xff]
      %v784 = vld [vmem:[%s4 + $0x98] sm:$0xff]
      %v785 = vld [vmem:[%s4 + $0xa0] sm:$0xff]
      %v786 = vld [vmem:[%s4 + $0xa8] sm:$0xff]
      %v787 = vld [vmem:[%s4 + $0xb0] sm:$0xff]
      %v788 = vld [vmem:[%s4 + $0xb8] sm:$0xff]
      %v789 = vld [vmem:[%s4 + $0xc0] sm:$0xff]
      %v790 = vld [vmem:[%s4 + $0xc8] sm:$0xff]
      %v791 = vld [vmem:[%s4 + $0xd0] sm:$0xff]
      %v792 = vld [vmem:[%s4 + $0xd8] sm:$0xff]
      %v793 = vld [vmem:[%s4 + $0xe0] sm:$0xff]
      %v794 = vld [vmem:[%s4 + $0xe8] sm:$0xff]
      %v795 = vld [vmem:[%s4 + $0xf0] sm:$0xff]
      %v796 = vld [vmem:[%s4 + $0xf8] sm:$0xff]
      %798 = vset.pattern.permute.xlu0 0
      %799 = vperm.xlu0 %798, %v765
      %v800 = vpop.permute.xlu0 %799
      %803 = vset.pattern.permute.xlu0 0
      %804 = vperm.xlu0 %803, %v766
      %v805 = vpop.permute.xlu0 %804
      %808 = vset.pattern.permute.xlu0 0
      %809 = vperm.xlu0 %808, %v767
      %v810 = vpop.permute.xlu0 %809
      %813 = vset.pattern.permute.xlu0 0
      %814 = vperm.xlu0 %813, %v768
      %v815 = vpop.permute.xlu0 %814
      %818 = vset.pattern.permute.xlu0 0
      %819 = vperm.xlu0 %818, %v769
      %v820 = vpop.permute.xlu0 %819
      %823 = vset.pattern.permute.xlu0 0
      %824 = vperm.xlu0 %823, %v770
      %v825 = vpop.permute.xlu0 %824
      %828 = vset.pattern.permute.xlu0 0
      %829 = vperm.xlu0 %828, %v771
      %v830 = vpop.permute.xlu0 %829
      %833 = vset.pattern.permute.xlu0 0
      %834 = vperm.xlu0 %833, %v772
      %v835 = vpop.permute.xlu0 %834
      %838 = vset.pattern.permute.xlu0 0
      %839 = vperm.xlu0 %838, %v773
      %v840 = vpop.permute.xlu0 %839
      %843 = vset.pattern.permute.xlu0 0
      %844 = vperm.xlu0 %843, %v774
      %v845 = vpop.permute.xlu0 %844
      %848 = vset.pattern.permute.xlu0 0
      %849 = vperm.xlu0 %848, %v775
      %v850 = vpop.permute.xlu0 %849
      %853 = vset.pattern.permute.xlu0 0
      %854 = vperm.xlu0 %853, %v776
      %v855 = vpop.permute.xlu0 %854
      %858 = vset.pattern.permute.xlu0 0
      %859 = vperm.xlu0 %858, %v777
      %v860 = vpop.permute.xlu0 %859
      %863 = vset.pattern.permute.xlu0 0
      %864 = vperm.xlu0 %863, %v778
      %v865 = vpop.permute.xlu0 %864
      %868 = vset.pattern.permute.xlu0 0
      %869 = vperm.xlu0 %868, %v779
      %v870 = vpop.permute.xlu0 %869
      %873 = vset.pattern.permute.xlu0 0
      %874 = vperm.xlu0 %873, %v780
      %v875 = vpop.permute.xlu0 %874
      %878 = vset.pattern.permute.xlu0 0
      %879 = vperm.xlu0 %878, %v781
      %v880 = vpop.permute.xlu0 %879
      %883 = vset.pattern.permute.xlu0 0
      %884 = vperm.xlu0 %883, %v782
      %v885 = vpop.permute.xlu0 %884
      %888 = vset.pattern.permute.xlu0 0
      %889 = vperm.xlu0 %888, %v783
      %v890 = vpop.permute.xlu0 %889
      %893 = vset.pattern.permute.xlu0 0
      %894 = vperm.xlu0 %893, %v784
      %v895 = vpop.permute.xlu0 %894
      %898 = vset.pattern.permute.xlu0 0
      %899 = vperm.xlu0 %898, %v785
      %v900 = vpop.permute.xlu0 %899
      %903 = vset.pattern.permute.xlu0 0
      %904 = vperm.xlu0 %903, %v786
      %v905 = vpop.permute.xlu0 %904
      %908 = vset.pattern.permute.xlu0 0
      %909 = vperm.xlu0 %908, %v787
      %v910 = vpop.permute.xlu0 %909
      %913 = vset.pattern.permute.xlu0 0
      %914 = vperm.xlu0 %913, %v788
      %v915 = vpop.permute.xlu0 %914
      %918 = vset.pattern.permute.xlu0 0
      %919 = vperm.xlu0 %918, %v789
      %v920 = vpop.permute.xlu0 %919
      %923 = vset.pattern.permute.xlu0 0
      %924 = vperm.xlu0 %923, %v790
      %v925 = vpop.permute.xlu0 %924
      %928 = vset.pattern.permute.xlu0 0
      %929 = vperm.xlu0 %928, %v791
      %v930 = vpop.permute.xlu0 %929
      %933 = vset.pattern.permute.xlu0 0
      %934 = vperm.xlu0 %933, %v792
      %v935 = vpop.permute.xlu0 %934
      %938 = vset.pattern.permute.xlu0 0
      %939 = vperm.xlu0 %938, %v793
      %v940 = vpop.permute.xlu0 %939
      %943 = vset.pattern.permute.xlu0 0
      %944 = vperm.xlu0 %943, %v794
      %v945 = vpop.permute.xlu0 %944
      %948 = vset.pattern.permute.xlu0 0
      %949 = vperm.xlu0 %948, %v795
      %v950 = vpop.permute.xlu0 %949
      %953 = vset.pattern.permute.xlu0 0
      %954 = vperm.xlu0 %953, %v796
      %v955 = vpop.permute.xlu0 %954
      %v957 = vmul.f32 %v733, %v800
      %v958 = vmul.f32 %v734, %v805
      %v959 = vmul.f32 %v735, %v810
      %v960 = vmul.f32 %v736, %v815
      %v961 = vmul.f32 %v737, %v820
      %v962 = vmul.f32 %v738, %v825
      %v963 = vmul.f32 %v739, %v830
      %v964 = vmul.f32 %v740, %v835
      %v965 = vmul.f32 %v741, %v840
      %v966 = vmul.f32 %v742, %v845
      %v967 = vmul.f32 %v743, %v850
      %v968 = vmul.f32 %v744, %v855
      %v969 = vmul.f32 %v745, %v860
      %v970 = vmul.f32 %v746, %v865
      %v971 = vmul.f32 %v747, %v870
      %v972 = vmul.f32 %v748, %v875
      %v973 = vmul.f32 %v749, %v880
      %v974 = vmul.f32 %v750, %v885
      %v975 = vmul.f32 %v751, %v890
      %v976 = vmul.f32 %v752, %v895
      %v977 = vmul.f32 %v753, %v900
      %v978 = vmul.f32 %v754, %v905
      %v979 = vmul.f32 %v755, %v910
      %v980 = vmul.f32 %v756, %v915
      %v981 = vmul.f32 %v757, %v920
      %v982 = vmul.f32 %v758, %v925
      %v983 = vmul.f32 %v759, %v930
      %v984 = vmul.f32 %v760, %v935
      %v985 = vmul.f32 %v761, %v940
      %v986 = vmul.f32 %v762, %v945
      %v987 = vmul.f32 %v763, %v950
      %v988 = vmul.f32 %v764, %v955
      %v989 = vpack.c.bf16 %v957, %v957
      %v990 = vpack.c.bf16 %v958, %v958
      %v991 = vpack.c.bf16 %v959, %v959
      %v992 = vpack.c.bf16 %v960, %v960
      %v993 = vpack.c.bf16 %v961, %v961
      %v994 = vpack.c.bf16 %v962, %v962
      %v995 = vpack.c.bf16 %v963, %v963
      %v996 = vpack.c.bf16 %v964, %v964
      %v997 = vpack.c.bf16 %v965, %v965
      %v998 = vpack.c.bf16 %v966, %v966
      %v999 = vpack.c.bf16 %v967, %v967
      %v1000 = vpack.c.bf16 %v968, %v968
      %v1001 = vpack.c.bf16 %v969, %v969
      %v1002 = vpack.c.bf16 %v970, %v970
      %v1003 = vpack.c.bf16 %v971, %v971
      %v1004 = vpack.c.bf16 %v972, %v972
      %v1005 = vpack.c.bf16 %v973, %v973
      %v1006 = vpack.c.bf16 %v974, %v974
      %v1007 = vpack.c.bf16 %v975, %v975
      %v1008 = vpack.c.bf16 %v976, %v976
      %v1009 = vpack.c.bf16 %v977, %v977
      %v1010 = vpack.c.bf16 %v978, %v978
      %v1011 = vpack.c.bf16 %v979, %v979
      %v1012 = vpack.c.bf16 %v980, %v980
      %v1013 = vpack.c.bf16 %v981, %v981
      %v1014 = vpack.c.bf16 %v982, %v982
      %v1015 = vpack.c.bf16 %v983, %v983
      %v1016 = vpack.c.bf16 %v984, %v984
      %v1017 = vpack.c.bf16 %v985, %v985
      %v1018 = vpack.c.bf16 %v986, %v986
      %v1019 = vpack.c.bf16 %v987, %v987
      %v1020 = vpack.c.bf16 %v988, %v988
      %1021 = vst [vmem:[%s5] sm:$0xf] %v989
      %1022 = vst [vmem:[%s5 + $0x4] sm:$0xf] %v990
      %1023 = vst [vmem:[%s5 + $0x8] sm:$0xf] %v991
      %1024 = vst [vmem:[%s5 + $0xc] sm:$0xf] %v992
      %1025 = vst [vmem:[%s5 + $0x10] sm:$0xf] %v993
      %1026 = vst [vmem:[%s5 + $0x14] sm:$0xf] %v994
      %1027 = vst [vmem:[%s5 + $0x18] sm:$0xf] %v995
      %1028 = vst [vmem:[%s5 + $0x1c] sm:$0xf] %v996
      %1029 = vst [vmem:[%s5 + $0x20] sm:$0xf] %v997
      %1030 = vst [vmem:[%s5 + $0x24] sm:$0xf] %v998
      %1031 = vst [vmem:[%s5 + $0x28] sm:$0xf] %v999
      %1032 = vst [vmem:[%s5 + $0x2c] sm:$0xf] %v1000
      %1033 = vst [vmem:[%s5 + $0x30] sm:$0xf] %v1001
      %1034 = vst [vmem:[%s5 + $0x34] sm:$0xf] %v1002
      %1035 = vst [vmem:[%s5 + $0x38] sm:$0xf] %v1003
      %1036 = vst [vmem:[%s5 + $0x3c] sm:$0xf] %v1004
      %1037 = vst [vmem:[%s5 + $0x40] sm:$0xf] %v1005
      %1038 = vst [vmem:[%s5 + $0x44] sm:$0xf] %v1006
      %1039 = vst [vmem:[%s5 + $0x48] sm:$0xf] %v1007
      %1040 = vst [vmem:[%s5 + $0x4c] sm:$0xf] %v1008
      %1041 = vst [vmem:[%s5 + $0x50] sm:$0xf] %v1009
      %1042 = vst [vmem:[%s5 + $0x54] sm:$0xf] %v1010
      %1043 = vst [vmem:[%s5 + $0x58] sm:$0xf] %v1011
      %1044 = vst [vmem:[%s5 + $0x5c] sm:$0xf] %v1012
      %1045 = vst [vmem:[%s5 + $0x60] sm:$0xf] %v1013
      %1046 = vst [vmem:[%s5 + $0x64] sm:$0xf] %v1014
      %1047 = vst [vmem:[%s5 + $0x68] sm:$0xf] %v1015
      %1048 = vst [vmem:[%s5 + $0x6c] sm:$0xf] %v1016
      %1049 = vst [vmem:[%s5 + $0x70] sm:$0xf] %v1017
      %1050 = vst [vmem:[%s5 + $0x74] sm:$0xf] %v1018
      %1051 = vst [vmem:[%s5 + $0x78] sm:$0xf] %v1019
      %1052 = vst [vmem:[%s5 + $0x7c] sm:$0xf] %v1020
      %v1053 = vlaneseq
      %v1054 = vshrl.u32 %v1053, 7
      %vm1055 = vcmp.eq.s32.totalorder %v1054, 0
      %v1056 = vsel %vm1055, 1, 0
      %v1057 = vcvt.s32.f32 %v1056
      %v1058 = vadd.f32 %v957, %v958
      %v1059 = vadd.f32 %v1058, %v959
      %v1060 = vadd.f32 %v1059, %v960
      %v1061 = vadd.f32 %v1060, %v961
      %v1062 = vadd.f32 %v1061, %v962
      %v1063 = vadd.f32 %v1062, %v963
      %v1064 = vadd.f32 %v1063, %v964
      %v1065 = vadd.f32 %v1064, %v965
      %v1066 = vadd.f32 %v1065, %v966
      %v1067 = vadd.f32 %v1066, %v967
      %v1068 = vadd.f32 %v1067, %v968
      %v1069 = vadd.f32 %v1068, %v969
      %v1070 = vadd.f32 %v1069, %v970
      %v1071 = vadd.f32 %v1070, %v971
      %v1072 = vadd.f32 %v1071, %v972
      %v1073 = vadd.f32 %v1072, %v973
      %v1074 = vadd.f32 %v1073, %v974
      %v1075 = vadd.f32 %v1074, %v975
      %v1076 = vadd.f32 %v1075, %v976
      %v1077 = vadd.f32 %v1076, %v977
      %v1078 = vadd.f32 %v1077, %v978
      %v1079 = vadd.f32 %v1078, %v979
      %v1080 = vadd.f32 %v1079, %v980
      %v1081 = vadd.f32 %v1080, %v981
      %v1082 = vadd.f32 %v1081, %v982
      %v1083 = vadd.f32 %v1082, %v983
      %v1084 = vadd.f32 %v1083, %v984
      %v1085 = vadd.f32 %v1084, %v985
      %v1086 = vadd.f32 %v1085, %v986
      %v1087 = vadd.f32 %v1086, %v987
      %v1088 = vadd.f32 %v1087, %v988
      %v1089 = vrot.slane %v1088, 4
      %v1090 = vadd.f32 %v1088, %v1089
      %v1091 = vrot.slane %v1090, 2
      %v1092 = vadd.f32 %v1090, %v1091
      %v1093 = vrot.slane %v1092, 1
      %v1094 = vadd.f32 %v1092, %v1093
      %v1095 = vmul.f32 %v1057, %v1094
      %1096 = vst [vmem:[#allocation3] sm:$0xff] %v1095
      %v1097 = vmul.f32 %v957, %v957
      %v1098 = vmul.f32 %v958, %v958
      %v1099 = vmul.f32 %v959, %v959
      %v1100 = vmul.f32 %v960, %v960
      %v1101 = vmul.f32 %v961, %v961
      %v1102 = vmul.f32 %v962, %v962
      %v1103 = vmul.f32 %v963, %v963
      %v1104 = vmul.f32 %v964, %v964
      %v1105 = vmul.f32 %v965, %v965
      %v1106 = vmul.f32 %v966, %v966
      %v1107 = vmul.f32 %v967, %v967
      %v1108 = vmul.f32 %v968, %v968
      %v1109 = vmul.f32 %v969, %v969
      %v1110 = vmul.f32 %v970, %v970
      %v1111 = vmul.f32 %v971, %v971
      %v1112 = vmul.f32 %v972, %v972
      %v1113 = vmul.f32 %v973, %v973
      %v1114 = vmul.f32 %v974, %v974
      %v1115 = vmul.f32 %v975, %v975
      %v1116 = vmul.f32 %v976, %v976
      %v1117 = vmul.f32 %v977, %v977
      %v1118 = vmul.f32 %v978, %v978
      %v1119 = vmul.f32 %v979, %v979
      %v1120 = vmul.f32 %v980, %v980
      %v1121 = vmul.f32 %v981, %v981
      %v1122 = vmul.f32 %v982, %v982
      %v1123 = vmul.f32 %v983, %v983
      %v1124 = vmul.f32 %v984, %v984
      %v1125 = vmul.f32 %v985, %v985
      %v1126 = vmul.f32 %v986, %v986
      %v1127 = vmul.f32 %v987, %v987
      %v1128 = vmul.f32 %v988, %v988
      %v1129 = vadd.f32 %v1097, %v1098
      %v1130 = vadd.f32 %v1129, %v1099
      %v1131 = vadd.f32 %v1130, %v1100
      %v1132 = vadd.f32 %v1131, %v1101
      %v1133 = vadd.f32 %v1132, %v1102
      %v1134 = vadd.f32 %v1133, %v1103
      %v1135 = vadd.f32 %v1134, %v1104
      %v1136 = vadd.f32 %v1135, %v1105
      %v1137 = vadd.f32 %v1136, %v1106
      %v1138 = vadd.f32 %v1137, %v1107
      %v1139 = vadd.f32 %v1138, %v1108
      %v1140 = vadd.f32 %v1139, %v1109
      %v1141 = vadd.f32 %v1140, %v1110
      %v1142 = vadd.f32 %v1141, %v1111
      %v1143 = vadd.f32 %v1142, %v1112
      %v1144 = vadd.f32 %v1143, %v1113
      %v1145 = vadd.f32 %v1144, %v1114
      %v1146 = vadd.f32 %v1145, %v1115
      %v1147 = vadd.f32 %v1146, %v1116
      %v1148 = vadd.f32 %v1147, %v1117
      %v1149 = vadd.f32 %v1148, %v1118
      %v1150 = vadd.f32 %v1149, %v1119
      %v1151 = vadd.f32 %v1150, %v1120
      %v1152 = vadd.f32 %v1151, %v1121
      %v1153 = vadd.f32 %v1152, %v1122
      %v1154 = vadd.f32 %v1153, %v1123
      %v1155 = vadd.f32 %v1154, %v1124
      %v1156 = vadd.f32 %v1155, %v1125
      %v1157 = vadd.f32 %v1156, %v1126
      %v1158 = vadd.f32 %v1157, %v1127
      %v1159 = vadd.f32 %v1158, %v1128
      %v1160 = vrot.slane %v1159, 4
      %v1161 = vadd.f32 %v1159, %v1160
      %v1162 = vrot.slane %v1161, 2
      %v1163 = vadd.f32 %v1161, %v1162
      %v1164 = vrot.slane %v1163, 1
      %v1165 = vadd.f32 %v1163, %v1164
      %v1166 = vmul.f32 %v1057, %v1165
      %1167 = vst [vmem:[#allocation5] sm:$0xff] %v1166
    $region29: #{hgnn_encoder_forward.17} parent=1 // pred_fallthru
      _
    // Predicated region
    $region30: #{hgnn_encoder_forward.17} parent=1 // pred_check
      _
    $region31: #{hgnn_encoder_forward.17} parent=1 // pred_check_branch
      %1169 = sbr.rel (0) target = $region33
    $region32: #{hgnn_encoder_forward.17} parent=1 // pred_region
      _
    $region33: #{hgnn_encoder_forward.17} parent=1 // pred_fallthru
      _
    // Predicated region
    $region34: #{hgnn_encoder_forward.17} parent=1 // pred_check
      _
    $region35: #{hgnn_encoder_forward.17} parent=1 // pred_check_branch
      %1171 = sbr.rel (0) target = $region37
    $region36: #{hgnn_encoder_forward.17} parent=1 // pred_region
      %1173 = vsyncadd [#allocation4], 0
      %s1175 = sshll.u32 [#allocation3], 4
      %s1176 = int_to_ptr.vmem [resolvable:$true] %s1175
      %s1177 = sshll.u32 %s6, 4
      %s1178 = int_to_ptr.hbm [resolvable:$true] %s1177
      %1180 = dma.vmem_to_hbm [thread:$0]  %s1176, 128, %s1178, [#allocation4]
    $region37: #{hgnn_encoder_forward.17} parent=1 // pred_fallthru
      _
    // Predicated region
    $region38: #{hgnn_encoder_forward.17} parent=1 // pred_check
      _
    $region39: #{hgnn_encoder_forward.17} parent=1 // pred_check_branch
      %1182 = sbr.rel (0) target = $region41
    $region40: #{hgnn_encoder_forward.17} parent=1 // pred_region
      %1184 = vsyncadd [#allocation6], 0
      %s1186 = sshll.u32 [#allocation5], 4
      %s1187 = int_to_ptr.vmem [resolvable:$true] %s1186
      %s1188 = sshll.u32 %s7, 4
      %s1189 = int_to_ptr.hbm [resolvable:$true] %s1188
      %1191 = dma.vmem_to_hbm [thread:$0]  %s1187, 128, %s1189, [#allocation6]
    $region41: #{hgnn_encoder_forward.17} parent=1 // pred_fallthru
      _
    // Predicated region
    $region42: #{hgnn_encoder_forward.17} parent=1 // pred_check
      _
    $region43: #{hgnn_encoder_forward.17} parent=1 // pred_check_branch
      %1193 = sbr.rel (0) target = $region45
    $region44: #{hgnn_encoder_forward.17} parent=1 // pred_region
      _
    $region45: #{hgnn_encoder_forward.17} parent=1 // pred_fallthru
      _
    // Predicated region
    $region46: #{hgnn_encoder_forward.17} parent=1 // pred_check
      _
    $region47: #{hgnn_encoder_forward.17} parent=1 // pred_check_branch
      %1195 = sbr.rel (0) target = $region49
    $region48: #{hgnn_encoder_forward.17} parent=1 // pred_region
      %1197 = dma.done [#allocation4], 128
    $region49: #{hgnn_encoder_forward.17} parent=1 // pred_fallthru
      _
    // Predicated region
    $region50: #{hgnn_encoder_forward.17} parent=1 // pred_check
      _
    $region51: #{hgnn_encoder_forward.17} parent=1 // pred_check_branch
      %1199 = sbr.rel (0) target = $region53
    $region52: #{hgnn_encoder_forward.17} parent=1 // pred_region
      %1201 = dma.done [#allocation6], 128
    $region53: #{hgnn_encoder_forward.17} parent=1 // pred_fallthru
      _
    %1202 = vsyncpa [#allocation4], 1
    %1203 = vsyncpa [#allocation6], 1

</llo_original>
